<compile_context>
chip_gen: v7x
topology: tpu7x:2x2x1
jax: 0.10.0
libtpu: 0.0.40
codegen_flags: <defaults>
</compile_context>

<pallas_src>
import functools

import jax
import jax.numpy as jnp
from jax.experimental import pallas as pl
from jax.experimental.pallas import tpu as pltpu


# ---------------------------------------------------------------------------
# helpers
# ---------------------------------------------------------------------------
def _round_up(x, m):
    return ((x + m - 1) // m) * m


@functools.lru_cache(maxsize=None)
def _chip_config():
    """Returns (vmem_limit_bytes, is_multicore_chip) with safe fallbacks."""
    phys = 64 * 1024 * 1024
    try:
        phys = int(pltpu.get_tpu_info().vmem_capacity_bytes)
    except Exception:
        pass
    kind = ""
    try:
        kind = jax.devices()[0].device_kind.lower()
    except Exception:
        pass
    # Chips with >1 TensorCore sharing the grid via dimension_semantics.
    multicore = any(t in kind for t in ("v7", "7x", "v4", "v3"))
    # v5e/v6e: 128 MiB physical -> 64 MiB scoped; v7x: 64 MiB -> 32 MiB.
    limit = min(96 * 1024 * 1024, max(32 * 1024 * 1024, phys // 2))
    return limit, multicore


def _pick_tk(K):
    # K-tile the reduction axis only when it is large (production channel
    # counts); small K stays fully resident (single K step).
    if K > 512 and K % 512 == 0:
        return 512
    return K


def _gemm_tiles(M, K, N, out_itemsize):
    """Row tile from the per-step VMEM footprint, not a fixed cap."""
    limit, multicore = _chip_config()
    tk = _pick_tk(K)
    # Per output row: double-buffered bf16 patch block + double-buffered output
    # block + f32 accumulator column.
    per_row = 2 * tk * 2 + 2 * N * out_itemsize + 4 * N
    weight_bytes = 2 * tk * N * 2          # double-buffered bf16 weight block
    budget = limit // 2                    # leave headroom for compiler scratch
    tm = 16
    if budget > weight_bytes:
        tm = max(16, ((budget - weight_bytes) // per_row) // 16 * 16)
    tm = min(tm, 2048, _round_up(M, 16))
    # >=2 grid steps only pays off when two TensorCores can split the grid.
    if multicore and tm >= _round_up(M, 16) and M >= 32:
        tm = _round_up((M + 1) // 2, 16)
    return int(tm), int(tk), limit


# ---------------------------------------------------------------------------
# Pallas kernels
# ---------------------------------------------------------------------------
def _gemm_stats_kernel(p_ref, w_ref, o_ref, st_ref, acc_ref):
    # (tm, tk) @ (tk, N) on the MXU, bf16 operands, f32 VMEM accumulator.
    @pl.when(pl.program_id(1) == 0)
    def _():
        acc_ref[...] = jnp.zeros_like(acc_ref)

    acc_ref[...] += jnp.dot(p_ref[...], w_ref[...],
                            preferred_element_type=jnp.float32)

    @pl.when(pl.program_id(1) == pl.num_programs(1) - 1)
    def _():
        acc = acc_ref[...]
        o_ref[...] = acc.astype(o_ref.dtype)          # bf16 activation out
        s = jnp.sum(acc, axis=0, keepdims=True)       # (1, N)
        sq = jnp.sum(acc * acc, axis=0, keepdims=True)  # (1, N)
        st_ref[...] = jnp.concatenate([s, sq], axis=0)[None]  # (1, 2, N)


def _gemm_sigmoid_kernel(p_ref, w_ref, o_ref, acc_ref):
    # Final layer: bias=False, no norm/relu -> fuse the sigmoid epilogue here.
    @pl.when(pl.program_id(1) == 0)
    def _():
        acc_ref[...] = jnp.zeros_like(acc_ref)

    acc_ref[...] += jnp.dot(p_ref[...], w_ref[...],
                            preferred_element_type=jnp.float32)

    @pl.when(pl.program_id(1) == pl.num_programs(1) - 1)
    def _():
        o_ref[...] = jax.nn.sigmoid(acc_ref[...]).astype(o_ref.dtype)


# ---------------------------------------------------------------------------
# Pallas wrappers
# ---------------------------------------------------------------------------
def gemm_with_stats(patches, wmat):
    """patches (M,K) bf16, wmat (K,N) bf16 -> y (M,N) bf16, mean (N,), var (N,)."""
    M, K = patches.shape
    N = wmat.shape[1]
    tm, tk, vmem_limit = _gemm_tiles(M, K, N, out_itemsize=2)
    Mp = _round_up(M, tm)
    if Mp != M:
        patches = jnp.pad(patches, ((0, Mp - M), (0, 0)))
    T, KT = Mp // tm, K // tk

    y, stats = pl.pallas_call(
        _gemm_stats_kernel,
        out_shape=(
            jax.ShapeDtypeStruct((Mp, N), jnp.bfloat16),
            jax.ShapeDtypeStruct((T, 2, N), jnp.float32),
        ),
        grid=(T, KT),
        in_specs=[
            pl.BlockSpec((tm, tk), lambda i, k: (i, k)),
            pl.BlockSpec((tk, N), lambda i, k: (k, 0)),
        ],
        out_specs=(
            pl.BlockSpec((tm, N), lambda i, k: (i, 0)),
            pl.BlockSpec((1, 2, N), lambda i, k: (i, 0, 0)),
        ),
        scratch_shapes=[pltpu.VMEM((tm, N), jnp.float32)],
        compiler_params=pltpu.CompilerParams(
            dimension_semantics=("parallel", "arbitrary"),
            vmem_limit_bytes=vmem_limit,
        ),
    )(patches, wmat)

    # Zero-padded rows contribute nothing to the partials -> divide by true M.
    s = jnp.sum(stats[:, 0, :], axis=0)
    sq = jnp.sum(stats[:, 1, :], axis=0)
    mean = s / M
    var = jnp.maximum(sq / M - mean * mean, 0.0)  # biased var, like BN train mode
    # TODO(synk): E[x^2]-E[x]^2 can cancel at large |mean|/std; switch to a
    # two-pass / Welford reduction if trained-scale weights require it.
    return y[:M], mean, var


def gemm_sigmoid(patches, wmat):
    """Final-layer GEMM with fused sigmoid epilogue. Returns f32 (M, N)."""
    M, K = patches.shape
    N = wmat.shape[1]
    tm, tk, vmem_limit = _gemm_tiles(M, K, N, out_itemsize=4)
    Mp = _round_up(M, tm)
    if Mp != M:
        patches = jnp.pad(patches, ((0, Mp - M), (0, 0)))
    T, KT = Mp // tm, K // tk

    out = pl.pallas_call(
        _gemm_sigmoid_kernel,
        out_shape=jax.ShapeDtypeStruct((Mp, N), jnp.float32),
        grid=(T, KT),
        in_specs=[
            pl.BlockSpec((tm, tk), lambda i, k: (i, k)),
            pl.BlockSpec((tk, N), lambda i, k: (k, 0)),
        ],
        out_specs=pl.BlockSpec((tm, N), lambda i, k: (i, 0)),
        scratch_shapes=[pltpu.VMEM((tm, N), jnp.float32)],
        compiler_params=pltpu.CompilerParams(
            dimension_semantics=("parallel", "arbitrary"),
            vmem_limit_bytes=vmem_limit,
        ),
    )(patches, wmat)
    return out[:M]


# ---------------------------------------------------------------------------
# Conv2d -> bf16 strided im2col + GEMM  (glue in plain JAX, fused by XLA)
# ---------------------------------------------------------------------------
def _affine_lrelu_nhwc(y, scale, shift, slope):
    # Folded BN affine + LeakyReLU of the previous layer; applied *before*
    # padding so the conv's zero padding stays exactly zero. Fuses into the
    # bf16 patch construction below (no standalone elementwise HBM pass).
    v = y.astype(jnp.float32) * scale + shift
    return jnp.maximum(v, slope * v)


def _conv_prep(x_nhwc, w, *, stride=2, padding=1):
    """bf16 im2col patches (M, k*k*C_in) and bf16 weight matrix (K, C_out)."""
    C_out, C_in, k, _ = w.shape
    B, H, W, _ = x_nhwc.shape
    OH = (H + 2 * padding - k) // stride + 1
    OW = (W + 2 * padding - k) // stride + 1
    x = x_nhwc.astype(jnp.bfloat16)
    x_pad = jnp.pad(x, ((0, 0), (padding, padding), (padding, padding), (0, 0)))
    cols = []
    for kh in range(k):
        for kw in range(k):
            cols.append(
                x_pad[:, kh: kh + stride * (OH - 1) + 1: stride,
                         kw: kw + stride * (OW - 1) + 1: stride, :]
            )
    patches = jnp.stack(cols, axis=3).reshape(B * OH * OW, k * k * C_in)
    # wmat[(kh*k+kw)*C_in + ci, co] = w[co, ci, kh, kw]
    wmat = jnp.transpose(w, (2, 3, 1, 0)).reshape(k * k * C_in, C_out)
    return patches, wmat.astype(jnp.bfloat16), (B, OH, OW, C_out)


# ---------------------------------------------------------------------------
# Discriminator model
# ---------------------------------------------------------------------------
def init_discriminator_params(key, in_channels, out_channels, nker):
    cfg = [
        (in_channels, 1 * nker, True),
        (1 * nker, 2 * nker, True),
        (2 * nker, 4 * nker, True),
        (4 * nker, 8 * nker, True),
        (8 * nker, out_channels, False),
    ]
    params = []
    for ci, co, has_bn in cfg:
        key, kw, kg, kb = jax.random.split(key, 4)
        w = 0.02 * jax.random.normal(kw, (co, ci, 4, 4), jnp.float32)
        gamma = (1.0 + 0.1 * jax.random.normal(kg, (co,), jnp.float32)) if has_bn else None
        beta = (0.1 * jax.random.normal(kb, (co,), jnp.float32)) if has_bn else None
        params.append(dict(w=w, gamma=gamma, beta=beta))
    return params


def discriminator_forward(params, x_nchw, *, slope=0.2, eps=1e-5):
    # PyTorch NCHW -> NHWC for the kernels, back to NCHW at the end.
    act = jnp.transpose(x_nchw, (0, 2, 3, 1)).astype(jnp.float32)
    scale = shift = None
    for p in params[:-1]:
        if scale is not None:
            act = _affine_lrelu_nhwc(act, scale, shift, slope)
        patches, wmat, (B, OH, OW, C) = _conv_prep(act, p["w"])
        y, mean, var = gemm_with_stats(patches, wmat)
        # Conv bias omitted: training-mode BN's mean subtraction cancels it.
        scale = p["gamma"] * jax.lax.rsqrt(var + eps)
        shift = p["beta"] - mean * scale
        act = y.reshape(B, OH, OW, C)                 # bf16 intermediate
    act = _affine_lrelu_nhwc(act, scale, shift, slope)
    patches, wmat, (B, OH, OW, C) = _conv_prep(act, params[-1]["w"])
    out = gemm_sigmoid(patches, wmat).reshape(B, OH, OW, C)
    return jnp.transpose(out, (0, 3, 1, 2))


if __name__ == "__main__":
    key = jax.random.PRNGKey(0)
    k_x, k_p = jax.random.split(key)

    # Small but spec-consistent: 5 stride-2 k=4 convs need 64x64 -> 2x2 output.
    batch, in_channels, out_channels, nker = 2, 3, 1, 8
    x = jax.random.normal(k_x, (batch, in_channels, 64, 64), jnp.float32)

    params = init_discriminator_params(k_p, in_channels, out_channels, nker)
    fwd = jax.jit(discriminator_forward)
    out = jax.block_until_ready(fwd(params, x))

    # 64 -> 32 -> 16 -> 8 -> 4 -> 2 spatially, out_channels=1
    assert out.shape == (batch, out_channels, 2, 2), out.shape
    assert bool(jnp.all(jnp.isfinite(out)))
    assert bool(jnp.all((out >= 0.0) & (out <= 1.0)))  # sigmoid range
    print("KERNEL_OK")
</pallas_src>

<mosaic_0001>
module attributes {stable_mosaic.version = 11 : i64} {
  func.func @_gemm_stats_kernel(%arg0: i32, %arg1: i32, %arg2: memref<2048x48xbf16, #tpu.memory_space<vmem>>, %arg3: memref<48x8xbf16, #tpu.memory_space<vmem>>, %arg4: memref<2048x8xbf16, #tpu.memory_space<vmem>>, %arg5: memref<1x2x8xf32, #tpu.memory_space<vmem>>, %arg6: memref<2048x8xf32, #tpu.memory_space<vmem>>) attributes {dimension_semantics = [#tpu.dimension_semantics<parallel>, #tpu.dimension_semantics<arbitrary>], iteration_bounds = array<i64: 1, 1>, scalar_prefetch = 0 : i64, scratch_operands = 1 : i64, tpu.core_type = #tpu.core_type<tc>, window_params = [{transform_indices = @transform_0, window_bounds = array<i64: 2048, 48>}, {transform_indices = @transform_1, window_bounds = array<i64: 48, 8>}, {transform_indices = @transform_2, window_bounds = array<i64: 2048, 8>}, {transform_indices = @transform_3, window_bounds = array<i64: 1, 2, 8>}]} {
    %c0_i32 = arith.constant 0 : i32
    %0 = arith.cmpi eq, %arg1, %c0_i32 : i32
    %1 = arith.extui %0 : i1 to i32
    %c0_i32_0 = arith.constant 0 : i32
    %2 = arith.cmpi ne, %1, %c0_i32_0 : i32
    scf.if %2 {
      %cst_10 = arith.constant 0.000000e+00 : f32
      %12 = vector.broadcast %cst_10 : f32 to vector<2048x8xf32>
      %c0_11 = arith.constant 0 : index
      %c0_12 = arith.constant 0 : index
      %13 = vector.load %arg6[%c0_11, %c0_12] : memref<2048x8xf32, #tpu.memory_space<vmem>>, vector<2048x8xf32>
      tpu.vector_store %arg6[%c0_11, %c0_12], %12 {strides = array<i32>} : memref<2048x8xf32, #tpu.memory_space<vmem>>, vector<2048x8xf32>,
    } else {
    }
    %c0 = arith.constant 0 : index
    %c0_1 = arith.constant 0 : index
    %3 = vector.load %arg6[%c0, %c0_1] : memref<2048x8xf32, #tpu.memory_space<vmem>>, vector<2048x8xf32>
    %c0_2 = arith.constant 0 : index
    %c0_3 = arith.constant 0 : index
    %4 = vector.load %arg2[%c0_2, %c0_3] : memref<2048x48xbf16, #tpu.memory_space<vmem>>, vector<2048x48xbf16>
    %c0_4 = arith.constant 0 : index
    %c0_5 = arith.constant 0 : index
    %5 = vector.load %arg3[%c0_4, %c0_5] : memref<48x8xbf16, #tpu.memory_space<vmem>>, vector<48x8xbf16>
    %cst = arith.constant dense<0.000000e+00> : vector<2048x8xf32>
    %6 = tpu.matmul %4, %5, %cst {dimension_numbers = #tpu.dot_dimension_numbers<[1], [0], [0], [1], [0, 0, 1, 1], [], []>} : vector<2048x48xbf16>, vector<48x8xbf16>, vector<2048x8xf32> -> vector<2048x8xf32>
    %7 = arith.addf %3, %6 : vector<2048x8xf32>
    %c0_6 = arith.constant 0 : index
    %c0_7 = arith.constant 0 : index
    %8 = vector.load %arg6[%c0_6, %c0_7] : memref<2048x8xf32, #tpu.memory_space<vmem>>, vector<2048x8xf32>
    tpu.vector_store %arg6[%c0_6, %c0_7], %7 {strides = array<i32>} : memref<2048x8xf32, #tpu.memory_space<vmem>>, vector<2048x8xf32>,
    %c0_i32_8 = arith.constant 0 : i32
    %9 = arith.cmpi eq, %arg1, %c0_i32_8 : i32
    %10 = arith.extui %9 : i1 to i32
    %c0_i32_9 = arith.constant 0 : i32
    %11 = arith.cmpi ne, %10, %c0_i32_9 : i32
    scf.if %11 {
      %c0_10 = arith.constant 0 : index
      %c0_11 = arith.constant 0 : index
      %12 = vector.load %arg6[%c0_10, %c0_11] : memref<2048x8xf32, #tpu.memory_space<vmem>>, vector<2048x8xf32>
      %13 = arith.truncf %12 : vector<2048x8xf32> to vector<2048x8xbf16>
      %c0_12 = arith.constant 0 : index
      %c0_13 = arith.constant 0 : index
      %14 = vector.load %arg4[%c0_12, %c0_13] : memref<2048x8xbf16, #tpu.memory_space<vmem>>, vector<2048x8xbf16>
      tpu.vector_store %arg4[%c0_12, %c0_13], %13 {strides = array<i32>} : memref<2048x8xbf16, #tpu.memory_space<vmem>>, vector<2048x8xbf16>,
      %cst_14 = arith.constant dense<0.000000e+00> : vector<8xf32>
      %15 = vector.multi_reduction <add>, %12, %cst_14 [0] : vector<2048x8xf32> to vector<8xf32>
      %16 = vector.shape_cast %15 : vector<8xf32> to vector<1x8xf32>
      %17 = arith.mulf %12, %12 : vector<2048x8xf32>
      %cst_15 = arith.constant dense<0.000000e+00> : vector<8xf32>
      %18 = vector.multi_reduction <add>, %17, %cst_15 [0] : vector<2048x8xf32> to vector<8xf32>
      %19 = vector.shape_cast %18 : vector<8xf32> to vector<1x8xf32>
      %20 = tpu.concatenate %16, %19 in 0 : vector<1x8xf32>, vector<1x8xf32> -> vector<2x8xf32>
      %21 = vector.shape_cast %20 : vector<2x8xf32> to vector<1x2x8xf32>
      %c0_16 = arith.constant 0 : index
      %c0_17 = arith.constant 0 : index
      %c0_18 = arith.constant 0 : index
      %22 = vector.load %arg5[%c0_16, %c0_17, %c0_18] : memref<1x2x8xf32, #tpu.memory_space<vmem>>, vector<1x2x8xf32>
      tpu.vector_store %arg5[%c0_16, %c0_17, %c0_18], %21 {strides = array<i32>} : memref<1x2x8xf32, #tpu.memory_space<vmem>>, vector<1x2x8xf32>,
    } else {
    }
    return
  }
  func.func @transform_0(%arg0: i32, %arg1: i32) -> (i32, i32) {
    %c0_i32 = arith.constant 0 : i32
    return %arg0, %arg1 : i32, i32
  }
  func.func @transform_1(%arg0: i32, %arg1: i32) -> (i32, i32) {
    %c0_i32 = arith.constant 0 : i32
    %c0_i32_0 = arith.constant 0 : i32
    return %arg1, %c0_i32 : i32, i32
  }
  func.func @transform_2(%arg0: i32, %arg1: i32) -> (i32, i32) {
    %c0_i32 = arith.constant 0 : i32
    %c0_i32_0 = arith.constant 0 : i32
    return %arg0, %c0_i32 : i32, i32
  }
  func.func @transform_3(%arg0: i32, %arg1: i32) -> (i32, i32, i32) {
    %c0_i32 = arith.constant 0 : i32
    %c0_i32_0 = arith.constant 0 : i32
    %c0_i32_1 = arith.constant 0 : i32
    return %arg0, %c0_i32, %c0_i32_0 : i32, i32, i32
  }
}

module attributes {stable_mosaic.version = 11 : i64} {
  func.func @_gemm_stats_kernel(%arg0: i32, %arg1: i32, %arg2: memref<512x128xbf16, #tpu.memory_space<vmem>>, %arg3: memref<128x16xbf16, #tpu.memory_space<vmem>>, %arg4: memref<512x16xbf16, #tpu.memory_space<vmem>>, %arg5: memref<1x2x16xf32, #tpu.memory_space<vmem>>, %arg6: memref<512x16xf32, #tpu.memory_space<vmem>>) attributes {dimension_semantics = [#tpu.dimension_semantics<parallel>, #tpu.dimension_semantics<arbitrary>], iteration_bounds = array<i64: 1, 1>, scalar_prefetch = 0 : i64, scratch_operands = 1 : i64, tpu.core_type = #tpu.core_type<tc>, window_params = [{transform_indices = @transform_0, window_bounds = array<i64: 512, 128>}, {transform_indices = @transform_1, window_bounds = array<i64: 128, 16>}, {transform_indices = @transform_2, window_bounds = array<i64: 512, 16>}, {transform_indices = @transform_3, window_bounds = array<i64: 1, 2, 16>}]} {
    %c0_i32 = arith.constant 0 : i32
    %0 = arith.cmpi eq, %arg1, %c0_i32 : i32
    %1 = arith.extui %0 : i1 to i32
    %c0_i32_0 = arith.constant 0 : i32
    %2 = arith.cmpi ne, %1, %c0_i32_0 : i32
    scf.if %2 {
      %cst_10 = arith.constant 0.000000e+00 : f32
      %12 = vector.broadcast %cst_10 : f32 to vector<512x16xf32>
      %c0_11 = arith.constant 0 : index
      %c0_12 = arith.constant 0 : index
      %13 = vector.load %arg6[%c0_11, %c0_12] : memref<512x16xf32, #tpu.memory_space<vmem>>, vector<512x16xf32>
      tpu.vector_store %arg6[%c0_11, %c0_12], %12 {strides = array<i32>} : memref<512x16xf32, #tpu.memory_space<vmem>>, vector<512x16xf32>,
    } else {
    }
    %c0 = arith.constant 0 : index
    %c0_1 = arith.constant 0 : index
    %3 = vector.load %arg6[%c0, %c0_1] : memref<512x16xf32, #tpu.memory_space<vmem>>, vector<512x16xf32>
    %c0_2 = arith.constant 0 : index
    %c0_3 = arith.constant 0 : index
    %4 = vector.load %arg2[%c0_2, %c0_3] : memref<512x128xbf16, #tpu.memory_space<vmem>>, vector<512x128xbf16>
    %c0_4 = arith.constant 0 : index
    %c0_5 = arith.constant 0 : index
    %5 = vector.load %arg3[%c0_4, %c0_5] : memref<128x16xbf16, #tpu.memory_space<vmem>>, vector<128x16xbf16>
    %cst = arith.constant dense<0.000000e+00> : vector<512x16xf32>
    %6 = tpu.matmul %4, %5, %cst {dimension_numbers = #tpu.dot_dimension_numbers<[1], [0], [0], [1], [0, 0, 1, 1], [], []>} : vector<512x128xbf16>, vector<128x16xbf16>, vector<512x16xf32> -> vector<512x16xf32>
    %7 = arith.addf %3, %6 : vector<512x16xf32>
    %c0_6 = arith.constant 0 : index
    %c0_7 = arith.constant 0 : index
    %8 = vector.load %arg6[%c0_6, %c0_7] : memref<512x16xf32, #tpu.memory_space<vmem>>, vector<512x16xf32>
    tpu.vector_store %arg6[%c0_6, %c0_7], %7 {strides = array<i32>} : memref<512x16xf32, #tpu.memory_space<vmem>>, vector<512x16xf32>,
    %c0_i32_8 = arith.constant 0 : i32
    %9 = arith.cmpi eq, %arg1, %c0_i32_8 : i32
    %10 = arith.extui %9 : i1 to i32
    %c0_i32_9 = arith.constant 0 : i32
    %11 = arith.cmpi ne, %10, %c0_i32_9 : i32
    scf.if %11 {
      %c0_10 = arith.constant 0 : index
      %c0_11 = arith.constant 0 : index
      %12 = vector.load %arg6[%c0_10, %c0_11] : memref<512x16xf32, #tpu.memory_space<vmem>>, vector<512x16xf32>
      %13 = arith.truncf %12 : vector<512x16xf32> to vector<512x16xbf16>
      %c0_12 = arith.constant 0 : index
      %c0_13 = arith.constant 0 : index
      %14 = vector.load %arg4[%c0_12, %c0_13] : memref<512x16xbf16, #tpu.memory_space<vmem>>, vector<512x16xbf16>
      tpu.vector_store %arg4[%c0_12, %c0_13], %13 {strides = array<i32>} : memref<512x16xbf16, #tpu.memory_space<vmem>>, vector<512x16xbf16>,
      %cst_14 = arith.constant dense<0.000000e+00> : vector<16xf32>
      %15 = vector.multi_reduction <add>, %12, %cst_14 [0] : vector<512x16xf32> to vector<16xf32>
      %16 = vector.shape_cast %15 : vector<16xf32> to vector<1x16xf32>
      %17 = arith.mulf %12, %12 : vector<512x16xf32>
      %cst_15 = arith.constant dense<0.000000e+00> : vector<16xf32>
      %18 = vector.multi_reduction <add>, %17, %cst_15 [0] : vector<512x16xf32> to vector<16xf32>
      %19 = vector.shape_cast %18 : vector<16xf32> to vector<1x16xf32>
      %20 = tpu.concatenate %16, %19 in 0 : vector<1x16xf32>, vector<1x16xf32> -> vector<2x16xf32>
      %21 = vector.shape_cast %20 : vector<2x16xf32> to vector<1x2x16xf32>
      %c0_16 = arith.constant 0 : index
      %c0_17 = arith.constant 0 : index
      %c0_18 = arith.constant 0 : index
      %22 = vector.load %arg5[%c0_16, %c0_17, %c0_18] : memref<1x2x16xf32, #tpu.memory_space<vmem>>, vector<1x2x16xf32>
      tpu.vector_store %arg5[%c0_16, %c0_17, %c0_18], %21 {strides = array<i32>} : memref<1x2x16xf32, #tpu.memory_space<vmem>>, vector<1x2x16xf32>,
    } else {
    }
    return
  }
  func.func @transform_0(%arg0: i32, %arg1: i32) -> (i32, i32) {
    %c0_i32 = arith.constant 0 : i32
    return %arg0, %arg1 : i32, i32
  }
  func.func @transform_1(%arg0: i32, %arg1: i32) -> (i32, i32) {
    %c0_i32 = arith.constant 0 : i32
    %c0_i32_0 = arith.constant 0 : i32
    return %arg1, %c0_i32 : i32, i32
  }
  func.func @transform_2(%arg0: i32, %arg1: i32) -> (i32, i32) {
    %c0_i32 = arith.constant 0 : i32
    %c0_i32_0 = arith.constant 0 : i32
    return %arg0, %c0_i32 : i32, i32
  }
  func.func @transform_3(%arg0: i32, %arg1: i32) -> (i32, i32, i32) {
    %c0_i32 = arith.constant 0 : i32
    %c0_i32_0 = arith.constant 0 : i32
    %c0_i32_1 = arith.constant 0 : i32
    return %arg0, %c0_i32, %c0_i32_0 : i32, i32, i32
  }
}

module attributes {stable_mosaic.version = 11 : i64} {
  func.func @_gemm_stats_kernel(%arg0: i32, %arg1: i32, %arg2: memref<128x256xbf16, #tpu.memory_space<vmem>>, %arg3: memref<256x32xbf16, #tpu.memory_space<vmem>>, %arg4: memref<128x32xbf16, #tpu.memory_space<vmem>>, %arg5: memref<1x2x32xf32, #tpu.memory_space<vmem>>, %arg6: memref<128x32xf32, #tpu.memory_space<vmem>>) attributes {dimension_semantics = [#tpu.dimension_semantics<parallel>, #tpu.dimension_semantics<arbitrary>], iteration_bounds = array<i64: 1, 1>, scalar_prefetch = 0 : i64, scratch_operands = 1 : i64, tpu.core_type = #tpu.core_type<tc>, window_params = [{transform_indices = @transform_0, window_bounds = array<i64: 128, 256>}, {transform_indices = @transform_1, window_bounds = array<i64: 256, 32>}, {transform_indices = @transform_2, window_bounds = array<i64: 128, 32>}, {transform_indices = @transform_3, window_bounds = array<i64: 1, 2, 32>}]} {
    %c0_i32 = arith.constant 0 : i32
    %0 = arith.cmpi eq, %arg1, %c0_i32 : i32
    %1 = arith.extui %0 : i1 to i32
    %c0_i32_0 = arith.constant 0 : i32
    %2 = arith.cmpi ne, %1, %c0_i32_0 : i32
    scf.if %2 {
      %cst_10 = arith.constant 0.000000e+00 : f32
      %12 = vector.broadcast %cst_10 : f32 to vector<128x32xf32>
      %c0_11 = arith.constant 0 : index
      %c0_12 = arith.constant 0 : index
      %13 = vector.load %arg6[%c0_11, %c0_12] : memref<128x32xf32, #tpu.memory_space<vmem>>, vector<128x32xf32>
      tpu.vector_store %arg6[%c0_11, %c0_12], %12 {strides = array<i32>} : memref<128x32xf32, #tpu.memory_space<vmem>>, vector<128x32xf32>,
    } else {
    }
    %c0 = arith.constant 0 : index
    %c0_1 = arith.constant 0 : index
    %3 = vector.load %arg6[%c0, %c0_1] : memref<128x32xf32, #tpu.memory_space<vmem>>, vector<128x32xf32>
    %c0_2 = arith.constant 0 : index
    %c0_3 = arith.constant 0 : index
    %4 = vector.load %arg2[%c0_2, %c0_3] : memref<128x256xbf16, #tpu.memory_space<vmem>>, vector<128x256xbf16>
    %c0_4 = arith.constant 0 : index
    %c0_5 = arith.constant 0 : index
    %5 = vector.load %arg3[%c0_4, %c0_5] : memref<256x32xbf16, #tpu.memory_space<vmem>>, vector<256x32xbf16>
    %cst = arith.constant dense<0.000000e+00> : vector<128x32xf32>
    %6 = tpu.matmul %4, %5, %cst {dimension_numbers = #tpu.dot_dimension_numbers<[1], [0], [0], [1], [0, 0, 1, 1], [], []>} : vector<128x256xbf16>, vector<256x32xbf16>, vector<128x32xf32> -> vector<128x32xf32>
    %7 = arith.addf %3, %6 : vector<128x32xf32>
    %c0_6 = arith.constant 0 : index
    %c0_7 = arith.constant 0 : index
    %8 = vector.load %arg6[%c0_6, %c0_7] : memref<128x32xf32, #tpu.memory_space<vmem>>, vector<128x32xf32>
    tpu.vector_store %arg6[%c0_6, %c0_7], %7 {strides = array<i32>} : memref<128x32xf32, #tpu.memory_space<vmem>>, vector<128x32xf32>,
    %c0_i32_8 = arith.constant 0 : i32
    %9 = arith.cmpi eq, %arg1, %c0_i32_8 : i32
    %10 = arith.extui %9 : i1 to i32
    %c0_i32_9 = arith.constant 0 : i32
    %11 = arith.cmpi ne, %10, %c0_i32_9 : i32
    scf.if %11 {
      %c0_10 = arith.constant 0 : index
      %c0_11 = arith.constant 0 : index
      %12 = vector.load %arg6[%c0_10, %c0_11] : memref<128x32xf32, #tpu.memory_space<vmem>>, vector<128x32xf32>
      %13 = arith.truncf %12 : vector<128x32xf32> to vector<128x32xbf16>
      %c0_12 = arith.constant 0 : index
      %c0_13 = arith.constant 0 : index
      %14 = vector.load %arg4[%c0_12, %c0_13] : memref<128x32xbf16, #tpu.memory_space<vmem>>, vector<128x32xbf16>
      tpu.vector_store %arg4[%c0_12, %c0_13], %13 {strides = array<i32>} : memref<128x32xbf16, #tpu.memory_space<vmem>>, vector<128x32xbf16>,
      %cst_14 = arith.constant dense<0.000000e+00> : vector<32xf32>
      %15 = vector.multi_reduction <add>, %12, %cst_14 [0] : vector<128x32xf32> to vector<32xf32>
      %16 = vector.shape_cast %15 : vector<32xf32> to vector<1x32xf32>
      %17 = arith.mulf %12, %12 : vector<128x32xf32>
      %cst_15 = arith.constant dense<0.000000e+00> : vector<32xf32>
      %18 = vector.multi_reduction <add>, %17, %cst_15 [0] : vector<128x32xf32> to vector<32xf32>
      %19 = vector.shape_cast %18 : vector<32xf32> to vector<1x32xf32>
      %20 = tpu.concatenate %16, %19 in 0 : vector<1x32xf32>, vector<1x32xf32> -> vector<2x32xf32>
      %21 = vector.shape_cast %20 : vector<2x32xf32> to vector<1x2x32xf32>
      %c0_16 = arith.constant 0 : index
      %c0_17 = arith.constant 0 : index
      %c0_18 = arith.constant 0 : index
      %22 = vector.load %arg5[%c0_16, %c0_17, %c0_18] : memref<1x2x32xf32, #tpu.memory_space<vmem>>, vector<1x2x32xf32>
      tpu.vector_store %arg5[%c0_16, %c0_17, %c0_18], %21 {strides = array<i32>} : memref<1x2x32xf32, #tpu.memory_space<vmem>>, vector<1x2x32xf32>,
    } else {
    }
    return
  }
  func.func @transform_0(%arg0: i32, %arg1: i32) -> (i32, i32) {
    %c0_i32 = arith.constant 0 : i32
    return %arg0, %arg1 : i32, i32
  }
  func.func @transform_1(%arg0: i32, %arg1: i32) -> (i32, i32) {
    %c0_i32 = arith.constant 0 : i32
    %c0_i32_0 = arith.constant 0 : i32
    return %arg1, %c0_i32 : i32, i32
  }
  func.func @transform_2(%arg0: i32, %arg1: i32) -> (i32, i32) {
    %c0_i32 = arith.constant 0 : i32
    %c0_i32_0 = arith.constant 0 : i32
    return %arg0, %c0_i32 : i32, i32
  }
  func.func @transform_3(%arg0: i32, %arg1: i32) -> (i32, i32, i32) {
    %c0_i32 = arith.constant 0 : i32
    %c0_i32_0 = arith.constant 0 : i32
    %c0_i32_1 = arith.constant 0 : i32
    return %arg0, %c0_i32, %c0_i32_0 : i32, i32, i32
  }
}

module attributes {stable_mosaic.version = 11 : i64} {
  func.func @_gemm_stats_kernel(%arg0: i32, %arg1: i32, %arg2: memref<32x512xbf16, #tpu.memory_space<vmem>>, %arg3: memref<512x64xbf16, #tpu.memory_space<vmem>>, %arg4: memref<32x64xbf16, #tpu.memory_space<vmem>>, %arg5: memref<1x2x64xf32, #tpu.memory_space<vmem>>, %arg6: memref<32x64xf32, #tpu.memory_space<vmem>>) attributes {dimension_semantics = [#tpu.dimension_semantics<parallel>, #tpu.dimension_semantics<arbitrary>], iteration_bounds = array<i64: 1, 1>, scalar_prefetch = 0 : i64, scratch_operands = 1 : i64, tpu.core_type = #tpu.core_type<tc>, window_params = [{transform_indices = @transform_0, window_bounds = array<i64: 32, 512>}, {transform_indices = @transform_1, window_bounds = array<i64: 512, 64>}, {transform_indices = @transform_2, window_bounds = array<i64: 32, 64>}, {transform_indices = @transform_3, window_bounds = array<i64: 1, 2, 64>}]} {
    %c0_i32 = arith.constant 0 : i32
    %0 = arith.cmpi eq, %arg1, %c0_i32 : i32
    %1 = arith.extui %0 : i1 to i32
    %c0_i32_0 = arith.constant 0 : i32
    %2 = arith.cmpi ne, %1, %c0_i32_0 : i32
    scf.if %2 {
      %cst_10 = arith.constant 0.000000e+00 : f32
      %12 = vector.broadcast %cst_10 : f32 to vector<32x64xf32>
      %c0_11 = arith.constant 0 : index
      %c0_12 = arith.constant 0 : index
      %13 = vector.load %arg6[%c0_11, %c0_12] : memref<32x64xf32, #tpu.memory_space<vmem>>, vector<32x64xf32>
      tpu.vector_store %arg6[%c0_11, %c0_12], %12 {strides = array<i32>} : memref<32x64xf32, #tpu.memory_space<vmem>>, vector<32x64xf32>,
    } else {
    }
    %c0 = arith.constant 0 : index
    %c0_1 = arith.constant 0 : index
    %3 = vector.load %arg6[%c0, %c0_1] : memref<32x64xf32, #tpu.memory_space<vmem>>, vector<32x64xf32>
    %c0_2 = arith.constant 0 : index
    %c0_3 = arith.constant 0 : index
    %4 = vector.load %arg2[%c0_2, %c0_3] : memref<32x512xbf16, #tpu.memory_space<vmem>>, vector<32x512xbf16>
    %c0_4 = arith.constant 0 : index
    %c0_5 = arith.constant 0 : index
    %5 = vector.load %arg3[%c0_4, %c0_5] : memref<512x64xbf16, #tpu.memory_space<vmem>>, vector<512x64xbf16>
    %cst = arith.constant dense<0.000000e+00> : vector<32x64xf32>
    %6 = tpu.matmul %4, %5, %cst {dimension_numbers = #tpu.dot_dimension_numbers<[1], [0], [0], [1], [0, 0, 1, 1], [], []>} : vector<32x512xbf16>, vector<512x64xbf16>, vector<32x64xf32> -> vector<32x64xf32>
    %7 = arith.addf %3, %6 : vector<32x64xf32>
    %c0_6 = arith.constant 0 : index
    %c0_7 = arith.constant 0 : index
    %8 = vector.load %arg6[%c0_6, %c0_7] : memref<32x64xf32, #tpu.memory_space<vmem>>, vector<32x64xf32>
    tpu.vector_store %arg6[%c0_6, %c0_7], %7 {strides = array<i32>} : memref<32x64xf32, #tpu.memory_space<vmem>>, vector<32x64xf32>,
    %c0_i32_8 = arith.constant 0 : i32
    %9 = arith.cmpi eq, %arg1, %c0_i32_8 : i32
    %10 = arith.extui %9 : i1 to i32
    %c0_i32_9 = arith.constant 0 : i32
    %11 = arith.cmpi ne, %10, %c0_i32_9 : i32
    scf.if %11 {
      %c0_10 = arith.constant 0 : index
      %c0_11 = arith.constant 0 : index
      %12 = vector.load %arg6[%c0_10, %c0_11] : memref<32x64xf32, #tpu.memory_space<vmem>>, vector<32x64xf32>
      %13 = arith.truncf %12 : vector<32x64xf32> to vector<32x64xbf16>
      %c0_12 = arith.constant 0 : index
      %c0_13 = arith.constant 0 : index
      %14 = vector.load %arg4[%c0_12, %c0_13] : memref<32x64xbf16, #tpu.memory_space<vmem>>, vector<32x64xbf16>
      tpu.vector_store %arg4[%c0_12, %c0_13], %13 {strides = array<i32>} : memref<32x64xbf16, #tpu.memory_space<vmem>>, vector<32x64xbf16>,
      %cst_14 = arith.constant dense<0.000000e+00> : vector<64xf32>
      %15 = vector.multi_reduction <add>, %12, %cst_14 [0] : vector<32x64xf32> to vector<64xf32>
      %16 = vector.shape_cast %15 : vector<64xf32> to vector<1x64xf32>
      %17 = arith.mulf %12, %12 : vector<32x64xf32>
      %cst_15 = arith.constant dense<0.000000e+00> : vector<64xf32>
      %18 = vector.multi_reduction <add>, %17, %cst_15 [0] : vector<32x64xf32> to vector<64xf32>
      %19 = vector.shape_cast %18 : vector<64xf32> to vector<1x64xf32>
      %20 = tpu.concatenate %16, %19 in 0 : vector<1x64xf32>, vector<1x64xf32> -> vector<2x64xf32>
      %21 = vector.shape_cast %20 : vector<2x64xf32> to vector<1x2x64xf32>
      %c0_16 = arith.constant 0 : index
      %c0_17 = arith.constant 0 : index
      %c0_18 = arith.constant 0 : index
      %22 = vector.load %arg5[%c0_16, %c0_17, %c0_18] : memref<1x2x64xf32, #tpu.memory_space<vmem>>, vector<1x2x64xf32>
      tpu.vector_store %arg5[%c0_16, %c0_17, %c0_18], %21 {strides = array<i32>} : memref<1x2x64xf32, #tpu.memory_space<vmem>>, vector<1x2x64xf32>,
    } else {
    }
    return
  }
  func.func @transform_0(%arg0: i32, %arg1: i32) -> (i32, i32) {
    %c0_i32 = arith.constant 0 : i32
    return %arg0, %arg1 : i32, i32
  }
  func.func @transform_1(%arg0: i32, %arg1: i32) -> (i32, i32) {
    %c0_i32 = arith.constant 0 : i32
    %c0_i32_0 = arith.constant 0 : i32
    return %arg1, %c0_i32 : i32, i32
  }
  func.func @transform_2(%arg0: i32, %arg1: i32) -> (i32, i32) {
    %c0_i32 = arith.constant 0 : i32
    %c0_i32_0 = arith.constant 0 : i32
    return %arg0, %c0_i32 : i32, i32
  }
  func.func @transform_3(%arg0: i32, %arg1: i32) -> (i32, i32, i32) {
    %c0_i32 = arith.constant 0 : i32
    %c0_i32_0 = arith.constant 0 : i32
    %c0_i32_1 = arith.constant 0 : i32
    return %arg0, %c0_i32, %c0_i32_0 : i32, i32, i32
  }
}

module attributes {stable_mosaic.version = 11 : i64} {
  func.func @_gemm_sigmoid_kernel(%arg0: i32, %arg1: i32, %arg2: memref<16x512xbf16, #tpu.memory_space<vmem>>, %arg3: memref<512x1xbf16, #tpu.memory_space<vmem>>, %arg4: memref<16x1xf32, #tpu.memory_space<vmem>>, %arg5: memref<16x1xf32, #tpu.memory_space<vmem>>) attributes {dimension_semantics = [#tpu.dimension_semantics<parallel>, #tpu.dimension_semantics<arbitrary>], iteration_bounds = array<i64: 1, 2>, scalar_prefetch = 0 : i64, scratch_operands = 1 : i64, tpu.core_type = #tpu.core_type<tc>, window_params = [{transform_indices = @transform_0, window_bounds = array<i64: 16, 512>}, {transform_indices = @transform_1, window_bounds = array<i64: 512, 1>}, {transform_indices = @transform_2, window_bounds = array<i64: 16, 1>}]} {
    %c0_i32 = arith.constant 0 : i32
    %0 = arith.cmpi eq, %arg1, %c0_i32 : i32
    %1 = arith.extui %0 : i1 to i32
    %c0_i32_0 = arith.constant 0 : i32
    %2 = arith.cmpi ne, %1, %c0_i32_0 : i32
    scf.if %2 {
      %cst_9 = arith.constant 0.000000e+00 : f32
      %12 = vector.broadcast %cst_9 : f32 to vector<16x1xf32>
      %c0_10 = arith.constant 0 : index
      %c0_11 = arith.constant 0 : index
      %13 = vector.load %arg5[%c0_10, %c0_11] : memref<16x1xf32, #tpu.memory_space<vmem>>, vector<16x1xf32>
      tpu.vector_store %arg5[%c0_10, %c0_11], %12 {strides = array<i32>} : memref<16x1xf32, #tpu.memory_space<vmem>>, vector<16x1xf32>,
    } else {
    }
    %c0 = arith.constant 0 : index
    %c0_1 = arith.constant 0 : index
    %3 = vector.load %arg5[%c0, %c0_1] : memref<16x1xf32, #tpu.memory_space<vmem>>, vector<16x1xf32>
    %c0_2 = arith.constant 0 : index
    %c0_3 = arith.constant 0 : index
    %4 = vector.load %arg2[%c0_2, %c0_3] : memref<16x512xbf16, #tpu.memory_space<vmem>>, vector<16x512xbf16>
    %c0_4 = arith.constant 0 : index
    %c0_5 = arith.constant 0 : index
    %5 = vector.load %arg3[%c0_4, %c0_5] : memref<512x1xbf16, #tpu.memory_space<vmem>>, vector<512x1xbf16>
    %cst = arith.constant dense<0.000000e+00> : vector<16x1xf32>
    %6 = tpu.matmul %4, %5, %cst {dimension_numbers = #tpu.dot_dimension_numbers<[1], [0], [0], [1], [0, 0, 1, 1], [], []>} : vector<16x512xbf16>, vector<512x1xbf16>, vector<16x1xf32> -> vector<16x1xf32>
    %7 = arith.addf %3, %6 : vector<16x1xf32>
    %c0_6 = arith.constant 0 : index
    %c0_7 = arith.constant 0 : index
    %8 = vector.load %arg5[%c0_6, %c0_7] : memref<16x1xf32, #tpu.memory_space<vmem>>, vector<16x1xf32>
    tpu.vector_store %arg5[%c0_6, %c0_7], %7 {strides = array<i32>} : memref<16x1xf32, #tpu.memory_space<vmem>>, vector<16x1xf32>,
    %c1_i32 = arith.constant 1 : i32
    %9 = arith.cmpi eq, %arg1, %c1_i32 : i32
    %10 = arith.extui %9 : i1 to i32
    %c0_i32_8 = arith.constant 0 : i32
    %11 = arith.cmpi ne, %10, %c0_i32_8 : i32
    scf.if %11 {
      %c0_9 = arith.constant 0 : index
      %c0_10 = arith.constant 0 : index
      %12 = vector.load %arg5[%c0_9, %c0_10] : memref<16x1xf32, #tpu.memory_space<vmem>>, vector<16x1xf32>
      %13 = arith.negf %12 : vector<16x1xf32>
      %14 = math.exp %13 : vector<16x1xf32>
      %cst_11 = arith.constant 1.000000e+00 : f32
      %15 = vector.broadcast %cst_11 : f32 to vector<16x1xf32>
      %16 = arith.addf %15, %14 : vector<16x1xf32>
      %17 = arith.divf %15, %16 : vector<16x1xf32>
      %c0_12 = arith.constant 0 : index
      %c0_13 = arith.constant 0 : index
      %18 = vector.load %arg4[%c0_12, %c0_13] : memref<16x1xf32, #tpu.memory_space<vmem>>, vector<16x1xf32>
      tpu.vector_store %arg4[%c0_12, %c0_13], %17 {strides = array<i32>} : memref<16x1xf32, #tpu.memory_space<vmem>>, vector<16x1xf32>,
    } else {
    }
    return
  }
  func.func @transform_0(%arg0: i32, %arg1: i32) -> (i32, i32) {
    %c0_i32 = arith.constant 0 : i32
    return %arg0, %arg1 : i32, i32
  }
  func.func @transform_1(%arg0: i32, %arg1: i32) -> (i32, i32) {
    %c0_i32 = arith.constant 0 : i32
    %c0_i32_0 = arith.constant 0 : i32
    return %arg1, %c0_i32 : i32, i32
  }
  func.func @transform_2(%arg0: i32, %arg1: i32) -> (i32, i32) {
    %c0_i32 = arith.constant 0 : i32
    %c0_i32_0 = arith.constant 0 : i32
    return %arg0, %c0_i32 : i32, i32
  }
}

</mosaic_0001>

<llo_original>
// kernel: discriminator_forward.5
$region0: #{discriminator_forward.5}
  #allocation0 [shape = 'u32[]', space=smem, size = 0x4, offset = 0x4, fixed_abs, tag = 'smem constant byte address 0x4 - core index']
  #allocation1 [shape = 'u32[144,128]{1,0:T(1,128)}', space=vmem, size = 0x12000, scoped, tag = 'internal scratch']
  #allocation2 [shape = 'f32[2048,8]{1,0:T(8,128)}', space=vmem, size = 0x100000, scoped, tag = 'scratch operand']
  %s0 = inlined_call_operand.vmem [shape: bf16[2048,48], index: 0, kind: input, shape index: {}]
  %s1 = inlined_call_operand.vmem [shape: bf16[48,8], index: 1, kind: input, shape index: {}]
  %s2 = inlined_call_operand.vmem [shape: bf16[2048,8], index: 2, kind: output, shape index: {0}]
  %s3 = inlined_call_operand.vmem [shape: f32[1,2,8], index: 3, kind: output, shape index: {1}]
  %4 = xla_tuple %s2, %s3
  %s5 = sld [smem:[#allocation0]]
  $region34: #{discriminator_forward.5} parent=0
    _
  %s7 = ssub.s32 1, %s5
  %s8 = scalar_select 0, %s7, %s5
  // Predicated region
  $region2: #{discriminator_forward.5} parent=0 // pred_check
    _
  $region3: #{discriminator_forward.5} parent=0 // pred_check_branch
    %10 = sbr.rel (0) target = $region5
  $region4: #{discriminator_forward.5} parent=0 // pred_region
    _
  $region5: #{discriminator_forward.5} parent=0 // pred_fallthru
    _
  // Predicated region
  $region6: #{discriminator_forward.5} parent=0 // pred_check
    _
  $region7: #{discriminator_forward.5} parent=0 // pred_check_branch
    %12 = sbr.rel (0) target = $region9
  $region8: #{discriminator_forward.5} parent=0 // pred_region
    _
  $region9: #{discriminator_forward.5} parent=0 // pred_fallthru
    _
  %p14 = scmp.eq.s32.totalorder 0, 0
  // Predicated region
  $region10: #{discriminator_forward.5} parent=0 // pred_check
    %p15 = pneg %p14
  $region11: #{discriminator_forward.5} parent=0 // pred_check_branch
    %17 = sbr.rel (%p15) target = $region13
  $region12: #{discriminator_forward.5} parent=0 // pred_region
    %vm18 = vcmask 64512
    %19 = vst.msk [vmem:[#allocation2] sm:$0xff] %vm18, 0.0
    %20 = vst.msk [vmem:[#allocation2 + $0x8] sm:$0xff] %vm18, 0.0
    %21 = vst.msk [vmem:[#allocation2 + $0x10] sm:$0xff] %vm18, 0.0
    %22 = vst.msk [vmem:[#allocation2 + $0x18] sm:$0xff] %vm18, 0.0
    %23 = vst.msk [vmem:[#allocation2 + $0x20] sm:$0xff] %vm18, 0.0
    %24 = vst.msk [vmem:[#allocation2 + $0x28] sm:$0xff] %vm18, 0.0
    %25 = vst.msk [vmem:[#allocation2 + $0x30] sm:$0xff] %vm18, 0.0
    %26 = vst.msk [vmem:[#allocation2 + $0x38] sm:$0xff] %vm18, 0.0
    %27 = vst.msk [vmem:[#allocation2 + $0x40] sm:$0xff] %vm18, 0.0
    %28 = vst.msk [vmem:[#allocation2 + $0x48] sm:$0xff] %vm18, 0.0
    %29 = vst.msk [vmem:[#allocation2 + $0x50] sm:$0xff] %vm18, 0.0
    %30 = vst.msk [vmem:[#allocation2 + $0x58] sm:$0xff] %vm18, 0.0
    %31 = vst.msk [vmem:[#allocation2 + $0x60] sm:$0xff] %vm18, 0.0
    %32 = vst.msk [vmem:[#allocation2 + $0x68] sm:$0xff] %vm18, 0.0
    %33 = vst.msk [vmem:[#allocation2 + $0x70] sm:$0xff] %vm18, 0.0
    %34 = vst.msk [vmem:[#allocation2 + $0x78] sm:$0xff] %vm18, 0.0
    %35 = vst.msk [vmem:[#allocation2 + $0x80] sm:$0xff] %vm18, 0.0
    %36 = vst.msk [vmem:[#allocation2 + $0x88] sm:$0xff] %vm18, 0.0
    %37 = vst.msk [vmem:[#allocation2 + $0x90] sm:$0xff] %vm18, 0.0
    %38 = vst.msk [vmem:[#allocation2 + $0x98] sm:$0xff] %vm18, 0.0
    %39 = vst.msk [vmem:[#allocation2 + $0xa0] sm:$0xff] %vm18, 0.0
    %40 = vst.msk [vmem:[#allocation2 + $0xa8] sm:$0xff] %vm18, 0.0
    %41 = vst.msk [vmem:[#allocation2 + $0xb0] sm:$0xff] %vm18, 0.0
    %42 = vst.msk [vmem:[#allocation2 + $0xb8] sm:$0xff] %vm18, 0.0
    %43 = vst.msk [vmem:[#allocation2 + $0xc0] sm:$0xff] %vm18, 0.0
    %44 = vst.msk [vmem:[#allocation2 + $0xc8] sm:$0xff] %vm18, 0.0
    %45 = vst.msk [vmem:[#allocation2 + $0xd0] sm:$0xff] %vm18, 0.0
    %46 = vst.msk [vmem:[#allocation2 + $0xd8] sm:$0xff] %vm18, 0.0
    %47 = vst.msk [vmem:[#allocation2 + $0xe0] sm:$0xff] %vm18, 0.0
    %48 = vst.msk [vmem:[#allocation2 + $0xe8] sm:$0xff] %vm18, 0.0
    %49 = vst.msk [vmem:[#allocation2 + $0xf0] sm:$0xff] %vm18, 0.0
    %50 = vst.msk [vmem:[#allocation2 + $0xf8] sm:$0xff] %vm18, 0.0
    %51 = vst.msk [vmem:[#allocation2 + $0x100] sm:$0xff] %vm18, 0.0
    %52 = vst.msk [vmem:[#allocation2 + $0x108] sm:$0xff] %vm18, 0.0
    %53 = vst.msk [vmem:[#allocation2 + $0x110] sm:$0xff] %vm18, 0.0
    %54 = vst.msk [vmem:[#allocation2 + $0x118] sm:$0xff] %vm18, 0.0
    %55 = vst.msk [vmem:[#allocation2 + $0x120] sm:$0xff] %vm18, 0.0
    %56 = vst.msk [vmem:[#allocation2 + $0x128] sm:$0xff] %vm18, 0.0
    %57 = vst.msk [vmem:[#allocation2 + $0x130] sm:$0xff] %vm18, 0.0
    %58 = vst.msk [vmem:[#allocation2 + $0x138] sm:$0xff] %vm18, 0.0
    %59 = vst.msk [vmem:[#allocation2 + $0x140] sm:$0xff] %vm18, 0.0
    %60 = vst.msk [vmem:[#allocation2 + $0x148] sm:$0xff] %vm18, 0.0
    %61 = vst.msk [vmem:[#allocation2 + $0x150] sm:$0xff] %vm18, 0.0
    %62 = vst.msk [vmem:[#allocation2 + $0x158] sm:$0xff] %vm18, 0.0
    %63 = vst.msk [vmem:[#allocation2 + $0x160] sm:$0xff] %vm18, 0.0
    %64 = vst.msk [vmem:[#allocation2 + $0x168] sm:$0xff] %vm18, 0.0
    %65 = vst.msk [vmem:[#allocation2 + $0x170] sm:$0xff] %vm18, 0.0
    %66 = vst.msk [vmem:[#allocation2 + $0x178] sm:$0xff] %vm18, 0.0
    %67 = vst.msk [vmem:[#allocation2 + $0x180] sm:$0xff] %vm18, 0.0
    %68 = vst.msk [vmem:[#allocation2 + $0x188] sm:$0xff] %vm18, 0.0
    %69 = vst.msk [vmem:[#allocation2 + $0x190] sm:$0xff] %vm18, 0.0
    %70 = vst.msk [vmem:[#allocation2 + $0x198] sm:$0xff] %vm18, 0.0
    %71 = vst.msk [vmem:[#allocation2 + $0x1a0] sm:$0xff] %vm18, 0.0
    %72 = vst.msk [vmem:[#allocation2 + $0x1a8] sm:$0xff] %vm18, 0.0
    %73 = vst.msk [vmem:[#allocation2 + $0x1b0] sm:$0xff] %vm18, 0.0
    %74 = vst.msk [vmem:[#allocation2 + $0x1b8] sm:$0xff] %vm18, 0.0
    %75 = vst.msk [vmem:[#allocation2 + $0x1c0] sm:$0xff] %vm18, 0.0
    %76 = vst.msk [vmem:[#allocation2 + $0x1c8] sm:$0xff] %vm18, 0.0
    %77 = vst.msk [vmem:[#allocation2 + $0x1d0] sm:$0xff] %vm18, 0.0
    %78 = vst.msk [vmem:[#allocation2 + $0x1d8] sm:$0xff] %vm18, 0.0
    %79 = vst.msk [vmem:[#allocation2 + $0x1e0] sm:$0xff] %vm18, 0.0
    %80 = vst.msk [vmem:[#allocation2 + $0x1e8] sm:$0xff] %vm18, 0.0
    %81 = vst.msk [vmem:[#allocation2 + $0x1f0] sm:$0xff] %vm18, 0.0
    %82 = vst.msk [vmem:[#allocation2 + $0x1f8] sm:$0xff] %vm18, 0.0
    %83 = vst.msk [vmem:[#allocation2 + $0x200] sm:$0xff] %vm18, 0.0
    %84 = vst.msk [vmem:[#allocation2 + $0x208] sm:$0xff] %vm18, 0.0
    %85 = vst.msk [vmem:[#allocation2 + $0x210] sm:$0xff] %vm18, 0.0
    %86 = vst.msk [vmem:[#allocation2 + $0x218] sm:$0xff] %vm18, 0.0
    %87 = vst.msk [vmem:[#allocation2 + $0x220] sm:$0xff] %vm18, 0.0
    %88 = vst.msk [vmem:[#allocation2 + $0x228] sm:$0xff] %vm18, 0.0
    %89 = vst.msk [vmem:[#allocation2 + $0x230] sm:$0xff] %vm18, 0.0
    %90 = vst.msk [vmem:[#allocation2 + $0x238] sm:$0xff] %vm18, 0.0
    %91 = vst.msk [vmem:[#allocation2 + $0x240] sm:$0xff] %vm18, 0.0
    %92 = vst.msk [vmem:[#allocation2 + $0x248] sm:$0xff] %vm18, 0.0
    %93 = vst.msk [vmem:[#allocation2 + $0x250] sm:$0xff] %vm18, 0.0
    %94 = vst.msk [vmem:[#allocation2 + $0x258] sm:$0xff] %vm18, 0.0
    %95 = vst.msk [vmem:[#allocation2 + $0x260] sm:$0xff] %vm18, 0.0
    %96 = vst.msk [vmem:[#allocation2 + $0x268] sm:$0xff] %vm18, 0.0
    %97 = vst.msk [vmem:[#allocation2 + $0x270] sm:$0xff] %vm18, 0.0
    %98 = vst.msk [vmem:[#allocation2 + $0x278] sm:$0xff] %vm18, 0.0
    %99 = vst.msk [vmem:[#allocation2 + $0x280] sm:$0xff] %vm18, 0.0
    %100 = vst.msk [vmem:[#allocation2 + $0x288] sm:$0xff] %vm18, 0.0
    %101 = vst.msk [vmem:[#allocation2 + $0x290] sm:$0xff] %vm18, 0.0
    %102 = vst.msk [vmem:[#allocation2 + $0x298] sm:$0xff] %vm18, 0.0
    %103 = vst.msk [vmem:[#allocation2 + $0x2a0] sm:$0xff] %vm18, 0.0
    %104 = vst.msk [vmem:[#allocation2 + $0x2a8] sm:$0xff] %vm18, 0.0
    %105 = vst.msk [vmem:[#allocation2 + $0x2b0] sm:$0xff] %vm18, 0.0
    %106 = vst.msk [vmem:[#allocation2 + $0x2b8] sm:$0xff] %vm18, 0.0
    %107 = vst.msk [vmem:[#allocation2 + $0x2c0] sm:$0xff] %vm18, 0.0
    %108 = vst.msk [vmem:[#allocation2 + $0x2c8] sm:$0xff] %vm18, 0.0
    %109 = vst.msk [vmem:[#allocation2 + $0x2d0] sm:$0xff] %vm18, 0.0
    %110 = vst.msk [vmem:[#allocation2 + $0x2d8] sm:$0xff] %vm18, 0.0
    %111 = vst.msk [vmem:[#allocation2 + $0x2e0] sm:$0xff] %vm18, 0.0
    %112 = vst.msk [vmem:[#allocation2 + $0x2e8] sm:$0xff] %vm18, 0.0
    %113 = vst.msk [vmem:[#allocation2 + $0x2f0] sm:$0xff] %vm18, 0.0
    %114 = vst.msk [vmem:[#allocation2 + $0x2f8] sm:$0xff] %vm18, 0.0
    %115 = vst.msk [vmem:[#allocation2 + $0x300] sm:$0xff] %vm18, 0.0
    %116 = vst.msk [vmem:[#allocation2 + $0x308] sm:$0xff] %vm18, 0.0
    %117 = vst.msk [vmem:[#allocation2 + $0x310] sm:$0xff] %vm18, 0.0
    %118 = vst.msk [vmem:[#allocation2 + $0x318] sm:$0xff] %vm18, 0.0
    %119 = vst.msk [vmem:[#allocation2 + $0x320] sm:$0xff] %vm18, 0.0
    %120 = vst.msk [vmem:[#allocation2 + $0x328] sm:$0xff] %vm18, 0.0
    %121 = vst.msk [vmem:[#allocation2 + $0x330] sm:$0xff] %vm18, 0.0
    %122 = vst.msk [vmem:[#allocation2 + $0x338] sm:$0xff] %vm18, 0.0
    %123 = vst.msk [vmem:[#allocation2 + $0x340] sm:$0xff] %vm18, 0.0
    %124 = vst.msk [vmem:[#allocation2 + $0x348] sm:$0xff] %vm18, 0.0
    %125 = vst.msk [vmem:[#allocation2 + $0x350] sm:$0xff] %vm18, 0.0
    %126 = vst.msk [vmem:[#allocation2 + $0x358] sm:$0xff] %vm18, 0.0
    %127 = vst.msk [vmem:[#allocation2 + $0x360] sm:$0xff] %vm18, 0.0
    %128 = vst.msk [vmem:[#allocation2 + $0x368] sm:$0xff] %vm18, 0.0
    %129 = vst.msk [vmem:[#allocation2 + $0x370] sm:$0xff] %vm18, 0.0
    %130 = vst.msk [vmem:[#allocation2 + $0x378] sm:$0xff] %vm18, 0.0
    %131 = vst.msk [vmem:[#allocation2 + $0x380] sm:$0xff] %vm18, 0.0
    %132 = vst.msk [vmem:[#allocation2 + $0x388] sm:$0xff] %vm18, 0.0
    %133 = vst.msk [vmem:[#allocation2 + $0x390] sm:$0xff] %vm18, 0.0
    %134 = vst.msk [vmem:[#allocation2 + $0x398] sm:$0xff] %vm18, 0.0
    %135 = vst.msk [vmem:[#allocation2 + $0x3a0] sm:$0xff] %vm18, 0.0
    %136 = vst.msk [vmem:[#allocation2 + $0x3a8] sm:$0xff] %vm18, 0.0
    %137 = vst.msk [vmem:[#allocation2 + $0x3b0] sm:$0xff] %vm18, 0.0
    %138 = vst.msk [vmem:[#allocation2 + $0x3b8] sm:$0xff] %vm18, 0.0
    %139 = vst.msk [vmem:[#allocation2 + $0x3c0] sm:$0xff] %vm18, 0.0
    %140 = vst.msk [vmem:[#allocation2 + $0x3c8] sm:$0xff] %vm18, 0.0
    %141 = vst.msk [vmem:[#allocation2 + $0x3d0] sm:$0xff] %vm18, 0.0
    %142 = vst.msk [vmem:[#allocation2 + $0x3d8] sm:$0xff] %vm18, 0.0
    %143 = vst.msk [vmem:[#allocation2 + $0x3e0] sm:$0xff] %vm18, 0.0
    %144 = vst.msk [vmem:[#allocation2 + $0x3e8] sm:$0xff] %vm18, 0.0
    %145 = vst.msk [vmem:[#allocation2 + $0x3f0] sm:$0xff] %vm18, 0.0
    %146 = vst.msk [vmem:[#allocation2 + $0x3f8] sm:$0xff] %vm18, 0.0
    %147 = vst.msk [vmem:[#allocation2 + $0x400] sm:$0xff] %vm18, 0.0
    %148 = vst.msk [vmem:[#allocation2 + $0x408] sm:$0xff] %vm18, 0.0
    %149 = vst.msk [vmem:[#allocation2 + $0x410] sm:$0xff] %vm18, 0.0
    %150 = vst.msk [vmem:[#allocation2 + $0x418] sm:$0xff] %vm18, 0.0
    %151 = vst.msk [vmem:[#allocation2 + $0x420] sm:$0xff] %vm18, 0.0
    %152 = vst.msk [vmem:[#allocation2 + $0x428] sm:$0xff] %vm18, 0.0
    %153 = vst.msk [vmem:[#allocation2 + $0x430] sm:$0xff] %vm18, 0.0
    %154 = vst.msk [vmem:[#allocation2 + $0x438] sm:$0xff] %vm18, 0.0
    %155 = vst.msk [vmem:[#allocation2 + $0x440] sm:$0xff] %vm18, 0.0
    %156 = vst.msk [vmem:[#allocation2 + $0x448] sm:$0xff] %vm18, 0.0
    %157 = vst.msk [vmem:[#allocation2 + $0x450] sm:$0xff] %vm18, 0.0
    %158 = vst.msk [vmem:[#allocation2 + $0x458] sm:$0xff] %vm18, 0.0
    %159 = vst.msk [vmem:[#allocation2 + $0x460] sm:$0xff] %vm18, 0.0
    %160 = vst.msk [vmem:[#allocation2 + $0x468] sm:$0xff] %vm18, 0.0
    %161 = vst.msk [vmem:[#allocation2 + $0x470] sm:$0xff] %vm18, 0.0
    %162 = vst.msk [vmem:[#allocation2 + $0x478] sm:$0xff] %vm18, 0.0
    %163 = vst.msk [vmem:[#allocation2 + $0x480] sm:$0xff] %vm18, 0.0
    %164 = vst.msk [vmem:[#allocation2 + $0x488] sm:$0xff] %vm18, 0.0
    %165 = vst.msk [vmem:[#allocation2 + $0x490] sm:$0xff] %vm18, 0.0
    %166 = vst.msk [vmem:[#allocation2 + $0x498] sm:$0xff] %vm18, 0.0
    %167 = vst.msk [vmem:[#allocation2 + $0x4a0] sm:$0xff] %vm18, 0.0
    %168 = vst.msk [vmem:[#allocation2 + $0x4a8] sm:$0xff] %vm18, 0.0
    %169 = vst.msk [vmem:[#allocation2 + $0x4b0] sm:$0xff] %vm18, 0.0
    %170 = vst.msk [vmem:[#allocation2 + $0x4b8] sm:$0xff] %vm18, 0.0
    %171 = vst.msk [vmem:[#allocation2 + $0x4c0] sm:$0xff] %vm18, 0.0
    %172 = vst.msk [vmem:[#allocation2 + $0x4c8] sm:$0xff] %vm18, 0.0
    %173 = vst.msk [vmem:[#allocation2 + $0x4d0] sm:$0xff] %vm18, 0.0
    %174 = vst.msk [vmem:[#allocation2 + $0x4d8] sm:$0xff] %vm18, 0.0
    %175 = vst.msk [vmem:[#allocation2 + $0x4e0] sm:$0xff] %vm18, 0.0
    %176 = vst.msk [vmem:[#allocation2 + $0x4e8] sm:$0xff] %vm18, 0.0
    %177 = vst.msk [vmem:[#allocation2 + $0x4f0] sm:$0xff] %vm18, 0.0
    %178 = vst.msk [vmem:[#allocation2 + $0x4f8] sm:$0xff] %vm18, 0.0
    %179 = vst.msk [vmem:[#allocation2 + $0x500] sm:$0xff] %vm18, 0.0
    %180 = vst.msk [vmem:[#allocation2 + $0x508] sm:$0xff] %vm18, 0.0
    %181 = vst.msk [vmem:[#allocation2 + $0x510] sm:$0xff] %vm18, 0.0
    %182 = vst.msk [vmem:[#allocation2 + $0x518] sm:$0xff] %vm18, 0.0
    %183 = vst.msk [vmem:[#allocation2 + $0x520] sm:$0xff] %vm18, 0.0
    %184 = vst.msk [vmem:[#allocation2 + $0x528] sm:$0xff] %vm18, 0.0
    %185 = vst.msk [vmem:[#allocation2 + $0x530] sm:$0xff] %vm18, 0.0
    %186 = vst.msk [vmem:[#allocation2 + $0x538] sm:$0xff] %vm18, 0.0
    %187 = vst.msk [vmem:[#allocation2 + $0x540] sm:$0xff] %vm18, 0.0
    %188 = vst.msk [vmem:[#allocation2 + $0x548] sm:$0xff] %vm18, 0.0
    %189 = vst.msk [vmem:[#allocation2 + $0x550] sm:$0xff] %vm18, 0.0
    %190 = vst.msk [vmem:[#allocation2 + $0x558] sm:$0xff] %vm18, 0.0
    %191 = vst.msk [vmem:[#allocation2 + $0x560] sm:$0xff] %vm18, 0.0
    %192 = vst.msk [vmem:[#allocation2 + $0x568] sm:$0xff] %vm18, 0.0
    %193 = vst.msk [vmem:[#allocation2 + $0x570] sm:$0xff] %vm18, 0.0
    %194 = vst.msk [vmem:[#allocation2 + $0x578] sm:$0xff] %vm18, 0.0
    %195 = vst.msk [vmem:[#allocation2 + $0x580] sm:$0xff] %vm18, 0.0
    %196 = vst.msk [vmem:[#allocation2 + $0x588] sm:$0xff] %vm18, 0.0
    %197 = vst.msk [vmem:[#allocation2 + $0x590] sm:$0xff] %vm18, 0.0
    %198 = vst.msk [vmem:[#allocation2 + $0x598] sm:$0xff] %vm18, 0.0
    %199 = vst.msk [vmem:[#allocation2 + $0x5a0] sm:$0xff] %vm18, 0.0
    %200 = vst.msk [vmem:[#allocation2 + $0x5a8] sm:$0xff] %vm18, 0.0
    %201 = vst.msk [vmem:[#allocation2 + $0x5b0] sm:$0xff] %vm18, 0.0
    %202 = vst.msk [vmem:[#allocation2 + $0x5b8] sm:$0xff] %vm18, 0.0
    %203 = vst.msk [vmem:[#allocation2 + $0x5c0] sm:$0xff] %vm18, 0.0
    %204 = vst.msk [vmem:[#allocation2 + $0x5c8] sm:$0xff] %vm18, 0.0
    %205 = vst.msk [vmem:[#allocation2 + $0x5d0] sm:$0xff] %vm18, 0.0
    %206 = vst.msk [vmem:[#allocation2 + $0x5d8] sm:$0xff] %vm18, 0.0
    %207 = vst.msk [vmem:[#allocation2 + $0x5e0] sm:$0xff] %vm18, 0.0
    %208 = vst.msk [vmem:[#allocation2 + $0x5e8] sm:$0xff] %vm18, 0.0
    %209 = vst.msk [vmem:[#allocation2 + $0x5f0] sm:$0xff] %vm18, 0.0
    %210 = vst.msk [vmem:[#allocation2 + $0x5f8] sm:$0xff] %vm18, 0.0
    %211 = vst.msk [vmem:[#allocation2 + $0x600] sm:$0xff] %vm18, 0.0
    %212 = vst.msk [vmem:[#allocation2 + $0x608] sm:$0xff] %vm18, 0.0
    %213 = vst.msk [vmem:[#allocation2 + $0x610] sm:$0xff] %vm18, 0.0
    %214 = vst.msk [vmem:[#allocation2 + $0x618] sm:$0xff] %vm18, 0.0
    %215 = vst.msk [vmem:[#allocation2 + $0x620] sm:$0xff] %vm18, 0.0
    %216 = vst.msk [vmem:[#allocation2 + $0x628] sm:$0xff] %vm18, 0.0
    %217 = vst.msk [vmem:[#allocation2 + $0x630] sm:$0xff] %vm18, 0.0
    %218 = vst.msk [vmem:[#allocation2 + $0x638] sm:$0xff] %vm18, 0.0
    %219 = vst.msk [vmem:[#allocation2 + $0x640] sm:$0xff] %vm18, 0.0
    %220 = vst.msk [vmem:[#allocation2 + $0x648] sm:$0xff] %vm18, 0.0
    %221 = vst.msk [vmem:[#allocation2 + $0x650] sm:$0xff] %vm18, 0.0
    %222 = vst.msk [vmem:[#allocation2 + $0x658] sm:$0xff] %vm18, 0.0
    %223 = vst.msk [vmem:[#allocation2 + $0x660] sm:$0xff] %vm18, 0.0
    %224 = vst.msk [vmem:[#allocation2 + $0x668] sm:$0xff] %vm18, 0.0
    %225 = vst.msk [vmem:[#allocation2 + $0x670] sm:$0xff] %vm18, 0.0
    %226 = vst.msk [vmem:[#allocation2 + $0x678] sm:$0xff] %vm18, 0.0
    %227 = vst.msk [vmem:[#allocation2 + $0x680] sm:$0xff] %vm18, 0.0
    %228 = vst.msk [vmem:[#allocation2 + $0x688] sm:$0xff] %vm18, 0.0
    %229 = vst.msk [vmem:[#allocation2 + $0x690] sm:$0xff] %vm18, 0.0
    %230 = vst.msk [vmem:[#allocation2 + $0x698] sm:$0xff] %vm18, 0.0
    %231 = vst.msk [vmem:[#allocation2 + $0x6a0] sm:$0xff] %vm18, 0.0
    %232 = vst.msk [vmem:[#allocation2 + $0x6a8] sm:$0xff] %vm18, 0.0
    %233 = vst.msk [vmem:[#allocation2 + $0x6b0] sm:$0xff] %vm18, 0.0
    %234 = vst.msk [vmem:[#allocation2 + $0x6b8] sm:$0xff] %vm18, 0.0
    %235 = vst.msk [vmem:[#allocation2 + $0x6c0] sm:$0xff] %vm18, 0.0
    %236 = vst.msk [vmem:[#allocation2 + $0x6c8] sm:$0xff] %vm18, 0.0
    %237 = vst.msk [vmem:[#allocation2 + $0x6d0] sm:$0xff] %vm18, 0.0
    %238 = vst.msk [vmem:[#allocation2 + $0x6d8] sm:$0xff] %vm18, 0.0
    %239 = vst.msk [vmem:[#allocation2 + $0x6e0] sm:$0xff] %vm18, 0.0
    %240 = vst.msk [vmem:[#allocation2 + $0x6e8] sm:$0xff] %vm18, 0.0
    %241 = vst.msk [vmem:[#allocation2 + $0x6f0] sm:$0xff] %vm18, 0.0
    %242 = vst.msk [vmem:[#allocation2 + $0x6f8] sm:$0xff] %vm18, 0.0
    %243 = vst.msk [vmem:[#allocation2 + $0x700] sm:$0xff] %vm18, 0.0
    %244 = vst.msk [vmem:[#allocation2 + $0x708] sm:$0xff] %vm18, 0.0
    %245 = vst.msk [vmem:[#allocation2 + $0x710] sm:$0xff] %vm18, 0.0
    %246 = vst.msk [vmem:[#allocation2 + $0x718] sm:$0xff] %vm18, 0.0
    %247 = vst.msk [vmem:[#allocation2 + $0x720] sm:$0xff] %vm18, 0.0
    %248 = vst.msk [vmem:[#allocation2 + $0x728] sm:$0xff] %vm18, 0.0
    %249 = vst.msk [vmem:[#allocation2 + $0x730] sm:$0xff] %vm18, 0.0
    %250 = vst.msk [vmem:[#allocation2 + $0x738] sm:$0xff] %vm18, 0.0
    %251 = vst.msk [vmem:[#allocation2 + $0x740] sm:$0xff] %vm18, 0.0
    %252 = vst.msk [vmem:[#allocation2 + $0x748] sm:$0xff] %vm18, 0.0
    %253 = vst.msk [vmem:[#allocation2 + $0x750] sm:$0xff] %vm18, 0.0
    %254 = vst.msk [vmem:[#allocation2 + $0x758] sm:$0xff] %vm18, 0.0
    %255 = vst.msk [vmem:[#allocation2 + $0x760] sm:$0xff] %vm18, 0.0
    %256 = vst.msk [vmem:[#allocation2 + $0x768] sm:$0xff] %vm18, 0.0
    %257 = vst.msk [vmem:[#allocation2 + $0x770] sm:$0xff] %vm18, 0.0
    %258 = vst.msk [vmem:[#allocation2 + $0x778] sm:$0xff] %vm18, 0.0
    %259 = vst.msk [vmem:[#allocation2 + $0x780] sm:$0xff] %vm18, 0.0
    %260 = vst.msk [vmem:[#allocation2 + $0x788] sm:$0xff] %vm18, 0.0
    %261 = vst.msk [vmem:[#allocation2 + $0x790] sm:$0xff] %vm18, 0.0
    %262 = vst.msk [vmem:[#allocation2 + $0x798] sm:$0xff] %vm18, 0.0
    %263 = vst.msk [vmem:[#allocation2 + $0x7a0] sm:$0xff] %vm18, 0.0
    %264 = vst.msk [vmem:[#allocation2 + $0x7a8] sm:$0xff] %vm18, 0.0
    %265 = vst.msk [vmem:[#allocation2 + $0x7b0] sm:$0xff] %vm18, 0.0
    %266 = vst.msk [vmem:[#allocation2 + $0x7b8] sm:$0xff] %vm18, 0.0
    %267 = vst.msk [vmem:[#allocation2 + $0x7c0] sm:$0xff] %vm18, 0.0
    %268 = vst.msk [vmem:[#allocation2 + $0x7c8] sm:$0xff] %vm18, 0.0
    %269 = vst.msk [vmem:[#allocation2 + $0x7d0] sm:$0xff] %vm18, 0.0
    %270 = vst.msk [vmem:[#allocation2 + $0x7d8] sm:$0xff] %vm18, 0.0
    %271 = vst.msk [vmem:[#allocation2 + $0x7e0] sm:$0xff] %vm18, 0.0
    %272 = vst.msk [vmem:[#allocation2 + $0x7e8] sm:$0xff] %vm18, 0.0
    %273 = vst.msk [vmem:[#allocation2 + $0x7f0] sm:$0xff] %vm18, 0.0
    %274 = vst.msk [vmem:[#allocation2 + $0x7f8] sm:$0xff] %vm18, 0.0
  $region13: #{discriminator_forward.5} parent=0 // pred_fallthru
    _
  %v275 = vld [vmem:[#allocation2] sm:$0xff]
  %v276 = vld [vmem:[#allocation2 + $0x8] sm:$0xff]
  %v277 = vld [vmem:[#allocation2 + $0x10] sm:$0xff]
  %v278 = vld [vmem:[#allocation2 + $0x18] sm:$0xff]
  %v279 = vld [vmem:[#allocation2 + $0x20] sm:$0xff]
  %v280 = vld [vmem:[#allocation2 + $0x28] sm:$0xff]
  %v281 = vld [vmem:[#allocation2 + $0x30] sm:$0xff]
  %v282 = vld [vmem:[#allocation2 + $0x38] sm:$0xff]
  %v283 = vld [vmem:[#allocation2 + $0x40] sm:$0xff]
  %v284 = vld [vmem:[#allocation2 + $0x48] sm:$0xff]
  %v285 = vld [vmem:[#allocation2 + $0x50] sm:$0xff]
  %v286 = vld [vmem:[#allocation2 + $0x58] sm:$0xff]
  %v287 = vld [vmem:[#allocation2 + $0x60] sm:$0xff]
  %v288 = vld [vmem:[#allocation2 + $0x68] sm:$0xff]
  %v289 = vld [vmem:[#allocation2 + $0x70] sm:$0xff]
  %v290 = vld [vmem:[#allocation2 + $0x78] sm:$0xff]
  %v291 = vld [vmem:[#allocation2 + $0x80] sm:$0xff]
  %v292 = vld [vmem:[#allocation2 + $0x88] sm:$0xff]
  %v293 = vld [vmem:[#allocation2 + $0x90] sm:$0xff]
  %v294 = vld [vmem:[#allocation2 + $0x98] sm:$0xff]
  %v295 = vld [vmem:[#allocation2 + $0xa0] sm:$0xff]
  %v296 = vld [vmem:[#allocation2 + $0xa8] sm:$0xff]
  %v297 = vld [vmem:[#allocation2 + $0xb0] sm:$0xff]
  %v298 = vld [vmem:[#allocation2 + $0xb8] sm:$0xff]
  %v299 = vld [vmem:[#allocation2 + $0xc0] sm:$0xff]
  %v300 = vld [vmem:[#allocation2 + $0xc8] sm:$0xff]
  %v301 = vld [vmem:[#allocation2 + $0xd0] sm:$0xff]
  %v302 = vld [vmem:[#allocation2 + $0xd8] sm:$0xff]
  %v303 = vld [vmem:[#allocation2 + $0xe0] sm:$0xff]
  %v304 = vld [vmem:[#allocation2 + $0xe8] sm:$0xff]
  %v305 = vld [vmem:[#allocation2 + $0xf0] sm:$0xff]
  %v306 = vld [vmem:[#allocation2 + $0xf8] sm:$0xff]
  %v307 = vld [vmem:[#allocation2 + $0x100] sm:$0xff]
  %v308 = vld [vmem:[#allocation2 + $0x108] sm:$0xff]
  %v309 = vld [vmem:[#allocation2 + $0x110] sm:$0xff]
  %v310 = vld [vmem:[#allocation2 + $0x118] sm:$0xff]
  %v311 = vld [vmem:[#allocation2 + $0x120] sm:$0xff]
  %v312 = vld [vmem:[#allocation2 + $0x128] sm:$0xff]
  %v313 = vld [vmem:[#allocation2 + $0x130] sm:$0xff]
  %v314 = vld [vmem:[#allocation2 + $0x138] sm:$0xff]
  %v315 = vld [vmem:[#allocation2 + $0x140] sm:$0xff]
  %v316 = vld [vmem:[#allocation2 + $0x148] sm:$0xff]
  %v317 = vld [vmem:[#allocation2 + $0x150] sm:$0xff]
  %v318 = vld [vmem:[#allocation2 + $0x158] sm:$0xff]
  %v319 = vld [vmem:[#allocation2 + $0x160] sm:$0xff]
  %v320 = vld [vmem:[#allocation2 + $0x168] sm:$0xff]
  %v321 = vld [vmem:[#allocation2 + $0x170] sm:$0xff]
  %v322 = vld [vmem:[#allocation2 + $0x178] sm:$0xff]
  %v323 = vld [vmem:[#allocation2 + $0x180] sm:$0xff]
  %v324 = vld [vmem:[#allocation2 + $0x188] sm:$0xff]
  %v325 = vld [vmem:[#allocation2 + $0x190] sm:$0xff]
  %v326 = vld [vmem:[#allocation2 + $0x198] sm:$0xff]
  %v327 = vld [vmem:[#allocation2 + $0x1a0] sm:$0xff]
  %v328 = vld [vmem:[#allocation2 + $0x1a8] sm:$0xff]
  %v329 = vld [vmem:[#allocation2 + $0x1b0] sm:$0xff]
  %v330 = vld [vmem:[#allocation2 + $0x1b8] sm:$0xff]
  %v331 = vld [vmem:[#allocation2 + $0x1c0] sm:$0xff]
  %v332 = vld [vmem:[#allocation2 + $0x1c8] sm:$0xff]
  %v333 = vld [vmem:[#allocation2 + $0x1d0] sm:$0xff]
  %v334 = vld [vmem:[#allocation2 + $0x1d8] sm:$0xff]
  %v335 = vld [vmem:[#allocation2 + $0x1e0] sm:$0xff]
  %v336 = vld [vmem:[#allocation2 + $0x1e8] sm:$0xff]
  %v337 = vld [vmem:[#allocation2 + $0x1f0] sm:$0xff]
  %v338 = vld [vmem:[#allocation2 + $0x1f8] sm:$0xff]
  %v339 = vld [vmem:[#allocation2 + $0x200] sm:$0xff]
  %v340 = vld [vmem:[#allocation2 + $0x208] sm:$0xff]
  %v341 = vld [vmem:[#allocation2 + $0x210] sm:$0xff]
  %v342 = vld [vmem:[#allocation2 + $0x218] sm:$0xff]
  %v343 = vld [vmem:[#allocation2 + $0x220] sm:$0xff]
  %v344 = vld [vmem:[#allocation2 + $0x228] sm:$0xff]
  %v345 = vld [vmem:[#allocation2 + $0x230] sm:$0xff]
  %v346 = vld [vmem:[#allocation2 + $0x238] sm:$0xff]
  %v347 = vld [vmem:[#allocation2 + $0x240] sm:$0xff]
  %v348 = vld [vmem:[#allocation2 + $0x248] sm:$0xff]
  %v349 = vld [vmem:[#allocation2 + $0x250] sm:$0xff]
  %v350 = vld [vmem:[#allocation2 + $0x258] sm:$0xff]
  %v351 = vld [vmem:[#allocation2 + $0x260] sm:$0xff]
  %v352 = vld [vmem:[#allocation2 + $0x268] sm:$0xff]
  %v353 = vld [vmem:[#allocation2 + $0x270] sm:$0xff]
  %v354 = vld [vmem:[#allocation2 + $0x278] sm:$0xff]
  %v355 = vld [vmem:[#allocation2 + $0x280] sm:$0xff]
  %v356 = vld [vmem:[#allocation2 + $0x288] sm:$0xff]
  %v357 = vld [vmem:[#allocation2 + $0x290] sm:$0xff]
  %v358 = vld [vmem:[#allocation2 + $0x298] sm:$0xff]
  %v359 = vld [vmem:[#allocation2 + $0x2a0] sm:$0xff]
  %v360 = vld [vmem:[#allocation2 + $0x2a8] sm:$0xff]
  %v361 = vld [vmem:[#allocation2 + $0x2b0] sm:$0xff]
  %v362 = vld [vmem:[#allocation2 + $0x2b8] sm:$0xff]
  %v363 = vld [vmem:[#allocation2 + $0x2c0] sm:$0xff]
  %v364 = vld [vmem:[#allocation2 + $0x2c8] sm:$0xff]
  %v365 = vld [vmem:[#allocation2 + $0x2d0] sm:$0xff]
  %v366 = vld [vmem:[#allocation2 + $0x2d8] sm:$0xff]
  %v367 = vld [vmem:[#allocation2 + $0x2e0] sm:$0xff]
  %v368 = vld [vmem:[#allocation2 + $0x2e8] sm:$0xff]
  %v369 = vld [vmem:[#allocation2 + $0x2f0] sm:$0xff]
  %v370 = vld [vmem:[#allocation2 + $0x2f8] sm:$0xff]
  %v371 = vld [vmem:[#allocation2 + $0x300] sm:$0xff]
  %v372 = vld [vmem:[#allocation2 + $0x308] sm:$0xff]
  %v373 = vld [vmem:[#allocation2 + $0x310] sm:$0xff]
  %v374 = vld [vmem:[#allocation2 + $0x318] sm:$0xff]
  %v375 = vld [vmem:[#allocation2 + $0x320] sm:$0xff]
  %v376 = vld [vmem:[#allocation2 + $0x328] sm:$0xff]
  %v377 = vld [vmem:[#allocation2 + $0x330] sm:$0xff]
  %v378 = vld [vmem:[#allocation2 + $0x338] sm:$0xff]
  %v379 = vld [vmem:[#allocation2 + $0x340] sm:$0xff]
  %v380 = vld [vmem:[#allocation2 + $0x348] sm:$0xff]
  %v381 = vld [vmem:[#allocation2 + $0x350] sm:$0xff]
  %v382 = vld [vmem:[#allocation2 + $0x358] sm:$0xff]
  %v383 = vld [vmem:[#allocation2 + $0x360] sm:$0xff]
  %v384 = vld [vmem:[#allocation2 + $0x368] sm:$0xff]
  %v385 = vld [vmem:[#allocation2 + $0x370] sm:$0xff]
  %v386 = vld [vmem:[#allocation2 + $0x378] sm:$0xff]
  %v387 = vld [vmem:[#allocation2 + $0x380] sm:$0xff]
  %v388 = vld [vmem:[#allocation2 + $0x388] sm:$0xff]
  %v389 = vld [vmem:[#allocation2 + $0x390] sm:$0xff]
  %v390 = vld [vmem:[#allocation2 + $0x398] sm:$0xff]
  %v391 = vld [vmem:[#allocation2 + $0x3a0] sm:$0xff]
  %v392 = vld [vmem:[#allocation2 + $0x3a8] sm:$0xff]
  %v393 = vld [vmem:[#allocation2 + $0x3b0] sm:$0xff]
  %v394 = vld [vmem:[#allocation2 + $0x3b8] sm:$0xff]
  %v395 = vld [vmem:[#allocation2 + $0x3c0] sm:$0xff]
  %v396 = vld [vmem:[#allocation2 + $0x3c8] sm:$0xff]
  %v397 = vld [vmem:[#allocation2 + $0x3d0] sm:$0xff]
  %v398 = vld [vmem:[#allocation2 + $0x3d8] sm:$0xff]
  %v399 = vld [vmem:[#allocation2 + $0x3e0] sm:$0xff]
  %v400 = vld [vmem:[#allocation2 + $0x3e8] sm:$0xff]
  %v401 = vld [vmem:[#allocation2 + $0x3f0] sm:$0xff]
  %v402 = vld [vmem:[#allocation2 + $0x3f8] sm:$0xff]
  %v403 = vld [vmem:[#allocation2 + $0x400] sm:$0xff]
  %v404 = vld [vmem:[#allocation2 + $0x408] sm:$0xff]
  %v405 = vld [vmem:[#allocation2 + $0x410] sm:$0xff]
  %v406 = vld [vmem:[#allocation2 + $0x418] sm:$0xff]
  %v407 = vld [vmem:[#allocation2 + $0x420] sm:$0xff]
  %v408 = vld [vmem:[#allocation2 + $0x428] sm:$0xff]
  %v409 = vld [vmem:[#allocation2 + $0x430] sm:$0xff]
  %v410 = vld [vmem:[#allocation2 + $0x438] sm:$0xff]
  %v411 = vld [vmem:[#allocation2 + $0x440] sm:$0xff]
  %v412 = vld [vmem:[#allocation2 + $0x448] sm:$0xff]
  %v413 = vld [vmem:[#allocation2 + $0x450] sm:$0xff]
  %v414 = vld [vmem:[#allocation2 + $0x458] sm:$0xff]
  %v415 = vld [vmem:[#allocation2 + $0x460] sm:$0xff]
  %v416 = vld [vmem:[#allocation2 + $0x468] sm:$0xff]
  %v417 = vld [vmem:[#allocation2 + $0x470] sm:$0xff]
  %v418 = vld [vmem:[#allocation2 + $0x478] sm:$0xff]
  %v419 = vld [vmem:[#allocation2 + $0x480] sm:$0xff]
  %v420 = vld [vmem:[#allocation2 + $0x488] sm:$0xff]
  %v421 = vld [vmem:[#allocation2 + $0x490] sm:$0xff]
  %v422 = vld [vmem:[#allocation2 + $0x498] sm:$0xff]
  %v423 = vld [vmem:[#allocation2 + $0x4a0] sm:$0xff]
  %v424 = vld [vmem:[#allocation2 + $0x4a8] sm:$0xff]
  %v425 = vld [vmem:[#allocation2 + $0x4b0] sm:$0xff]
  %v426 = vld [vmem:[#allocation2 + $0x4b8] sm:$0xff]
  %v427 = vld [vmem:[#allocation2 + $0x4c0] sm:$0xff]
  %v428 = vld [vmem:[#allocation2 + $0x4c8] sm:$0xff]
  %v429 = vld [vmem:[#allocation2 + $0x4d0] sm:$0xff]
  %v430 = vld [vmem:[#allocation2 + $0x4d8] sm:$0xff]
  %v431 = vld [vmem:[#allocation2 + $0x4e0] sm:$0xff]
  %v432 = vld [vmem:[#allocation2 + $0x4e8] sm:$0xff]
  %v433 = vld [vmem:[#allocation2 + $0x4f0] sm:$0xff]
  %v434 = vld [vmem:[#allocation2 + $0x4f8] sm:$0xff]
  %v435 = vld [vmem:[#allocation2 + $0x500] sm:$0xff]
  %v436 = vld [vmem:[#allocation2 + $0x508] sm:$0xff]
  %v437 = vld [vmem:[#allocation2 + $0x510] sm:$0xff]
  %v438 = vld [vmem:[#allocation2 + $0x518] sm:$0xff]
  %v439 = vld [vmem:[#allocation2 + $0x520] sm:$0xff]
  %v440 = vld [vmem:[#allocation2 + $0x528] sm:$0xff]
  %v441 = vld [vmem:[#allocation2 + $0x530] sm:$0xff]
  %v442 = vld [vmem:[#allocation2 + $0x538] sm:$0xff]
  %v443 = vld [vmem:[#allocation2 + $0x540] sm:$0xff]
  %v444 = vld [vmem:[#allocation2 + $0x548] sm:$0xff]
  %v445 = vld [vmem:[#allocation2 + $0x550] sm:$0xff]
  %v446 = vld [vmem:[#allocation2 + $0x558] sm:$0xff]
  %v447 = vld [vmem:[#allocation2 + $0x560] sm:$0xff]
  %v448 = vld [vmem:[#allocation2 + $0x568] sm:$0xff]
  %v449 = vld [vmem:[#allocation2 + $0x570] sm:$0xff]
  %v450 = vld [vmem:[#allocation2 + $0x578] sm:$0xff]
  %v451 = vld [vmem:[#allocation2 + $0x580] sm:$0xff]
  %v452 = vld [vmem:[#allocation2 + $0x588] sm:$0xff]
  %v453 = vld [vmem:[#allocation2 + $0x590] sm:$0xff]
  %v454 = vld [vmem:[#allocation2 + $0x598] sm:$0xff]
  %v455 = vld [vmem:[#allocation2 + $0x5a0] sm:$0xff]
  %v456 = vld [vmem:[#allocation2 + $0x5a8] sm:$0xff]
  %v457 = vld [vmem:[#allocation2 + $0x5b0] sm:$0xff]
  %v458 = vld [vmem:[#allocation2 + $0x5b8] sm:$0xff]
  %v459 = vld [vmem:[#allocation2 + $0x5c0] sm:$0xff]
  %v460 = vld [vmem:[#allocation2 + $0x5c8] sm:$0xff]
  %v461 = vld [vmem:[#allocation2 + $0x5d0] sm:$0xff]
  %v462 = vld [vmem:[#allocation2 + $0x5d8] sm:$0xff]
  %v463 = vld [vmem:[#allocation2 + $0x5e0] sm:$0xff]
  %v464 = vld [vmem:[#allocation2 + $0x5e8] sm:$0xff]
  %v465 = vld [vmem:[#allocation2 + $0x5f0] sm:$0xff]
  %v466 = vld [vmem:[#allocation2 + $0x5f8] sm:$0xff]
  %v467 = vld [vmem:[#allocation2 + $0x600] sm:$0xff]
  %v468 = vld [vmem:[#allocation2 + $0x608] sm:$0xff]
  %v469 = vld [vmem:[#allocation2 + $0x610] sm:$0xff]
  %v470 = vld [vmem:[#allocation2 + $0x618] sm:$0xff]
  %v471 = vld [vmem:[#allocation2 + $0x620] sm:$0xff]
  %v472 = vld [vmem:[#allocation2 + $0x628] sm:$0xff]
  %v473 = vld [vmem:[#allocation2 + $0x630] sm:$0xff]
  %v474 = vld [vmem:[#allocation2 + $0x638] sm:$0xff]
  %v475 = vld [vmem:[#allocation2 + $0x640] sm:$0xff]
  %v476 = vld [vmem:[#allocation2 + $0x648] sm:$0xff]
  %v477 = vld [vmem:[#allocation2 + $0x650] sm:$0xff]
  %v478 = vld [vmem:[#allocation2 + $0x658] sm:$0xff]
  %v479 = vld [vmem:[#allocation2 + $0x660] sm:$0xff]
  %v480 = vld [vmem:[#allocation2 + $0x668] sm:$0xff]
  %v481 = vld [vmem:[#allocation2 + $0x670] sm:$0xff]
  %v482 = vld [vmem:[#allocation2 + $0x678] sm:$0xff]
  %v483 = vld [vmem:[#allocation2 + $0x680] sm:$0xff]
  %v484 = vld [vmem:[#allocation2 + $0x688] sm:$0xff]
  %v485 = vld [vmem:[#allocation2 + $0x690] sm:$0xff]
  %v486 = vld [vmem:[#allocation2 + $0x698] sm:$0xff]
  %v487 = vld [vmem:[#allocation2 + $0x6a0] sm:$0xff]
  %v488 = vld [vmem:[#allocation2 + $0x6a8] sm:$0xff]
  %v489 = vld [vmem:[#allocation2 + $0x6b0] sm:$0xff]
  %v490 = vld [vmem:[#allocation2 + $0x6b8] sm:$0xff]
  %v491 = vld [vmem:[#allocation2 + $0x6c0] sm:$0xff]
  %v492 = vld [vmem:[#allocation2 + $0x6c8] sm:$0xff]
  %v493 = vld [vmem:[#allocation2 + $0x6d0] sm:$0xff]
  %v494 = vld [vmem:[#allocation2 + $0x6d8] sm:$0xff]
  %v495 = vld [vmem:[#allocation2 + $0x6e0] sm:$0xff]
  %v496 = vld [vmem:[#allocation2 + $0x6e8] sm:$0xff]
  %v497 = vld [vmem:[#allocation2 + $0x6f0] sm:$0xff]
  %v498 = vld [vmem:[#allocation2 + $0x6f8] sm:$0xff]
  %v499 = vld [vmem:[#allocation2 + $0x700] sm:$0xff]
  %v500 = vld [vmem:[#allocation2 + $0x708] sm:$0xff]
  %v501 = vld [vmem:[#allocation2 + $0x710] sm:$0xff]
  %v502 = vld [vmem:[#allocation2 + $0x718] sm:$0xff]
  %v503 = vld [vmem:[#allocation2 + $0x720] sm:$0xff]
  %v504 = vld [vmem:[#allocation2 + $0x728] sm:$0xff]
  %v505 = vld [vmem:[#allocation2 + $0x730] sm:$0xff]
  %v506 = vld [vmem:[#allocation2 + $0x738] sm:$0xff]
  %v507 = vld [vmem:[#allocation2 + $0x740] sm:$0xff]
  %v508 = vld [vmem:[#allocation2 + $0x748] sm:$0xff]
  %v509 = vld [vmem:[#allocation2 + $0x750] sm:$0xff]
  %v510 = vld [vmem:[#allocation2 + $0x758] sm:$0xff]
  %v511 = vld [vmem:[#allocation2 + $0x760] sm:$0xff]
  %v512 = vld [vmem:[#allocation2 + $0x768] sm:$0xff]
  %v513 = vld [vmem:[#allocation2 + $0x770] sm:$0xff]
  %v514 = vld [vmem:[#allocation2 + $0x778] sm:$0xff]
  %v515 = vld [vmem:[#allocation2 + $0x780] sm:$0xff]
  %v516 = vld [vmem:[#allocation2 + $0x788] sm:$0xff]
  %v517 = vld [vmem:[#allocation2 + $0x790] sm:$0xff]
  %v518 = vld [vmem:[#allocation2 + $0x798] sm:$0xff]
  %v519 = vld [vmem:[#allocation2 + $0x7a0] sm:$0xff]
  %v520 = vld [vmem:[#allocation2 + $0x7a8] sm:$0xff]
  %v521 = vld [vmem:[#allocation2 + $0x7b0] sm:$0xff]
  %v522 = vld [vmem:[#allocation2 + $0x7b8] sm:$0xff]
  %v523 = vld [vmem:[#allocation2 + $0x7c0] sm:$0xff]
  %v524 = vld [vmem:[#allocation2 + $0x7c8] sm:$0xff]
  %v525 = vld [vmem:[#allocation2 + $0x7d0] sm:$0xff]
  %v526 = vld [vmem:[#allocation2 + $0x7d8] sm:$0xff]
  %v527 = vld [vmem:[#allocation2 + $0x7e0] sm:$0xff]
  %v528 = vld [vmem:[#allocation2 + $0x7e8] sm:$0xff]
  %v529 = vld [vmem:[#allocation2 + $0x7f0] sm:$0xff]
  %v530 = vld [vmem:[#allocation2 + $0x7f8] sm:$0xff]
  %v531 = vld [vmem:[%s0] sm:$0xf]
  %v532 = vld [vmem:[%s0 + $0x4] sm:$0xf]
  %v533 = vld [vmem:[%s0 + $0x8] sm:$0xf]
  %v534 = vld [vmem:[%s0 + $0xc] sm:$0xf]
  %v535 = vld [vmem:[%s0 + $0x10] sm:$0xf]
  %v536 = vld [vmem:[%s0 + $0x14] sm:$0xf]
  %v537 = vld [vmem:[%s0 + $0x18] sm:$0xf]
  %v538 = vld [vmem:[%s0 + $0x1c] sm:$0xf]
  %v539 = vld [vmem:[%s0 + $0x20] sm:$0xf]
  %v540 = vld [vmem:[%s0 + $0x24] sm:$0xf]
  %v541 = vld [vmem:[%s0 + $0x28] sm:$0xf]
  %v542 = vld [vmem:[%s0 + $0x2c] sm:$0xf]
  %v543 = vld [vmem:[%s0 + $0x30] sm:$0xf]
  %v544 = vld [vmem:[%s0 + $0x34] sm:$0xf]
  %v545 = vld [vmem:[%s0 + $0x38] sm:$0xf]
  %v546 = vld [vmem:[%s0 + $0x3c] sm:$0xf]
  %v547 = vld [vmem:[%s0 + $0x40] sm:$0xf]
  %v548 = vld [vmem:[%s0 + $0x44] sm:$0xf]
  %v549 = vld [vmem:[%s0 + $0x48] sm:$0xf]
  %v550 = vld [vmem:[%s0 + $0x4c] sm:$0xf]
  %v551 = vld [vmem:[%s0 + $0x50] sm:$0xf]
  %v552 = vld [vmem:[%s0 + $0x54] sm:$0xf]
  %v553 = vld [vmem:[%s0 + $0x58] sm:$0xf]
  %v554 = vld [vmem:[%s0 + $0x5c] sm:$0xf]
  %v555 = vld [vmem:[%s0 + $0x60] sm:$0xf]
  %v556 = vld [vmem:[%s0 + $0x64] sm:$0xf]
  %v557 = vld [vmem:[%s0 + $0x68] sm:$0xf]
  %v558 = vld [vmem:[%s0 + $0x6c] sm:$0xf]
  %v559 = vld [vmem:[%s0 + $0x70] sm:$0xf]
  %v560 = vld [vmem:[%s0 + $0x74] sm:$0xf]
  %v561 = vld [vmem:[%s0 + $0x78] sm:$0xf]
  %v562 = vld [vmem:[%s0 + $0x7c] sm:$0xf]
  %v563 = vld [vmem:[%s0 + $0x80] sm:$0xf]
  %v564 = vld [vmem:[%s0 + $0x84] sm:$0xf]
  %v565 = vld [vmem:[%s0 + $0x88] sm:$0xf]
  %v566 = vld [vmem:[%s0 + $0x8c] sm:$0xf]
  %v567 = vld [vmem:[%s0 + $0x90] sm:$0xf]
  %v568 = vld [vmem:[%s0 + $0x94] sm:$0xf]
  %v569 = vld [vmem:[%s0 + $0x98] sm:$0xf]
  %v570 = vld [vmem:[%s0 + $0x9c] sm:$0xf]
  %v571 = vld [vmem:[%s0 + $0xa0] sm:$0xf]
  %v572 = vld [vmem:[%s0 + $0xa4] sm:$0xf]
  %v573 = vld [vmem:[%s0 + $0xa8] sm:$0xf]
  %v574 = vld [vmem:[%s0 + $0xac] sm:$0xf]
  %v575 = vld [vmem:[%s0 + $0xb0] sm:$0xf]
  %v576 = vld [vmem:[%s0 + $0xb4] sm:$0xf]
  %v577 = vld [vmem:[%s0 + $0xb8] sm:$0xf]
  %v578 = vld [vmem:[%s0 + $0xbc] sm:$0xf]
  %v579 = vld [vmem:[%s0 + $0xc0] sm:$0xf]
  %v580 = vld [vmem:[%s0 + $0xc4] sm:$0xf]
  %v581 = vld [vmem:[%s0 + $0xc8] sm:$0xf]
  %v582 = vld [vmem:[%s0 + $0xcc] sm:$0xf]
  %v583 = vld [vmem:[%s0 + $0xd0] sm:$0xf]
  %v584 = vld [vmem:[%s0 + $0xd4] sm:$0xf]
  %v585 = vld [vmem:[%s0 + $0xd8] sm:$0xf]
  %v586 = vld [vmem:[%s0 + $0xdc] sm:$0xf]
  %v587 = vld [vmem:[%s0 + $0xe0] sm:$0xf]
  %v588 = vld [vmem:[%s0 + $0xe4] sm:$0xf]
  %v589 = vld [vmem:[%s0 + $0xe8] sm:$0xf]
  %v590 = vld [vmem:[%s0 + $0xec] sm:$0xf]
  %v591 = vld [vmem:[%s0 + $0xf0] sm:$0xf]
  %v592 = vld [vmem:[%s0 + $0xf4] sm:$0xf]
  %v593 = vld [vmem:[%s0 + $0xf8] sm:$0xf]
  %v594 = vld [vmem:[%s0 + $0xfc] sm:$0xf]
  %v595 = vld [vmem:[%s0 + $0x100] sm:$0xf]
  %v596 = vld [vmem:[%s0 + $0x104] sm:$0xf]
  %v597 = vld [vmem:[%s0 + $0x108] sm:$0xf]
  %v598 = vld [vmem:[%s0 + $0x10c] sm:$0xf]
  %v599 = vld [vmem:[%s0 + $0x110] sm:$0xf]
  %v600 = vld [vmem:[%s0 + $0x114] sm:$0xf]
  %v601 = vld [vmem:[%s0 + $0x118] sm:$0xf]
  %v602 = vld [vmem:[%s0 + $0x11c] sm:$0xf]
  %v603 = vld [vmem:[%s0 + $0x120] sm:$0xf]
  %v604 = vld [vmem:[%s0 + $0x124] sm:$0xf]
  %v605 = vld [vmem:[%s0 + $0x128] sm:$0xf]
  %v606 = vld [vmem:[%s0 + $0x12c] sm:$0xf]
  %v607 = vld [vmem:[%s0 + $0x130] sm:$0xf]
  %v608 = vld [vmem:[%s0 + $0x134] sm:$0xf]
  %v609 = vld [vmem:[%s0 + $0x138] sm:$0xf]
  %v610 = vld [vmem:[%s0 + $0x13c] sm:$0xf]
  %v611 = vld [vmem:[%s0 + $0x140] sm:$0xf]
  %v612 = vld [vmem:[%s0 + $0x144] sm:$0xf]
  %v613 = vld [vmem:[%s0 + $0x148] sm:$0xf]
  %v614 = vld [vmem:[%s0 + $0x14c] sm:$0xf]
  %v615 = vld [vmem:[%s0 + $0x150] sm:$0xf]
  %v616 = vld [vmem:[%s0 + $0x154] sm:$0xf]
  %v617 = vld [vmem:[%s0 + $0x158] sm:$0xf]
  %v618 = vld [vmem:[%s0 + $0x15c] sm:$0xf]
  %v619 = vld [vmem:[%s0 + $0x160] sm:$0xf]
  %v620 = vld [vmem:[%s0 + $0x164] sm:$0xf]
  %v621 = vld [vmem:[%s0 + $0x168] sm:$0xf]
  %v622 = vld [vmem:[%s0 + $0x16c] sm:$0xf]
  %v623 = vld [vmem:[%s0 + $0x170] sm:$0xf]
  %v624 = vld [vmem:[%s0 + $0x174] sm:$0xf]
  %v625 = vld [vmem:[%s0 + $0x178] sm:$0xf]
  %v626 = vld [vmem:[%s0 + $0x17c] sm:$0xf]
  %v627 = vld [vmem:[%s0 + $0x180] sm:$0xf]
  %v628 = vld [vmem:[%s0 + $0x184] sm:$0xf]
  %v629 = vld [vmem:[%s0 + $0x188] sm:$0xf]
  %v630 = vld [vmem:[%s0 + $0x18c] sm:$0xf]
  %v631 = vld [vmem:[%s0 + $0x190] sm:$0xf]
  %v632 = vld [vmem:[%s0 + $0x194] sm:$0xf]
  %v633 = vld [vmem:[%s0 + $0x198] sm:$0xf]
  %v634 = vld [vmem:[%s0 + $0x19c] sm:$0xf]
  %v635 = vld [vmem:[%s0 + $0x1a0] sm:$0xf]
  %v636 = vld [vmem:[%s0 + $0x1a4] sm:$0xf]
  %v637 = vld [vmem:[%s0 + $0x1a8] sm:$0xf]
  %v638 = vld [vmem:[%s0 + $0x1ac] sm:$0xf]
  %v639 = vld [vmem:[%s0 + $0x1b0] sm:$0xf]
  %v640 = vld [vmem:[%s0 + $0x1b4] sm:$0xf]
  %v641 = vld [vmem:[%s0 + $0x1b8] sm:$0xf]
  %v642 = vld [vmem:[%s0 + $0x1bc] sm:$0xf]
  %v643 = vld [vmem:[%s0 + $0x1c0] sm:$0xf]
  %v644 = vld [vmem:[%s0 + $0x1c4] sm:$0xf]
  %v645 = vld [vmem:[%s0 + $0x1c8] sm:$0xf]
  %v646 = vld [vmem:[%s0 + $0x1cc] sm:$0xf]
  %v647 = vld [vmem:[%s0 + $0x1d0] sm:$0xf]
  %v648 = vld [vmem:[%s0 + $0x1d4] sm:$0xf]
  %v649 = vld [vmem:[%s0 + $0x1d8] sm:$0xf]
  %v650 = vld [vmem:[%s0 + $0x1dc] sm:$0xf]
  %v651 = vld [vmem:[%s0 + $0x1e0] sm:$0xf]
  %v652 = vld [vmem:[%s0 + $0x1e4] sm:$0xf]
  %v653 = vld [vmem:[%s0 + $0x1e8] sm:$0xf]
  %v654 = vld [vmem:[%s0 + $0x1ec] sm:$0xf]
  %v655 = vld [vmem:[%s0 + $0x1f0] sm:$0xf]
  %v656 = vld [vmem:[%s0 + $0x1f4] sm:$0xf]
  %v657 = vld [vmem:[%s0 + $0x1f8] sm:$0xf]
  %v658 = vld [vmem:[%s0 + $0x1fc] sm:$0xf]
  %v659 = vld [vmem:[%s0 + $0x200] sm:$0xf]
  %v660 = vld [vmem:[%s0 + $0x204] sm:$0xf]
  %v661 = vld [vmem:[%s0 + $0x208] sm:$0xf]
  %v662 = vld [vmem:[%s0 + $0x20c] sm:$0xf]
  %v663 = vld [vmem:[%s0 + $0x210] sm:$0xf]
  %v664 = vld [vmem:[%s0 + $0x214] sm:$0xf]
  %v665 = vld [vmem:[%s0 + $0x218] sm:$0xf]
  %v666 = vld [vmem:[%s0 + $0x21c] sm:$0xf]
  %v667 = vld [vmem:[%s0 + $0x220] sm:$0xf]
  %v668 = vld [vmem:[%s0 + $0x224] sm:$0xf]
  %v669 = vld [vmem:[%s0 + $0x228] sm:$0xf]
  %v670 = vld [vmem:[%s0 + $0x22c] sm:$0xf]
  %v671 = vld [vmem:[%s0 + $0x230] sm:$0xf]
  %v672 = vld [vmem:[%s0 + $0x234] sm:$0xf]
  %v673 = vld [vmem:[%s0 + $0x238] sm:$0xf]
  %v674 = vld [vmem:[%s0 + $0x23c] sm:$0xf]
  %v675 = vld [vmem:[%s0 + $0x240] sm:$0xf]
  %v676 = vld [vmem:[%s0 + $0x244] sm:$0xf]
  %v677 = vld [vmem:[%s0 + $0x248] sm:$0xf]
  %v678 = vld [vmem:[%s0 + $0x24c] sm:$0xf]
  %v679 = vld [vmem:[%s0 + $0x250] sm:$0xf]
  %v680 = vld [vmem:[%s0 + $0x254] sm:$0xf]
  %v681 = vld [vmem:[%s0 + $0x258] sm:$0xf]
  %v682 = vld [vmem:[%s0 + $0x25c] sm:$0xf]
  %v683 = vld [vmem:[%s0 + $0x260] sm:$0xf]
  %v684 = vld [vmem:[%s0 + $0x264] sm:$0xf]
  %v685 = vld [vmem:[%s0 + $0x268] sm:$0xf]
  %v686 = vld [vmem:[%s0 + $0x26c] sm:$0xf]
  %v687 = vld [vmem:[%s0 + $0x270] sm:$0xf]
  %v688 = vld [vmem:[%s0 + $0x274] sm:$0xf]
  %v689 = vld [vmem:[%s0 + $0x278] sm:$0xf]
  %v690 = vld [vmem:[%s0 + $0x27c] sm:$0xf]
  %v691 = vld [vmem:[%s0 + $0x280] sm:$0xf]
  %v692 = vld [vmem:[%s0 + $0x284] sm:$0xf]
  %v693 = vld [vmem:[%s0 + $0x288] sm:$0xf]
  %v694 = vld [vmem:[%s0 + $0x28c] sm:$0xf]
  %v695 = vld [vmem:[%s0 + $0x290] sm:$0xf]
  %v696 = vld [vmem:[%s0 + $0x294] sm:$0xf]
  %v697 = vld [vmem:[%s0 + $0x298] sm:$0xf]
  %v698 = vld [vmem:[%s0 + $0x29c] sm:$0xf]
  %v699 = vld [vmem:[%s0 + $0x2a0] sm:$0xf]
  %v700 = vld [vmem:[%s0 + $0x2a4] sm:$0xf]
  %v701 = vld [vmem:[%s0 + $0x2a8] sm:$0xf]
  %v702 = vld [vmem:[%s0 + $0x2ac] sm:$0xf]
  %v703 = vld [vmem:[%s0 + $0x2b0] sm:$0xf]
  %v704 = vld [vmem:[%s0 + $0x2b4] sm:$0xf]
  %v705 = vld [vmem:[%s0 + $0x2b8] sm:$0xf]
  %v706 = vld [vmem:[%s0 + $0x2bc] sm:$0xf]
  %v707 = vld [vmem:[%s0 + $0x2c0] sm:$0xf]
  %v708 = vld [vmem:[%s0 + $0x2c4] sm:$0xf]
  %v709 = vld [vmem:[%s0 + $0x2c8] sm:$0xf]
  %v710 = vld [vmem:[%s0 + $0x2cc] sm:$0xf]
  %v711 = vld [vmem:[%s0 + $0x2d0] sm:$0xf]
  %v712 = vld [vmem:[%s0 + $0x2d4] sm:$0xf]
  %v713 = vld [vmem:[%s0 + $0x2d8] sm:$0xf]
  %v714 = vld [vmem:[%s0 + $0x2dc] sm:$0xf]
  %v715 = vld [vmem:[%s0 + $0x2e0] sm:$0xf]
  %v716 = vld [vmem:[%s0 + $0x2e4] sm:$0xf]
  %v717 = vld [vmem:[%s0 + $0x2e8] sm:$0xf]
  %v718 = vld [vmem:[%s0 + $0x2ec] sm:$0xf]
  %v719 = vld [vmem:[%s0 + $0x2f0] sm:$0xf]
  %v720 = vld [vmem:[%s0 + $0x2f4] sm:$0xf]
  %v721 = vld [vmem:[%s0 + $0x2f8] sm:$0xf]
  %v722 = vld [vmem:[%s0 + $0x2fc] sm:$0xf]
  %v723 = vld [vmem:[%s0 + $0x300] sm:$0xf]
  %v724 = vld [vmem:[%s0 + $0x304] sm:$0xf]
  %v725 = vld [vmem:[%s0 + $0x308] sm:$0xf]
  %v726 = vld [vmem:[%s0 + $0x30c] sm:$0xf]
  %v727 = vld [vmem:[%s0 + $0x310] sm:$0xf]
  %v728 = vld [vmem:[%s0 + $0x314] sm:$0xf]
  %v729 = vld [vmem:[%s0 + $0x318] sm:$0xf]
  %v730 = vld [vmem:[%s0 + $0x31c] sm:$0xf]
  %v731 = vld [vmem:[%s0 + $0x320] sm:$0xf]
  %v732 = vld [vmem:[%s0 + $0x324] sm:$0xf]
  %v733 = vld [vmem:[%s0 + $0x328] sm:$0xf]
  %v734 = vld [vmem:[%s0 + $0x32c] sm:$0xf]
  %v735 = vld [vmem:[%s0 + $0x330] sm:$0xf]
  %v736 = vld [vmem:[%s0 + $0x334] sm:$0xf]
  %v737 = vld [vmem:[%s0 + $0x338] sm:$0xf]
  %v738 = vld [vmem:[%s0 + $0x33c] sm:$0xf]
  %v739 = vld [vmem:[%s0 + $0x340] sm:$0xf]
  %v740 = vld [vmem:[%s0 + $0x344] sm:$0xf]
  %v741 = vld [vmem:[%s0 + $0x348] sm:$0xf]
  %v742 = vld [vmem:[%s0 + $0x34c] sm:$0xf]
  %v743 = vld [vmem:[%s0 + $0x350] sm:$0xf]
  %v744 = vld [vmem:[%s0 + $0x354] sm:$0xf]
  %v745 = vld [vmem:[%s0 + $0x358] sm:$0xf]
  %v746 = vld [vmem:[%s0 + $0x35c] sm:$0xf]
  %v747 = vld [vmem:[%s0 + $0x360] sm:$0xf]
  %v748 = vld [vmem:[%s0 + $0x364] sm:$0xf]
  %v749 = vld [vmem:[%s0 + $0x368] sm:$0xf]
  %v750 = vld [vmem:[%s0 + $0x36c] sm:$0xf]
  %v751 = vld [vmem:[%s0 + $0x370] sm:$0xf]
  %v752 = vld [vmem:[%s0 + $0x374] sm:$0xf]
  %v753 = vld [vmem:[%s0 + $0x378] sm:$0xf]
  %v754 = vld [vmem:[%s0 + $0x37c] sm:$0xf]
  %v755 = vld [vmem:[%s0 + $0x380] sm:$0xf]
  %v756 = vld [vmem:[%s0 + $0x384] sm:$0xf]
  %v757 = vld [vmem:[%s0 + $0x388] sm:$0xf]
  %v758 = vld [vmem:[%s0 + $0x38c] sm:$0xf]
  %v759 = vld [vmem:[%s0 + $0x390] sm:$0xf]
  %v760 = vld [vmem:[%s0 + $0x394] sm:$0xf]
  %v761 = vld [vmem:[%s0 + $0x398] sm:$0xf]
  %v762 = vld [vmem:[%s0 + $0x39c] sm:$0xf]
  %v763 = vld [vmem:[%s0 + $0x3a0] sm:$0xf]
  %v764 = vld [vmem:[%s0 + $0x3a4] sm:$0xf]
  %v765 = vld [vmem:[%s0 + $0x3a8] sm:$0xf]
  %v766 = vld [vmem:[%s0 + $0x3ac] sm:$0xf]
  %v767 = vld [vmem:[%s0 + $0x3b0] sm:$0xf]
  %v768 = vld [vmem:[%s0 + $0x3b4] sm:$0xf]
  %v769 = vld [vmem:[%s0 + $0x3b8] sm:$0xf]
  %v770 = vld [vmem:[%s0 + $0x3bc] sm:$0xf]
  %v771 = vld [vmem:[%s0 + $0x3c0] sm:$0xf]
  %v772 = vld [vmem:[%s0 + $0x3c4] sm:$0xf]
  %v773 = vld [vmem:[%s0 + $0x3c8] sm:$0xf]
  %v774 = vld [vmem:[%s0 + $0x3cc] sm:$0xf]
  %v775 = vld [vmem:[%s0 + $0x3d0] sm:$0xf]
  %v776 = vld [vmem:[%s0 + $0x3d4] sm:$0xf]
  %v777 = vld [vmem:[%s0 + $0x3d8] sm:$0xf]
  %v778 = vld [vmem:[%s0 + $0x3dc] sm:$0xf]
  %v779 = vld [vmem:[%s0 + $0x3e0] sm:$0xf]
  %v780 = vld [vmem:[%s0 + $0x3e4] sm:$0xf]
  %v781 = vld [vmem:[%s0 + $0x3e8] sm:$0xf]
  %v782 = vld [vmem:[%s0 + $0x3ec] sm:$0xf]
  %v783 = vld [vmem:[%s0 + $0x3f0] sm:$0xf]
  %v784 = vld [vmem:[%s0 + $0x3f4] sm:$0xf]
  %v785 = vld [vmem:[%s0 + $0x3f8] sm:$0xf]
  %v786 = vld [vmem:[%s0 + $0x3fc] sm:$0xf]
  %v787 = vld [vmem:[%s1] sm:$0xf]
  %v788 = vld [vmem:[%s1 + $0x4] sm:$0xf]
  %v789 = vld [vmem:[%s1 + $0x8] sm:$0xf]
  %v790 = vld [vmem:[%s1 + $0xc] sm:$0xf]
  %v791 = vld [vmem:[%s1 + $0x10] sm:$0xf]
  %v792 = vld [vmem:[%s1 + $0x14] sm:$0xf]
  %v1049 = vunpack.c.l.b16 %v531
  %v1050 = vunpack.c.l.b16 %v532
  %v1051 = vunpack.c.l.b16 %v533
  %v1052 = vunpack.c.l.b16 %v534
  %v1053 = vunpack.c.l.b16 %v535
  %v1054 = vunpack.c.l.b16 %v536
  %v1055 = vunpack.c.l.b16 %v537
  %v1056 = vunpack.c.l.b16 %v538
  %v1057 = vunpack.c.l.b16 %v539
  %v1058 = vunpack.c.l.b16 %v540
  %v1059 = vunpack.c.l.b16 %v541
  %v1060 = vunpack.c.l.b16 %v542
  %v1061 = vunpack.c.l.b16 %v543
  %v1062 = vunpack.c.l.b16 %v544
  %v1063 = vunpack.c.l.b16 %v545
  %v1064 = vunpack.c.l.b16 %v546
  %v1065 = vunpack.c.l.b16 %v547
  %v1066 = vunpack.c.l.b16 %v548
  %v1067 = vunpack.c.l.b16 %v549
  %v1068 = vunpack.c.l.b16 %v550
  %v1069 = vunpack.c.l.b16 %v551
  %v1070 = vunpack.c.l.b16 %v552
  %v1071 = vunpack.c.l.b16 %v553
  %v1072 = vunpack.c.l.b16 %v554
  %v1073 = vunpack.c.l.b16 %v555
  %v1074 = vunpack.c.l.b16 %v556
  %v1075 = vunpack.c.l.b16 %v557
  %v1076 = vunpack.c.l.b16 %v558
  %v1077 = vunpack.c.l.b16 %v559
  %v1078 = vunpack.c.l.b16 %v560
  %v1079 = vunpack.c.l.b16 %v561
  %v1080 = vunpack.c.l.b16 %v562
  %v1081 = vunpack.c.l.b16 %v563
  %v1082 = vunpack.c.l.b16 %v564
  %v1083 = vunpack.c.l.b16 %v565
  %v1084 = vunpack.c.l.b16 %v566
  %v1085 = vunpack.c.l.b16 %v567
  %v1086 = vunpack.c.l.b16 %v568
  %v1087 = vunpack.c.l.b16 %v569
  %v1088 = vunpack.c.l.b16 %v570
  %v1089 = vunpack.c.l.b16 %v571
  %v1090 = vunpack.c.l.b16 %v572
  %v1091 = vunpack.c.l.b16 %v573
  %v1092 = vunpack.c.l.b16 %v574
  %v1093 = vunpack.c.l.b16 %v575
  %v1094 = vunpack.c.l.b16 %v576
  %v1095 = vunpack.c.l.b16 %v577
  %v1096 = vunpack.c.l.b16 %v578
  %v1097 = vunpack.c.l.b16 %v579
  %v1098 = vunpack.c.l.b16 %v580
  %v1099 = vunpack.c.l.b16 %v581
  %v1100 = vunpack.c.l.b16 %v582
  %v1101 = vunpack.c.l.b16 %v583
  %v1102 = vunpack.c.l.b16 %v584
  %v1103 = vunpack.c.l.b16 %v585
  %v1104 = vunpack.c.l.b16 %v586
  %v1105 = vunpack.c.l.b16 %v587
  %v1106 = vunpack.c.l.b16 %v588
  %v1107 = vunpack.c.l.b16 %v589
  %v1108 = vunpack.c.l.b16 %v590
  %v1109 = vunpack.c.l.b16 %v591
  %v1110 = vunpack.c.l.b16 %v592
  %v1111 = vunpack.c.l.b16 %v593
  %v1112 = vunpack.c.l.b16 %v594
  %v1113 = vunpack.c.l.b16 %v595
  %v1114 = vunpack.c.l.b16 %v596
  %v1115 = vunpack.c.l.b16 %v597
  %v1116 = vunpack.c.l.b16 %v598
  %v1117 = vunpack.c.l.b16 %v599
  %v1118 = vunpack.c.l.b16 %v600
  %v1119 = vunpack.c.l.b16 %v601
  %v1120 = vunpack.c.l.b16 %v602
  %v1121 = vunpack.c.l.b16 %v603
  %v1122 = vunpack.c.l.b16 %v604
  %v1123 = vunpack.c.l.b16 %v605
  %v1124 = vunpack.c.l.b16 %v606
  %v1125 = vunpack.c.l.b16 %v607
  %v1126 = vunpack.c.l.b16 %v608
  %v1127 = vunpack.c.l.b16 %v609
  %v1128 = vunpack.c.l.b16 %v610
  %v1129 = vunpack.c.l.b16 %v611
  %v1130 = vunpack.c.l.b16 %v612
  %v1131 = vunpack.c.l.b16 %v613
  %v1132 = vunpack.c.l.b16 %v614
  %v1133 = vunpack.c.l.b16 %v615
  %v1134 = vunpack.c.l.b16 %v616
  %v1135 = vunpack.c.l.b16 %v617
  %v1136 = vunpack.c.l.b16 %v618
  %v1137 = vunpack.c.l.b16 %v619
  %v1138 = vunpack.c.l.b16 %v620
  %v1139 = vunpack.c.l.b16 %v621
  %v1140 = vunpack.c.l.b16 %v622
  %v1141 = vunpack.c.l.b16 %v623
  %v1142 = vunpack.c.l.b16 %v624
  %v1143 = vunpack.c.l.b16 %v625
  %v1144 = vunpack.c.l.b16 %v626
  %v1145 = vunpack.c.l.b16 %v627
  %v1146 = vunpack.c.l.b16 %v628
  %v1147 = vunpack.c.l.b16 %v629
  %v1148 = vunpack.c.l.b16 %v630
  %v1149 = vunpack.c.l.b16 %v631
  %v1150 = vunpack.c.l.b16 %v632
  %v1151 = vunpack.c.l.b16 %v633
  %v1152 = vunpack.c.l.b16 %v634
  %v1153 = vunpack.c.l.b16 %v635
  %v1154 = vunpack.c.l.b16 %v636
  %v1155 = vunpack.c.l.b16 %v637
  %v1156 = vunpack.c.l.b16 %v638
  %v1157 = vunpack.c.l.b16 %v639
  %v1158 = vunpack.c.l.b16 %v640
  %v1159 = vunpack.c.l.b16 %v641
  %v1160 = vunpack.c.l.b16 %v642
  %v1161 = vunpack.c.l.b16 %v643
  %v1162 = vunpack.c.l.b16 %v644
  %v1163 = vunpack.c.l.b16 %v645
  %v1164 = vunpack.c.l.b16 %v646
  %v1165 = vunpack.c.l.b16 %v647
  %v1166 = vunpack.c.l.b16 %v648
  %v1167 = vunpack.c.l.b16 %v649
  %v1168 = vunpack.c.l.b16 %v650
  %v1169 = vunpack.c.l.b16 %v651
  %v1170 = vunpack.c.l.b16 %v652
  %v1171 = vunpack.c.l.b16 %v653
  %v1172 = vunpack.c.l.b16 %v654
  %v1173 = vunpack.c.l.b16 %v655
  %v1174 = vunpack.c.l.b16 %v656
  %v1175 = vunpack.c.l.b16 %v657
  %v1176 = vunpack.c.l.b16 %v658
  %v1177 = vunpack.c.l.b16 %v659
  %v1178 = vunpack.c.l.b16 %v660
  %v1179 = vunpack.c.l.b16 %v661
  %v1180 = vunpack.c.l.b16 %v662
  %v1181 = vunpack.c.l.b16 %v663
  %v1182 = vunpack.c.l.b16 %v664
  %v1183 = vunpack.c.l.b16 %v665
  %v1184 = vunpack.c.l.b16 %v666
  %v1185 = vunpack.c.l.b16 %v667
  %v1186 = vunpack.c.l.b16 %v668
  %v1187 = vunpack.c.l.b16 %v669
  %v1188 = vunpack.c.l.b16 %v670
  %v1189 = vunpack.c.l.b16 %v671
  %v1190 = vunpack.c.l.b16 %v672
  %v1191 = vunpack.c.l.b16 %v673
  %v1192 = vunpack.c.l.b16 %v674
  %v1193 = vunpack.c.l.b16 %v675
  %v1194 = vunpack.c.l.b16 %v676
  %v1195 = vunpack.c.l.b16 %v677
  %v1196 = vunpack.c.l.b16 %v678
  %v1197 = vunpack.c.l.b16 %v679
  %v1198 = vunpack.c.l.b16 %v680
  %v1199 = vunpack.c.l.b16 %v681
  %v1200 = vunpack.c.l.b16 %v682
  %v1201 = vunpack.c.l.b16 %v683
  %v1202 = vunpack.c.l.b16 %v684
  %v1203 = vunpack.c.l.b16 %v685
  %v1204 = vunpack.c.l.b16 %v686
  %v1205 = vunpack.c.l.b16 %v687
  %v1206 = vunpack.c.l.b16 %v688
  %v1207 = vunpack.c.l.b16 %v689
  %v1208 = vunpack.c.l.b16 %v690
  %v1209 = vunpack.c.l.b16 %v691
  %v1210 = vunpack.c.l.b16 %v692
  %v1211 = vunpack.c.l.b16 %v693
  %v1212 = vunpack.c.l.b16 %v694
  %v1213 = vunpack.c.l.b16 %v695
  %v1214 = vunpack.c.l.b16 %v696
  %v1215 = vunpack.c.l.b16 %v697
  %v1216 = vunpack.c.l.b16 %v698
  %v1217 = vunpack.c.l.b16 %v699
  %v1218 = vunpack.c.l.b16 %v700
  %v1219 = vunpack.c.l.b16 %v701
  %v1220 = vunpack.c.l.b16 %v702
  %v1221 = vunpack.c.l.b16 %v703
  %v1222 = vunpack.c.l.b16 %v704
  %v1223 = vunpack.c.l.b16 %v705
  %v1224 = vunpack.c.l.b16 %v706
  %v1225 = vunpack.c.l.b16 %v707
  %v1226 = vunpack.c.l.b16 %v708
  %v1227 = vunpack.c.l.b16 %v709
  %v1228 = vunpack.c.l.b16 %v710
  %v1229 = vunpack.c.l.b16 %v711
  %v1230 = vunpack.c.l.b16 %v712
  %v1231 = vunpack.c.l.b16 %v713
  %v1232 = vunpack.c.l.b16 %v714
  %v1233 = vunpack.c.l.b16 %v715
  %v1234 = vunpack.c.l.b16 %v716
  %v1235 = vunpack.c.l.b16 %v717
  %v1236 = vunpack.c.l.b16 %v718
  %v1237 = vunpack.c.l.b16 %v719
  %v1238 = vunpack.c.l.b16 %v720
  %v1239 = vunpack.c.l.b16 %v721
  %v1240 = vunpack.c.l.b16 %v722
  %v1241 = vunpack.c.l.b16 %v723
  %v1242 = vunpack.c.l.b16 %v724
  %v1243 = vunpack.c.l.b16 %v725
  %v1244 = vunpack.c.l.b16 %v726
  %v1245 = vunpack.c.l.b16 %v727
  %v1246 = vunpack.c.l.b16 %v728
  %v1247 = vunpack.c.l.b16 %v729
  %v1248 = vunpack.c.l.b16 %v730
  %v1249 = vunpack.c.l.b16 %v731
  %v1250 = vunpack.c.l.b16 %v732
  %v1251 = vunpack.c.l.b16 %v733
  %v1252 = vunpack.c.l.b16 %v734
  %v1253 = vunpack.c.l.b16 %v735
  %v1254 = vunpack.c.l.b16 %v736
  %v1255 = vunpack.c.l.b16 %v737
  %v1256 = vunpack.c.l.b16 %v738
  %v1257 = vunpack.c.l.b16 %v739
  %v1258 = vunpack.c.l.b16 %v740
  %v1259 = vunpack.c.l.b16 %v741
  %v1260 = vunpack.c.l.b16 %v742
  %v1261 = vunpack.c.l.b16 %v743
  %v1262 = vunpack.c.l.b16 %v744
  %v1263 = vunpack.c.l.b16 %v745
  %v1264 = vunpack.c.l.b16 %v746
  %v1265 = vunpack.c.l.b16 %v747
  %v1266 = vunpack.c.l.b16 %v748
  %v1267 = vunpack.c.l.b16 %v749
  %v1268 = vunpack.c.l.b16 %v750
  %v1269 = vunpack.c.l.b16 %v751
  %v1270 = vunpack.c.l.b16 %v752
  %v1271 = vunpack.c.l.b16 %v753
  %v1272 = vunpack.c.l.b16 %v754
  %v1273 = vunpack.c.l.b16 %v755
  %v1274 = vunpack.c.l.b16 %v756
  %v1275 = vunpack.c.l.b16 %v757
  %v1276 = vunpack.c.l.b16 %v758
  %v1277 = vunpack.c.l.b16 %v759
  %v1278 = vunpack.c.l.b16 %v760
  %v1279 = vunpack.c.l.b16 %v761
  %v1280 = vunpack.c.l.b16 %v762
  %v1281 = vunpack.c.l.b16 %v763
  %v1282 = vunpack.c.l.b16 %v764
  %v1283 = vunpack.c.l.b16 %v765
  %v1284 = vunpack.c.l.b16 %v766
  %v1285 = vunpack.c.l.b16 %v767
  %v1286 = vunpack.c.l.b16 %v768
  %v1287 = vunpack.c.l.b16 %v769
  %v1288 = vunpack.c.l.b16 %v770
  %v1289 = vunpack.c.l.b16 %v771
  %v1290 = vunpack.c.l.b16 %v772
  %v1291 = vunpack.c.l.b16 %v773
  %v1292 = vunpack.c.l.b16 %v774
  %v1293 = vunpack.c.l.b16 %v775
  %v1294 = vunpack.c.l.b16 %v776
  %v1295 = vunpack.c.l.b16 %v777
  %v1296 = vunpack.c.l.b16 %v778
  %v1297 = vunpack.c.l.b16 %v779
  %v1298 = vunpack.c.l.b16 %v780
  %v1299 = vunpack.c.l.b16 %v781
  %v1300 = vunpack.c.l.b16 %v782
  %v1301 = vunpack.c.l.b16 %v783
  %v1302 = vunpack.c.l.b16 %v784
  %v1303 = vunpack.c.l.b16 %v785
  %v1304 = vunpack.c.l.b16 %v786
  %v1305 = vpack.c.b16 %v1050, %v1049
  %v1306 = vpack.c.b16 %v1052, %v1051
  %v1307 = vpack.c.b16 %v1054, %v1053
  %v1308 = vpack.c.b16 %v1056, %v1055
  %v1309 = vpack.c.b16 %v1058, %v1057
  %v1310 = vpack.c.b16 %v1060, %v1059
  %v1311 = vpack.c.b16 %v1062, %v1061
  %v1312 = vpack.c.b16 %v1064, %v1063
  %v1313 = vpack.c.b16 %v1066, %v1065
  %v1314 = vpack.c.b16 %v1068, %v1067
  %v1315 = vpack.c.b16 %v1070, %v1069
  %v1316 = vpack.c.b16 %v1072, %v1071
  %v1317 = vpack.c.b16 %v1074, %v1073
  %v1318 = vpack.c.b16 %v1076, %v1075
  %v1319 = vpack.c.b16 %v1078, %v1077
  %v1320 = vpack.c.b16 %v1080, %v1079
  %v1321 = vpack.c.b16 %v1082, %v1081
  %v1322 = vpack.c.b16 %v1084, %v1083
  %v1323 = vpack.c.b16 %v1086, %v1085
  %v1324 = vpack.c.b16 %v1088, %v1087
  %v1325 = vpack.c.b16 %v1090, %v1089
  %v1326 = vpack.c.b16 %v1092, %v1091
  %v1327 = vpack.c.b16 %v1094, %v1093
  %v1328 = vpack.c.b16 %v1096, %v1095
  %v1329 = vpack.c.b16 %v1098, %v1097
  %v1330 = vpack.c.b16 %v1100, %v1099
  %v1331 = vpack.c.b16 %v1102, %v1101
  %v1332 = vpack.c.b16 %v1104, %v1103
  %v1333 = vpack.c.b16 %v1106, %v1105
  %v1334 = vpack.c.b16 %v1108, %v1107
  %v1335 = vpack.c.b16 %v1110, %v1109
  %v1336 = vpack.c.b16 %v1112, %v1111
  %v1337 = vpack.c.b16 %v1114, %v1113
  %v1338 = vpack.c.b16 %v1116, %v1115
  %v1339 = vpack.c.b16 %v1118, %v1117
  %v1340 = vpack.c.b16 %v1120, %v1119
  %v1341 = vpack.c.b16 %v1122, %v1121
  %v1342 = vpack.c.b16 %v1124, %v1123
  %v1343 = vpack.c.b16 %v1126, %v1125
  %v1344 = vpack.c.b16 %v1128, %v1127
  %v1345 = vpack.c.b16 %v1130, %v1129
  %v1346 = vpack.c.b16 %v1132, %v1131
  %v1347 = vpack.c.b16 %v1134, %v1133
  %v1348 = vpack.c.b16 %v1136, %v1135
  %v1349 = vpack.c.b16 %v1138, %v1137
  %v1350 = vpack.c.b16 %v1140, %v1139
  %v1351 = vpack.c.b16 %v1142, %v1141
  %v1352 = vpack.c.b16 %v1144, %v1143
  %v1353 = vpack.c.b16 %v1146, %v1145
  %v1354 = vpack.c.b16 %v1148, %v1147
  %v1355 = vpack.c.b16 %v1150, %v1149
  %v1356 = vpack.c.b16 %v1152, %v1151
  %v1357 = vpack.c.b16 %v1154, %v1153
  %v1358 = vpack.c.b16 %v1156, %v1155
  %v1359 = vpack.c.b16 %v1158, %v1157
  %v1360 = vpack.c.b16 %v1160, %v1159
  %v1361 = vpack.c.b16 %v1162, %v1161
  %v1362 = vpack.c.b16 %v1164, %v1163
  %v1363 = vpack.c.b16 %v1166, %v1165
  %v1364 = vpack.c.b16 %v1168, %v1167
  %v1365 = vpack.c.b16 %v1170, %v1169
  %v1366 = vpack.c.b16 %v1172, %v1171
  %v1367 = vpack.c.b16 %v1174, %v1173
  %v1368 = vpack.c.b16 %v1176, %v1175
  %v1369 = vpack.c.b16 %v1178, %v1177
  %v1370 = vpack.c.b16 %v1180, %v1179
  %v1371 = vpack.c.b16 %v1182, %v1181
  %v1372 = vpack.c.b16 %v1184, %v1183
  %v1373 = vpack.c.b16 %v1186, %v1185
  %v1374 = vpack.c.b16 %v1188, %v1187
  %v1375 = vpack.c.b16 %v1190, %v1189
  %v1376 = vpack.c.b16 %v1192, %v1191
  %v1377 = vpack.c.b16 %v1194, %v1193
  %v1378 = vpack.c.b16 %v1196, %v1195
  %v1379 = vpack.c.b16 %v1198, %v1197
  %v1380 = vpack.c.b16 %v1200, %v1199
  %v1381 = vpack.c.b16 %v1202, %v1201
  %v1382 = vpack.c.b16 %v1204, %v1203
  %v1383 = vpack.c.b16 %v1206, %v1205
  %v1384 = vpack.c.b16 %v1208, %v1207
  %v1385 = vpack.c.b16 %v1210, %v1209
  %v1386 = vpack.c.b16 %v1212, %v1211
  %v1387 = vpack.c.b16 %v1214, %v1213
  %v1388 = vpack.c.b16 %v1216, %v1215
  %v1389 = vpack.c.b16 %v1218, %v1217
  %v1390 = vpack.c.b16 %v1220, %v1219
  %v1391 = vpack.c.b16 %v1222, %v1221
  %v1392 = vpack.c.b16 %v1224, %v1223
  %v1393 = vpack.c.b16 %v1226, %v1225
  %v1394 = vpack.c.b16 %v1228, %v1227
  %v1395 = vpack.c.b16 %v1230, %v1229
  %v1396 = vpack.c.b16 %v1232, %v1231
  %v1397 = vpack.c.b16 %v1234, %v1233
  %v1398 = vpack.c.b16 %v1236, %v1235
  %v1399 = vpack.c.b16 %v1238, %v1237
  %v1400 = vpack.c.b16 %v1240, %v1239
  %v1401 = vpack.c.b16 %v1242, %v1241
  %v1402 = vpack.c.b16 %v1244, %v1243
  %v1403 = vpack.c.b16 %v1246, %v1245
  %v1404 = vpack.c.b16 %v1248, %v1247
  %v1405 = vpack.c.b16 %v1250, %v1249
  %v1406 = vpack.c.b16 %v1252, %v1251
  %v1407 = vpack.c.b16 %v1254, %v1253
  %v1408 = vpack.c.b16 %v1256, %v1255
  %v1409 = vpack.c.b16 %v1258, %v1257
  %v1410 = vpack.c.b16 %v1260, %v1259
  %v1411 = vpack.c.b16 %v1262, %v1261
  %v1412 = vpack.c.b16 %v1264, %v1263
  %v1413 = vpack.c.b16 %v1266, %v1265
  %v1414 = vpack.c.b16 %v1268, %v1267
  %v1415 = vpack.c.b16 %v1270, %v1269
  %v1416 = vpack.c.b16 %v1272, %v1271
  %v1417 = vpack.c.b16 %v1274, %v1273
  %v1418 = vpack.c.b16 %v1276, %v1275
  %v1419 = vpack.c.b16 %v1278, %v1277
  %v1420 = vpack.c.b16 %v1280, %v1279
  %v1421 = vpack.c.b16 %v1282, %v1281
  %v1422 = vpack.c.b16 %v1284, %v1283
  %v1423 = vpack.c.b16 %v1286, %v1285
  %v1424 = vpack.c.b16 %v1288, %v1287
  %v1425 = vpack.c.b16 %v1290, %v1289
  %v1426 = vpack.c.b16 %v1292, %v1291
  %v1427 = vpack.c.b16 %v1294, %v1293
  %v1428 = vpack.c.b16 %v1296, %v1295
  %v1429 = vpack.c.b16 %v1298, %v1297
  %v1430 = vpack.c.b16 %v1300, %v1299
  %v1431 = vpack.c.b16 %v1302, %v1301
  %v1432 = vpack.c.b16 %v1304, %v1303
  %v1439 = vunpack.c.l.b16 %v787
  %v1440 = vunpack.c.l.b16 %v788
  %v1441 = vunpack.c.l.b16 %v789
  %v1442 = vunpack.c.l.b16 %v790
  %v1443 = vunpack.c.l.b16 %v791
  %v1444 = vunpack.c.l.b16 %v792
  %v1445 = vpack.c.b16 %v1440, %v1439
  %v1446 = vpack.c.b16 %v1442, %v1441
  %v1447 = vpack.c.b16 %v1444, %v1443
  %vm1451 = vcmask 392192
  %v1453 = vsel %vm1451, %v1305, 0
  %v1456 = vsel %vm1451, %v1306, 0
  %v1459 = vsel %vm1451, %v1307, 0
  %v1462 = vsel %vm1451, %v1308, 0
  %v1465 = vsel %vm1451, %v1309, 0
  %v1468 = vsel %vm1451, %v1310, 0
  %v1471 = vsel %vm1451, %v1311, 0
  %v1474 = vsel %vm1451, %v1312, 0
  %v1477 = vsel %vm1451, %v1313, 0
  %v1480 = vsel %vm1451, %v1314, 0
  %v1483 = vsel %vm1451, %v1315, 0
  %v1486 = vsel %vm1451, %v1316, 0
  %v1489 = vsel %vm1451, %v1317, 0
  %v1492 = vsel %vm1451, %v1318, 0
  %v1495 = vsel %vm1451, %v1319, 0
  %v1498 = vsel %vm1451, %v1320, 0
  %v1501 = vsel %vm1451, %v1321, 0
  %v1504 = vsel %vm1451, %v1322, 0
  %v1507 = vsel %vm1451, %v1323, 0
  %v1510 = vsel %vm1451, %v1324, 0
  %v1513 = vsel %vm1451, %v1325, 0
  %v1516 = vsel %vm1451, %v1326, 0
  %v1519 = vsel %vm1451, %v1327, 0
  %v1522 = vsel %vm1451, %v1328, 0
  %v1525 = vsel %vm1451, %v1329, 0
  %v1528 = vsel %vm1451, %v1330, 0
  %v1531 = vsel %vm1451, %v1331, 0
  %v1534 = vsel %vm1451, %v1332, 0
  %v1537 = vsel %vm1451, %v1333, 0
  %v1540 = vsel %vm1451, %v1334, 0
  %v1543 = vsel %vm1451, %v1335, 0
  %v1546 = vsel %vm1451, %v1336, 0
  %v1549 = vsel %vm1451, %v1337, 0
  %v1552 = vsel %vm1451, %v1338, 0
  %v1555 = vsel %vm1451, %v1339, 0
  %v1558 = vsel %vm1451, %v1340, 0
  %v1561 = vsel %vm1451, %v1341, 0
  %v1564 = vsel %vm1451, %v1342, 0
  %v1567 = vsel %vm1451, %v1343, 0
  %v1570 = vsel %vm1451, %v1344, 0
  %v1573 = vsel %vm1451, %v1345, 0
  %v1576 = vsel %vm1451, %v1346, 0
  %v1579 = vsel %vm1451, %v1347, 0
  %v1582 = vsel %vm1451, %v1348, 0
  %v1585 = vsel %vm1451, %v1349, 0
  %v1588 = vsel %vm1451, %v1350, 0
  %v1591 = vsel %vm1451, %v1351, 0
  %v1594 = vsel %vm1451, %v1352, 0
  %v1597 = vsel %vm1451, %v1353, 0
  %v1600 = vsel %vm1451, %v1354, 0
  %v1603 = vsel %vm1451, %v1355, 0
  %v1606 = vsel %vm1451, %v1356, 0
  %v1609 = vsel %vm1451, %v1357, 0
  %v1612 = vsel %vm1451, %v1358, 0
  %v1615 = vsel %vm1451, %v1359, 0
  %v1618 = vsel %vm1451, %v1360, 0
  %v1621 = vsel %vm1451, %v1361, 0
  %v1624 = vsel %vm1451, %v1362, 0
  %v1627 = vsel %vm1451, %v1363, 0
  %v1630 = vsel %vm1451, %v1364, 0
  %v1633 = vsel %vm1451, %v1365, 0
  %v1636 = vsel %vm1451, %v1366, 0
  %v1639 = vsel %vm1451, %v1367, 0
  %v1642 = vsel %vm1451, %v1368, 0
  %v1645 = vsel %vm1451, %v1369, 0
  %v1648 = vsel %vm1451, %v1370, 0
  %v1651 = vsel %vm1451, %v1371, 0
  %v1654 = vsel %vm1451, %v1372, 0
  %v1657 = vsel %vm1451, %v1373, 0
  %v1660 = vsel %vm1451, %v1374, 0
  %v1663 = vsel %vm1451, %v1375, 0
  %v1666 = vsel %vm1451, %v1376, 0
  %v1669 = vsel %vm1451, %v1377, 0
  %v1672 = vsel %vm1451, %v1378, 0
  %v1675 = vsel %vm1451, %v1379, 0
  %v1678 = vsel %vm1451, %v1380, 0
  %v1681 = vsel %vm1451, %v1381, 0
  %v1684 = vsel %vm1451, %v1382, 0
  %v1687 = vsel %vm1451, %v1383, 0
  %v1690 = vsel %vm1451, %v1384, 0
  %v1693 = vsel %vm1451, %v1385, 0
  %v1696 = vsel %vm1451, %v1386, 0
  %v1699 = vsel %vm1451, %v1387, 0
  %v1702 = vsel %vm1451, %v1388, 0
  %v1705 = vsel %vm1451, %v1389, 0
  %v1708 = vsel %vm1451, %v1390, 0
  %v1711 = vsel %vm1451, %v1391, 0
  %v1714 = vsel %vm1451, %v1392, 0
  %v1717 = vsel %vm1451, %v1393, 0
  %v1720 = vsel %vm1451, %v1394, 0
  %v1723 = vsel %vm1451, %v1395, 0
  %v1726 = vsel %vm1451, %v1396, 0
  %v1729 = vsel %vm1451, %v1397, 0
  %v1732 = vsel %vm1451, %v1398, 0
  %v1735 = vsel %vm1451, %v1399, 0
  %v1738 = vsel %vm1451, %v1400, 0
  %v1741 = vsel %vm1451, %v1401, 0
  %v1744 = vsel %vm1451, %v1402, 0
  %v1747 = vsel %vm1451, %v1403, 0
  %v1750 = vsel %vm1451, %v1404, 0
  %v1753 = vsel %vm1451, %v1405, 0
  %v1756 = vsel %vm1451, %v1406, 0
  %v1759 = vsel %vm1451, %v1407, 0
  %v1762 = vsel %vm1451, %v1408, 0
  %v1765 = vsel %vm1451, %v1409, 0
  %v1768 = vsel %vm1451, %v1410, 0
  %v1771 = vsel %vm1451, %v1411, 0
  %v1774 = vsel %vm1451, %v1412, 0
  %v1777 = vsel %vm1451, %v1413, 0
  %v1780 = vsel %vm1451, %v1414, 0
  %v1783 = vsel %vm1451, %v1415, 0
  %v1786 = vsel %vm1451, %v1416, 0
  %v1789 = vsel %vm1451, %v1417, 0
  %v1792 = vsel %vm1451, %v1418, 0
  %v1795 = vsel %vm1451, %v1419, 0
  %v1798 = vsel %vm1451, %v1420, 0
  %v1801 = vsel %vm1451, %v1421, 0
  %v1804 = vsel %vm1451, %v1422, 0
  %v1807 = vsel %vm1451, %v1423, 0
  %v1810 = vsel %vm1451, %v1424, 0
  %v1813 = vsel %vm1451, %v1425, 0
  %v1816 = vsel %vm1451, %v1426, 0
  %v1819 = vsel %vm1451, %v1427, 0
  %v1822 = vsel %vm1451, %v1428, 0
  %v1825 = vsel %vm1451, %v1429, 0
  %v1828 = vsel %vm1451, %v1430, 0
  %v1831 = vsel %vm1451, %v1431, 0
  %v1834 = vsel %vm1451, %v1432, 0
  %1836 = vmatprep.subr.bf16.mxu0 0
  %1837 = vmatpush1.bf16.msra.mxu0 %v1445
  %1838 = vmatprep.subr.bf16.mxu0 0
  %1839 = vmatpush1.bf16.msra.mxu0 %v1446
  %1840 = vmatprep.subr.bf16.mxu0 0
  %1841 = vmatpush1.bf16.msra.mxu0 %v1447
  %1842 = vmatprep.subr.bf16.mxu0 0
  %1843 = vmatpush1.bf16.msra.mxu0 0
  %1844 = vmatprep.subr.bf16.mxu0 0
  %1845 = vmatpush1.bf16.msra.mxu0 0
  %1846 = vmatprep.subr.bf16.mxu0 0
  %1847 = vmatpush1.bf16.msra.mxu0 0
  %1848 = vmatprep.subr.bf16.mxu0 0
  %1849 = vmatpush1.bf16.msra.mxu0 0
  %1850 = vmatprep.subr.bf16.mxu0 0
  %1851 = vmatpush1.bf16.msra.mxu0 0
  %1852 = vmatprep.subr.bf16.mxu0 0
  %1853 = vmatpush1.bf16.msra.mxu0 0
  %1854 = vmatprep.subr.bf16.mxu0 0
  %1855 = vmatpush1.bf16.msra.mxu0 0
  %1856 = vmatprep.subr.bf16.mxu0 0
  %1857 = vmatpush1.bf16.msra.mxu0 0
  %1858 = vmatprep.subr.bf16.mxu0 0
  %1859 = vmatpush1.bf16.msra.mxu0 0
  %1860 = vmatprep.subr.bf16.mxu0 0
  %1861 = vmatpush1.bf16.msra.mxu0 0
  %1862 = vmatprep.subr.bf16.mxu0 0
  %1863 = vmatpush1.bf16.msra.mxu0 0
  %1864 = vmatprep.subr.bf16.mxu0 0
  %1865 = vmatpush1.bf16.msra.mxu0 0
  %1866 = vmatprep.subr.bf16.mxu0 0
  %1867 = vmatpush1.bf16.msra.mxu0 0
  %1868 = vmatprep.mubr.bf16.mxu0 0
  %1869 = vmatmul.mubr.bf16.gmra.mrb[0].mxu0 %v1453
  %v1870 = vpop.f32.mrb[0].mxu0
  %v1871 = vadd.f32 0.0, %v1870
  %v1872 = vpop.f32.mrb[0].mxu0
  %v1873 = vpop.f32.mrb[0].mxu0
  %v1874 = vadd.f32 0.0, %v1873
  %v1875 = vpop.f32.mrb[0].mxu0
  %1876 = vmatprep.mubr.bf16.mxu0 0
  %1877 = vmatmul.mubr.bf16.gmra.mrb[0].mxu0 %v1456
  %v1878 = vpop.f32.mrb[0].mxu0
  %v1879 = vadd.f32 0.0, %v1878
  %v1880 = vpop.f32.mrb[0].mxu0
  %v1881 = vpop.f32.mrb[0].mxu0
  %v1882 = vadd.f32 0.0, %v1881
  %v1883 = vpop.f32.mrb[0].mxu0
  %1884 = vmatprep.mubr.bf16.mxu0 0
  %1885 = vmatmul.mubr.bf16.gmra.mrb[0].mxu0 %v1459
  %v1886 = vpop.f32.mrb[0].mxu0
  %v1887 = vadd.f32 0.0, %v1886
  %v1888 = vpop.f32.mrb[0].mxu0
  %v1889 = vpop.f32.mrb[0].mxu0
  %v1890 = vadd.f32 0.0, %v1889
  %v1891 = vpop.f32.mrb[0].mxu0
  %1892 = vmatprep.mubr.bf16.mxu0 0
  %1893 = vmatmul.mubr.bf16.gmra.mrb[0].mxu0 %v1462
  %v1894 = vpop.f32.mrb[0].mxu0
  %v1895 = vadd.f32 0.0, %v1894
  %v1896 = vpop.f32.mrb[0].mxu0
  %v1897 = vpop.f32.mrb[0].mxu0
  %v1898 = vadd.f32 0.0, %v1897
  %v1899 = vpop.f32.mrb[0].mxu0
  %1900 = vmatprep.mubr.bf16.mxu0 0
  %1901 = vmatmul.mubr.bf16.gmra.mrb[0].mxu0 %v1465
  %v1902 = vpop.f32.mrb[0].mxu0
  %v1903 = vadd.f32 0.0, %v1902
  %v1904 = vpop.f32.mrb[0].mxu0
  %v1905 = vpop.f32.mrb[0].mxu0
  %v1906 = vadd.f32 0.0, %v1905
  %v1907 = vpop.f32.mrb[0].mxu0
  %1908 = vmatprep.mubr.bf16.mxu0 0
  %1909 = vmatmul.mubr.bf16.gmra.mrb[0].mxu0 %v1468
  %v1910 = vpop.f32.mrb[0].mxu0
  %v1911 = vadd.f32 0.0, %v1910
  %v1912 = vpop.f32.mrb[0].mxu0
  %v1913 = vpop.f32.mrb[0].mxu0
  %v1914 = vadd.f32 0.0, %v1913
  %v1915 = vpop.f32.mrb[0].mxu0
  %1916 = vmatprep.mubr.bf16.mxu0 0
  %1917 = vmatmul.mubr.bf16.gmra.mrb[0].mxu0 %v1471
  %v1918 = vpop.f32.mrb[0].mxu0
  %v1919 = vadd.f32 0.0, %v1918
  %v1920 = vpop.f32.mrb[0].mxu0
  %v1921 = vpop.f32.mrb[0].mxu0
  %v1922 = vadd.f32 0.0, %v1921
  %v1923 = vpop.f32.mrb[0].mxu0
  %1924 = vmatprep.mubr.bf16.mxu0 0
  %1925 = vmatmul.mubr.bf16.gmra.mrb[0].mxu0 %v1474
  %v1926 = vpop.f32.mrb[0].mxu0
  %v1927 = vadd.f32 0.0, %v1926
  %v1928 = vpop.f32.mrb[0].mxu0
  %v1929 = vpop.f32.mrb[0].mxu0
  %v1930 = vadd.f32 0.0, %v1929
  %v1931 = vpop.f32.mrb[0].mxu0
  %1932 = vmatprep.mubr.bf16.mxu0 0
  %1933 = vmatmul.mubr.bf16.gmra.mrb[0].mxu0 %v1477
  %v1934 = vpop.f32.mrb[0].mxu0
  %v1935 = vadd.f32 0.0, %v1934
  %v1936 = vpop.f32.mrb[0].mxu0
  %v1937 = vpop.f32.mrb[0].mxu0
  %v1938 = vadd.f32 0.0, %v1937
  %v1939 = vpop.f32.mrb[0].mxu0
  %1940 = vmatprep.mubr.bf16.mxu0 0
  %1941 = vmatmul.mubr.bf16.gmra.mrb[0].mxu0 %v1480
  %v1942 = vpop.f32.mrb[0].mxu0
  %v1943 = vadd.f32 0.0, %v1942
  %v1944 = vpop.f32.mrb[0].mxu0
  %v1945 = vpop.f32.mrb[0].mxu0
  %v1946 = vadd.f32 0.0, %v1945
  %v1947 = vpop.f32.mrb[0].mxu0
  %1948 = vmatprep.mubr.bf16.mxu0 0
  %1949 = vmatmul.mubr.bf16.gmra.mrb[0].mxu0 %v1483
  %v1950 = vpop.f32.mrb[0].mxu0
  %v1951 = vadd.f32 0.0, %v1950
  %v1952 = vpop.f32.mrb[0].mxu0
  %v1953 = vpop.f32.mrb[0].mxu0
  %v1954 = vadd.f32 0.0, %v1953
  %v1955 = vpop.f32.mrb[0].mxu0
  %1956 = vmatprep.mubr.bf16.mxu0 0
  %1957 = vmatmul.mubr.bf16.gmra.mrb[0].mxu0 %v1486
  %v1958 = vpop.f32.mrb[0].mxu0
  %v1959 = vadd.f32 0.0, %v1958
  %v1960 = vpop.f32.mrb[0].mxu0
  %v1961 = vpop.f32.mrb[0].mxu0
  %v1962 = vadd.f32 0.0, %v1961
  %v1963 = vpop.f32.mrb[0].mxu0
  %1964 = vmatprep.mubr.bf16.mxu0 0
  %1965 = vmatmul.mubr.bf16.gmra.mrb[0].mxu0 %v1489
  %v1966 = vpop.f32.mrb[0].mxu0
  %v1967 = vadd.f32 0.0, %v1966
  %v1968 = vpop.f32.mrb[0].mxu0
  %v1969 = vpop.f32.mrb[0].mxu0
  %v1970 = vadd.f32 0.0, %v1969
  %v1971 = vpop.f32.mrb[0].mxu0
  %1972 = vmatprep.mubr.bf16.mxu0 0
  %1973 = vmatmul.mubr.bf16.gmra.mrb[0].mxu0 %v1492
  %v1974 = vpop.f32.mrb[0].mxu0
  %v1975 = vadd.f32 0.0, %v1974
  %v1976 = vpop.f32.mrb[0].mxu0
  %v1977 = vpop.f32.mrb[0].mxu0
  %v1978 = vadd.f32 0.0, %v1977
  %v1979 = vpop.f32.mrb[0].mxu0
  %1980 = vmatprep.mubr.bf16.mxu0 0
  %1981 = vmatmul.mubr.bf16.gmra.mrb[0].mxu0 %v1495
  %v1982 = vpop.f32.mrb[0].mxu0
  %v1983 = vadd.f32 0.0, %v1982
  %v1984 = vpop.f32.mrb[0].mxu0
  %v1985 = vpop.f32.mrb[0].mxu0
  %v1986 = vadd.f32 0.0, %v1985
  %v1987 = vpop.f32.mrb[0].mxu0
  %1988 = vmatprep.mubr.bf16.mxu0 0
  %1989 = vmatmul.mubr.bf16.gmra.mrb[0].mxu0 %v1498
  %v1990 = vpop.f32.mrb[0].mxu0
  %v1991 = vadd.f32 0.0, %v1990
  %v1992 = vpop.f32.mrb[0].mxu0
  %v1993 = vpop.f32.mrb[0].mxu0
  %v1994 = vadd.f32 0.0, %v1993
  %v1995 = vpop.f32.mrb[0].mxu0
  %1996 = vmatprep.mubr.bf16.mxu0 0
  %1997 = vmatmul.mubr.bf16.gmra.mrb[0].mxu0 %v1501
  %v1998 = vpop.f32.mrb[0].mxu0
  %v1999 = vadd.f32 0.0, %v1998
  %v2000 = vpop.f32.mrb[0].mxu0
  %v2001 = vpop.f32.mrb[0].mxu0
  %v2002 = vadd.f32 0.0, %v2001
  %v2003 = vpop.f32.mrb[0].mxu0
  %2004 = vmatprep.mubr.bf16.mxu0 0
  %2005 = vmatmul.mubr.bf16.gmra.mrb[0].mxu0 %v1504
  %v2006 = vpop.f32.mrb[0].mxu0
  %v2007 = vadd.f32 0.0, %v2006
  %v2008 = vpop.f32.mrb[0].mxu0
  %v2009 = vpop.f32.mrb[0].mxu0
  %v2010 = vadd.f32 0.0, %v2009
  %v2011 = vpop.f32.mrb[0].mxu0
  %2012 = vmatprep.mubr.bf16.mxu0 0
  %2013 = vmatmul.mubr.bf16.gmra.mrb[0].mxu0 %v1507
  %v2014 = vpop.f32.mrb[0].mxu0
  %v2015 = vadd.f32 0.0, %v2014
  %v2016 = vpop.f32.mrb[0].mxu0
  %v2017 = vpop.f32.mrb[0].mxu0
  %v2018 = vadd.f32 0.0, %v2017
  %v2019 = vpop.f32.mrb[0].mxu0
  %2020 = vmatprep.mubr.bf16.mxu0 0
  %2021 = vmatmul.mubr.bf16.gmra.mrb[0].mxu0 %v1510
  %v2022 = vpop.f32.mrb[0].mxu0
  %v2023 = vadd.f32 0.0, %v2022
  %v2024 = vpop.f32.mrb[0].mxu0
  %v2025 = vpop.f32.mrb[0].mxu0
  %v2026 = vadd.f32 0.0, %v2025
  %v2027 = vpop.f32.mrb[0].mxu0
  %2028 = vmatprep.mubr.bf16.mxu0 0
  %2029 = vmatmul.mubr.bf16.gmra.mrb[0].mxu0 %v1513
  %v2030 = vpop.f32.mrb[0].mxu0
  %v2031 = vadd.f32 0.0, %v2030
  %v2032 = vpop.f32.mrb[0].mxu0
  %v2033 = vpop.f32.mrb[0].mxu0
  %v2034 = vadd.f32 0.0, %v2033
  %v2035 = vpop.f32.mrb[0].mxu0
  %2036 = vmatprep.mubr.bf16.mxu0 0
  %2037 = vmatmul.mubr.bf16.gmra.mrb[0].mxu0 %v1516
  %v2038 = vpop.f32.mrb[0].mxu0
  %v2039 = vadd.f32 0.0, %v2038
  %v2040 = vpop.f32.mrb[0].mxu0
  %v2041 = vpop.f32.mrb[0].mxu0
  %v2042 = vadd.f32 0.0, %v2041
  %v2043 = vpop.f32.mrb[0].mxu0
  %2044 = vmatprep.mubr.bf16.mxu0 0
  %2045 = vmatmul.mubr.bf16.gmra.mrb[0].mxu0 %v1519
  %v2046 = vpop.f32.mrb[0].mxu0
  %v2047 = vadd.f32 0.0, %v2046
  %v2048 = vpop.f32.mrb[0].mxu0
  %v2049 = vpop.f32.mrb[0].mxu0
  %v2050 = vadd.f32 0.0, %v2049
  %v2051 = vpop.f32.mrb[0].mxu0
  %2052 = vmatprep.mubr.bf16.mxu0 0
  %2053 = vmatmul.mubr.bf16.gmra.mrb[0].mxu0 %v1522
  %v2054 = vpop.f32.mrb[0].mxu0
  %v2055 = vadd.f32 0.0, %v2054
  %v2056 = vpop.f32.mrb[0].mxu0
  %v2057 = vpop.f32.mrb[0].mxu0
  %v2058 = vadd.f32 0.0, %v2057
  %v2059 = vpop.f32.mrb[0].mxu0
  %2060 = vmatprep.mubr.bf16.mxu0 0
  %2061 = vmatmul.mubr.bf16.gmra.mrb[0].mxu0 %v1525
  %v2062 = vpop.f32.mrb[0].mxu0
  %v2063 = vadd.f32 0.0, %v2062
  %v2064 = vpop.f32.mrb[0].mxu0
  %v2065 = vpop.f32.mrb[0].mxu0
  %v2066 = vadd.f32 0.0, %v2065
  %v2067 = vpop.f32.mrb[0].mxu0
  %2068 = vmatprep.mubr.bf16.mxu0 0
  %2069 = vmatmul.mubr.bf16.gmra.mrb[0].mxu0 %v1528
  %v2070 = vpop.f32.mrb[0].mxu0
  %v2071 = vadd.f32 0.0, %v2070
  %v2072 = vpop.f32.mrb[0].mxu0
  %v2073 = vpop.f32.mrb[0].mxu0
  %v2074 = vadd.f32 0.0, %v2073
  %v2075 = vpop.f32.mrb[0].mxu0
  %2076 = vmatprep.mubr.bf16.mxu0 0
  %2077 = vmatmul.mubr.bf16.gmra.mrb[0].mxu0 %v1531
  %v2078 = vpop.f32.mrb[0].mxu0
  %v2079 = vadd.f32 0.0, %v2078
  %v2080 = vpop.f32.mrb[0].mxu0
  %v2081 = vpop.f32.mrb[0].mxu0
  %v2082 = vadd.f32 0.0, %v2081
  %v2083 = vpop.f32.mrb[0].mxu0
  %2084 = vmatprep.mubr.bf16.mxu0 0
  %2085 = vmatmul.mubr.bf16.gmra.mrb[0].mxu0 %v1534
  %v2086 = vpop.f32.mrb[0].mxu0
  %v2087 = vadd.f32 0.0, %v2086
  %v2088 = vpop.f32.mrb[0].mxu0
  %v2089 = vpop.f32.mrb[0].mxu0
  %v2090 = vadd.f32 0.0, %v2089
  %v2091 = vpop.f32.mrb[0].mxu0
  %2092 = vmatprep.mubr.bf16.mxu0 0
  %2093 = vmatmul.mubr.bf16.gmra.mrb[0].mxu0 %v1537
  %v2094 = vpop.f32.mrb[0].mxu0
  %v2095 = vadd.f32 0.0, %v2094
  %v2096 = vpop.f32.mrb[0].mxu0
  %v2097 = vpop.f32.mrb[0].mxu0
  %v2098 = vadd.f32 0.0, %v2097
  %v2099 = vpop.f32.mrb[0].mxu0
  %2100 = vmatprep.mubr.bf16.mxu0 0
  %2101 = vmatmul.mubr.bf16.gmra.mrb[0].mxu0 %v1540
  %v2102 = vpop.f32.mrb[0].mxu0
  %v2103 = vadd.f32 0.0, %v2102
  %v2104 = vpop.f32.mrb[0].mxu0
  %v2105 = vpop.f32.mrb[0].mxu0
  %v2106 = vadd.f32 0.0, %v2105
  %v2107 = vpop.f32.mrb[0].mxu0
  %2108 = vmatprep.mubr.bf16.mxu0 0
  %2109 = vmatmul.mubr.bf16.gmra.mrb[0].mxu0 %v1543
  %v2110 = vpop.f32.mrb[0].mxu0
  %v2111 = vadd.f32 0.0, %v2110
  %v2112 = vpop.f32.mrb[0].mxu0
  %v2113 = vpop.f32.mrb[0].mxu0
  %v2114 = vadd.f32 0.0, %v2113
  %v2115 = vpop.f32.mrb[0].mxu0
  %2116 = vmatprep.mubr.bf16.mxu0 0
  %2117 = vmatmul.mubr.bf16.gmra.mrb[0].mxu0 %v1546
  %v2118 = vpop.f32.mrb[0].mxu0
  %v2119 = vadd.f32 0.0, %v2118
  %v2120 = vpop.f32.mrb[0].mxu0
  %v2121 = vpop.f32.mrb[0].mxu0
  %v2122 = vadd.f32 0.0, %v2121
  %v2123 = vpop.f32.mrb[0].mxu0
  %2124 = vmatprep.mubr.bf16.mxu0 0
  %2125 = vmatmul.mubr.bf16.gmra.mrb[0].mxu0 %v1549
  %v2126 = vpop.f32.mrb[0].mxu0
  %v2127 = vadd.f32 0.0, %v2126
  %v2128 = vpop.f32.mrb[0].mxu0
  %v2129 = vpop.f32.mrb[0].mxu0
  %v2130 = vadd.f32 0.0, %v2129
  %v2131 = vpop.f32.mrb[0].mxu0
  %2132 = vmatprep.mubr.bf16.mxu0 0
  %2133 = vmatmul.mubr.bf16.gmra.mrb[0].mxu0 %v1552
  %v2134 = vpop.f32.mrb[0].mxu0
  %v2135 = vadd.f32 0.0, %v2134
  %v2136 = vpop.f32.mrb[0].mxu0
  %v2137 = vpop.f32.mrb[0].mxu0
  %v2138 = vadd.f32 0.0, %v2137
  %v2139 = vpop.f32.mrb[0].mxu0
  %2140 = vmatprep.mubr.bf16.mxu0 0
  %2141 = vmatmul.mubr.bf16.gmra.mrb[0].mxu0 %v1555
  %v2142 = vpop.f32.mrb[0].mxu0
  %v2143 = vadd.f32 0.0, %v2142
  %v2144 = vpop.f32.mrb[0].mxu0
  %v2145 = vpop.f32.mrb[0].mxu0
  %v2146 = vadd.f32 0.0, %v2145
  %v2147 = vpop.f32.mrb[0].mxu0
  %2148 = vmatprep.mubr.bf16.mxu0 0
  %2149 = vmatmul.mubr.bf16.gmra.mrb[0].mxu0 %v1558
  %v2150 = vpop.f32.mrb[0].mxu0
  %v2151 = vadd.f32 0.0, %v2150
  %v2152 = vpop.f32.mrb[0].mxu0
  %v2153 = vpop.f32.mrb[0].mxu0
  %v2154 = vadd.f32 0.0, %v2153
  %v2155 = vpop.f32.mrb[0].mxu0
  %2156 = vmatprep.mubr.bf16.mxu0 0
  %2157 = vmatmul.mubr.bf16.gmra.mrb[0].mxu0 %v1561
  %v2158 = vpop.f32.mrb[0].mxu0
  %v2159 = vadd.f32 0.0, %v2158
  %v2160 = vpop.f32.mrb[0].mxu0
  %v2161 = vpop.f32.mrb[0].mxu0
  %v2162 = vadd.f32 0.0, %v2161
  %v2163 = vpop.f32.mrb[0].mxu0
  %2164 = vmatprep.mubr.bf16.mxu0 0
  %2165 = vmatmul.mubr.bf16.gmra.mrb[0].mxu0 %v1564
  %v2166 = vpop.f32.mrb[0].mxu0
  %v2167 = vadd.f32 0.0, %v2166
  %v2168 = vpop.f32.mrb[0].mxu0
  %v2169 = vpop.f32.mrb[0].mxu0
  %v2170 = vadd.f32 0.0, %v2169
  %v2171 = vpop.f32.mrb[0].mxu0
  %2172 = vmatprep.mubr.bf16.mxu0 0
  %2173 = vmatmul.mubr.bf16.gmra.mrb[0].mxu0 %v1567
  %v2174 = vpop.f32.mrb[0].mxu0
  %v2175 = vadd.f32 0.0, %v2174
  %v2176 = vpop.f32.mrb[0].mxu0
  %v2177 = vpop.f32.mrb[0].mxu0
  %v2178 = vadd.f32 0.0, %v2177
  %v2179 = vpop.f32.mrb[0].mxu0
  %2180 = vmatprep.mubr.bf16.mxu0 0
  %2181 = vmatmul.mubr.bf16.gmra.mrb[0].mxu0 %v1570
  %v2182 = vpop.f32.mrb[0].mxu0
  %v2183 = vadd.f32 0.0, %v2182
  %v2184 = vpop.f32.mrb[0].mxu0
  %v2185 = vpop.f32.mrb[0].mxu0
  %v2186 = vadd.f32 0.0, %v2185
  %v2187 = vpop.f32.mrb[0].mxu0
  %2188 = vmatprep.mubr.bf16.mxu0 0
  %2189 = vmatmul.mubr.bf16.gmra.mrb[0].mxu0 %v1573
  %v2190 = vpop.f32.mrb[0].mxu0
  %v2191 = vadd.f32 0.0, %v2190
  %v2192 = vpop.f32.mrb[0].mxu0
  %v2193 = vpop.f32.mrb[0].mxu0
  %v2194 = vadd.f32 0.0, %v2193
  %v2195 = vpop.f32.mrb[0].mxu0
  %2196 = vmatprep.mubr.bf16.mxu0 0
  %2197 = vmatmul.mubr.bf16.gmra.mrb[0].mxu0 %v1576
  %v2198 = vpop.f32.mrb[0].mxu0
  %v2199 = vadd.f32 0.0, %v2198
  %v2200 = vpop.f32.mrb[0].mxu0
  %v2201 = vpop.f32.mrb[0].mxu0
  %v2202 = vadd.f32 0.0, %v2201
  %v2203 = vpop.f32.mrb[0].mxu0
  %2204 = vmatprep.mubr.bf16.mxu0 0
  %2205 = vmatmul.mubr.bf16.gmra.mrb[0].mxu0 %v1579
  %v2206 = vpop.f32.mrb[0].mxu0
  %v2207 = vadd.f32 0.0, %v2206
  %v2208 = vpop.f32.mrb[0].mxu0
  %v2209 = vpop.f32.mrb[0].mxu0
  %v2210 = vadd.f32 0.0, %v2209
  %v2211 = vpop.f32.mrb[0].mxu0
  %2212 = vmatprep.mubr.bf16.mxu0 0
  %2213 = vmatmul.mubr.bf16.gmra.mrb[0].mxu0 %v1582
  %v2214 = vpop.f32.mrb[0].mxu0
  %v2215 = vadd.f32 0.0, %v2214
  %v2216 = vpop.f32.mrb[0].mxu0
  %v2217 = vpop.f32.mrb[0].mxu0
  %v2218 = vadd.f32 0.0, %v2217
  %v2219 = vpop.f32.mrb[0].mxu0
  %2220 = vmatprep.mubr.bf16.mxu0 0
  %2221 = vmatmul.mubr.bf16.gmra.mrb[0].mxu0 %v1585
  %v2222 = vpop.f32.mrb[0].mxu0
  %v2223 = vadd.f32 0.0, %v2222
  %v2224 = vpop.f32.mrb[0].mxu0
  %v2225 = vpop.f32.mrb[0].mxu0
  %v2226 = vadd.f32 0.0, %v2225
  %v2227 = vpop.f32.mrb[0].mxu0
  %2228 = vmatprep.mubr.bf16.mxu0 0
  %2229 = vmatmul.mubr.bf16.gmra.mrb[0].mxu0 %v1588
  %v2230 = vpop.f32.mrb[0].mxu0
  %v2231 = vadd.f32 0.0, %v2230
  %v2232 = vpop.f32.mrb[0].mxu0
  %v2233 = vpop.f32.mrb[0].mxu0
  %v2234 = vadd.f32 0.0, %v2233
  %v2235 = vpop.f32.mrb[0].mxu0
  %2236 = vmatprep.mubr.bf16.mxu0 0
  %2237 = vmatmul.mubr.bf16.gmra.mrb[0].mxu0 %v1591
  %v2238 = vpop.f32.mrb[0].mxu0
  %v2239 = vadd.f32 0.0, %v2238
  %v2240 = vpop.f32.mrb[0].mxu0
  %v2241 = vpop.f32.mrb[0].mxu0
  %v2242 = vadd.f32 0.0, %v2241
  %v2243 = vpop.f32.mrb[0].mxu0
  %2244 = vmatprep.mubr.bf16.mxu0 0
  %2245 = vmatmul.mubr.bf16.gmra.mrb[0].mxu0 %v1594
  %v2246 = vpop.f32.mrb[0].mxu0
  %v2247 = vadd.f32 0.0, %v2246
  %v2248 = vpop.f32.mrb[0].mxu0
  %v2249 = vpop.f32.mrb[0].mxu0
  %v2250 = vadd.f32 0.0, %v2249
  %v2251 = vpop.f32.mrb[0].mxu0
  %2252 = vmatprep.mubr.bf16.mxu0 0
  %2253 = vmatmul.mubr.bf16.gmra.mrb[0].mxu0 %v1597
  %v2254 = vpop.f32.mrb[0].mxu0
  %v2255 = vadd.f32 0.0, %v2254
  %v2256 = vpop.f32.mrb[0].mxu0
  %v2257 = vpop.f32.mrb[0].mxu0
  %v2258 = vadd.f32 0.0, %v2257
  %v2259 = vpop.f32.mrb[0].mxu0
  %2260 = vmatprep.mubr.bf16.mxu0 0
  %2261 = vmatmul.mubr.bf16.gmra.mrb[0].mxu0 %v1600
  %v2262 = vpop.f32.mrb[0].mxu0
  %v2263 = vadd.f32 0.0, %v2262
  %v2264 = vpop.f32.mrb[0].mxu0
  %v2265 = vpop.f32.mrb[0].mxu0
  %v2266 = vadd.f32 0.0, %v2265
  %v2267 = vpop.f32.mrb[0].mxu0
  %2268 = vmatprep.mubr.bf16.mxu0 0
  %2269 = vmatmul.mubr.bf16.gmra.mrb[0].mxu0 %v1603
  %v2270 = vpop.f32.mrb[0].mxu0
  %v2271 = vadd.f32 0.0, %v2270
  %v2272 = vpop.f32.mrb[0].mxu0
  %v2273 = vpop.f32.mrb[0].mxu0
  %v2274 = vadd.f32 0.0, %v2273
  %v2275 = vpop.f32.mrb[0].mxu0
  %2276 = vmatprep.mubr.bf16.mxu0 0
  %2277 = vmatmul.mubr.bf16.gmra.mrb[0].mxu0 %v1606
  %v2278 = vpop.f32.mrb[0].mxu0
  %v2279 = vadd.f32 0.0, %v2278
  %v2280 = vpop.f32.mrb[0].mxu0
  %v2281 = vpop.f32.mrb[0].mxu0
  %v2282 = vadd.f32 0.0, %v2281
  %v2283 = vpop.f32.mrb[0].mxu0
  %2284 = vmatprep.mubr.bf16.mxu0 0
  %2285 = vmatmul.mubr.bf16.gmra.mrb[0].mxu0 %v1609
  %v2286 = vpop.f32.mrb[0].mxu0
  %v2287 = vadd.f32 0.0, %v2286
  %v2288 = vpop.f32.mrb[0].mxu0
  %v2289 = vpop.f32.mrb[0].mxu0
  %v2290 = vadd.f32 0.0, %v2289
  %v2291 = vpop.f32.mrb[0].mxu0
  %2292 = vmatprep.mubr.bf16.mxu0 0
  %2293 = vmatmul.mubr.bf16.gmra.mrb[0].mxu0 %v1612
  %v2294 = vpop.f32.mrb[0].mxu0
  %v2295 = vadd.f32 0.0, %v2294
  %v2296 = vpop.f32.mrb[0].mxu0
  %v2297 = vpop.f32.mrb[0].mxu0
  %v2298 = vadd.f32 0.0, %v2297
  %v2299 = vpop.f32.mrb[0].mxu0
  %2300 = vmatprep.mubr.bf16.mxu0 0
  %2301 = vmatmul.mubr.bf16.gmra.mrb[0].mxu0 %v1615
  %v2302 = vpop.f32.mrb[0].mxu0
  %v2303 = vadd.f32 0.0, %v2302
  %v2304 = vpop.f32.mrb[0].mxu0
  %v2305 = vpop.f32.mrb[0].mxu0
  %v2306 = vadd.f32 0.0, %v2305
  %v2307 = vpop.f32.mrb[0].mxu0
  %2308 = vmatprep.mubr.bf16.mxu0 0
  %2309 = vmatmul.mubr.bf16.gmra.mrb[0].mxu0 %v1618
  %v2310 = vpop.f32.mrb[0].mxu0
  %v2311 = vadd.f32 0.0, %v2310
  %v2312 = vpop.f32.mrb[0].mxu0
  %v2313 = vpop.f32.mrb[0].mxu0
  %v2314 = vadd.f32 0.0, %v2313
  %v2315 = vpop.f32.mrb[0].mxu0
  %2316 = vmatprep.mubr.bf16.mxu0 0
  %2317 = vmatmul.mubr.bf16.gmra.mrb[0].mxu0 %v1621
  %v2318 = vpop.f32.mrb[0].mxu0
  %v2319 = vadd.f32 0.0, %v2318
  %v2320 = vpop.f32.mrb[0].mxu0
  %v2321 = vpop.f32.mrb[0].mxu0
  %v2322 = vadd.f32 0.0, %v2321
  %v2323 = vpop.f32.mrb[0].mxu0
  %2324 = vmatprep.mubr.bf16.mxu0 0
  %2325 = vmatmul.mubr.bf16.gmra.mrb[0].mxu0 %v1624
  %v2326 = vpop.f32.mrb[0].mxu0
  %v2327 = vadd.f32 0.0, %v2326
  %v2328 = vpop.f32.mrb[0].mxu0
  %v2329 = vpop.f32.mrb[0].mxu0
  %v2330 = vadd.f32 0.0, %v2329
  %v2331 = vpop.f32.mrb[0].mxu0
  %2332 = vmatprep.mubr.bf16.mxu0 0
  %2333 = vmatmul.mubr.bf16.gmra.mrb[0].mxu0 %v1627
  %v2334 = vpop.f32.mrb[0].mxu0
  %v2335 = vadd.f32 0.0, %v2334
  %v2336 = vpop.f32.mrb[0].mxu0
  %v2337 = vpop.f32.mrb[0].mxu0
  %v2338 = vadd.f32 0.0, %v2337
  %v2339 = vpop.f32.mrb[0].mxu0
  %2340 = vmatprep.mubr.bf16.mxu0 0
  %2341 = vmatmul.mubr.bf16.gmra.mrb[0].mxu0 %v1630
  %v2342 = vpop.f32.mrb[0].mxu0
  %v2343 = vadd.f32 0.0, %v2342
  %v2344 = vpop.f32.mrb[0].mxu0
  %v2345 = vpop.f32.mrb[0].mxu0
  %v2346 = vadd.f32 0.0, %v2345
  %v2347 = vpop.f32.mrb[0].mxu0
  %2348 = vmatprep.mubr.bf16.mxu0 0
  %2349 = vmatmul.mubr.bf16.gmra.mrb[0].mxu0 %v1633
  %v2350 = vpop.f32.mrb[0].mxu0
  %v2351 = vadd.f32 0.0, %v2350
  %v2352 = vpop.f32.mrb[0].mxu0
  %v2353 = vpop.f32.mrb[0].mxu0
  %v2354 = vadd.f32 0.0, %v2353
  %v2355 = vpop.f32.mrb[0].mxu0
  %2356 = vmatprep.mubr.bf16.mxu0 0
  %2357 = vmatmul.mubr.bf16.gmra.mrb[0].mxu0 %v1636
  %v2358 = vpop.f32.mrb[0].mxu0
  %v2359 = vadd.f32 0.0, %v2358
  %v2360 = vpop.f32.mrb[0].mxu0
  %v2361 = vpop.f32.mrb[0].mxu0
  %v2362 = vadd.f32 0.0, %v2361
  %v2363 = vpop.f32.mrb[0].mxu0
  %2364 = vmatprep.mubr.bf16.mxu0 0
  %2365 = vmatmul.mubr.bf16.gmra.mrb[0].mxu0 %v1639
  %v2366 = vpop.f32.mrb[0].mxu0
  %v2367 = vadd.f32 0.0, %v2366
  %v2368 = vpop.f32.mrb[0].mxu0
  %v2369 = vpop.f32.mrb[0].mxu0
  %v2370 = vadd.f32 0.0, %v2369
  %v2371 = vpop.f32.mrb[0].mxu0
  %2372 = vmatprep.mubr.bf16.mxu0 0
  %2373 = vmatmul.mubr.bf16.gmra.mrb[0].mxu0 %v1642
  %v2374 = vpop.f32.mrb[0].mxu0
  %v2375 = vadd.f32 0.0, %v2374
  %v2376 = vpop.f32.mrb[0].mxu0
  %v2377 = vpop.f32.mrb[0].mxu0
  %v2378 = vadd.f32 0.0, %v2377
  %v2379 = vpop.f32.mrb[0].mxu0
  %2380 = vmatprep.mubr.bf16.mxu0 0
  %2381 = vmatmul.mubr.bf16.gmra.mrb[0].mxu0 %v1645
  %v2382 = vpop.f32.mrb[0].mxu0
  %v2383 = vadd.f32 0.0, %v2382
  %v2384 = vpop.f32.mrb[0].mxu0
  %v2385 = vpop.f32.mrb[0].mxu0
  %v2386 = vadd.f32 0.0, %v2385
  %v2387 = vpop.f32.mrb[0].mxu0
  %2388 = vmatprep.mubr.bf16.mxu0 0
  %2389 = vmatmul.mubr.bf16.gmra.mrb[0].mxu0 %v1648
  %v2390 = vpop.f32.mrb[0].mxu0
  %v2391 = vadd.f32 0.0, %v2390
  %v2392 = vpop.f32.mrb[0].mxu0
  %v2393 = vpop.f32.mrb[0].mxu0
  %v2394 = vadd.f32 0.0, %v2393
  %v2395 = vpop.f32.mrb[0].mxu0
  %2396 = vmatprep.mubr.bf16.mxu0 0
  %2397 = vmatmul.mubr.bf16.gmra.mrb[0].mxu0 %v1651
  %v2398 = vpop.f32.mrb[0].mxu0
  %v2399 = vadd.f32 0.0, %v2398
  %v2400 = vpop.f32.mrb[0].mxu0
  %v2401 = vpop.f32.mrb[0].mxu0
  %v2402 = vadd.f32 0.0, %v2401
  %v2403 = vpop.f32.mrb[0].mxu0
  %2404 = vmatprep.mubr.bf16.mxu0 0
  %2405 = vmatmul.mubr.bf16.gmra.mrb[0].mxu0 %v1654
  %v2406 = vpop.f32.mrb[0].mxu0
  %v2407 = vadd.f32 0.0, %v2406
  %v2408 = vpop.f32.mrb[0].mxu0
  %v2409 = vpop.f32.mrb[0].mxu0
  %v2410 = vadd.f32 0.0, %v2409
  %v2411 = vpop.f32.mrb[0].mxu0
  %2412 = vmatprep.mubr.bf16.mxu0 0
  %2413 = vmatmul.mubr.bf16.gmra.mrb[0].mxu0 %v1657
  %v2414 = vpop.f32.mrb[0].mxu0
  %v2415 = vadd.f32 0.0, %v2414
  %v2416 = vpop.f32.mrb[0].mxu0
  %v2417 = vpop.f32.mrb[0].mxu0
  %v2418 = vadd.f32 0.0, %v2417
  %v2419 = vpop.f32.mrb[0].mxu0
  %2420 = vmatprep.mubr.bf16.mxu0 0
  %2421 = vmatmul.mubr.bf16.gmra.mrb[0].mxu0 %v1660
  %v2422 = vpop.f32.mrb[0].mxu0
  %v2423 = vadd.f32 0.0, %v2422
  %v2424 = vpop.f32.mrb[0].mxu0
  %v2425 = vpop.f32.mrb[0].mxu0
  %v2426 = vadd.f32 0.0, %v2425
  %v2427 = vpop.f32.mrb[0].mxu0
  %2428 = vmatprep.mubr.bf16.mxu0 0
  %2429 = vmatmul.mubr.bf16.gmra.mrb[0].mxu0 %v1663
  %v2430 = vpop.f32.mrb[0].mxu0
  %v2431 = vadd.f32 0.0, %v2430
  %v2432 = vpop.f32.mrb[0].mxu0
  %v2433 = vpop.f32.mrb[0].mxu0
  %v2434 = vadd.f32 0.0, %v2433
  %v2435 = vpop.f32.mrb[0].mxu0
  %2436 = vmatprep.mubr.bf16.mxu0 0
  %2437 = vmatmul.mubr.bf16.gmra.mrb[0].mxu0 %v1666
  %v2438 = vpop.f32.mrb[0].mxu0
  %v2439 = vadd.f32 0.0, %v2438
  %v2440 = vpop.f32.mrb[0].mxu0
  %v2441 = vpop.f32.mrb[0].mxu0
  %v2442 = vadd.f32 0.0, %v2441
  %v2443 = vpop.f32.mrb[0].mxu0
  %2444 = vmatprep.mubr.bf16.mxu0 0
  %2445 = vmatmul.mubr.bf16.gmra.mrb[0].mxu0 %v1669
  %v2446 = vpop.f32.mrb[0].mxu0
  %v2447 = vadd.f32 0.0, %v2446
  %v2448 = vpop.f32.mrb[0].mxu0
  %v2449 = vpop.f32.mrb[0].mxu0
  %v2450 = vadd.f32 0.0, %v2449
  %v2451 = vpop.f32.mrb[0].mxu0
  %2452 = vmatprep.mubr.bf16.mxu0 0
  %2453 = vmatmul.mubr.bf16.gmra.mrb[0].mxu0 %v1672
  %v2454 = vpop.f32.mrb[0].mxu0
  %v2455 = vadd.f32 0.0, %v2454
  %v2456 = vpop.f32.mrb[0].mxu0
  %v2457 = vpop.f32.mrb[0].mxu0
  %v2458 = vadd.f32 0.0, %v2457
  %v2459 = vpop.f32.mrb[0].mxu0
  %2460 = vmatprep.mubr.bf16.mxu0 0
  %2461 = vmatmul.mubr.bf16.gmra.mrb[0].mxu0 %v1675
  %v2462 = vpop.f32.mrb[0].mxu0
  %v2463 = vadd.f32 0.0, %v2462
  %v2464 = vpop.f32.mrb[0].mxu0
  %v2465 = vpop.f32.mrb[0].mxu0
  %v2466 = vadd.f32 0.0, %v2465
  %v2467 = vpop.f32.mrb[0].mxu0
  %2468 = vmatprep.mubr.bf16.mxu0 0
  %2469 = vmatmul.mubr.bf16.gmra.mrb[0].mxu0 %v1678
  %v2470 = vpop.f32.mrb[0].mxu0
  %v2471 = vadd.f32 0.0, %v2470
  %v2472 = vpop.f32.mrb[0].mxu0
  %v2473 = vpop.f32.mrb[0].mxu0
  %v2474 = vadd.f32 0.0, %v2473
  %v2475 = vpop.f32.mrb[0].mxu0
  %2476 = vmatprep.mubr.bf16.mxu0 0
  %2477 = vmatmul.mubr.bf16.gmra.mrb[0].mxu0 %v1681
  %v2478 = vpop.f32.mrb[0].mxu0
  %v2479 = vadd.f32 0.0, %v2478
  %v2480 = vpop.f32.mrb[0].mxu0
  %v2481 = vpop.f32.mrb[0].mxu0
  %v2482 = vadd.f32 0.0, %v2481
  %v2483 = vpop.f32.mrb[0].mxu0
  %2484 = vmatprep.mubr.bf16.mxu0 0
  %2485 = vmatmul.mubr.bf16.gmra.mrb[0].mxu0 %v1684
  %v2486 = vpop.f32.mrb[0].mxu0
  %v2487 = vadd.f32 0.0, %v2486
  %v2488 = vpop.f32.mrb[0].mxu0
  %v2489 = vpop.f32.mrb[0].mxu0
  %v2490 = vadd.f32 0.0, %v2489
  %v2491 = vpop.f32.mrb[0].mxu0
  %2492 = vmatprep.mubr.bf16.mxu0 0
  %2493 = vmatmul.mubr.bf16.gmra.mrb[0].mxu0 %v1687
  %v2494 = vpop.f32.mrb[0].mxu0
  %v2495 = vadd.f32 0.0, %v2494
  %v2496 = vpop.f32.mrb[0].mxu0
  %v2497 = vpop.f32.mrb[0].mxu0
  %v2498 = vadd.f32 0.0, %v2497
  %v2499 = vpop.f32.mrb[0].mxu0
  %2500 = vmatprep.mubr.bf16.mxu0 0
  %2501 = vmatmul.mubr.bf16.gmra.mrb[0].mxu0 %v1690
  %v2502 = vpop.f32.mrb[0].mxu0
  %v2503 = vadd.f32 0.0, %v2502
  %v2504 = vpop.f32.mrb[0].mxu0
  %v2505 = vpop.f32.mrb[0].mxu0
  %v2506 = vadd.f32 0.0, %v2505
  %v2507 = vpop.f32.mrb[0].mxu0
  %2508 = vmatprep.mubr.bf16.mxu0 0
  %2509 = vmatmul.mubr.bf16.gmra.mrb[0].mxu0 %v1693
  %v2510 = vpop.f32.mrb[0].mxu0
  %v2511 = vadd.f32 0.0, %v2510
  %v2512 = vpop.f32.mrb[0].mxu0
  %v2513 = vpop.f32.mrb[0].mxu0
  %v2514 = vadd.f32 0.0, %v2513
  %v2515 = vpop.f32.mrb[0].mxu0
  %2516 = vmatprep.mubr.bf16.mxu0 0
  %2517 = vmatmul.mubr.bf16.gmra.mrb[0].mxu0 %v1696
  %v2518 = vpop.f32.mrb[0].mxu0
  %v2519 = vadd.f32 0.0, %v2518
  %v2520 = vpop.f32.mrb[0].mxu0
  %v2521 = vpop.f32.mrb[0].mxu0
  %v2522 = vadd.f32 0.0, %v2521
  %v2523 = vpop.f32.mrb[0].mxu0
  %2524 = vmatprep.mubr.bf16.mxu0 0
  %2525 = vmatmul.mubr.bf16.gmra.mrb[0].mxu0 %v1699
  %v2526 = vpop.f32.mrb[0].mxu0
  %v2527 = vadd.f32 0.0, %v2526
  %v2528 = vpop.f32.mrb[0].mxu0
  %v2529 = vpop.f32.mrb[0].mxu0
  %v2530 = vadd.f32 0.0, %v2529
  %v2531 = vpop.f32.mrb[0].mxu0
  %2532 = vmatprep.mubr.bf16.mxu0 0
  %2533 = vmatmul.mubr.bf16.gmra.mrb[0].mxu0 %v1702
  %v2534 = vpop.f32.mrb[0].mxu0
  %v2535 = vadd.f32 0.0, %v2534
  %v2536 = vpop.f32.mrb[0].mxu0
  %v2537 = vpop.f32.mrb[0].mxu0
  %v2538 = vadd.f32 0.0, %v2537
  %v2539 = vpop.f32.mrb[0].mxu0
  %2540 = vmatprep.mubr.bf16.mxu0 0
  %2541 = vmatmul.mubr.bf16.gmra.mrb[0].mxu0 %v1705
  %v2542 = vpop.f32.mrb[0].mxu0
  %v2543 = vadd.f32 0.0, %v2542
  %v2544 = vpop.f32.mrb[0].mxu0
  %v2545 = vpop.f32.mrb[0].mxu0
  %v2546 = vadd.f32 0.0, %v2545
  %v2547 = vpop.f32.mrb[0].mxu0
  %2548 = vmatprep.mubr.bf16.mxu0 0
  %2549 = vmatmul.mubr.bf16.gmra.mrb[0].mxu0 %v1708
  %v2550 = vpop.f32.mrb[0].mxu0
  %v2551 = vadd.f32 0.0, %v2550
  %v2552 = vpop.f32.mrb[0].mxu0
  %v2553 = vpop.f32.mrb[0].mxu0
  %v2554 = vadd.f32 0.0, %v2553
  %v2555 = vpop.f32.mrb[0].mxu0
  %2556 = vmatprep.mubr.bf16.mxu0 0
  %2557 = vmatmul.mubr.bf16.gmra.mrb[0].mxu0 %v1711
  %v2558 = vpop.f32.mrb[0].mxu0
  %v2559 = vadd.f32 0.0, %v2558
  %v2560 = vpop.f32.mrb[0].mxu0
  %v2561 = vpop.f32.mrb[0].mxu0
  %v2562 = vadd.f32 0.0, %v2561
  %v2563 = vpop.f32.mrb[0].mxu0
  %2564 = vmatprep.mubr.bf16.mxu0 0
  %2565 = vmatmul.mubr.bf16.gmra.mrb[0].mxu0 %v1714
  %v2566 = vpop.f32.mrb[0].mxu0
  %v2567 = vadd.f32 0.0, %v2566
  %v2568 = vpop.f32.mrb[0].mxu0
  %v2569 = vpop.f32.mrb[0].mxu0
  %v2570 = vadd.f32 0.0, %v2569
  %v2571 = vpop.f32.mrb[0].mxu0
  %2572 = vmatprep.mubr.bf16.mxu0 0
  %2573 = vmatmul.mubr.bf16.gmra.mrb[0].mxu0 %v1717
  %v2574 = vpop.f32.mrb[0].mxu0
  %v2575 = vadd.f32 0.0, %v2574
  %v2576 = vpop.f32.mrb[0].mxu0
  %v2577 = vpop.f32.mrb[0].mxu0
  %v2578 = vadd.f32 0.0, %v2577
  %v2579 = vpop.f32.mrb[0].mxu0
  %2580 = vmatprep.mubr.bf16.mxu0 0
  %2581 = vmatmul.mubr.bf16.gmra.mrb[0].mxu0 %v1720
  %v2582 = vpop.f32.mrb[0].mxu0
  %v2583 = vadd.f32 0.0, %v2582
  %v2584 = vpop.f32.mrb[0].mxu0
  %v2585 = vpop.f32.mrb[0].mxu0
  %v2586 = vadd.f32 0.0, %v2585
  %v2587 = vpop.f32.mrb[0].mxu0
  %2588 = vmatprep.mubr.bf16.mxu0 0
  %2589 = vmatmul.mubr.bf16.gmra.mrb[0].mxu0 %v1723
  %v2590 = vpop.f32.mrb[0].mxu0
  %v2591 = vadd.f32 0.0, %v2590
  %v2592 = vpop.f32.mrb[0].mxu0
  %v2593 = vpop.f32.mrb[0].mxu0
  %v2594 = vadd.f32 0.0, %v2593
  %v2595 = vpop.f32.mrb[0].mxu0
  %2596 = vmatprep.mubr.bf16.mxu0 0
  %2597 = vmatmul.mubr.bf16.gmra.mrb[0].mxu0 %v1726
  %v2598 = vpop.f32.mrb[0].mxu0
  %v2599 = vadd.f32 0.0, %v2598
  %v2600 = vpop.f32.mrb[0].mxu0
  %v2601 = vpop.f32.mrb[0].mxu0
  %v2602 = vadd.f32 0.0, %v2601
  %v2603 = vpop.f32.mrb[0].mxu0
  %2604 = vmatprep.mubr.bf16.mxu0 0
  %2605 = vmatmul.mubr.bf16.gmra.mrb[0].mxu0 %v1729
  %v2606 = vpop.f32.mrb[0].mxu0
  %v2607 = vadd.f32 0.0, %v2606
  %v2608 = vpop.f32.mrb[0].mxu0
  %v2609 = vpop.f32.mrb[0].mxu0
  %v2610 = vadd.f32 0.0, %v2609
  %v2611 = vpop.f32.mrb[0].mxu0
  %2612 = vmatprep.mubr.bf16.mxu0 0
  %2613 = vmatmul.mubr.bf16.gmra.mrb[0].mxu0 %v1732
  %v2614 = vpop.f32.mrb[0].mxu0
  %v2615 = vadd.f32 0.0, %v2614
  %v2616 = vpop.f32.mrb[0].mxu0
  %v2617 = vpop.f32.mrb[0].mxu0
  %v2618 = vadd.f32 0.0, %v2617
  %v2619 = vpop.f32.mrb[0].mxu0
  %2620 = vmatprep.mubr.bf16.mxu0 0
  %2621 = vmatmul.mubr.bf16.gmra.mrb[0].mxu0 %v1735
  %v2622 = vpop.f32.mrb[0].mxu0
  %v2623 = vadd.f32 0.0, %v2622
  %v2624 = vpop.f32.mrb[0].mxu0
  %v2625 = vpop.f32.mrb[0].mxu0
  %v2626 = vadd.f32 0.0, %v2625
  %v2627 = vpop.f32.mrb[0].mxu0
  %2628 = vmatprep.mubr.bf16.mxu0 0
  %2629 = vmatmul.mubr.bf16.gmra.mrb[0].mxu0 %v1738
  %v2630 = vpop.f32.mrb[0].mxu0
  %v2631 = vadd.f32 0.0, %v2630
  %v2632 = vpop.f32.mrb[0].mxu0
  %v2633 = vpop.f32.mrb[0].mxu0
  %v2634 = vadd.f32 0.0, %v2633
  %v2635 = vpop.f32.mrb[0].mxu0
  %2636 = vmatprep.mubr.bf16.mxu0 0
  %2637 = vmatmul.mubr.bf16.gmra.mrb[0].mxu0 %v1741
  %v2638 = vpop.f32.mrb[0].mxu0
  %v2639 = vadd.f32 0.0, %v2638
  %v2640 = vpop.f32.mrb[0].mxu0
  %v2641 = vpop.f32.mrb[0].mxu0
  %v2642 = vadd.f32 0.0, %v2641
  %v2643 = vpop.f32.mrb[0].mxu0
  %2644 = vmatprep.mubr.bf16.mxu0 0
  %2645 = vmatmul.mubr.bf16.gmra.mrb[0].mxu0 %v1744
  %v2646 = vpop.f32.mrb[0].mxu0
  %v2647 = vadd.f32 0.0, %v2646
  %v2648 = vpop.f32.mrb[0].mxu0
  %v2649 = vpop.f32.mrb[0].mxu0
  %v2650 = vadd.f32 0.0, %v2649
  %v2651 = vpop.f32.mrb[0].mxu0
  %2652 = vmatprep.mubr.bf16.mxu0 0
  %2653 = vmatmul.mubr.bf16.gmra.mrb[0].mxu0 %v1747
  %v2654 = vpop.f32.mrb[0].mxu0
  %v2655 = vadd.f32 0.0, %v2654
  %v2656 = vpop.f32.mrb[0].mxu0
  %v2657 = vpop.f32.mrb[0].mxu0
  %v2658 = vadd.f32 0.0, %v2657
  %v2659 = vpop.f32.mrb[0].mxu0
  %2660 = vmatprep.mubr.bf16.mxu0 0
  %2661 = vmatmul.mubr.bf16.gmra.mrb[0].mxu0 %v1750
  %v2662 = vpop.f32.mrb[0].mxu0
  %v2663 = vadd.f32 0.0, %v2662
  %v2664 = vpop.f32.mrb[0].mxu0
  %v2665 = vpop.f32.mrb[0].mxu0
  %v2666 = vadd.f32 0.0, %v2665
  %v2667 = vpop.f32.mrb[0].mxu0
  %2668 = vmatprep.mubr.bf16.mxu0 0
  %2669 = vmatmul.mubr.bf16.gmra.mrb[0].mxu0 %v1753
  %v2670 = vpop.f32.mrb[0].mxu0
  %v2671 = vadd.f32 0.0, %v2670
  %v2672 = vpop.f32.mrb[0].mxu0
  %v2673 = vpop.f32.mrb[0].mxu0
  %v2674 = vadd.f32 0.0, %v2673
  %v2675 = vpop.f32.mrb[0].mxu0
  %2676 = vmatprep.mubr.bf16.mxu0 0
  %2677 = vmatmul.mubr.bf16.gmra.mrb[0].mxu0 %v1756
  %v2678 = vpop.f32.mrb[0].mxu0
  %v2679 = vadd.f32 0.0, %v2678
  %v2680 = vpop.f32.mrb[0].mxu0
  %v2681 = vpop.f32.mrb[0].mxu0
  %v2682 = vadd.f32 0.0, %v2681
  %v2683 = vpop.f32.mrb[0].mxu0
  %2684 = vmatprep.mubr.bf16.mxu0 0
  %2685 = vmatmul.mubr.bf16.gmra.mrb[0].mxu0 %v1759
  %v2686 = vpop.f32.mrb[0].mxu0
  %v2687 = vadd.f32 0.0, %v2686
  %v2688 = vpop.f32.mrb[0].mxu0
  %v2689 = vpop.f32.mrb[0].mxu0
  %v2690 = vadd.f32 0.0, %v2689
  %v2691 = vpop.f32.mrb[0].mxu0
  %2692 = vmatprep.mubr.bf16.mxu0 0
  %2693 = vmatmul.mubr.bf16.gmra.mrb[0].mxu0 %v1762
  %v2694 = vpop.f32.mrb[0].mxu0
  %v2695 = vadd.f32 0.0, %v2694
  %v2696 = vpop.f32.mrb[0].mxu0
  %v2697 = vpop.f32.mrb[0].mxu0
  %v2698 = vadd.f32 0.0, %v2697
  %v2699 = vpop.f32.mrb[0].mxu0
  %2700 = vmatprep.mubr.bf16.mxu0 0
  %2701 = vmatmul.mubr.bf16.gmra.mrb[0].mxu0 %v1765
  %v2702 = vpop.f32.mrb[0].mxu0
  %v2703 = vadd.f32 0.0, %v2702
  %v2704 = vpop.f32.mrb[0].mxu0
  %v2705 = vpop.f32.mrb[0].mxu0
  %v2706 = vadd.f32 0.0, %v2705
  %v2707 = vpop.f32.mrb[0].mxu0
  %2708 = vmatprep.mubr.bf16.mxu0 0
  %2709 = vmatmul.mubr.bf16.gmra.mrb[0].mxu0 %v1768
  %v2710 = vpop.f32.mrb[0].mxu0
  %v2711 = vadd.f32 0.0, %v2710
  %v2712 = vpop.f32.mrb[0].mxu0
  %v2713 = vpop.f32.mrb[0].mxu0
  %v2714 = vadd.f32 0.0, %v2713
  %v2715 = vpop.f32.mrb[0].mxu0
  %2716 = vmatprep.mubr.bf16.mxu0 0
  %2717 = vmatmul.mubr.bf16.gmra.mrb[0].mxu0 %v1771
  %v2718 = vpop.f32.mrb[0].mxu0
  %v2719 = vadd.f32 0.0, %v2718
  %v2720 = vpop.f32.mrb[0].mxu0
  %v2721 = vpop.f32.mrb[0].mxu0
  %v2722 = vadd.f32 0.0, %v2721
  %v2723 = vpop.f32.mrb[0].mxu0
  %2724 = vmatprep.mubr.bf16.mxu0 0
  %2725 = vmatmul.mubr.bf16.gmra.mrb[0].mxu0 %v1774
  %v2726 = vpop.f32.mrb[0].mxu0
  %v2727 = vadd.f32 0.0, %v2726
  %v2728 = vpop.f32.mrb[0].mxu0
  %v2729 = vpop.f32.mrb[0].mxu0
  %v2730 = vadd.f32 0.0, %v2729
  %v2731 = vpop.f32.mrb[0].mxu0
  %2732 = vmatprep.mubr.bf16.mxu0 0
  %2733 = vmatmul.mubr.bf16.gmra.mrb[0].mxu0 %v1777
  %v2734 = vpop.f32.mrb[0].mxu0
  %v2735 = vadd.f32 0.0, %v2734
  %v2736 = vpop.f32.mrb[0].mxu0
  %v2737 = vpop.f32.mrb[0].mxu0
  %v2738 = vadd.f32 0.0, %v2737
  %v2739 = vpop.f32.mrb[0].mxu0
  %2740 = vmatprep.mubr.bf16.mxu0 0
  %2741 = vmatmul.mubr.bf16.gmra.mrb[0].mxu0 %v1780
  %v2742 = vpop.f32.mrb[0].mxu0
  %v2743 = vadd.f32 0.0, %v2742
  %v2744 = vpop.f32.mrb[0].mxu0
  %v2745 = vpop.f32.mrb[0].mxu0
  %v2746 = vadd.f32 0.0, %v2745
  %v2747 = vpop.f32.mrb[0].mxu0
  %2748 = vmatprep.mubr.bf16.mxu0 0
  %2749 = vmatmul.mubr.bf16.gmra.mrb[0].mxu0 %v1783
  %v2750 = vpop.f32.mrb[0].mxu0
  %v2751 = vadd.f32 0.0, %v2750
  %v2752 = vpop.f32.mrb[0].mxu0
  %v2753 = vpop.f32.mrb[0].mxu0
  %v2754 = vadd.f32 0.0, %v2753
  %v2755 = vpop.f32.mrb[0].mxu0
  %2756 = vmatprep.mubr.bf16.mxu0 0
  %2757 = vmatmul.mubr.bf16.gmra.mrb[0].mxu0 %v1786
  %v2758 = vpop.f32.mrb[0].mxu0
  %v2759 = vadd.f32 0.0, %v2758
  %v2760 = vpop.f32.mrb[0].mxu0
  %v2761 = vpop.f32.mrb[0].mxu0
  %v2762 = vadd.f32 0.0, %v2761
  %v2763 = vpop.f32.mrb[0].mxu0
  %2764 = vmatprep.mubr.bf16.mxu0 0
  %2765 = vmatmul.mubr.bf16.gmra.mrb[0].mxu0 %v1789
  %v2766 = vpop.f32.mrb[0].mxu0
  %v2767 = vadd.f32 0.0, %v2766
  %v2768 = vpop.f32.mrb[0].mxu0
  %v2769 = vpop.f32.mrb[0].mxu0
  %v2770 = vadd.f32 0.0, %v2769
  %v2771 = vpop.f32.mrb[0].mxu0
  %2772 = vmatprep.mubr.bf16.mxu0 0
  %2773 = vmatmul.mubr.bf16.gmra.mrb[0].mxu0 %v1792
  %v2774 = vpop.f32.mrb[0].mxu0
  %v2775 = vadd.f32 0.0, %v2774
  %v2776 = vpop.f32.mrb[0].mxu0
  %v2777 = vpop.f32.mrb[0].mxu0
  %v2778 = vadd.f32 0.0, %v2777
  %v2779 = vpop.f32.mrb[0].mxu0
  %2780 = vmatprep.mubr.bf16.mxu0 0
  %2781 = vmatmul.mubr.bf16.gmra.mrb[0].mxu0 %v1795
  %v2782 = vpop.f32.mrb[0].mxu0
  %v2783 = vadd.f32 0.0, %v2782
  %v2784 = vpop.f32.mrb[0].mxu0
  %v2785 = vpop.f32.mrb[0].mxu0
  %v2786 = vadd.f32 0.0, %v2785
  %v2787 = vpop.f32.mrb[0].mxu0
  %2788 = vmatprep.mubr.bf16.mxu0 0
  %2789 = vmatmul.mubr.bf16.gmra.mrb[0].mxu0 %v1798
  %v2790 = vpop.f32.mrb[0].mxu0
  %v2791 = vadd.f32 0.0, %v2790
  %v2792 = vpop.f32.mrb[0].mxu0
  %v2793 = vpop.f32.mrb[0].mxu0
  %v2794 = vadd.f32 0.0, %v2793
  %v2795 = vpop.f32.mrb[0].mxu0
  %2796 = vmatprep.mubr.bf16.mxu0 0
  %2797 = vmatmul.mubr.bf16.gmra.mrb[0].mxu0 %v1801
  %v2798 = vpop.f32.mrb[0].mxu0
  %v2799 = vadd.f32 0.0, %v2798
  %v2800 = vpop.f32.mrb[0].mxu0
  %v2801 = vpop.f32.mrb[0].mxu0
  %v2802 = vadd.f32 0.0, %v2801
  %v2803 = vpop.f32.mrb[0].mxu0
  %2804 = vmatprep.mubr.bf16.mxu0 0
  %2805 = vmatmul.mubr.bf16.gmra.mrb[0].mxu0 %v1804
  %v2806 = vpop.f32.mrb[0].mxu0
  %v2807 = vadd.f32 0.0, %v2806
  %v2808 = vpop.f32.mrb[0].mxu0
  %v2809 = vpop.f32.mrb[0].mxu0
  %v2810 = vadd.f32 0.0, %v2809
  %v2811 = vpop.f32.mrb[0].mxu0
  %2812 = vmatprep.mubr.bf16.mxu0 0
  %2813 = vmatmul.mubr.bf16.gmra.mrb[0].mxu0 %v1807
  %v2814 = vpop.f32.mrb[0].mxu0
  %v2815 = vadd.f32 0.0, %v2814
  %v2816 = vpop.f32.mrb[0].mxu0
  %v2817 = vpop.f32.mrb[0].mxu0
  %v2818 = vadd.f32 0.0, %v2817
  %v2819 = vpop.f32.mrb[0].mxu0
  %2820 = vmatprep.mubr.bf16.mxu0 0
  %2821 = vmatmul.mubr.bf16.gmra.mrb[0].mxu0 %v1810
  %v2822 = vpop.f32.mrb[0].mxu0
  %v2823 = vadd.f32 0.0, %v2822
  %v2824 = vpop.f32.mrb[0].mxu0
  %v2825 = vpop.f32.mrb[0].mxu0
  %v2826 = vadd.f32 0.0, %v2825
  %v2827 = vpop.f32.mrb[0].mxu0
  %2828 = vmatprep.mubr.bf16.mxu0 0
  %2829 = vmatmul.mubr.bf16.gmra.mrb[0].mxu0 %v1813
  %v2830 = vpop.f32.mrb[0].mxu0
  %v2831 = vadd.f32 0.0, %v2830
  %v2832 = vpop.f32.mrb[0].mxu0
  %v2833 = vpop.f32.mrb[0].mxu0
  %v2834 = vadd.f32 0.0, %v2833
  %v2835 = vpop.f32.mrb[0].mxu0
  %2836 = vmatprep.mubr.bf16.mxu0 0
  %2837 = vmatmul.mubr.bf16.gmra.mrb[0].mxu0 %v1816
  %v2838 = vpop.f32.mrb[0].mxu0
  %v2839 = vadd.f32 0.0, %v2838
  %v2840 = vpop.f32.mrb[0].mxu0
  %v2841 = vpop.f32.mrb[0].mxu0
  %v2842 = vadd.f32 0.0, %v2841
  %v2843 = vpop.f32.mrb[0].mxu0
  %2844 = vmatprep.mubr.bf16.mxu0 0
  %2845 = vmatmul.mubr.bf16.gmra.mrb[0].mxu0 %v1819
  %v2846 = vpop.f32.mrb[0].mxu0
  %v2847 = vadd.f32 0.0, %v2846
  %v2848 = vpop.f32.mrb[0].mxu0
  %v2849 = vpop.f32.mrb[0].mxu0
  %v2850 = vadd.f32 0.0, %v2849
  %v2851 = vpop.f32.mrb[0].mxu0
  %2852 = vmatprep.mubr.bf16.mxu0 0
  %2853 = vmatmul.mubr.bf16.gmra.mrb[0].mxu0 %v1822
  %v2854 = vpop.f32.mrb[0].mxu0
  %v2855 = vadd.f32 0.0, %v2854
  %v2856 = vpop.f32.mrb[0].mxu0
  %v2857 = vpop.f32.mrb[0].mxu0
  %v2858 = vadd.f32 0.0, %v2857
  %v2859 = vpop.f32.mrb[0].mxu0
  %2860 = vmatprep.mubr.bf16.mxu0 0
  %2861 = vmatmul.mubr.bf16.gmra.mrb[0].mxu0 %v1825
  %v2862 = vpop.f32.mrb[0].mxu0
  %v2863 = vadd.f32 0.0, %v2862
  %v2864 = vpop.f32.mrb[0].mxu0
  %v2865 = vpop.f32.mrb[0].mxu0
  %v2866 = vadd.f32 0.0, %v2865
  %v2867 = vpop.f32.mrb[0].mxu0
  %2868 = vmatprep.mubr.bf16.mxu0 0
  %2869 = vmatmul.mubr.bf16.gmra.mrb[0].mxu0 %v1828
  %v2870 = vpop.f32.mrb[0].mxu0
  %v2871 = vadd.f32 0.0, %v2870
  %v2872 = vpop.f32.mrb[0].mxu0
  %v2873 = vpop.f32.mrb[0].mxu0
  %v2874 = vadd.f32 0.0, %v2873
  %v2875 = vpop.f32.mrb[0].mxu0
  %2876 = vmatprep.mubr.bf16.mxu0 0
  %2877 = vmatmul.mubr.bf16.gmra.mrb[0].mxu0 %v1831
  %v2878 = vpop.f32.mrb[0].mxu0
  %v2879 = vadd.f32 0.0, %v2878
  %v2880 = vpop.f32.mrb[0].mxu0
  %v2881 = vpop.f32.mrb[0].mxu0
  %v2882 = vadd.f32 0.0, %v2881
  %v2883 = vpop.f32.mrb[0].mxu0
  %2884 = vmatprep.mubr.bf16.mxu0 0
  %2885 = vmatmul.mubr.bf16.gmra.mrb[0].mxu0 %v1834
  %v2886 = vpop.f32.mrb[0].mxu0
  %v2887 = vadd.f32 0.0, %v2886
  %v2888 = vpop.f32.mrb[0].mxu0
  %v2889 = vpop.f32.mrb[0].mxu0
  %v2890 = vadd.f32 0.0, %v2889
  %v2891 = vpop.f32.mrb[0].mxu0
  %2892 = vdwg.mxu0
  %v2893 = vadd.f32 %v275, %v1871
  %v2894 = vadd.f32 %v276, %v1874
  %v2895 = vadd.f32 %v277, %v1879
  %v2896 = vadd.f32 %v278, %v1882
  %v2897 = vadd.f32 %v279, %v1887
  %v2898 = vadd.f32 %v280, %v1890
  %v2899 = vadd.f32 %v281, %v1895
  %v2900 = vadd.f32 %v282, %v1898
  %v2901 = vadd.f32 %v283, %v1903
  %v2902 = vadd.f32 %v284, %v1906
  %v2903 = vadd.f32 %v285, %v1911
  %v2904 = vadd.f32 %v286, %v1914
  %v2905 = vadd.f32 %v287, %v1919
  %v2906 = vadd.f32 %v288, %v1922
  %v2907 = vadd.f32 %v289, %v1927
  %v2908 = vadd.f32 %v290, %v1930
  %v2909 = vadd.f32 %v291, %v1935
  %v2910 = vadd.f32 %v292, %v1938
  %v2911 = vadd.f32 %v293, %v1943
  %v2912 = vadd.f32 %v294, %v1946
  %v2913 = vadd.f32 %v295, %v1951
  %v2914 = vadd.f32 %v296, %v1954
  %v2915 = vadd.f32 %v297, %v1959
  %v2916 = vadd.f32 %v298, %v1962
  %v2917 = vadd.f32 %v299, %v1967
  %v2918 = vadd.f32 %v300, %v1970
  %v2919 = vadd.f32 %v301, %v1975
  %v2920 = vadd.f32 %v302, %v1978
  %v2921 = vadd.f32 %v303, %v1983
  %v2922 = vadd.f32 %v304, %v1986
  %v2923 = vadd.f32 %v305, %v1991
  %v2924 = vadd.f32 %v306, %v1994
  %v2925 = vadd.f32 %v307, %v1999
  %v2926 = vadd.f32 %v308, %v2002
  %v2927 = vadd.f32 %v309, %v2007
  %v2928 = vadd.f32 %v310, %v2010
  %v2929 = vadd.f32 %v311, %v2015
  %v2930 = vadd.f32 %v312, %v2018
  %v2931 = vadd.f32 %v313, %v2023
  %v2932 = vadd.f32 %v314, %v2026
  %v2933 = vadd.f32 %v315, %v2031
  %v2934 = vadd.f32 %v316, %v2034
  %v2935 = vadd.f32 %v317, %v2039
  %v2936 = vadd.f32 %v318, %v2042
  %v2937 = vadd.f32 %v319, %v2047
  %v2938 = vadd.f32 %v320, %v2050
  %v2939 = vadd.f32 %v321, %v2055
  %v2940 = vadd.f32 %v322, %v2058
  %v2941 = vadd.f32 %v323, %v2063
  %v2942 = vadd.f32 %v324, %v2066
  %v2943 = vadd.f32 %v325, %v2071
  %v2944 = vadd.f32 %v326, %v2074
  %v2945 = vadd.f32 %v327, %v2079
  %v2946 = vadd.f32 %v328, %v2082
  %v2947 = vadd.f32 %v329, %v2087
  %v2948 = vadd.f32 %v330, %v2090
  %v2949 = vadd.f32 %v331, %v2095
  %v2950 = vadd.f32 %v332, %v2098
  %v2951 = vadd.f32 %v333, %v2103
  %v2952 = vadd.f32 %v334, %v2106
  %v2953 = vadd.f32 %v335, %v2111
  %v2954 = vadd.f32 %v336, %v2114
  %v2955 = vadd.f32 %v337, %v2119
  %v2956 = vadd.f32 %v338, %v2122
  %v2957 = vadd.f32 %v339, %v2127
  %v2958 = vadd.f32 %v340, %v2130
  %v2959 = vadd.f32 %v341, %v2135
  %v2960 = vadd.f32 %v342, %v2138
  %v2961 = vadd.f32 %v343, %v2143
  %v2962 = vadd.f32 %v344, %v2146
  %v2963 = vadd.f32 %v345, %v2151
  %v2964 = vadd.f32 %v346, %v2154
  %v2965 = vadd.f32 %v347, %v2159
  %v2966 = vadd.f32 %v348, %v2162
  %v2967 = vadd.f32 %v349, %v2167
  %v2968 = vadd.f32 %v350, %v2170
  %v2969 = vadd.f32 %v351, %v2175
  %v2970 = vadd.f32 %v352, %v2178
  %v2971 = vadd.f32 %v353, %v2183
  %v2972 = vadd.f32 %v354, %v2186
  %v2973 = vadd.f32 %v355, %v2191
  %v2974 = vadd.f32 %v356, %v2194
  %v2975 = vadd.f32 %v357, %v2199
  %v2976 = vadd.f32 %v358, %v2202
  %v2977 = vadd.f32 %v359, %v2207
  %v2978 = vadd.f32 %v360, %v2210
  %v2979 = vadd.f32 %v361, %v2215
  %v2980 = vadd.f32 %v362, %v2218
  %v2981 = vadd.f32 %v363, %v2223
  %v2982 = vadd.f32 %v364, %v2226
  %v2983 = vadd.f32 %v365, %v2231
  %v2984 = vadd.f32 %v366, %v2234
  %v2985 = vadd.f32 %v367, %v2239
  %v2986 = vadd.f32 %v368, %v2242
  %v2987 = vadd.f32 %v369, %v2247
  %v2988 = vadd.f32 %v370, %v2250
  %v2989 = vadd.f32 %v371, %v2255
  %v2990 = vadd.f32 %v372, %v2258
  %v2991 = vadd.f32 %v373, %v2263
  %v2992 = vadd.f32 %v374, %v2266
  %v2993 = vadd.f32 %v375, %v2271
  %v2994 = vadd.f32 %v376, %v2274
  %v2995 = vadd.f32 %v377, %v2279
  %v2996 = vadd.f32 %v378, %v2282
  %v2997 = vadd.f32 %v379, %v2287
  %v2998 = vadd.f32 %v380, %v2290
  %v2999 = vadd.f32 %v381, %v2295
  %v3000 = vadd.f32 %v382, %v2298
  %v3001 = vadd.f32 %v383, %v2303
  %v3002 = vadd.f32 %v384, %v2306
  %v3003 = vadd.f32 %v385, %v2311
  %v3004 = vadd.f32 %v386, %v2314
  %v3005 = vadd.f32 %v387, %v2319
  %v3006 = vadd.f32 %v388, %v2322
  %v3007 = vadd.f32 %v389, %v2327
  %v3008 = vadd.f32 %v390, %v2330
  %v3009 = vadd.f32 %v391, %v2335
  %v3010 = vadd.f32 %v392, %v2338
  %v3011 = vadd.f32 %v393, %v2343
  %v3012 = vadd.f32 %v394, %v2346
  %v3013 = vadd.f32 %v395, %v2351
  %v3014 = vadd.f32 %v396, %v2354
  %v3015 = vadd.f32 %v397, %v2359
  %v3016 = vadd.f32 %v398, %v2362
  %v3017 = vadd.f32 %v399, %v2367
  %v3018 = vadd.f32 %v400, %v2370
  %v3019 = vadd.f32 %v401, %v2375
  %v3020 = vadd.f32 %v402, %v2378
  %v3021 = vadd.f32 %v403, %v2383
  %v3022 = vadd.f32 %v404, %v2386
  %v3023 = vadd.f32 %v405, %v2391
  %v3024 = vadd.f32 %v406, %v2394
  %v3025 = vadd.f32 %v407, %v2399
  %v3026 = vadd.f32 %v408, %v2402
  %v3027 = vadd.f32 %v409, %v2407
  %v3028 = vadd.f32 %v410, %v2410
  %v3029 = vadd.f32 %v411, %v2415
  %v3030 = vadd.f32 %v412, %v2418
  %v3031 = vadd.f32 %v413, %v2423
  %v3032 = vadd.f32 %v414, %v2426
  %v3033 = vadd.f32 %v415, %v2431
  %v3034 = vadd.f32 %v416, %v2434
  %v3035 = vadd.f32 %v417, %v2439
  %v3036 = vadd.f32 %v418, %v2442
  %v3037 = vadd.f32 %v419, %v2447
  %v3038 = vadd.f32 %v420, %v2450
  %v3039 = vadd.f32 %v421, %v2455
  %v3040 = vadd.f32 %v422, %v2458
  %v3041 = vadd.f32 %v423, %v2463
  %v3042 = vadd.f32 %v424, %v2466
  %v3043 = vadd.f32 %v425, %v2471
  %v3044 = vadd.f32 %v426, %v2474
  %v3045 = vadd.f32 %v427, %v2479
  %v3046 = vadd.f32 %v428, %v2482
  %v3047 = vadd.f32 %v429, %v2487
  %v3048 = vadd.f32 %v430, %v2490
  %v3049 = vadd.f32 %v431, %v2495
  %v3050 = vadd.f32 %v432, %v2498
  %v3051 = vadd.f32 %v433, %v2503
  %v3052 = vadd.f32 %v434, %v2506
  %v3053 = vadd.f32 %v435, %v2511
  %v3054 = vadd.f32 %v436, %v2514
  %v3055 = vadd.f32 %v437, %v2519
  %v3056 = vadd.f32 %v438, %v2522
  %v3057 = vadd.f32 %v439, %v2527
  %v3058 = vadd.f32 %v440, %v2530
  %v3059 = vadd.f32 %v441, %v2535
  %v3060 = vadd.f32 %v442, %v2538
  %v3061 = vadd.f32 %v443, %v2543
  %v3062 = vadd.f32 %v444, %v2546
  %v3063 = vadd.f32 %v445, %v2551
  %v3064 = vadd.f32 %v446, %v2554
  %v3065 = vadd.f32 %v447, %v2559
  %v3066 = vadd.f32 %v448, %v2562
  %v3067 = vadd.f32 %v449, %v2567
  %v3068 = vadd.f32 %v450, %v2570
  %v3069 = vadd.f32 %v451, %v2575
  %v3070 = vadd.f32 %v452, %v2578
  %v3071 = vadd.f32 %v453, %v2583
  %v3072 = vadd.f32 %v454, %v2586
  %v3073 = vadd.f32 %v455, %v2591
  %v3074 = vadd.f32 %v456, %v2594
  %v3075 = vadd.f32 %v457, %v2599
  %v3076 = vadd.f32 %v458, %v2602
  %v3077 = vadd.f32 %v459, %v2607
  %v3078 = vadd.f32 %v460, %v2610
  %v3079 = vadd.f32 %v461, %v2615
  %v3080 = vadd.f32 %v462, %v2618
  %v3081 = vadd.f32 %v463, %v2623
  %v3082 = vadd.f32 %v464, %v2626
  %v3083 = vadd.f32 %v465, %v2631
  %v3084 = vadd.f32 %v466, %v2634
  %v3085 = vadd.f32 %v467, %v2639
  %v3086 = vadd.f32 %v468, %v2642
  %v3087 = vadd.f32 %v469, %v2647
  %v3088 = vadd.f32 %v470, %v2650
  %v3089 = vadd.f32 %v471, %v2655
  %v3090 = vadd.f32 %v472, %v2658
  %v3091 = vadd.f32 %v473, %v2663
  %v3092 = vadd.f32 %v474, %v2666
  %v3093 = vadd.f32 %v475, %v2671
  %v3094 = vadd.f32 %v476, %v2674
  %v3095 = vadd.f32 %v477, %v2679
  %v3096 = vadd.f32 %v478, %v2682
  %v3097 = vadd.f32 %v479, %v2687
  %v3098 = vadd.f32 %v480, %v2690
  %v3099 = vadd.f32 %v481, %v2695
  %v3100 = vadd.f32 %v482, %v2698
  %v3101 = vadd.f32 %v483, %v2703
  %v3102 = vadd.f32 %v484, %v2706
  %v3103 = vadd.f32 %v485, %v2711
  %v3104 = vadd.f32 %v486, %v2714
  %v3105 = vadd.f32 %v487, %v2719
  %v3106 = vadd.f32 %v488, %v2722
  %v3107 = vadd.f32 %v489, %v2727
  %v3108 = vadd.f32 %v490, %v2730
  %v3109 = vadd.f32 %v491, %v2735
  %v3110 = vadd.f32 %v492, %v2738
  %v3111 = vadd.f32 %v493, %v2743
  %v3112 = vadd.f32 %v494, %v2746
  %v3113 = vadd.f32 %v495, %v2751
  %v3114 = vadd.f32 %v496, %v2754
  %v3115 = vadd.f32 %v497, %v2759
  %v3116 = vadd.f32 %v498, %v2762
  %v3117 = vadd.f32 %v499, %v2767
  %v3118 = vadd.f32 %v500, %v2770
  %v3119 = vadd.f32 %v501, %v2775
  %v3120 = vadd.f32 %v502, %v2778
  %v3121 = vadd.f32 %v503, %v2783
  %v3122 = vadd.f32 %v504, %v2786
  %v3123 = vadd.f32 %v505, %v2791
  %v3124 = vadd.f32 %v506, %v2794
  %v3125 = vadd.f32 %v507, %v2799
  %v3126 = vadd.f32 %v508, %v2802
  %v3127 = vadd.f32 %v509, %v2807
  %v3128 = vadd.f32 %v510, %v2810
  %v3129 = vadd.f32 %v511, %v2815
  %v3130 = vadd.f32 %v512, %v2818
  %v3131 = vadd.f32 %v513, %v2823
  %v3132 = vadd.f32 %v514, %v2826
  %v3133 = vadd.f32 %v515, %v2831
  %v3134 = vadd.f32 %v516, %v2834
  %v3135 = vadd.f32 %v517, %v2839
  %v3136 = vadd.f32 %v518, %v2842
  %v3137 = vadd.f32 %v519, %v2847
  %v3138 = vadd.f32 %v520, %v2850
  %v3139 = vadd.f32 %v521, %v2855
  %v3140 = vadd.f32 %v522, %v2858
  %v3141 = vadd.f32 %v523, %v2863
  %v3142 = vadd.f32 %v524, %v2866
  %v3143 = vadd.f32 %v525, %v2871
  %v3144 = vadd.f32 %v526, %v2874
  %v3145 = vadd.f32 %v527, %v2879
  %v3146 = vadd.f32 %v528, %v2882
  %v3147 = vadd.f32 %v529, %v2887
  %v3148 = vadd.f32 %v530, %v2890
  %vm3149 = vcmask 64512
  %3150 = vst.msk [vmem:[#allocation2] sm:$0xff] %vm3149, %v2893
  %3151 = vst.msk [vmem:[#allocation2 + $0x8] sm:$0xff] %vm3149, %v2894
  %3152 = vst.msk [vmem:[#allocation2 + $0x10] sm:$0xff] %vm3149, %v2895
  %3153 = vst.msk [vmem:[#allocation2 + $0x18] sm:$0xff] %vm3149, %v2896
  %3154 = vst.msk [vmem:[#allocation2 + $0x20] sm:$0xff] %vm3149, %v2897
  %3155 = vst.msk [vmem:[#allocation2 + $0x28] sm:$0xff] %vm3149, %v2898
  %3156 = vst.msk [vmem:[#allocation2 + $0x30] sm:$0xff] %vm3149, %v2899
  %3157 = vst.msk [vmem:[#allocation2 + $0x38] sm:$0xff] %vm3149, %v2900
  %3158 = vst.msk [vmem:[#allocation2 + $0x40] sm:$0xff] %vm3149, %v2901
  %3159 = vst.msk [vmem:[#allocation2 + $0x48] sm:$0xff] %vm3149, %v2902
  %3160 = vst.msk [vmem:[#allocation2 + $0x50] sm:$0xff] %vm3149, %v2903
  %3161 = vst.msk [vmem:[#allocation2 + $0x58] sm:$0xff] %vm3149, %v2904
  %3162 = vst.msk [vmem:[#allocation2 + $0x60] sm:$0xff] %vm3149, %v2905
  %3163 = vst.msk [vmem:[#allocation2 + $0x68] sm:$0xff] %vm3149, %v2906
  %3164 = vst.msk [vmem:[#allocation2 + $0x70] sm:$0xff] %vm3149, %v2907
  %3165 = vst.msk [vmem:[#allocation2 + $0x78] sm:$0xff] %vm3149, %v2908
  %3166 = vst.msk [vmem:[#allocation2 + $0x80] sm:$0xff] %vm3149, %v2909
  %3167 = vst.msk [vmem:[#allocation2 + $0x88] sm:$0xff] %vm3149, %v2910
  %3168 = vst.msk [vmem:[#allocation2 + $0x90] sm:$0xff] %vm3149, %v2911
  %3169 = vst.msk [vmem:[#allocation2 + $0x98] sm:$0xff] %vm3149, %v2912
  %3170 = vst.msk [vmem:[#allocation2 + $0xa0] sm:$0xff] %vm3149, %v2913
  %3171 = vst.msk [vmem:[#allocation2 + $0xa8] sm:$0xff] %vm3149, %v2914
  %3172 = vst.msk [vmem:[#allocation2 + $0xb0] sm:$0xff] %vm3149, %v2915
  %3173 = vst.msk [vmem:[#allocation2 + $0xb8] sm:$0xff] %vm3149, %v2916
  %3174 = vst.msk [vmem:[#allocation2 + $0xc0] sm:$0xff] %vm3149, %v2917
  %3175 = vst.msk [vmem:[#allocation2 + $0xc8] sm:$0xff] %vm3149, %v2918
  %3176 = vst.msk [vmem:[#allocation2 + $0xd0] sm:$0xff] %vm3149, %v2919
  %3177 = vst.msk [vmem:[#allocation2 + $0xd8] sm:$0xff] %vm3149, %v2920
  %3178 = vst.msk [vmem:[#allocation2 + $0xe0] sm:$0xff] %vm3149, %v2921
  %3179 = vst.msk [vmem:[#allocation2 + $0xe8] sm:$0xff] %vm3149, %v2922
  %3180 = vst.msk [vmem:[#allocation2 + $0xf0] sm:$0xff] %vm3149, %v2923
  %3181 = vst.msk [vmem:[#allocation2 + $0xf8] sm:$0xff] %vm3149, %v2924
  %3182 = vst.msk [vmem:[#allocation2 + $0x100] sm:$0xff] %vm3149, %v2925
  %3183 = vst.msk [vmem:[#allocation2 + $0x108] sm:$0xff] %vm3149, %v2926
  %3184 = vst.msk [vmem:[#allocation2 + $0x110] sm:$0xff] %vm3149, %v2927
  %3185 = vst.msk [vmem:[#allocation2 + $0x118] sm:$0xff] %vm3149, %v2928
  %3186 = vst.msk [vmem:[#allocation2 + $0x120] sm:$0xff] %vm3149, %v2929
  %3187 = vst.msk [vmem:[#allocation2 + $0x128] sm:$0xff] %vm3149, %v2930
  %3188 = vst.msk [vmem:[#allocation2 + $0x130] sm:$0xff] %vm3149, %v2931
  %3189 = vst.msk [vmem:[#allocation2 + $0x138] sm:$0xff] %vm3149, %v2932
  %3190 = vst.msk [vmem:[#allocation2 + $0x140] sm:$0xff] %vm3149, %v2933
  %3191 = vst.msk [vmem:[#allocation2 + $0x148] sm:$0xff] %vm3149, %v2934
  %3192 = vst.msk [vmem:[#allocation2 + $0x150] sm:$0xff] %vm3149, %v2935
  %3193 = vst.msk [vmem:[#allocation2 + $0x158] sm:$0xff] %vm3149, %v2936
  %3194 = vst.msk [vmem:[#allocation2 + $0x160] sm:$0xff] %vm3149, %v2937
  %3195 = vst.msk [vmem:[#allocation2 + $0x168] sm:$0xff] %vm3149, %v2938
  %3196 = vst.msk [vmem:[#allocation2 + $0x170] sm:$0xff] %vm3149, %v2939
  %3197 = vst.msk [vmem:[#allocation2 + $0x178] sm:$0xff] %vm3149, %v2940
  %3198 = vst.msk [vmem:[#allocation2 + $0x180] sm:$0xff] %vm3149, %v2941
  %3199 = vst.msk [vmem:[#allocation2 + $0x188] sm:$0xff] %vm3149, %v2942
  %3200 = vst.msk [vmem:[#allocation2 + $0x190] sm:$0xff] %vm3149, %v2943
  %3201 = vst.msk [vmem:[#allocation2 + $0x198] sm:$0xff] %vm3149, %v2944
  %3202 = vst.msk [vmem:[#allocation2 + $0x1a0] sm:$0xff] %vm3149, %v2945
  %3203 = vst.msk [vmem:[#allocation2 + $0x1a8] sm:$0xff] %vm3149, %v2946
  %3204 = vst.msk [vmem:[#allocation2 + $0x1b0] sm:$0xff] %vm3149, %v2947
  %3205 = vst.msk [vmem:[#allocation2 + $0x1b8] sm:$0xff] %vm3149, %v2948
  %3206 = vst.msk [vmem:[#allocation2 + $0x1c0] sm:$0xff] %vm3149, %v2949
  %3207 = vst.msk [vmem:[#allocation2 + $0x1c8] sm:$0xff] %vm3149, %v2950
  %3208 = vst.msk [vmem:[#allocation2 + $0x1d0] sm:$0xff] %vm3149, %v2951
  %3209 = vst.msk [vmem:[#allocation2 + $0x1d8] sm:$0xff] %vm3149, %v2952
  %3210 = vst.msk [vmem:[#allocation2 + $0x1e0] sm:$0xff] %vm3149, %v2953
  %3211 = vst.msk [vmem:[#allocation2 + $0x1e8] sm:$0xff] %vm3149, %v2954
  %3212 = vst.msk [vmem:[#allocation2 + $0x1f0] sm:$0xff] %vm3149, %v2955
  %3213 = vst.msk [vmem:[#allocation2 + $0x1f8] sm:$0xff] %vm3149, %v2956
  %3214 = vst.msk [vmem:[#allocation2 + $0x200] sm:$0xff] %vm3149, %v2957
  %3215 = vst.msk [vmem:[#allocation2 + $0x208] sm:$0xff] %vm3149, %v2958
  %3216 = vst.msk [vmem:[#allocation2 + $0x210] sm:$0xff] %vm3149, %v2959
  %3217 = vst.msk [vmem:[#allocation2 + $0x218] sm:$0xff] %vm3149, %v2960
  %3218 = vst.msk [vmem:[#allocation2 + $0x220] sm:$0xff] %vm3149, %v2961
  %3219 = vst.msk [vmem:[#allocation2 + $0x228] sm:$0xff] %vm3149, %v2962
  %3220 = vst.msk [vmem:[#allocation2 + $0x230] sm:$0xff] %vm3149, %v2963
  %3221 = vst.msk [vmem:[#allocation2 + $0x238] sm:$0xff] %vm3149, %v2964
  %3222 = vst.msk [vmem:[#allocation2 + $0x240] sm:$0xff] %vm3149, %v2965
  %3223 = vst.msk [vmem:[#allocation2 + $0x248] sm:$0xff] %vm3149, %v2966
  %3224 = vst.msk [vmem:[#allocation2 + $0x250] sm:$0xff] %vm3149, %v2967
  %3225 = vst.msk [vmem:[#allocation2 + $0x258] sm:$0xff] %vm3149, %v2968
  %3226 = vst.msk [vmem:[#allocation2 + $0x260] sm:$0xff] %vm3149, %v2969
  %3227 = vst.msk [vmem:[#allocation2 + $0x268] sm:$0xff] %vm3149, %v2970
  %3228 = vst.msk [vmem:[#allocation2 + $0x270] sm:$0xff] %vm3149, %v2971
  %3229 = vst.msk [vmem:[#allocation2 + $0x278] sm:$0xff] %vm3149, %v2972
  %3230 = vst.msk [vmem:[#allocation2 + $0x280] sm:$0xff] %vm3149, %v2973
  %3231 = vst.msk [vmem:[#allocation2 + $0x288] sm:$0xff] %vm3149, %v2974
  %3232 = vst.msk [vmem:[#allocation2 + $0x290] sm:$0xff] %vm3149, %v2975
  %3233 = vst.msk [vmem:[#allocation2 + $0x298] sm:$0xff] %vm3149, %v2976
  %3234 = vst.msk [vmem:[#allocation2 + $0x2a0] sm:$0xff] %vm3149, %v2977
  %3235 = vst.msk [vmem:[#allocation2 + $0x2a8] sm:$0xff] %vm3149, %v2978
  %3236 = vst.msk [vmem:[#allocation2 + $0x2b0] sm:$0xff] %vm3149, %v2979
  %3237 = vst.msk [vmem:[#allocation2 + $0x2b8] sm:$0xff] %vm3149, %v2980
  %3238 = vst.msk [vmem:[#allocation2 + $0x2c0] sm:$0xff] %vm3149, %v2981
  %3239 = vst.msk [vmem:[#allocation2 + $0x2c8] sm:$0xff] %vm3149, %v2982
  %3240 = vst.msk [vmem:[#allocation2 + $0x2d0] sm:$0xff] %vm3149, %v2983
  %3241 = vst.msk [vmem:[#allocation2 + $0x2d8] sm:$0xff] %vm3149, %v2984
  %3242 = vst.msk [vmem:[#allocation2 + $0x2e0] sm:$0xff] %vm3149, %v2985
  %3243 = vst.msk [vmem:[#allocation2 + $0x2e8] sm:$0xff] %vm3149, %v2986
  %3244 = vst.msk [vmem:[#allocation2 + $0x2f0] sm:$0xff] %vm3149, %v2987
  %3245 = vst.msk [vmem:[#allocation2 + $0x2f8] sm:$0xff] %vm3149, %v2988
  %3246 = vst.msk [vmem:[#allocation2 + $0x300] sm:$0xff] %vm3149, %v2989
  %3247 = vst.msk [vmem:[#allocation2 + $0x308] sm:$0xff] %vm3149, %v2990
  %3248 = vst.msk [vmem:[#allocation2 + $0x310] sm:$0xff] %vm3149, %v2991
  %3249 = vst.msk [vmem:[#allocation2 + $0x318] sm:$0xff] %vm3149, %v2992
  %3250 = vst.msk [vmem:[#allocation2 + $0x320] sm:$0xff] %vm3149, %v2993
  %3251 = vst.msk [vmem:[#allocation2 + $0x328] sm:$0xff] %vm3149, %v2994
  %3252 = vst.msk [vmem:[#allocation2 + $0x330] sm:$0xff] %vm3149, %v2995
  %3253 = vst.msk [vmem:[#allocation2 + $0x338] sm:$0xff] %vm3149, %v2996
  %3254 = vst.msk [vmem:[#allocation2 + $0x340] sm:$0xff] %vm3149, %v2997
  %3255 = vst.msk [vmem:[#allocation2 + $0x348] sm:$0xff] %vm3149, %v2998
  %3256 = vst.msk [vmem:[#allocation2 + $0x350] sm:$0xff] %vm3149, %v2999
  %3257 = vst.msk [vmem:[#allocation2 + $0x358] sm:$0xff] %vm3149, %v3000
  %3258 = vst.msk [vmem:[#allocation2 + $0x360] sm:$0xff] %vm3149, %v3001
  %3259 = vst.msk [vmem:[#allocation2 + $0x368] sm:$0xff] %vm3149, %v3002
  %3260 = vst.msk [vmem:[#allocation2 + $0x370] sm:$0xff] %vm3149, %v3003
  %3261 = vst.msk [vmem:[#allocation2 + $0x378] sm:$0xff] %vm3149, %v3004
  %3262 = vst.msk [vmem:[#allocation2 + $0x380] sm:$0xff] %vm3149, %v3005
  %3263 = vst.msk [vmem:[#allocation2 + $0x388] sm:$0xff] %vm3149, %v3006
  %3264 = vst.msk [vmem:[#allocation2 + $0x390] sm:$0xff] %vm3149, %v3007
  %3265 = vst.msk [vmem:[#allocation2 + $0x398] sm:$0xff] %vm3149, %v3008
  %3266 = vst.msk [vmem:[#allocation2 + $0x3a0] sm:$0xff] %vm3149, %v3009
  %3267 = vst.msk [vmem:[#allocation2 + $0x3a8] sm:$0xff] %vm3149, %v3010
  %3268 = vst.msk [vmem:[#allocation2 + $0x3b0] sm:$0xff] %vm3149, %v3011
  %3269 = vst.msk [vmem:[#allocation2 + $0x3b8] sm:$0xff] %vm3149, %v3012
  %3270 = vst.msk [vmem:[#allocation2 + $0x3c0] sm:$0xff] %vm3149, %v3013
  %3271 = vst.msk [vmem:[#allocation2 + $0x3c8] sm:$0xff] %vm3149, %v3014
  %3272 = vst.msk [vmem:[#allocation2 + $0x3d0] sm:$0xff] %vm3149, %v3015
  %3273 = vst.msk [vmem:[#allocation2 + $0x3d8] sm:$0xff] %vm3149, %v3016
  %3274 = vst.msk [vmem:[#allocation2 + $0x3e0] sm:$0xff] %vm3149, %v3017
  %3275 = vst.msk [vmem:[#allocation2 + $0x3e8] sm:$0xff] %vm3149, %v3018
  %3276 = vst.msk [vmem:[#allocation2 + $0x3f0] sm:$0xff] %vm3149, %v3019
  %3277 = vst.msk [vmem:[#allocation2 + $0x3f8] sm:$0xff] %vm3149, %v3020
  %3278 = vst.msk [vmem:[#allocation2 + $0x400] sm:$0xff] %vm3149, %v3021
  %3279 = vst.msk [vmem:[#allocation2 + $0x408] sm:$0xff] %vm3149, %v3022
  %3280 = vst.msk [vmem:[#allocation2 + $0x410] sm:$0xff] %vm3149, %v3023
  %3281 = vst.msk [vmem:[#allocation2 + $0x418] sm:$0xff] %vm3149, %v3024
  %3282 = vst.msk [vmem:[#allocation2 + $0x420] sm:$0xff] %vm3149, %v3025
  %3283 = vst.msk [vmem:[#allocation2 + $0x428] sm:$0xff] %vm3149, %v3026
  %3284 = vst.msk [vmem:[#allocation2 + $0x430] sm:$0xff] %vm3149, %v3027
  %3285 = vst.msk [vmem:[#allocation2 + $0x438] sm:$0xff] %vm3149, %v3028
  %3286 = vst.msk [vmem:[#allocation2 + $0x440] sm:$0xff] %vm3149, %v3029
  %3287 = vst.msk [vmem:[#allocation2 + $0x448] sm:$0xff] %vm3149, %v3030
  %3288 = vst.msk [vmem:[#allocation2 + $0x450] sm:$0xff] %vm3149, %v3031
  %3289 = vst.msk [vmem:[#allocation2 + $0x458] sm:$0xff] %vm3149, %v3032
  %3290 = vst.msk [vmem:[#allocation2 + $0x460] sm:$0xff] %vm3149, %v3033
  %3291 = vst.msk [vmem:[#allocation2 + $0x468] sm:$0xff] %vm3149, %v3034
  %3292 = vst.msk [vmem:[#allocation2 + $0x470] sm:$0xff] %vm3149, %v3035
  %3293 = vst.msk [vmem:[#allocation2 + $0x478] sm:$0xff] %vm3149, %v3036
  %3294 = vst.msk [vmem:[#allocation2 + $0x480] sm:$0xff] %vm3149, %v3037
  %3295 = vst.msk [vmem:[#allocation2 + $0x488] sm:$0xff] %vm3149, %v3038
  %3296 = vst.msk [vmem:[#allocation2 + $0x490] sm:$0xff] %vm3149, %v3039
  %3297 = vst.msk [vmem:[#allocation2 + $0x498] sm:$0xff] %vm3149, %v3040
  %3298 = vst.msk [vmem:[#allocation2 + $0x4a0] sm:$0xff] %vm3149, %v3041
  %3299 = vst.msk [vmem:[#allocation2 + $0x4a8] sm:$0xff] %vm3149, %v3042
  %3300 = vst.msk [vmem:[#allocation2 + $0x4b0] sm:$0xff] %vm3149, %v3043
  %3301 = vst.msk [vmem:[#allocation2 + $0x4b8] sm:$0xff] %vm3149, %v3044
  %3302 = vst.msk [vmem:[#allocation2 + $0x4c0] sm:$0xff] %vm3149, %v3045
  %3303 = vst.msk [vmem:[#allocation2 + $0x4c8] sm:$0xff] %vm3149, %v3046
  %3304 = vst.msk [vmem:[#allocation2 + $0x4d0] sm:$0xff] %vm3149, %v3047
  %3305 = vst.msk [vmem:[#allocation2 + $0x4d8] sm:$0xff] %vm3149, %v3048
  %3306 = vst.msk [vmem:[#allocation2 + $0x4e0] sm:$0xff] %vm3149, %v3049
  %3307 = vst.msk [vmem:[#allocation2 + $0x4e8] sm:$0xff] %vm3149, %v3050
  %3308 = vst.msk [vmem:[#allocation2 + $0x4f0] sm:$0xff] %vm3149, %v3051
  %3309 = vst.msk [vmem:[#allocation2 + $0x4f8] sm:$0xff] %vm3149, %v3052
  %3310 = vst.msk [vmem:[#allocation2 + $0x500] sm:$0xff] %vm3149, %v3053
  %3311 = vst.msk [vmem:[#allocation2 + $0x508] sm:$0xff] %vm3149, %v3054
  %3312 = vst.msk [vmem:[#allocation2 + $0x510] sm:$0xff] %vm3149, %v3055
  %3313 = vst.msk [vmem:[#allocation2 + $0x518] sm:$0xff] %vm3149, %v3056
  %3314 = vst.msk [vmem:[#allocation2 + $0x520] sm:$0xff] %vm3149, %v3057
  %3315 = vst.msk [vmem:[#allocation2 + $0x528] sm:$0xff] %vm3149, %v3058
  %3316 = vst.msk [vmem:[#allocation2 + $0x530] sm:$0xff] %vm3149, %v3059
  %3317 = vst.msk [vmem:[#allocation2 + $0x538] sm:$0xff] %vm3149, %v3060
  %3318 = vst.msk [vmem:[#allocation2 + $0x540] sm:$0xff] %vm3149, %v3061
  %3319 = vst.msk [vmem:[#allocation2 + $0x548] sm:$0xff] %vm3149, %v3062
  %3320 = vst.msk [vmem:[#allocation2 + $0x550] sm:$0xff] %vm3149, %v3063
  %3321 = vst.msk [vmem:[#allocation2 + $0x558] sm:$0xff] %vm3149, %v3064
  %3322 = vst.msk [vmem:[#allocation2 + $0x560] sm:$0xff] %vm3149, %v3065
  %3323 = vst.msk [vmem:[#allocation2 + $0x568] sm:$0xff] %vm3149, %v3066
  %3324 = vst.msk [vmem:[#allocation2 + $0x570] sm:$0xff] %vm3149, %v3067
  %3325 = vst.msk [vmem:[#allocation2 + $0x578] sm:$0xff] %vm3149, %v3068
  %3326 = vst.msk [vmem:[#allocation2 + $0x580] sm:$0xff] %vm3149, %v3069
  %3327 = vst.msk [vmem:[#allocation2 + $0x588] sm:$0xff] %vm3149, %v3070
  %3328 = vst.msk [vmem:[#allocation2 + $0x590] sm:$0xff] %vm3149, %v3071
  %3329 = vst.msk [vmem:[#allocation2 + $0x598] sm:$0xff] %vm3149, %v3072
  %3330 = vst.msk [vmem:[#allocation2 + $0x5a0] sm:$0xff] %vm3149, %v3073
  %3331 = vst.msk [vmem:[#allocation2 + $0x5a8] sm:$0xff] %vm3149, %v3074
  %3332 = vst.msk [vmem:[#allocation2 + $0x5b0] sm:$0xff] %vm3149, %v3075
  %3333 = vst.msk [vmem:[#allocation2 + $0x5b8] sm:$0xff] %vm3149, %v3076
  %3334 = vst.msk [vmem:[#allocation2 + $0x5c0] sm:$0xff] %vm3149, %v3077
  %3335 = vst.msk [vmem:[#allocation2 + $0x5c8] sm:$0xff] %vm3149, %v3078
  %3336 = vst.msk [vmem:[#allocation2 + $0x5d0] sm:$0xff] %vm3149, %v3079
  %3337 = vst.msk [vmem:[#allocation2 + $0x5d8] sm:$0xff] %vm3149, %v3080
  %3338 = vst.msk [vmem:[#allocation2 + $0x5e0] sm:$0xff] %vm3149, %v3081
  %3339 = vst.msk [vmem:[#allocation2 + $0x5e8] sm:$0xff] %vm3149, %v3082
  %3340 = vst.msk [vmem:[#allocation2 + $0x5f0] sm:$0xff] %vm3149, %v3083
  %3341 = vst.msk [vmem:[#allocation2 + $0x5f8] sm:$0xff] %vm3149, %v3084
  %3342 = vst.msk [vmem:[#allocation2 + $0x600] sm:$0xff] %vm3149, %v3085
  %3343 = vst.msk [vmem:[#allocation2 + $0x608] sm:$0xff] %vm3149, %v3086
  %3344 = vst.msk [vmem:[#allocation2 + $0x610] sm:$0xff] %vm3149, %v3087
  %3345 = vst.msk [vmem:[#allocation2 + $0x618] sm:$0xff] %vm3149, %v3088
  %3346 = vst.msk [vmem:[#allocation2 + $0x620] sm:$0xff] %vm3149, %v3089
  %3347 = vst.msk [vmem:[#allocation2 + $0x628] sm:$0xff] %vm3149, %v3090
  %3348 = vst.msk [vmem:[#allocation2 + $0x630] sm:$0xff] %vm3149, %v3091
  %3349 = vst.msk [vmem:[#allocation2 + $0x638] sm:$0xff] %vm3149, %v3092
  %3350 = vst.msk [vmem:[#allocation2 + $0x640] sm:$0xff] %vm3149, %v3093
  %3351 = vst.msk [vmem:[#allocation2 + $0x648] sm:$0xff] %vm3149, %v3094
  %3352 = vst.msk [vmem:[#allocation2 + $0x650] sm:$0xff] %vm3149, %v3095
  %3353 = vst.msk [vmem:[#allocation2 + $0x658] sm:$0xff] %vm3149, %v3096
  %3354 = vst.msk [vmem:[#allocation2 + $0x660] sm:$0xff] %vm3149, %v3097
  %3355 = vst.msk [vmem:[#allocation2 + $0x668] sm:$0xff] %vm3149, %v3098
  %3356 = vst.msk [vmem:[#allocation2 + $0x670] sm:$0xff] %vm3149, %v3099
  %3357 = vst.msk [vmem:[#allocation2 + $0x678] sm:$0xff] %vm3149, %v3100
  %3358 = vst.msk [vmem:[#allocation2 + $0x680] sm:$0xff] %vm3149, %v3101
  %3359 = vst.msk [vmem:[#allocation2 + $0x688] sm:$0xff] %vm3149, %v3102
  %3360 = vst.msk [vmem:[#allocation2 + $0x690] sm:$0xff] %vm3149, %v3103
  %3361 = vst.msk [vmem:[#allocation2 + $0x698] sm:$0xff] %vm3149, %v3104
  %3362 = vst.msk [vmem:[#allocation2 + $0x6a0] sm:$0xff] %vm3149, %v3105
  %3363 = vst.msk [vmem:[#allocation2 + $0x6a8] sm:$0xff] %vm3149, %v3106
  %3364 = vst.msk [vmem:[#allocation2 + $0x6b0] sm:$0xff] %vm3149, %v3107
  %3365 = vst.msk [vmem:[#allocation2 + $0x6b8] sm:$0xff] %vm3149, %v3108
  %3366 = vst.msk [vmem:[#allocation2 + $0x6c0] sm:$0xff] %vm3149, %v3109
  %3367 = vst.msk [vmem:[#allocation2 + $0x6c8] sm:$0xff] %vm3149, %v3110
  %3368 = vst.msk [vmem:[#allocation2 + $0x6d0] sm:$0xff] %vm3149, %v3111
  %3369 = vst.msk [vmem:[#allocation2 + $0x6d8] sm:$0xff] %vm3149, %v3112
  %3370 = vst.msk [vmem:[#allocation2 + $0x6e0] sm:$0xff] %vm3149, %v3113
  %3371 = vst.msk [vmem:[#allocation2 + $0x6e8] sm:$0xff] %vm3149, %v3114
  %3372 = vst.msk [vmem:[#allocation2 + $0x6f0] sm:$0xff] %vm3149, %v3115
  %3373 = vst.msk [vmem:[#allocation2 + $0x6f8] sm:$0xff] %vm3149, %v3116
  %3374 = vst.msk [vmem:[#allocation2 + $0x700] sm:$0xff] %vm3149, %v3117
  %3375 = vst.msk [vmem:[#allocation2 + $0x708] sm:$0xff] %vm3149, %v3118
  %3376 = vst.msk [vmem:[#allocation2 + $0x710] sm:$0xff] %vm3149, %v3119
  %3377 = vst.msk [vmem:[#allocation2 + $0x718] sm:$0xff] %vm3149, %v3120
  %3378 = vst.msk [vmem:[#allocation2 + $0x720] sm:$0xff] %vm3149, %v3121
  %3379 = vst.msk [vmem:[#allocation2 + $0x728] sm:$0xff] %vm3149, %v3122
  %3380 = vst.msk [vmem:[#allocation2 + $0x730] sm:$0xff] %vm3149, %v3123
  %3381 = vst.msk [vmem:[#allocation2 + $0x738] sm:$0xff] %vm3149, %v3124
  %3382 = vst.msk [vmem:[#allocation2 + $0x740] sm:$0xff] %vm3149, %v3125
  %3383 = vst.msk [vmem:[#allocation2 + $0x748] sm:$0xff] %vm3149, %v3126
  %3384 = vst.msk [vmem:[#allocation2 + $0x750] sm:$0xff] %vm3149, %v3127
  %3385 = vst.msk [vmem:[#allocation2 + $0x758] sm:$0xff] %vm3149, %v3128
  %3386 = vst.msk [vmem:[#allocation2 + $0x760] sm:$0xff] %vm3149, %v3129
  %3387 = vst.msk [vmem:[#allocation2 + $0x768] sm:$0xff] %vm3149, %v3130
  %3388 = vst.msk [vmem:[#allocation2 + $0x770] sm:$0xff] %vm3149, %v3131
  %3389 = vst.msk [vmem:[#allocation2 + $0x778] sm:$0xff] %vm3149, %v3132
  %3390 = vst.msk [vmem:[#allocation2 + $0x780] sm:$0xff] %vm3149, %v3133
  %3391 = vst.msk [vmem:[#allocation2 + $0x788] sm:$0xff] %vm3149, %v3134
  %3392 = vst.msk [vmem:[#allocation2 + $0x790] sm:$0xff] %vm3149, %v3135
  %3393 = vst.msk [vmem:[#allocation2 + $0x798] sm:$0xff] %vm3149, %v3136
  %3394 = vst.msk [vmem:[#allocation2 + $0x7a0] sm:$0xff] %vm3149, %v3137
  %3395 = vst.msk [vmem:[#allocation2 + $0x7a8] sm:$0xff] %vm3149, %v3138
  %3396 = vst.msk [vmem:[#allocation2 + $0x7b0] sm:$0xff] %vm3149, %v3139
  %3397 = vst.msk [vmem:[#allocation2 + $0x7b8] sm:$0xff] %vm3149, %v3140
  %3398 = vst.msk [vmem:[#allocation2 + $0x7c0] sm:$0xff] %vm3149, %v3141
  %3399 = vst.msk [vmem:[#allocation2 + $0x7c8] sm:$0xff] %vm3149, %v3142
  %3400 = vst.msk [vmem:[#allocation2 + $0x7d0] sm:$0xff] %vm3149, %v3143
  %3401 = vst.msk [vmem:[#allocation2 + $0x7d8] sm:$0xff] %vm3149, %v3144
  %3402 = vst.msk [vmem:[#allocation2 + $0x7e0] sm:$0xff] %vm3149, %v3145
  %3403 = vst.msk [vmem:[#allocation2 + $0x7e8] sm:$0xff] %vm3149, %v3146
  %3404 = vst.msk [vmem:[#allocation2 + $0x7f0] sm:$0xff] %vm3149, %v3147
  %3405 = vst.msk [vmem:[#allocation2 + $0x7f8] sm:$0xff] %vm3149, %v3148
  // Predicated region
  $region14: #{discriminator_forward.5} parent=0 // pred_check
    %p3406 = pneg %p14
  $region15: #{discriminator_forward.5} parent=0 // pred_check_branch
    %3408 = sbr.rel (%p3406) target = $region17
  $region16: #{discriminator_forward.5} parent=0 // pred_region
    %v3409 = vld [vmem:[#allocation2] sm:$0xff]
    %v3410 = vld [vmem:[#allocation2 + $0x8] sm:$0xff]
    %v3411 = vld [vmem:[#allocation2 + $0x10] sm:$0xff]
    %v3412 = vld [vmem:[#allocation2 + $0x18] sm:$0xff]
    %v3413 = vld [vmem:[#allocation2 + $0x20] sm:$0xff]
    %v3414 = vld [vmem:[#allocation2 + $0x28] sm:$0xff]
    %v3415 = vld [vmem:[#allocation2 + $0x30] sm:$0xff]
    %v3416 = vld [vmem:[#allocation2 + $0x38] sm:$0xff]
    %v3417 = vld [vmem:[#allocation2 + $0x40] sm:$0xff]
    %v3418 = vld [vmem:[#allocation2 + $0x48] sm:$0xff]
    %v3419 = vld [vmem:[#allocation2 + $0x50] sm:$0xff]
    %v3420 = vld [vmem:[#allocation2 + $0x58] sm:$0xff]
    %v3421 = vld [vmem:[#allocation2 + $0x60] sm:$0xff]
    %v3422 = vld [vmem:[#allocation2 + $0x68] sm:$0xff]
    %v3423 = vld [vmem:[#allocation2 + $0x70] sm:$0xff]
    %v3424 = vld [vmem:[#allocation2 + $0x78] sm:$0xff]
    %v3425 = vld [vmem:[#allocation2 + $0x80] sm:$0xff]
    %v3426 = vld [vmem:[#allocation2 + $0x88] sm:$0xff]
    %v3427 = vld [vmem:[#allocation2 + $0x90] sm:$0xff]
    %v3428 = vld [vmem:[#allocation2 + $0x98] sm:$0xff]
    %v3429 = vld [vmem:[#allocation2 + $0xa0] sm:$0xff]
    %v3430 = vld [vmem:[#allocation2 + $0xa8] sm:$0xff]
    %v3431 = vld [vmem:[#allocation2 + $0xb0] sm:$0xff]
    %v3432 = vld [vmem:[#allocation2 + $0xb8] sm:$0xff]
    %v3433 = vld [vmem:[#allocation2 + $0xc0] sm:$0xff]
    %v3434 = vld [vmem:[#allocation2 + $0xc8] sm:$0xff]
    %v3435 = vld [vmem:[#allocation2 + $0xd0] sm:$0xff]
    %v3436 = vld [vmem:[#allocation2 + $0xd8] sm:$0xff]
    %v3437 = vld [vmem:[#allocation2 + $0xe0] sm:$0xff]
    %v3438 = vld [vmem:[#allocation2 + $0xe8] sm:$0xff]
    %v3439 = vld [vmem:[#allocation2 + $0xf0] sm:$0xff]
    %v3440 = vld [vmem:[#allocation2 + $0xf8] sm:$0xff]
    %v3441 = vld [vmem:[#allocation2 + $0x100] sm:$0xff]
    %v3442 = vld [vmem:[#allocation2 + $0x108] sm:$0xff]
    %v3443 = vld [vmem:[#allocation2 + $0x110] sm:$0xff]
    %v3444 = vld [vmem:[#allocation2 + $0x118] sm:$0xff]
    %v3445 = vld [vmem:[#allocation2 + $0x120] sm:$0xff]
    %v3446 = vld [vmem:[#allocation2 + $0x128] sm:$0xff]
    %v3447 = vld [vmem:[#allocation2 + $0x130] sm:$0xff]
    %v3448 = vld [vmem:[#allocation2 + $0x138] sm:$0xff]
    %v3449 = vld [vmem:[#allocation2 + $0x140] sm:$0xff]
    %v3450 = vld [vmem:[#allocation2 + $0x148] sm:$0xff]
    %v3451 = vld [vmem:[#allocation2 + $0x150] sm:$0xff]
    %v3452 = vld [vmem:[#allocation2 + $0x158] sm:$0xff]
    %v3453 = vld [vmem:[#allocation2 + $0x160] sm:$0xff]
    %v3454 = vld [vmem:[#allocation2 + $0x168] sm:$0xff]
    %v3455 = vld [vmem:[#allocation2 + $0x170] sm:$0xff]
    %v3456 = vld [vmem:[#allocation2 + $0x178] sm:$0xff]
    %v3457 = vld [vmem:[#allocation2 + $0x180] sm:$0xff]
    %v3458 = vld [vmem:[#allocation2 + $0x188] sm:$0xff]
    %v3459 = vld [vmem:[#allocation2 + $0x190] sm:$0xff]
    %v3460 = vld [vmem:[#allocation2 + $0x198] sm:$0xff]
    %v3461 = vld [vmem:[#allocation2 + $0x1a0] sm:$0xff]
    %v3462 = vld [vmem:[#allocation2 + $0x1a8] sm:$0xff]
    %v3463 = vld [vmem:[#allocation2 + $0x1b0] sm:$0xff]
    %v3464 = vld [vmem:[#allocation2 + $0x1b8] sm:$0xff]
    %v3465 = vld [vmem:[#allocation2 + $0x1c0] sm:$0xff]
    %v3466 = vld [vmem:[#allocation2 + $0x1c8] sm:$0xff]
    %v3467 = vld [vmem:[#allocation2 + $0x1d0] sm:$0xff]
    %v3468 = vld [vmem:[#allocation2 + $0x1d8] sm:$0xff]
    %v3469 = vld [vmem:[#allocation2 + $0x1e0] sm:$0xff]
    %v3470 = vld [vmem:[#allocation2 + $0x1e8] sm:$0xff]
    %v3471 = vld [vmem:[#allocation2 + $0x1f0] sm:$0xff]
    %v3472 = vld [vmem:[#allocation2 + $0x1f8] sm:$0xff]
    %v3473 = vld [vmem:[#allocation2 + $0x200] sm:$0xff]
    %v3474 = vld [vmem:[#allocation2 + $0x208] sm:$0xff]
    %v3475 = vld [vmem:[#allocation2 + $0x210] sm:$0xff]
    %v3476 = vld [vmem:[#allocation2 + $0x218] sm:$0xff]
    %v3477 = vld [vmem:[#allocation2 + $0x220] sm:$0xff]
    %v3478 = vld [vmem:[#allocation2 + $0x228] sm:$0xff]
    %v3479 = vld [vmem:[#allocation2 + $0x230] sm:$0xff]
    %v3480 = vld [vmem:[#allocation2 + $0x238] sm:$0xff]
    %v3481 = vld [vmem:[#allocation2 + $0x240] sm:$0xff]
    %v3482 = vld [vmem:[#allocation2 + $0x248] sm:$0xff]
    %v3483 = vld [vmem:[#allocation2 + $0x250] sm:$0xff]
    %v3484 = vld [vmem:[#allocation2 + $0x258] sm:$0xff]
    %v3485 = vld [vmem:[#allocation2 + $0x260] sm:$0xff]
    %v3486 = vld [vmem:[#allocation2 + $0x268] sm:$0xff]
    %v3487 = vld [vmem:[#allocation2 + $0x270] sm:$0xff]
    %v3488 = vld [vmem:[#allocation2 + $0x278] sm:$0xff]
    %v3489 = vld [vmem:[#allocation2 + $0x280] sm:$0xff]
    %v3490 = vld [vmem:[#allocation2 + $0x288] sm:$0xff]
    %v3491 = vld [vmem:[#allocation2 + $0x290] sm:$0xff]
    %v3492 = vld [vmem:[#allocation2 + $0x298] sm:$0xff]
    %v3493 = vld [vmem:[#allocation2 + $0x2a0] sm:$0xff]
    %v3494 = vld [vmem:[#allocation2 + $0x2a8] sm:$0xff]
    %v3495 = vld [vmem:[#allocation2 + $0x2b0] sm:$0xff]
    %v3496 = vld [vmem:[#allocation2 + $0x2b8] sm:$0xff]
    %v3497 = vld [vmem:[#allocation2 + $0x2c0] sm:$0xff]
    %v3498 = vld [vmem:[#allocation2 + $0x2c8] sm:$0xff]
    %v3499 = vld [vmem:[#allocation2 + $0x2d0] sm:$0xff]
    %v3500 = vld [vmem:[#allocation2 + $0x2d8] sm:$0xff]
    %v3501 = vld [vmem:[#allocation2 + $0x2e0] sm:$0xff]
    %v3502 = vld [vmem:[#allocation2 + $0x2e8] sm:$0xff]
    %v3503 = vld [vmem:[#allocation2 + $0x2f0] sm:$0xff]
    %v3504 = vld [vmem:[#allocation2 + $0x2f8] sm:$0xff]
    %v3505 = vld [vmem:[#allocation2 + $0x300] sm:$0xff]
    %v3506 = vld [vmem:[#allocation2 + $0x308] sm:$0xff]
    %v3507 = vld [vmem:[#allocation2 + $0x310] sm:$0xff]
    %v3508 = vld [vmem:[#allocation2 + $0x318] sm:$0xff]
    %v3509 = vld [vmem:[#allocation2 + $0x320] sm:$0xff]
    %v3510 = vld [vmem:[#allocation2 + $0x328] sm:$0xff]
    %v3511 = vld [vmem:[#allocation2 + $0x330] sm:$0xff]
    %v3512 = vld [vmem:[#allocation2 + $0x338] sm:$0xff]
    %v3513 = vld [vmem:[#allocation2 + $0x340] sm:$0xff]
    %v3514 = vld [vmem:[#allocation2 + $0x348] sm:$0xff]
    %v3515 = vld [vmem:[#allocation2 + $0x350] sm:$0xff]
    %v3516 = vld [vmem:[#allocation2 + $0x358] sm:$0xff]
    %v3517 = vld [vmem:[#allocation2 + $0x360] sm:$0xff]
    %v3518 = vld [vmem:[#allocation2 + $0x368] sm:$0xff]
    %v3519 = vld [vmem:[#allocation2 + $0x370] sm:$0xff]
    %v3520 = vld [vmem:[#allocation2 + $0x378] sm:$0xff]
    %v3521 = vld [vmem:[#allocation2 + $0x380] sm:$0xff]
    %v3522 = vld [vmem:[#allocation2 + $0x388] sm:$0xff]
    %v3523 = vld [vmem:[#allocation2 + $0x390] sm:$0xff]
    %v3524 = vld [vmem:[#allocation2 + $0x398] sm:$0xff]
    %v3525 = vld [vmem:[#allocation2 + $0x3a0] sm:$0xff]
    %v3526 = vld [vmem:[#allocation2 + $0x3a8] sm:$0xff]
    %v3527 = vld [vmem:[#allocation2 + $0x3b0] sm:$0xff]
    %v3528 = vld [vmem:[#allocation2 + $0x3b8] sm:$0xff]
    %v3529 = vld [vmem:[#allocation2 + $0x3c0] sm:$0xff]
    %v3530 = vld [vmem:[#allocation2 + $0x3c8] sm:$0xff]
    %v3531 = vld [vmem:[#allocation2 + $0x3d0] sm:$0xff]
    %v3532 = vld [vmem:[#allocation2 + $0x3d8] sm:$0xff]
    %v3533 = vld [vmem:[#allocation2 + $0x3e0] sm:$0xff]
    %v3534 = vld [vmem:[#allocation2 + $0x3e8] sm:$0xff]
    %v3535 = vld [vmem:[#allocation2 + $0x3f0] sm:$0xff]
    %v3536 = vld [vmem:[#allocation2 + $0x3f8] sm:$0xff]
    %v3537 = vld [vmem:[#allocation2 + $0x400] sm:$0xff]
    %v3538 = vld [vmem:[#allocation2 + $0x408] sm:$0xff]
    %v3539 = vld [vmem:[#allocation2 + $0x410] sm:$0xff]
    %v3540 = vld [vmem:[#allocation2 + $0x418] sm:$0xff]
    %v3541 = vld [vmem:[#allocation2 + $0x420] sm:$0xff]
    %v3542 = vld [vmem:[#allocation2 + $0x428] sm:$0xff]
    %v3543 = vld [vmem:[#allocation2 + $0x430] sm:$0xff]
    %v3544 = vld [vmem:[#allocation2 + $0x438] sm:$0xff]
    %v3545 = vld [vmem:[#allocation2 + $0x440] sm:$0xff]
    %v3546 = vld [vmem:[#allocation2 + $0x448] sm:$0xff]
    %v3547 = vld [vmem:[#allocation2 + $0x450] sm:$0xff]
    %v3548 = vld [vmem:[#allocation2 + $0x458] sm:$0xff]
    %v3549 = vld [vmem:[#allocation2 + $0x460] sm:$0xff]
    %v3550 = vld [vmem:[#allocation2 + $0x468] sm:$0xff]
    %v3551 = vld [vmem:[#allocation2 + $0x470] sm:$0xff]
    %v3552 = vld [vmem:[#allocation2 + $0x478] sm:$0xff]
    %v3553 = vld [vmem:[#allocation2 + $0x480] sm:$0xff]
    %v3554 = vld [vmem:[#allocation2 + $0x488] sm:$0xff]
    %v3555 = vld [vmem:[#allocation2 + $0x490] sm:$0xff]
    %v3556 = vld [vmem:[#allocation2 + $0x498] sm:$0xff]
    %v3557 = vld [vmem:[#allocation2 + $0x4a0] sm:$0xff]
    %v3558 = vld [vmem:[#allocation2 + $0x4a8] sm:$0xff]
    %v3559 = vld [vmem:[#allocation2 + $0x4b0] sm:$0xff]
    %v3560 = vld [vmem:[#allocation2 + $0x4b8] sm:$0xff]
    %v3561 = vld [vmem:[#allocation2 + $0x4c0] sm:$0xff]
    %v3562 = vld [vmem:[#allocation2 + $0x4c8] sm:$0xff]
    %v3563 = vld [vmem:[#allocation2 + $0x4d0] sm:$0xff]
    %v3564 = vld [vmem:[#allocation2 + $0x4d8] sm:$0xff]
    %v3565 = vld [vmem:[#allocation2 + $0x4e0] sm:$0xff]
    %v3566 = vld [vmem:[#allocation2 + $0x4e8] sm:$0xff]
    %v3567 = vld [vmem:[#allocation2 + $0x4f0] sm:$0xff]
    %v3568 = vld [vmem:[#allocation2 + $0x4f8] sm:$0xff]
    %v3569 = vld [vmem:[#allocation2 + $0x500] sm:$0xff]
    %v3570 = vld [vmem:[#allocation2 + $0x508] sm:$0xff]
    %v3571 = vld [vmem:[#allocation2 + $0x510] sm:$0xff]
    %v3572 = vld [vmem:[#allocation2 + $0x518] sm:$0xff]
    %v3573 = vld [vmem:[#allocation2 + $0x520] sm:$0xff]
    %v3574 = vld [vmem:[#allocation2 + $0x528] sm:$0xff]
    %v3575 = vld [vmem:[#allocation2 + $0x530] sm:$0xff]
    %v3576 = vld [vmem:[#allocation2 + $0x538] sm:$0xff]
    %v3577 = vld [vmem:[#allocation2 + $0x540] sm:$0xff]
    %v3578 = vld [vmem:[#allocation2 + $0x548] sm:$0xff]
    %v3579 = vld [vmem:[#allocation2 + $0x550] sm:$0xff]
    %v3580 = vld [vmem:[#allocation2 + $0x558] sm:$0xff]
    %v3581 = vld [vmem:[#allocation2 + $0x560] sm:$0xff]
    %v3582 = vld [vmem:[#allocation2 + $0x568] sm:$0xff]
    %v3583 = vld [vmem:[#allocation2 + $0x570] sm:$0xff]
    %v3584 = vld [vmem:[#allocation2 + $0x578] sm:$0xff]
    %v3585 = vld [vmem:[#allocation2 + $0x580] sm:$0xff]
    %v3586 = vld [vmem:[#allocation2 + $0x588] sm:$0xff]
    %v3587 = vld [vmem:[#allocation2 + $0x590] sm:$0xff]
    %v3588 = vld [vmem:[#allocation2 + $0x598] sm:$0xff]
    %v3589 = vld [vmem:[#allocation2 + $0x5a0] sm:$0xff]
    %v3590 = vld [vmem:[#allocation2 + $0x5a8] sm:$0xff]
    %v3591 = vld [vmem:[#allocation2 + $0x5b0] sm:$0xff]
    %v3592 = vld [vmem:[#allocation2 + $0x5b8] sm:$0xff]
    %v3593 = vld [vmem:[#allocation2 + $0x5c0] sm:$0xff]
    %v3594 = vld [vmem:[#allocation2 + $0x5c8] sm:$0xff]
    %v3595 = vld [vmem:[#allocation2 + $0x5d0] sm:$0xff]
    %v3596 = vld [vmem:[#allocation2 + $0x5d8] sm:$0xff]
    %v3597 = vld [vmem:[#allocation2 + $0x5e0] sm:$0xff]
    %v3598 = vld [vmem:[#allocation2 + $0x5e8] sm:$0xff]
    %v3599 = vld [vmem:[#allocation2 + $0x5f0] sm:$0xff]
    %v3600 = vld [vmem:[#allocation2 + $0x5f8] sm:$0xff]
    %v3601 = vld [vmem:[#allocation2 + $0x600] sm:$0xff]
    %v3602 = vld [vmem:[#allocation2 + $0x608] sm:$0xff]
    %v3603 = vld [vmem:[#allocation2 + $0x610] sm:$0xff]
    %v3604 = vld [vmem:[#allocation2 + $0x618] sm:$0xff]
    %v3605 = vld [vmem:[#allocation2 + $0x620] sm:$0xff]
    %v3606 = vld [vmem:[#allocation2 + $0x628] sm:$0xff]
    %v3607 = vld [vmem:[#allocation2 + $0x630] sm:$0xff]
    %v3608 = vld [vmem:[#allocation2 + $0x638] sm:$0xff]
    %v3609 = vld [vmem:[#allocation2 + $0x640] sm:$0xff]
    %v3610 = vld [vmem:[#allocation2 + $0x648] sm:$0xff]
    %v3611 = vld [vmem:[#allocation2 + $0x650] sm:$0xff]
    %v3612 = vld [vmem:[#allocation2 + $0x658] sm:$0xff]
    %v3613 = vld [vmem:[#allocation2 + $0x660] sm:$0xff]
    %v3614 = vld [vmem:[#allocation2 + $0x668] sm:$0xff]
    %v3615 = vld [vmem:[#allocation2 + $0x670] sm:$0xff]
    %v3616 = vld [vmem:[#allocation2 + $0x678] sm:$0xff]
    %v3617 = vld [vmem:[#allocation2 + $0x680] sm:$0xff]
    %v3618 = vld [vmem:[#allocation2 + $0x688] sm:$0xff]
    %v3619 = vld [vmem:[#allocation2 + $0x690] sm:$0xff]
    %v3620 = vld [vmem:[#allocation2 + $0x698] sm:$0xff]
    %v3621 = vld [vmem:[#allocation2 + $0x6a0] sm:$0xff]
    %v3622 = vld [vmem:[#allocation2 + $0x6a8] sm:$0xff]
    %v3623 = vld [vmem:[#allocation2 + $0x6b0] sm:$0xff]
    %v3624 = vld [vmem:[#allocation2 + $0x6b8] sm:$0xff]
    %v3625 = vld [vmem:[#allocation2 + $0x6c0] sm:$0xff]
    %v3626 = vld [vmem:[#allocation2 + $0x6c8] sm:$0xff]
    %v3627 = vld [vmem:[#allocation2 + $0x6d0] sm:$0xff]
    %v3628 = vld [vmem:[#allocation2 + $0x6d8] sm:$0xff]
    %v3629 = vld [vmem:[#allocation2 + $0x6e0] sm:$0xff]
    %v3630 = vld [vmem:[#allocation2 + $0x6e8] sm:$0xff]
    %v3631 = vld [vmem:[#allocation2 + $0x6f0] sm:$0xff]
    %v3632 = vld [vmem:[#allocation2 + $0x6f8] sm:$0xff]
    %v3633 = vld [vmem:[#allocation2 + $0x700] sm:$0xff]
    %v3634 = vld [vmem:[#allocation2 + $0x708] sm:$0xff]
    %v3635 = vld [vmem:[#allocation2 + $0x710] sm:$0xff]
    %v3636 = vld [vmem:[#allocation2 + $0x718] sm:$0xff]
    %v3637 = vld [vmem:[#allocation2 + $0x720] sm:$0xff]
    %v3638 = vld [vmem:[#allocation2 + $0x728] sm:$0xff]
    %v3639 = vld [vmem:[#allocation2 + $0x730] sm:$0xff]
    %v3640 = vld [vmem:[#allocation2 + $0x738] sm:$0xff]
    %v3641 = vld [vmem:[#allocation2 + $0x740] sm:$0xff]
    %v3642 = vld [vmem:[#allocation2 + $0x748] sm:$0xff]
    %v3643 = vld [vmem:[#allocation2 + $0x750] sm:$0xff]
    %v3644 = vld [vmem:[#allocation2 + $0x758] sm:$0xff]
    %v3645 = vld [vmem:[#allocation2 + $0x760] sm:$0xff]
    %v3646 = vld [vmem:[#allocation2 + $0x768] sm:$0xff]
    %v3647 = vld [vmem:[#allocation2 + $0x770] sm:$0xff]
    %v3648 = vld [vmem:[#allocation2 + $0x778] sm:$0xff]
    %v3649 = vld [vmem:[#allocation2 + $0x780] sm:$0xff]
    %v3650 = vld [vmem:[#allocation2 + $0x788] sm:$0xff]
    %v3651 = vld [vmem:[#allocation2 + $0x790] sm:$0xff]
    %v3652 = vld [vmem:[#allocation2 + $0x798] sm:$0xff]
    %v3653 = vld [vmem:[#allocation2 + $0x7a0] sm:$0xff]
    %v3654 = vld [vmem:[#allocation2 + $0x7a8] sm:$0xff]
    %v3655 = vld [vmem:[#allocation2 + $0x7b0] sm:$0xff]
    %v3656 = vld [vmem:[#allocation2 + $0x7b8] sm:$0xff]
    %v3657 = vld [vmem:[#allocation2 + $0x7c0] sm:$0xff]
    %v3658 = vld [vmem:[#allocation2 + $0x7c8] sm:$0xff]
    %v3659 = vld [vmem:[#allocation2 + $0x7d0] sm:$0xff]
    %v3660 = vld [vmem:[#allocation2 + $0x7d8] sm:$0xff]
    %v3661 = vld [vmem:[#allocation2 + $0x7e0] sm:$0xff]
    %v3662 = vld [vmem:[#allocation2 + $0x7e8] sm:$0xff]
    %v3663 = vld [vmem:[#allocation2 + $0x7f0] sm:$0xff]
    %v3664 = vld [vmem:[#allocation2 + $0x7f8] sm:$0xff]
    %v3665 = vpack.c.bf16 %v3410, %v3409
    %v3666 = vpack.c.bf16 %v3412, %v3411
    %v3667 = vpack.c.bf16 %v3414, %v3413
    %v3668 = vpack.c.bf16 %v3416, %v3415
    %v3669 = vpack.c.bf16 %v3418, %v3417
    %v3670 = vpack.c.bf16 %v3420, %v3419
    %v3671 = vpack.c.bf16 %v3422, %v3421
    %v3672 = vpack.c.bf16 %v3424, %v3423
    %v3673 = vpack.c.bf16 %v3426, %v3425
    %v3674 = vpack.c.bf16 %v3428, %v3427
    %v3675 = vpack.c.bf16 %v3430, %v3429
    %v3676 = vpack.c.bf16 %v3432, %v3431
    %v3677 = vpack.c.bf16 %v3434, %v3433
    %v3678 = vpack.c.bf16 %v3436, %v3435
    %v3679 = vpack.c.bf16 %v3438, %v3437
    %v3680 = vpack.c.bf16 %v3440, %v3439
    %v3681 = vpack.c.bf16 %v3442, %v3441
    %v3682 = vpack.c.bf16 %v3444, %v3443
    %v3683 = vpack.c.bf16 %v3446, %v3445
    %v3684 = vpack.c.bf16 %v3448, %v3447
    %v3685 = vpack.c.bf16 %v3450, %v3449
    %v3686 = vpack.c.bf16 %v3452, %v3451
    %v3687 = vpack.c.bf16 %v3454, %v3453
    %v3688 = vpack.c.bf16 %v3456, %v3455
    %v3689 = vpack.c.bf16 %v3458, %v3457
    %v3690 = vpack.c.bf16 %v3460, %v3459
    %v3691 = vpack.c.bf16 %v3462, %v3461
    %v3692 = vpack.c.bf16 %v3464, %v3463
    %v3693 = vpack.c.bf16 %v3466, %v3465
    %v3694 = vpack.c.bf16 %v3468, %v3467
    %v3695 = vpack.c.bf16 %v3470, %v3469
    %v3696 = vpack.c.bf16 %v3472, %v3471
    %v3697 = vpack.c.bf16 %v3474, %v3473
    %v3698 = vpack.c.bf16 %v3476, %v3475
    %v3699 = vpack.c.bf16 %v3478, %v3477
    %v3700 = vpack.c.bf16 %v3480, %v3479
    %v3701 = vpack.c.bf16 %v3482, %v3481
    %v3702 = vpack.c.bf16 %v3484, %v3483
    %v3703 = vpack.c.bf16 %v3486, %v3485
    %v3704 = vpack.c.bf16 %v3488, %v3487
    %v3705 = vpack.c.bf16 %v3490, %v3489
    %v3706 = vpack.c.bf16 %v3492, %v3491
    %v3707 = vpack.c.bf16 %v3494, %v3493
    %v3708 = vpack.c.bf16 %v3496, %v3495
    %v3709 = vpack.c.bf16 %v3498, %v3497
    %v3710 = vpack.c.bf16 %v3500, %v3499
    %v3711 = vpack.c.bf16 %v3502, %v3501
    %v3712 = vpack.c.bf16 %v3504, %v3503
    %v3713 = vpack.c.bf16 %v3506, %v3505
    %v3714 = vpack.c.bf16 %v3508, %v3507
    %v3715 = vpack.c.bf16 %v3510, %v3509
    %v3716 = vpack.c.bf16 %v3512, %v3511
    %v3717 = vpack.c.bf16 %v3514, %v3513
    %v3718 = vpack.c.bf16 %v3516, %v3515
    %v3719 = vpack.c.bf16 %v3518, %v3517
    %v3720 = vpack.c.bf16 %v3520, %v3519
    %v3721 = vpack.c.bf16 %v3522, %v3521
    %v3722 = vpack.c.bf16 %v3524, %v3523
    %v3723 = vpack.c.bf16 %v3526, %v3525
    %v3724 = vpack.c.bf16 %v3528, %v3527
    %v3725 = vpack.c.bf16 %v3530, %v3529
    %v3726 = vpack.c.bf16 %v3532, %v3531
    %v3727 = vpack.c.bf16 %v3534, %v3533
    %v3728 = vpack.c.bf16 %v3536, %v3535
    %v3729 = vpack.c.bf16 %v3538, %v3537
    %v3730 = vpack.c.bf16 %v3540, %v3539
    %v3731 = vpack.c.bf16 %v3542, %v3541
    %v3732 = vpack.c.bf16 %v3544, %v3543
    %v3733 = vpack.c.bf16 %v3546, %v3545
    %v3734 = vpack.c.bf16 %v3548, %v3547
    %v3735 = vpack.c.bf16 %v3550, %v3549
    %v3736 = vpack.c.bf16 %v3552, %v3551
    %v3737 = vpack.c.bf16 %v3554, %v3553
    %v3738 = vpack.c.bf16 %v3556, %v3555
    %v3739 = vpack.c.bf16 %v3558, %v3557
    %v3740 = vpack.c.bf16 %v3560, %v3559
    %v3741 = vpack.c.bf16 %v3562, %v3561
    %v3742 = vpack.c.bf16 %v3564, %v3563
    %v3743 = vpack.c.bf16 %v3566, %v3565
    %v3744 = vpack.c.bf16 %v3568, %v3567
    %v3745 = vpack.c.bf16 %v3570, %v3569
    %v3746 = vpack.c.bf16 %v3572, %v3571
    %v3747 = vpack.c.bf16 %v3574, %v3573
    %v3748 = vpack.c.bf16 %v3576, %v3575
    %v3749 = vpack.c.bf16 %v3578, %v3577
    %v3750 = vpack.c.bf16 %v3580, %v3579
    %v3751 = vpack.c.bf16 %v3582, %v3581
    %v3752 = vpack.c.bf16 %v3584, %v3583
    %v3753 = vpack.c.bf16 %v3586, %v3585
    %v3754 = vpack.c.bf16 %v3588, %v3587
    %v3755 = vpack.c.bf16 %v3590, %v3589
    %v3756 = vpack.c.bf16 %v3592, %v3591
    %v3757 = vpack.c.bf16 %v3594, %v3593
    %v3758 = vpack.c.bf16 %v3596, %v3595
    %v3759 = vpack.c.bf16 %v3598, %v3597
    %v3760 = vpack.c.bf16 %v3600, %v3599
    %v3761 = vpack.c.bf16 %v3602, %v3601
    %v3762 = vpack.c.bf16 %v3604, %v3603
    %v3763 = vpack.c.bf16 %v3606, %v3605
    %v3764 = vpack.c.bf16 %v3608, %v3607
    %v3765 = vpack.c.bf16 %v3610, %v3609
    %v3766 = vpack.c.bf16 %v3612, %v3611
    %v3767 = vpack.c.bf16 %v3614, %v3613
    %v3768 = vpack.c.bf16 %v3616, %v3615
    %v3769 = vpack.c.bf16 %v3618, %v3617
    %v3770 = vpack.c.bf16 %v3620, %v3619
    %v3771 = vpack.c.bf16 %v3622, %v3621
    %v3772 = vpack.c.bf16 %v3624, %v3623
    %v3773 = vpack.c.bf16 %v3626, %v3625
    %v3774 = vpack.c.bf16 %v3628, %v3627
    %v3775 = vpack.c.bf16 %v3630, %v3629
    %v3776 = vpack.c.bf16 %v3632, %v3631
    %v3777 = vpack.c.bf16 %v3634, %v3633
    %v3778 = vpack.c.bf16 %v3636, %v3635
    %v3779 = vpack.c.bf16 %v3638, %v3637
    %v3780 = vpack.c.bf16 %v3640, %v3639
    %v3781 = vpack.c.bf16 %v3642, %v3641
    %v3782 = vpack.c.bf16 %v3644, %v3643
    %v3783 = vpack.c.bf16 %v3646, %v3645
    %v3784 = vpack.c.bf16 %v3648, %v3647
    %v3785 = vpack.c.bf16 %v3650, %v3649
    %v3786 = vpack.c.bf16 %v3652, %v3651
    %v3787 = vpack.c.bf16 %v3654, %v3653
    %v3788 = vpack.c.bf16 %v3656, %v3655
    %v3789 = vpack.c.bf16 %v3658, %v3657
    %v3790 = vpack.c.bf16 %v3660, %v3659
    %v3791 = vpack.c.bf16 %v3662, %v3661
    %v3792 = vpack.c.bf16 %v3664, %v3663
    %v3921 = vunpack.c.l.b16 %v3665
    %v3922 = vunpack.c.h.b16 %v3665
    %v3923 = vunpack.c.l.b16 %v3666
    %v3924 = vunpack.c.h.b16 %v3666
    %v3925 = vunpack.c.l.b16 %v3667
    %v3926 = vunpack.c.h.b16 %v3667
    %v3927 = vunpack.c.l.b16 %v3668
    %v3928 = vunpack.c.h.b16 %v3668
    %v3929 = vunpack.c.l.b16 %v3669
    %v3930 = vunpack.c.h.b16 %v3669
    %v3931 = vunpack.c.l.b16 %v3670
    %v3932 = vunpack.c.h.b16 %v3670
    %v3933 = vunpack.c.l.b16 %v3671
    %v3934 = vunpack.c.h.b16 %v3671
    %v3935 = vunpack.c.l.b16 %v3672
    %v3936 = vunpack.c.h.b16 %v3672
    %v3937 = vunpack.c.l.b16 %v3673
    %v3938 = vunpack.c.h.b16 %v3673
    %v3939 = vunpack.c.l.b16 %v3674
    %v3940 = vunpack.c.h.b16 %v3674
    %v3941 = vunpack.c.l.b16 %v3675
    %v3942 = vunpack.c.h.b16 %v3675
    %v3943 = vunpack.c.l.b16 %v3676
    %v3944 = vunpack.c.h.b16 %v3676
    %v3945 = vunpack.c.l.b16 %v3677
    %v3946 = vunpack.c.h.b16 %v3677
    %v3947 = vunpack.c.l.b16 %v3678
    %v3948 = vunpack.c.h.b16 %v3678
    %v3949 = vunpack.c.l.b16 %v3679
    %v3950 = vunpack.c.h.b16 %v3679
    %v3951 = vunpack.c.l.b16 %v3680
    %v3952 = vunpack.c.h.b16 %v3680
    %v3953 = vunpack.c.l.b16 %v3681
    %v3954 = vunpack.c.h.b16 %v3681
    %v3955 = vunpack.c.l.b16 %v3682
    %v3956 = vunpack.c.h.b16 %v3682
    %v3957 = vunpack.c.l.b16 %v3683
    %v3958 = vunpack.c.h.b16 %v3683
    %v3959 = vunpack.c.l.b16 %v3684
    %v3960 = vunpack.c.h.b16 %v3684
    %v3961 = vunpack.c.l.b16 %v3685
    %v3962 = vunpack.c.h.b16 %v3685
    %v3963 = vunpack.c.l.b16 %v3686
    %v3964 = vunpack.c.h.b16 %v3686
    %v3965 = vunpack.c.l.b16 %v3687
    %v3966 = vunpack.c.h.b16 %v3687
    %v3967 = vunpack.c.l.b16 %v3688
    %v3968 = vunpack.c.h.b16 %v3688
    %v3969 = vunpack.c.l.b16 %v3689
    %v3970 = vunpack.c.h.b16 %v3689
    %v3971 = vunpack.c.l.b16 %v3690
    %v3972 = vunpack.c.h.b16 %v3690
    %v3973 = vunpack.c.l.b16 %v3691
    %v3974 = vunpack.c.h.b16 %v3691
    %v3975 = vunpack.c.l.b16 %v3692
    %v3976 = vunpack.c.h.b16 %v3692
    %v3977 = vunpack.c.l.b16 %v3693
    %v3978 = vunpack.c.h.b16 %v3693
    %v3979 = vunpack.c.l.b16 %v3694
    %v3980 = vunpack.c.h.b16 %v3694
    %v3981 = vunpack.c.l.b16 %v3695
    %v3982 = vunpack.c.h.b16 %v3695
    %v3983 = vunpack.c.l.b16 %v3696
    %v3984 = vunpack.c.h.b16 %v3696
    %v3985 = vunpack.c.l.b16 %v3697
    %v3986 = vunpack.c.h.b16 %v3697
    %v3987 = vunpack.c.l.b16 %v3698
    %v3988 = vunpack.c.h.b16 %v3698
    %v3989 = vunpack.c.l.b16 %v3699
    %v3990 = vunpack.c.h.b16 %v3699
    %v3991 = vunpack.c.l.b16 %v3700
    %v3992 = vunpack.c.h.b16 %v3700
    %v3993 = vunpack.c.l.b16 %v3701
    %v3994 = vunpack.c.h.b16 %v3701
    %v3995 = vunpack.c.l.b16 %v3702
    %v3996 = vunpack.c.h.b16 %v3702
    %v3997 = vunpack.c.l.b16 %v3703
    %v3998 = vunpack.c.h.b16 %v3703
    %v3999 = vunpack.c.l.b16 %v3704
    %v4000 = vunpack.c.h.b16 %v3704
    %v4001 = vunpack.c.l.b16 %v3705
    %v4002 = vunpack.c.h.b16 %v3705
    %v4003 = vunpack.c.l.b16 %v3706
    %v4004 = vunpack.c.h.b16 %v3706
    %v4005 = vunpack.c.l.b16 %v3707
    %v4006 = vunpack.c.h.b16 %v3707
    %v4007 = vunpack.c.l.b16 %v3708
    %v4008 = vunpack.c.h.b16 %v3708
    %v4009 = vunpack.c.l.b16 %v3709
    %v4010 = vunpack.c.h.b16 %v3709
    %v4011 = vunpack.c.l.b16 %v3710
    %v4012 = vunpack.c.h.b16 %v3710
    %v4013 = vunpack.c.l.b16 %v3711
    %v4014 = vunpack.c.h.b16 %v3711
    %v4015 = vunpack.c.l.b16 %v3712
    %v4016 = vunpack.c.h.b16 %v3712
    %v4017 = vunpack.c.l.b16 %v3713
    %v4018 = vunpack.c.h.b16 %v3713
    %v4019 = vunpack.c.l.b16 %v3714
    %v4020 = vunpack.c.h.b16 %v3714
    %v4021 = vunpack.c.l.b16 %v3715
    %v4022 = vunpack.c.h.b16 %v3715
    %v4023 = vunpack.c.l.b16 %v3716
    %v4024 = vunpack.c.h.b16 %v3716
    %v4025 = vunpack.c.l.b16 %v3717
    %v4026 = vunpack.c.h.b16 %v3717
    %v4027 = vunpack.c.l.b16 %v3718
    %v4028 = vunpack.c.h.b16 %v3718
    %v4029 = vunpack.c.l.b16 %v3719
    %v4030 = vunpack.c.h.b16 %v3719
    %v4031 = vunpack.c.l.b16 %v3720
    %v4032 = vunpack.c.h.b16 %v3720
    %v4033 = vunpack.c.l.b16 %v3721
    %v4034 = vunpack.c.h.b16 %v3721
    %v4035 = vunpack.c.l.b16 %v3722
    %v4036 = vunpack.c.h.b16 %v3722
    %v4037 = vunpack.c.l.b16 %v3723
    %v4038 = vunpack.c.h.b16 %v3723
    %v4039 = vunpack.c.l.b16 %v3724
    %v4040 = vunpack.c.h.b16 %v3724
    %v4041 = vunpack.c.l.b16 %v3725
    %v4042 = vunpack.c.h.b16 %v3725
    %v4043 = vunpack.c.l.b16 %v3726
    %v4044 = vunpack.c.h.b16 %v3726
    %v4045 = vunpack.c.l.b16 %v3727
    %v4046 = vunpack.c.h.b16 %v3727
    %v4047 = vunpack.c.l.b16 %v3728
    %v4048 = vunpack.c.h.b16 %v3728
    %v4049 = vunpack.c.l.b16 %v3729
    %v4050 = vunpack.c.h.b16 %v3729
    %v4051 = vunpack.c.l.b16 %v3730
    %v4052 = vunpack.c.h.b16 %v3730
    %v4053 = vunpack.c.l.b16 %v3731
    %v4054 = vunpack.c.h.b16 %v3731
    %v4055 = vunpack.c.l.b16 %v3732
    %v4056 = vunpack.c.h.b16 %v3732
    %v4057 = vunpack.c.l.b16 %v3733
    %v4058 = vunpack.c.h.b16 %v3733
    %v4059 = vunpack.c.l.b16 %v3734
    %v4060 = vunpack.c.h.b16 %v3734
    %v4061 = vunpack.c.l.b16 %v3735
    %v4062 = vunpack.c.h.b16 %v3735
    %v4063 = vunpack.c.l.b16 %v3736
    %v4064 = vunpack.c.h.b16 %v3736
    %v4065 = vunpack.c.l.b16 %v3737
    %v4066 = vunpack.c.h.b16 %v3737
    %v4067 = vunpack.c.l.b16 %v3738
    %v4068 = vunpack.c.h.b16 %v3738
    %v4069 = vunpack.c.l.b16 %v3739
    %v4070 = vunpack.c.h.b16 %v3739
    %v4071 = vunpack.c.l.b16 %v3740
    %v4072 = vunpack.c.h.b16 %v3740
    %v4073 = vunpack.c.l.b16 %v3741
    %v4074 = vunpack.c.h.b16 %v3741
    %v4075 = vunpack.c.l.b16 %v3742
    %v4076 = vunpack.c.h.b16 %v3742
    %v4077 = vunpack.c.l.b16 %v3743
    %v4078 = vunpack.c.h.b16 %v3743
    %v4079 = vunpack.c.l.b16 %v3744
    %v4080 = vunpack.c.h.b16 %v3744
    %v4081 = vunpack.c.l.b16 %v3745
    %v4082 = vunpack.c.h.b16 %v3745
    %v4083 = vunpack.c.l.b16 %v3746
    %v4084 = vunpack.c.h.b16 %v3746
    %v4085 = vunpack.c.l.b16 %v3747
    %v4086 = vunpack.c.h.b16 %v3747
    %v4087 = vunpack.c.l.b16 %v3748
    %v4088 = vunpack.c.h.b16 %v3748
    %v4089 = vunpack.c.l.b16 %v3749
    %v4090 = vunpack.c.h.b16 %v3749
    %v4091 = vunpack.c.l.b16 %v3750
    %v4092 = vunpack.c.h.b16 %v3750
    %v4093 = vunpack.c.l.b16 %v3751
    %v4094 = vunpack.c.h.b16 %v3751
    %v4095 = vunpack.c.l.b16 %v3752
    %v4096 = vunpack.c.h.b16 %v3752
    %v4097 = vunpack.c.l.b16 %v3753
    %v4098 = vunpack.c.h.b16 %v3753
    %v4099 = vunpack.c.l.b16 %v3754
    %v4100 = vunpack.c.h.b16 %v3754
    %v4101 = vunpack.c.l.b16 %v3755
    %v4102 = vunpack.c.h.b16 %v3755
    %v4103 = vunpack.c.l.b16 %v3756
    %v4104 = vunpack.c.h.b16 %v3756
    %v4105 = vunpack.c.l.b16 %v3757
    %v4106 = vunpack.c.h.b16 %v3757
    %v4107 = vunpack.c.l.b16 %v3758
    %v4108 = vunpack.c.h.b16 %v3758
    %v4109 = vunpack.c.l.b16 %v3759
    %v4110 = vunpack.c.h.b16 %v3759
    %v4111 = vunpack.c.l.b16 %v3760
    %v4112 = vunpack.c.h.b16 %v3760
    %v4113 = vunpack.c.l.b16 %v3761
    %v4114 = vunpack.c.h.b16 %v3761
    %v4115 = vunpack.c.l.b16 %v3762
    %v4116 = vunpack.c.h.b16 %v3762
    %v4117 = vunpack.c.l.b16 %v3763
    %v4118 = vunpack.c.h.b16 %v3763
    %v4119 = vunpack.c.l.b16 %v3764
    %v4120 = vunpack.c.h.b16 %v3764
    %v4121 = vunpack.c.l.b16 %v3765
    %v4122 = vunpack.c.h.b16 %v3765
    %v4123 = vunpack.c.l.b16 %v3766
    %v4124 = vunpack.c.h.b16 %v3766
    %v4125 = vunpack.c.l.b16 %v3767
    %v4126 = vunpack.c.h.b16 %v3767
    %v4127 = vunpack.c.l.b16 %v3768
    %v4128 = vunpack.c.h.b16 %v3768
    %v4129 = vunpack.c.l.b16 %v3769
    %v4130 = vunpack.c.h.b16 %v3769
    %v4131 = vunpack.c.l.b16 %v3770
    %v4132 = vunpack.c.h.b16 %v3770
    %v4133 = vunpack.c.l.b16 %v3771
    %v4134 = vunpack.c.h.b16 %v3771
    %v4135 = vunpack.c.l.b16 %v3772
    %v4136 = vunpack.c.h.b16 %v3772
    %v4137 = vunpack.c.l.b16 %v3773
    %v4138 = vunpack.c.h.b16 %v3773
    %v4139 = vunpack.c.l.b16 %v3774
    %v4140 = vunpack.c.h.b16 %v3774
    %v4141 = vunpack.c.l.b16 %v3775
    %v4142 = vunpack.c.h.b16 %v3775
    %v4143 = vunpack.c.l.b16 %v3776
    %v4144 = vunpack.c.h.b16 %v3776
    %v4145 = vunpack.c.l.b16 %v3777
    %v4146 = vunpack.c.h.b16 %v3777
    %v4147 = vunpack.c.l.b16 %v3778
    %v4148 = vunpack.c.h.b16 %v3778
    %v4149 = vunpack.c.l.b16 %v3779
    %v4150 = vunpack.c.h.b16 %v3779
    %v4151 = vunpack.c.l.b16 %v3780
    %v4152 = vunpack.c.h.b16 %v3780
    %v4153 = vunpack.c.l.b16 %v3781
    %v4154 = vunpack.c.h.b16 %v3781
    %v4155 = vunpack.c.l.b16 %v3782
    %v4156 = vunpack.c.h.b16 %v3782
    %v4157 = vunpack.c.l.b16 %v3783
    %v4158 = vunpack.c.h.b16 %v3783
    %v4159 = vunpack.c.l.b16 %v3784
    %v4160 = vunpack.c.h.b16 %v3784
    %v4161 = vunpack.c.l.b16 %v3785
    %v4162 = vunpack.c.h.b16 %v3785
    %v4163 = vunpack.c.l.b16 %v3786
    %v4164 = vunpack.c.h.b16 %v3786
    %v4165 = vunpack.c.l.b16 %v3787
    %v4166 = vunpack.c.h.b16 %v3787
    %v4167 = vunpack.c.l.b16 %v3788
    %v4168 = vunpack.c.h.b16 %v3788
    %v4169 = vunpack.c.l.b16 %v3789
    %v4170 = vunpack.c.h.b16 %v3789
    %v4171 = vunpack.c.l.b16 %v3790
    %v4172 = vunpack.c.h.b16 %v3790
    %v4173 = vunpack.c.l.b16 %v3791
    %v4174 = vunpack.c.h.b16 %v3791
    %v4175 = vunpack.c.l.b16 %v3792
    %v4176 = vunpack.c.h.b16 %v3792
    %v4177 = vpack.c.b16 %v3921, %v3921
    %v4178 = vpack.c.b16 %v3922, %v3922
    %v4179 = vpack.c.b16 %v3923, %v3923
    %v4180 = vpack.c.b16 %v3924, %v3924
    %v4181 = vpack.c.b16 %v3925, %v3925
    %v4182 = vpack.c.b16 %v3926, %v3926
    %v4183 = vpack.c.b16 %v3927, %v3927
    %v4184 = vpack.c.b16 %v3928, %v3928
    %v4185 = vpack.c.b16 %v3929, %v3929
    %v4186 = vpack.c.b16 %v3930, %v3930
    %v4187 = vpack.c.b16 %v3931, %v3931
    %v4188 = vpack.c.b16 %v3932, %v3932
    %v4189 = vpack.c.b16 %v3933, %v3933
    %v4190 = vpack.c.b16 %v3934, %v3934
    %v4191 = vpack.c.b16 %v3935, %v3935
    %v4192 = vpack.c.b16 %v3936, %v3936
    %v4193 = vpack.c.b16 %v3937, %v3937
    %v4194 = vpack.c.b16 %v3938, %v3938
    %v4195 = vpack.c.b16 %v3939, %v3939
    %v4196 = vpack.c.b16 %v3940, %v3940
    %v4197 = vpack.c.b16 %v3941, %v3941
    %v4198 = vpack.c.b16 %v3942, %v3942
    %v4199 = vpack.c.b16 %v3943, %v3943
    %v4200 = vpack.c.b16 %v3944, %v3944
    %v4201 = vpack.c.b16 %v3945, %v3945
    %v4202 = vpack.c.b16 %v3946, %v3946
    %v4203 = vpack.c.b16 %v3947, %v3947
    %v4204 = vpack.c.b16 %v3948, %v3948
    %v4205 = vpack.c.b16 %v3949, %v3949
    %v4206 = vpack.c.b16 %v3950, %v3950
    %v4207 = vpack.c.b16 %v3951, %v3951
    %v4208 = vpack.c.b16 %v3952, %v3952
    %v4209 = vpack.c.b16 %v3953, %v3953
    %v4210 = vpack.c.b16 %v3954, %v3954
    %v4211 = vpack.c.b16 %v3955, %v3955
    %v4212 = vpack.c.b16 %v3956, %v3956
    %v4213 = vpack.c.b16 %v3957, %v3957
    %v4214 = vpack.c.b16 %v3958, %v3958
    %v4215 = vpack.c.b16 %v3959, %v3959
    %v4216 = vpack.c.b16 %v3960, %v3960
    %v4217 = vpack.c.b16 %v3961, %v3961
    %v4218 = vpack.c.b16 %v3962, %v3962
    %v4219 = vpack.c.b16 %v3963, %v3963
    %v4220 = vpack.c.b16 %v3964, %v3964
    %v4221 = vpack.c.b16 %v3965, %v3965
    %v4222 = vpack.c.b16 %v3966, %v3966
    %v4223 = vpack.c.b16 %v3967, %v3967
    %v4224 = vpack.c.b16 %v3968, %v3968
    %v4225 = vpack.c.b16 %v3969, %v3969
    %v4226 = vpack.c.b16 %v3970, %v3970
    %v4227 = vpack.c.b16 %v3971, %v3971
    %v4228 = vpack.c.b16 %v3972, %v3972
    %v4229 = vpack.c.b16 %v3973, %v3973
    %v4230 = vpack.c.b16 %v3974, %v3974
    %v4231 = vpack.c.b16 %v3975, %v3975
    %v4232 = vpack.c.b16 %v3976, %v3976
    %v4233 = vpack.c.b16 %v3977, %v3977
    %v4234 = vpack.c.b16 %v3978, %v3978
    %v4235 = vpack.c.b16 %v3979, %v3979
    %v4236 = vpack.c.b16 %v3980, %v3980
    %v4237 = vpack.c.b16 %v3981, %v3981
    %v4238 = vpack.c.b16 %v3982, %v3982
    %v4239 = vpack.c.b16 %v3983, %v3983
    %v4240 = vpack.c.b16 %v3984, %v3984
    %v4241 = vpack.c.b16 %v3985, %v3985
    %v4242 = vpack.c.b16 %v3986, %v3986
    %v4243 = vpack.c.b16 %v3987, %v3987
    %v4244 = vpack.c.b16 %v3988, %v3988
    %v4245 = vpack.c.b16 %v3989, %v3989
    %v4246 = vpack.c.b16 %v3990, %v3990
    %v4247 = vpack.c.b16 %v3991, %v3991
    %v4248 = vpack.c.b16 %v3992, %v3992
    %v4249 = vpack.c.b16 %v3993, %v3993
    %v4250 = vpack.c.b16 %v3994, %v3994
    %v4251 = vpack.c.b16 %v3995, %v3995
    %v4252 = vpack.c.b16 %v3996, %v3996
    %v4253 = vpack.c.b16 %v3997, %v3997
    %v4254 = vpack.c.b16 %v3998, %v3998
    %v4255 = vpack.c.b16 %v3999, %v3999
    %v4256 = vpack.c.b16 %v4000, %v4000
    %v4257 = vpack.c.b16 %v4001, %v4001
    %v4258 = vpack.c.b16 %v4002, %v4002
    %v4259 = vpack.c.b16 %v4003, %v4003
    %v4260 = vpack.c.b16 %v4004, %v4004
    %v4261 = vpack.c.b16 %v4005, %v4005
    %v4262 = vpack.c.b16 %v4006, %v4006
    %v4263 = vpack.c.b16 %v4007, %v4007
    %v4264 = vpack.c.b16 %v4008, %v4008
    %v4265 = vpack.c.b16 %v4009, %v4009
    %v4266 = vpack.c.b16 %v4010, %v4010
    %v4267 = vpack.c.b16 %v4011, %v4011
    %v4268 = vpack.c.b16 %v4012, %v4012
    %v4269 = vpack.c.b16 %v4013, %v4013
    %v4270 = vpack.c.b16 %v4014, %v4014
    %v4271 = vpack.c.b16 %v4015, %v4015
    %v4272 = vpack.c.b16 %v4016, %v4016
    %v4273 = vpack.c.b16 %v4017, %v4017
    %v4274 = vpack.c.b16 %v4018, %v4018
    %v4275 = vpack.c.b16 %v4019, %v4019
    %v4276 = vpack.c.b16 %v4020, %v4020
    %v4277 = vpack.c.b16 %v4021, %v4021
    %v4278 = vpack.c.b16 %v4022, %v4022
    %v4279 = vpack.c.b16 %v4023, %v4023
    %v4280 = vpack.c.b16 %v4024, %v4024
    %v4281 = vpack.c.b16 %v4025, %v4025
    %v4282 = vpack.c.b16 %v4026, %v4026
    %v4283 = vpack.c.b16 %v4027, %v4027
    %v4284 = vpack.c.b16 %v4028, %v4028
    %v4285 = vpack.c.b16 %v4029, %v4029
    %v4286 = vpack.c.b16 %v4030, %v4030
    %v4287 = vpack.c.b16 %v4031, %v4031
    %v4288 = vpack.c.b16 %v4032, %v4032
    %v4289 = vpack.c.b16 %v4033, %v4033
    %v4290 = vpack.c.b16 %v4034, %v4034
    %v4291 = vpack.c.b16 %v4035, %v4035
    %v4292 = vpack.c.b16 %v4036, %v4036
    %v4293 = vpack.c.b16 %v4037, %v4037
    %v4294 = vpack.c.b16 %v4038, %v4038
    %v4295 = vpack.c.b16 %v4039, %v4039
    %v4296 = vpack.c.b16 %v4040, %v4040
    %v4297 = vpack.c.b16 %v4041, %v4041
    %v4298 = vpack.c.b16 %v4042, %v4042
    %v4299 = vpack.c.b16 %v4043, %v4043
    %v4300 = vpack.c.b16 %v4044, %v4044
    %v4301 = vpack.c.b16 %v4045, %v4045
    %v4302 = vpack.c.b16 %v4046, %v4046
    %v4303 = vpack.c.b16 %v4047, %v4047
    %v4304 = vpack.c.b16 %v4048, %v4048
    %v4305 = vpack.c.b16 %v4049, %v4049
    %v4306 = vpack.c.b16 %v4050, %v4050
    %v4307 = vpack.c.b16 %v4051, %v4051
    %v4308 = vpack.c.b16 %v4052, %v4052
    %v4309 = vpack.c.b16 %v4053, %v4053
    %v4310 = vpack.c.b16 %v4054, %v4054
    %v4311 = vpack.c.b16 %v4055, %v4055
    %v4312 = vpack.c.b16 %v4056, %v4056
    %v4313 = vpack.c.b16 %v4057, %v4057
    %v4314 = vpack.c.b16 %v4058, %v4058
    %v4315 = vpack.c.b16 %v4059, %v4059
    %v4316 = vpack.c.b16 %v4060, %v4060
    %v4317 = vpack.c.b16 %v4061, %v4061
    %v4318 = vpack.c.b16 %v4062, %v4062
    %v4319 = vpack.c.b16 %v4063, %v4063
    %v4320 = vpack.c.b16 %v4064, %v4064
    %v4321 = vpack.c.b16 %v4065, %v4065
    %v4322 = vpack.c.b16 %v4066, %v4066
    %v4323 = vpack.c.b16 %v4067, %v4067
    %v4324 = vpack.c.b16 %v4068, %v4068
    %v4325 = vpack.c.b16 %v4069, %v4069
    %v4326 = vpack.c.b16 %v4070, %v4070
    %v4327 = vpack.c.b16 %v4071, %v4071
    %v4328 = vpack.c.b16 %v4072, %v4072
    %v4329 = vpack.c.b16 %v4073, %v4073
    %v4330 = vpack.c.b16 %v4074, %v4074
    %v4331 = vpack.c.b16 %v4075, %v4075
    %v4332 = vpack.c.b16 %v4076, %v4076
    %v4333 = vpack.c.b16 %v4077, %v4077
    %v4334 = vpack.c.b16 %v4078, %v4078
    %v4335 = vpack.c.b16 %v4079, %v4079
    %v4336 = vpack.c.b16 %v4080, %v4080
    %v4337 = vpack.c.b16 %v4081, %v4081
    %v4338 = vpack.c.b16 %v4082, %v4082
    %v4339 = vpack.c.b16 %v4083, %v4083
    %v4340 = vpack.c.b16 %v4084, %v4084
    %v4341 = vpack.c.b16 %v4085, %v4085
    %v4342 = vpack.c.b16 %v4086, %v4086
    %v4343 = vpack.c.b16 %v4087, %v4087
    %v4344 = vpack.c.b16 %v4088, %v4088
    %v4345 = vpack.c.b16 %v4089, %v4089
    %v4346 = vpack.c.b16 %v4090, %v4090
    %v4347 = vpack.c.b16 %v4091, %v4091
    %v4348 = vpack.c.b16 %v4092, %v4092
    %v4349 = vpack.c.b16 %v4093, %v4093
    %v4350 = vpack.c.b16 %v4094, %v4094
    %v4351 = vpack.c.b16 %v4095, %v4095
    %v4352 = vpack.c.b16 %v4096, %v4096
    %v4353 = vpack.c.b16 %v4097, %v4097
    %v4354 = vpack.c.b16 %v4098, %v4098
    %v4355 = vpack.c.b16 %v4099, %v4099
    %v4356 = vpack.c.b16 %v4100, %v4100
    %v4357 = vpack.c.b16 %v4101, %v4101
    %v4358 = vpack.c.b16 %v4102, %v4102
    %v4359 = vpack.c.b16 %v4103, %v4103
    %v4360 = vpack.c.b16 %v4104, %v4104
    %v4361 = vpack.c.b16 %v4105, %v4105
    %v4362 = vpack.c.b16 %v4106, %v4106
    %v4363 = vpack.c.b16 %v4107, %v4107
    %v4364 = vpack.c.b16 %v4108, %v4108
    %v4365 = vpack.c.b16 %v4109, %v4109
    %v4366 = vpack.c.b16 %v4110, %v4110
    %v4367 = vpack.c.b16 %v4111, %v4111
    %v4368 = vpack.c.b16 %v4112, %v4112
    %v4369 = vpack.c.b16 %v4113, %v4113
    %v4370 = vpack.c.b16 %v4114, %v4114
    %v4371 = vpack.c.b16 %v4115, %v4115
    %v4372 = vpack.c.b16 %v4116, %v4116
    %v4373 = vpack.c.b16 %v4117, %v4117
    %v4374 = vpack.c.b16 %v4118, %v4118
    %v4375 = vpack.c.b16 %v4119, %v4119
    %v4376 = vpack.c.b16 %v4120, %v4120
    %v4377 = vpack.c.b16 %v4121, %v4121
    %v4378 = vpack.c.b16 %v4122, %v4122
    %v4379 = vpack.c.b16 %v4123, %v4123
    %v4380 = vpack.c.b16 %v4124, %v4124
    %v4381 = vpack.c.b16 %v4125, %v4125
    %v4382 = vpack.c.b16 %v4126, %v4126
    %v4383 = vpack.c.b16 %v4127, %v4127
    %v4384 = vpack.c.b16 %v4128, %v4128
    %v4385 = vpack.c.b16 %v4129, %v4129
    %v4386 = vpack.c.b16 %v4130, %v4130
    %v4387 = vpack.c.b16 %v4131, %v4131
    %v4388 = vpack.c.b16 %v4132, %v4132
    %v4389 = vpack.c.b16 %v4133, %v4133
    %v4390 = vpack.c.b16 %v4134, %v4134
    %v4391 = vpack.c.b16 %v4135, %v4135
    %v4392 = vpack.c.b16 %v4136, %v4136
    %v4393 = vpack.c.b16 %v4137, %v4137
    %v4394 = vpack.c.b16 %v4138, %v4138
    %v4395 = vpack.c.b16 %v4139, %v4139
    %v4396 = vpack.c.b16 %v4140, %v4140
    %v4397 = vpack.c.b16 %v4141, %v4141
    %v4398 = vpack.c.b16 %v4142, %v4142
    %v4399 = vpack.c.b16 %v4143, %v4143
    %v4400 = vpack.c.b16 %v4144, %v4144
    %v4401 = vpack.c.b16 %v4145, %v4145
    %v4402 = vpack.c.b16 %v4146, %v4146
    %v4403 = vpack.c.b16 %v4147, %v4147
    %v4404 = vpack.c.b16 %v4148, %v4148
    %v4405 = vpack.c.b16 %v4149, %v4149
    %v4406 = vpack.c.b16 %v4150, %v4150
    %v4407 = vpack.c.b16 %v4151, %v4151
    %v4408 = vpack.c.b16 %v4152, %v4152
    %v4409 = vpack.c.b16 %v4153, %v4153
    %v4410 = vpack.c.b16 %v4154, %v4154
    %v4411 = vpack.c.b16 %v4155, %v4155
    %v4412 = vpack.c.b16 %v4156, %v4156
    %v4413 = vpack.c.b16 %v4157, %v4157
    %v4414 = vpack.c.b16 %v4158, %v4158
    %v4415 = vpack.c.b16 %v4159, %v4159
    %v4416 = vpack.c.b16 %v4160, %v4160
    %v4417 = vpack.c.b16 %v4161, %v4161
    %v4418 = vpack.c.b16 %v4162, %v4162
    %v4419 = vpack.c.b16 %v4163, %v4163
    %v4420 = vpack.c.b16 %v4164, %v4164
    %v4421 = vpack.c.b16 %v4165, %v4165
    %v4422 = vpack.c.b16 %v4166, %v4166
    %v4423 = vpack.c.b16 %v4167, %v4167
    %v4424 = vpack.c.b16 %v4168, %v4168
    %v4425 = vpack.c.b16 %v4169, %v4169
    %v4426 = vpack.c.b16 %v4170, %v4170
    %v4427 = vpack.c.b16 %v4171, %v4171
    %v4428 = vpack.c.b16 %v4172, %v4172
    %v4429 = vpack.c.b16 %v4173, %v4173
    %v4430 = vpack.c.b16 %v4174, %v4174
    %v4431 = vpack.c.b16 %v4175, %v4175
    %v4432 = vpack.c.b16 %v4176, %v4176
    %vm4689 = vcmask 60416
    %4690 = vst.msk [vmem:[%s2] sm:$0xf] %vm4689, %v4177
    %4691 = vst.msk [vmem:[%s2 + $0x4] sm:$0xf] %vm4689, %v4178
    %4692 = vst.msk [vmem:[%s2 + $0x8] sm:$0xf] %vm4689, %v4179
    %4693 = vst.msk [vmem:[%s2 + $0xc] sm:$0xf] %vm4689, %v4180
    %4694 = vst.msk [vmem:[%s2 + $0x10] sm:$0xf] %vm4689, %v4181
    %4695 = vst.msk [vmem:[%s2 + $0x14] sm:$0xf] %vm4689, %v4182
    %4696 = vst.msk [vmem:[%s2 + $0x18] sm:$0xf] %vm4689, %v4183
    %4697 = vst.msk [vmem:[%s2 + $0x1c] sm:$0xf] %vm4689, %v4184
    %4698 = vst.msk [vmem:[%s2 + $0x20] sm:$0xf] %vm4689, %v4185
    %4699 = vst.msk [vmem:[%s2 + $0x24] sm:$0xf] %vm4689, %v4186
    %4700 = vst.msk [vmem:[%s2 + $0x28] sm:$0xf] %vm4689, %v4187
    %4701 = vst.msk [vmem:[%s2 + $0x2c] sm:$0xf] %vm4689, %v4188
    %4702 = vst.msk [vmem:[%s2 + $0x30] sm:$0xf] %vm4689, %v4189
    %4703 = vst.msk [vmem:[%s2 + $0x34] sm:$0xf] %vm4689, %v4190
    %4704 = vst.msk [vmem:[%s2 + $0x38] sm:$0xf] %vm4689, %v4191
    %4705 = vst.msk [vmem:[%s2 + $0x3c] sm:$0xf] %vm4689, %v4192
    %4706 = vst.msk [vmem:[%s2 + $0x40] sm:$0xf] %vm4689, %v4193
    %4707 = vst.msk [vmem:[%s2 + $0x44] sm:$0xf] %vm4689, %v4194
    %4708 = vst.msk [vmem:[%s2 + $0x48] sm:$0xf] %vm4689, %v4195
    %4709 = vst.msk [vmem:[%s2 + $0x4c] sm:$0xf] %vm4689, %v4196
    %4710 = vst.msk [vmem:[%s2 + $0x50] sm:$0xf] %vm4689, %v4197
    %4711 = vst.msk [vmem:[%s2 + $0x54] sm:$0xf] %vm4689, %v4198
    %4712 = vst.msk [vmem:[%s2 + $0x58] sm:$0xf] %vm4689, %v4199
    %4713 = vst.msk [vmem:[%s2 + $0x5c] sm:$0xf] %vm4689, %v4200
    %4714 = vst.msk [vmem:[%s2 + $0x60] sm:$0xf] %vm4689, %v4201
    %4715 = vst.msk [vmem:[%s2 + $0x64] sm:$0xf] %vm4689, %v4202
    %4716 = vst.msk [vmem:[%s2 + $0x68] sm:$0xf] %vm4689, %v4203
    %4717 = vst.msk [vmem:[%s2 + $0x6c] sm:$0xf] %vm4689, %v4204
    %4718 = vst.msk [vmem:[%s2 + $0x70] sm:$0xf] %vm4689, %v4205
    %4719 = vst.msk [vmem:[%s2 + $0x74] sm:$0xf] %vm4689, %v4206
    %4720 = vst.msk [vmem:[%s2 + $0x78] sm:$0xf] %vm4689, %v4207
    %4721 = vst.msk [vmem:[%s2 + $0x7c] sm:$0xf] %vm4689, %v4208
    %4722 = vst.msk [vmem:[%s2 + $0x80] sm:$0xf] %vm4689, %v4209
    %4723 = vst.msk [vmem:[%s2 + $0x84] sm:$0xf] %vm4689, %v4210
    %4724 = vst.msk [vmem:[%s2 + $0x88] sm:$0xf] %vm4689, %v4211
    %4725 = vst.msk [vmem:[%s2 + $0x8c] sm:$0xf] %vm4689, %v4212
    %4726 = vst.msk [vmem:[%s2 + $0x90] sm:$0xf] %vm4689, %v4213
    %4727 = vst.msk [vmem:[%s2 + $0x94] sm:$0xf] %vm4689, %v4214
    %4728 = vst.msk [vmem:[%s2 + $0x98] sm:$0xf] %vm4689, %v4215
    %4729 = vst.msk [vmem:[%s2 + $0x9c] sm:$0xf] %vm4689, %v4216
    %4730 = vst.msk [vmem:[%s2 + $0xa0] sm:$0xf] %vm4689, %v4217
    %4731 = vst.msk [vmem:[%s2 + $0xa4] sm:$0xf] %vm4689, %v4218
    %4732 = vst.msk [vmem:[%s2 + $0xa8] sm:$0xf] %vm4689, %v4219
    %4733 = vst.msk [vmem:[%s2 + $0xac] sm:$0xf] %vm4689, %v4220
    %4734 = vst.msk [vmem:[%s2 + $0xb0] sm:$0xf] %vm4689, %v4221
    %4735 = vst.msk [vmem:[%s2 + $0xb4] sm:$0xf] %vm4689, %v4222
    %4736 = vst.msk [vmem:[%s2 + $0xb8] sm:$0xf] %vm4689, %v4223
    %4737 = vst.msk [vmem:[%s2 + $0xbc] sm:$0xf] %vm4689, %v4224
    %4738 = vst.msk [vmem:[%s2 + $0xc0] sm:$0xf] %vm4689, %v4225
    %4739 = vst.msk [vmem:[%s2 + $0xc4] sm:$0xf] %vm4689, %v4226
    %4740 = vst.msk [vmem:[%s2 + $0xc8] sm:$0xf] %vm4689, %v4227
    %4741 = vst.msk [vmem:[%s2 + $0xcc] sm:$0xf] %vm4689, %v4228
    %4742 = vst.msk [vmem:[%s2 + $0xd0] sm:$0xf] %vm4689, %v4229
    %4743 = vst.msk [vmem:[%s2 + $0xd4] sm:$0xf] %vm4689, %v4230
    %4744 = vst.msk [vmem:[%s2 + $0xd8] sm:$0xf] %vm4689, %v4231
    %4745 = vst.msk [vmem:[%s2 + $0xdc] sm:$0xf] %vm4689, %v4232
    %4746 = vst.msk [vmem:[%s2 + $0xe0] sm:$0xf] %vm4689, %v4233
    %4747 = vst.msk [vmem:[%s2 + $0xe4] sm:$0xf] %vm4689, %v4234
    %4748 = vst.msk [vmem:[%s2 + $0xe8] sm:$0xf] %vm4689, %v4235
    %4749 = vst.msk [vmem:[%s2 + $0xec] sm:$0xf] %vm4689, %v4236
    %4750 = vst.msk [vmem:[%s2 + $0xf0] sm:$0xf] %vm4689, %v4237
    %4751 = vst.msk [vmem:[%s2 + $0xf4] sm:$0xf] %vm4689, %v4238
    %4752 = vst.msk [vmem:[%s2 + $0xf8] sm:$0xf] %vm4689, %v4239
    %4753 = vst.msk [vmem:[%s2 + $0xfc] sm:$0xf] %vm4689, %v4240
    %4754 = vst.msk [vmem:[%s2 + $0x100] sm:$0xf] %vm4689, %v4241
    %4755 = vst.msk [vmem:[%s2 + $0x104] sm:$0xf] %vm4689, %v4242
    %4756 = vst.msk [vmem:[%s2 + $0x108] sm:$0xf] %vm4689, %v4243
    %4757 = vst.msk [vmem:[%s2 + $0x10c] sm:$0xf] %vm4689, %v4244
    %4758 = vst.msk [vmem:[%s2 + $0x110] sm:$0xf] %vm4689, %v4245
    %4759 = vst.msk [vmem:[%s2 + $0x114] sm:$0xf] %vm4689, %v4246
    %4760 = vst.msk [vmem:[%s2 + $0x118] sm:$0xf] %vm4689, %v4247
    %4761 = vst.msk [vmem:[%s2 + $0x11c] sm:$0xf] %vm4689, %v4248
    %4762 = vst.msk [vmem:[%s2 + $0x120] sm:$0xf] %vm4689, %v4249
    %4763 = vst.msk [vmem:[%s2 + $0x124] sm:$0xf] %vm4689, %v4250
    %4764 = vst.msk [vmem:[%s2 + $0x128] sm:$0xf] %vm4689, %v4251
    %4765 = vst.msk [vmem:[%s2 + $0x12c] sm:$0xf] %vm4689, %v4252
    %4766 = vst.msk [vmem:[%s2 + $0x130] sm:$0xf] %vm4689, %v4253
    %4767 = vst.msk [vmem:[%s2 + $0x134] sm:$0xf] %vm4689, %v4254
    %4768 = vst.msk [vmem:[%s2 + $0x138] sm:$0xf] %vm4689, %v4255
    %4769 = vst.msk [vmem:[%s2 + $0x13c] sm:$0xf] %vm4689, %v4256
    %4770 = vst.msk [vmem:[%s2 + $0x140] sm:$0xf] %vm4689, %v4257
    %4771 = vst.msk [vmem:[%s2 + $0x144] sm:$0xf] %vm4689, %v4258
    %4772 = vst.msk [vmem:[%s2 + $0x148] sm:$0xf] %vm4689, %v4259
    %4773 = vst.msk [vmem:[%s2 + $0x14c] sm:$0xf] %vm4689, %v4260
    %4774 = vst.msk [vmem:[%s2 + $0x150] sm:$0xf] %vm4689, %v4261
    %4775 = vst.msk [vmem:[%s2 + $0x154] sm:$0xf] %vm4689, %v4262
    %4776 = vst.msk [vmem:[%s2 + $0x158] sm:$0xf] %vm4689, %v4263
    %4777 = vst.msk [vmem:[%s2 + $0x15c] sm:$0xf] %vm4689, %v4264
    %4778 = vst.msk [vmem:[%s2 + $0x160] sm:$0xf] %vm4689, %v4265
    %4779 = vst.msk [vmem:[%s2 + $0x164] sm:$0xf] %vm4689, %v4266
    %4780 = vst.msk [vmem:[%s2 + $0x168] sm:$0xf] %vm4689, %v4267
    %4781 = vst.msk [vmem:[%s2 + $0x16c] sm:$0xf] %vm4689, %v4268
    %4782 = vst.msk [vmem:[%s2 + $0x170] sm:$0xf] %vm4689, %v4269
    %4783 = vst.msk [vmem:[%s2 + $0x174] sm:$0xf] %vm4689, %v4270
    %4784 = vst.msk [vmem:[%s2 + $0x178] sm:$0xf] %vm4689, %v4271
    %4785 = vst.msk [vmem:[%s2 + $0x17c] sm:$0xf] %vm4689, %v4272
    %4786 = vst.msk [vmem:[%s2 + $0x180] sm:$0xf] %vm4689, %v4273
    %4787 = vst.msk [vmem:[%s2 + $0x184] sm:$0xf] %vm4689, %v4274
    %4788 = vst.msk [vmem:[%s2 + $0x188] sm:$0xf] %vm4689, %v4275
    %4789 = vst.msk [vmem:[%s2 + $0x18c] sm:$0xf] %vm4689, %v4276
    %4790 = vst.msk [vmem:[%s2 + $0x190] sm:$0xf] %vm4689, %v4277
    %4791 = vst.msk [vmem:[%s2 + $0x194] sm:$0xf] %vm4689, %v4278
    %4792 = vst.msk [vmem:[%s2 + $0x198] sm:$0xf] %vm4689, %v4279
    %4793 = vst.msk [vmem:[%s2 + $0x19c] sm:$0xf] %vm4689, %v4280
    %4794 = vst.msk [vmem:[%s2 + $0x1a0] sm:$0xf] %vm4689, %v4281
    %4795 = vst.msk [vmem:[%s2 + $0x1a4] sm:$0xf] %vm4689, %v4282
    %4796 = vst.msk [vmem:[%s2 + $0x1a8] sm:$0xf] %vm4689, %v4283
    %4797 = vst.msk [vmem:[%s2 + $0x1ac] sm:$0xf] %vm4689, %v4284
    %4798 = vst.msk [vmem:[%s2 + $0x1b0] sm:$0xf] %vm4689, %v4285
    %4799 = vst.msk [vmem:[%s2 + $0x1b4] sm:$0xf] %vm4689, %v4286
    %4800 = vst.msk [vmem:[%s2 + $0x1b8] sm:$0xf] %vm4689, %v4287
    %4801 = vst.msk [vmem:[%s2 + $0x1bc] sm:$0xf] %vm4689, %v4288
    %4802 = vst.msk [vmem:[%s2 + $0x1c0] sm:$0xf] %vm4689, %v4289
    %4803 = vst.msk [vmem:[%s2 + $0x1c4] sm:$0xf] %vm4689, %v4290
    %4804 = vst.msk [vmem:[%s2 + $0x1c8] sm:$0xf] %vm4689, %v4291
    %4805 = vst.msk [vmem:[%s2 + $0x1cc] sm:$0xf] %vm4689, %v4292
    %4806 = vst.msk [vmem:[%s2 + $0x1d0] sm:$0xf] %vm4689, %v4293
    %4807 = vst.msk [vmem:[%s2 + $0x1d4] sm:$0xf] %vm4689, %v4294
    %4808 = vst.msk [vmem:[%s2 + $0x1d8] sm:$0xf] %vm4689, %v4295
    %4809 = vst.msk [vmem:[%s2 + $0x1dc] sm:$0xf] %vm4689, %v4296
    %4810 = vst.msk [vmem:[%s2 + $0x1e0] sm:$0xf] %vm4689, %v4297
    %4811 = vst.msk [vmem:[%s2 + $0x1e4] sm:$0xf] %vm4689, %v4298
    %4812 = vst.msk [vmem:[%s2 + $0x1e8] sm:$0xf] %vm4689, %v4299
    %4813 = vst.msk [vmem:[%s2 + $0x1ec] sm:$0xf] %vm4689, %v4300
    %4814 = vst.msk [vmem:[%s2 + $0x1f0] sm:$0xf] %vm4689, %v4301
    %4815 = vst.msk [vmem:[%s2 + $0x1f4] sm:$0xf] %vm4689, %v4302
    %4816 = vst.msk [vmem:[%s2 + $0x1f8] sm:$0xf] %vm4689, %v4303
    %4817 = vst.msk [vmem:[%s2 + $0x1fc] sm:$0xf] %vm4689, %v4304
    %4818 = vst.msk [vmem:[%s2 + $0x200] sm:$0xf] %vm4689, %v4305
    %4819 = vst.msk [vmem:[%s2 + $0x204] sm:$0xf] %vm4689, %v4306
    %4820 = vst.msk [vmem:[%s2 + $0x208] sm:$0xf] %vm4689, %v4307
    %4821 = vst.msk [vmem:[%s2 + $0x20c] sm:$0xf] %vm4689, %v4308
    %4822 = vst.msk [vmem:[%s2 + $0x210] sm:$0xf] %vm4689, %v4309
    %4823 = vst.msk [vmem:[%s2 + $0x214] sm:$0xf] %vm4689, %v4310
    %4824 = vst.msk [vmem:[%s2 + $0x218] sm:$0xf] %vm4689, %v4311
    %4825 = vst.msk [vmem:[%s2 + $0x21c] sm:$0xf] %vm4689, %v4312
    %4826 = vst.msk [vmem:[%s2 + $0x220] sm:$0xf] %vm4689, %v4313
    %4827 = vst.msk [vmem:[%s2 + $0x224] sm:$0xf] %vm4689, %v4314
    %4828 = vst.msk [vmem:[%s2 + $0x228] sm:$0xf] %vm4689, %v4315
    %4829 = vst.msk [vmem:[%s2 + $0x22c] sm:$0xf] %vm4689, %v4316
    %4830 = vst.msk [vmem:[%s2 + $0x230] sm:$0xf] %vm4689, %v4317
    %4831 = vst.msk [vmem:[%s2 + $0x234] sm:$0xf] %vm4689, %v4318
    %4832 = vst.msk [vmem:[%s2 + $0x238] sm:$0xf] %vm4689, %v4319
    %4833 = vst.msk [vmem:[%s2 + $0x23c] sm:$0xf] %vm4689, %v4320
    %4834 = vst.msk [vmem:[%s2 + $0x240] sm:$0xf] %vm4689, %v4321
    %4835 = vst.msk [vmem:[%s2 + $0x244] sm:$0xf] %vm4689, %v4322
    %4836 = vst.msk [vmem:[%s2 + $0x248] sm:$0xf] %vm4689, %v4323
    %4837 = vst.msk [vmem:[%s2 + $0x24c] sm:$0xf] %vm4689, %v4324
    %4838 = vst.msk [vmem:[%s2 + $0x250] sm:$0xf] %vm4689, %v4325
    %4839 = vst.msk [vmem:[%s2 + $0x254] sm:$0xf] %vm4689, %v4326
    %4840 = vst.msk [vmem:[%s2 + $0x258] sm:$0xf] %vm4689, %v4327
    %4841 = vst.msk [vmem:[%s2 + $0x25c] sm:$0xf] %vm4689, %v4328
    %4842 = vst.msk [vmem:[%s2 + $0x260] sm:$0xf] %vm4689, %v4329
    %4843 = vst.msk [vmem:[%s2 + $0x264] sm:$0xf] %vm4689, %v4330
    %4844 = vst.msk [vmem:[%s2 + $0x268] sm:$0xf] %vm4689, %v4331
    %4845 = vst.msk [vmem:[%s2 + $0x26c] sm:$0xf] %vm4689, %v4332
    %4846 = vst.msk [vmem:[%s2 + $0x270] sm:$0xf] %vm4689, %v4333
    %4847 = vst.msk [vmem:[%s2 + $0x274] sm:$0xf] %vm4689, %v4334
    %4848 = vst.msk [vmem:[%s2 + $0x278] sm:$0xf] %vm4689, %v4335
    %4849 = vst.msk [vmem:[%s2 + $0x27c] sm:$0xf] %vm4689, %v4336
    %4850 = vst.msk [vmem:[%s2 + $0x280] sm:$0xf] %vm4689, %v4337
    %4851 = vst.msk [vmem:[%s2 + $0x284] sm:$0xf] %vm4689, %v4338
    %4852 = vst.msk [vmem:[%s2 + $0x288] sm:$0xf] %vm4689, %v4339
    %4853 = vst.msk [vmem:[%s2 + $0x28c] sm:$0xf] %vm4689, %v4340
    %4854 = vst.msk [vmem:[%s2 + $0x290] sm:$0xf] %vm4689, %v4341
    %4855 = vst.msk [vmem:[%s2 + $0x294] sm:$0xf] %vm4689, %v4342
    %4856 = vst.msk [vmem:[%s2 + $0x298] sm:$0xf] %vm4689, %v4343
    %4857 = vst.msk [vmem:[%s2 + $0x29c] sm:$0xf] %vm4689, %v4344
    %4858 = vst.msk [vmem:[%s2 + $0x2a0] sm:$0xf] %vm4689, %v4345
    %4859 = vst.msk [vmem:[%s2 + $0x2a4] sm:$0xf] %vm4689, %v4346
    %4860 = vst.msk [vmem:[%s2 + $0x2a8] sm:$0xf] %vm4689, %v4347
    %4861 = vst.msk [vmem:[%s2 + $0x2ac] sm:$0xf] %vm4689, %v4348
    %4862 = vst.msk [vmem:[%s2 + $0x2b0] sm:$0xf] %vm4689, %v4349
    %4863 = vst.msk [vmem:[%s2 + $0x2b4] sm:$0xf] %vm4689, %v4350
    %4864 = vst.msk [vmem:[%s2 + $0x2b8] sm:$0xf] %vm4689, %v4351
    %4865 = vst.msk [vmem:[%s2 + $0x2bc] sm:$0xf] %vm4689, %v4352
    %4866 = vst.msk [vmem:[%s2 + $0x2c0] sm:$0xf] %vm4689, %v4353
    %4867 = vst.msk [vmem:[%s2 + $0x2c4] sm:$0xf] %vm4689, %v4354
    %4868 = vst.msk [vmem:[%s2 + $0x2c8] sm:$0xf] %vm4689, %v4355
    %4869 = vst.msk [vmem:[%s2 + $0x2cc] sm:$0xf] %vm4689, %v4356
    %4870 = vst.msk [vmem:[%s2 + $0x2d0] sm:$0xf] %vm4689, %v4357
    %4871 = vst.msk [vmem:[%s2 + $0x2d4] sm:$0xf] %vm4689, %v4358
    %4872 = vst.msk [vmem:[%s2 + $0x2d8] sm:$0xf] %vm4689, %v4359
    %4873 = vst.msk [vmem:[%s2 + $0x2dc] sm:$0xf] %vm4689, %v4360
    %4874 = vst.msk [vmem:[%s2 + $0x2e0] sm:$0xf] %vm4689, %v4361
    %4875 = vst.msk [vmem:[%s2 + $0x2e4] sm:$0xf] %vm4689, %v4362
    %4876 = vst.msk [vmem:[%s2 + $0x2e8] sm:$0xf] %vm4689, %v4363
    %4877 = vst.msk [vmem:[%s2 + $0x2ec] sm:$0xf] %vm4689, %v4364
    %4878 = vst.msk [vmem:[%s2 + $0x2f0] sm:$0xf] %vm4689, %v4365
    %4879 = vst.msk [vmem:[%s2 + $0x2f4] sm:$0xf] %vm4689, %v4366
    %4880 = vst.msk [vmem:[%s2 + $0x2f8] sm:$0xf] %vm4689, %v4367
    %4881 = vst.msk [vmem:[%s2 + $0x2fc] sm:$0xf] %vm4689, %v4368
    %4882 = vst.msk [vmem:[%s2 + $0x300] sm:$0xf] %vm4689, %v4369
    %4883 = vst.msk [vmem:[%s2 + $0x304] sm:$0xf] %vm4689, %v4370
    %4884 = vst.msk [vmem:[%s2 + $0x308] sm:$0xf] %vm4689, %v4371
    %4885 = vst.msk [vmem:[%s2 + $0x30c] sm:$0xf] %vm4689, %v4372
    %4886 = vst.msk [vmem:[%s2 + $0x310] sm:$0xf] %vm4689, %v4373
    %4887 = vst.msk [vmem:[%s2 + $0x314] sm:$0xf] %vm4689, %v4374
    %4888 = vst.msk [vmem:[%s2 + $0x318] sm:$0xf] %vm4689, %v4375
    %4889 = vst.msk [vmem:[%s2 + $0x31c] sm:$0xf] %vm4689, %v4376
    %4890 = vst.msk [vmem:[%s2 + $0x320] sm:$0xf] %vm4689, %v4377
    %4891 = vst.msk [vmem:[%s2 + $0x324] sm:$0xf] %vm4689, %v4378
    %4892 = vst.msk [vmem:[%s2 + $0x328] sm:$0xf] %vm4689, %v4379
    %4893 = vst.msk [vmem:[%s2 + $0x32c] sm:$0xf] %vm4689, %v4380
    %4894 = vst.msk [vmem:[%s2 + $0x330] sm:$0xf] %vm4689, %v4381
    %4895 = vst.msk [vmem:[%s2 + $0x334] sm:$0xf] %vm4689, %v4382
    %4896 = vst.msk [vmem:[%s2 + $0x338] sm:$0xf] %vm4689, %v4383
    %4897 = vst.msk [vmem:[%s2 + $0x33c] sm:$0xf] %vm4689, %v4384
    %4898 = vst.msk [vmem:[%s2 + $0x340] sm:$0xf] %vm4689, %v4385
    %4899 = vst.msk [vmem:[%s2 + $0x344] sm:$0xf] %vm4689, %v4386
    %4900 = vst.msk [vmem:[%s2 + $0x348] sm:$0xf] %vm4689, %v4387
    %4901 = vst.msk [vmem:[%s2 + $0x34c] sm:$0xf] %vm4689, %v4388
    %4902 = vst.msk [vmem:[%s2 + $0x350] sm:$0xf] %vm4689, %v4389
    %4903 = vst.msk [vmem:[%s2 + $0x354] sm:$0xf] %vm4689, %v4390
    %4904 = vst.msk [vmem:[%s2 + $0x358] sm:$0xf] %vm4689, %v4391
    %4905 = vst.msk [vmem:[%s2 + $0x35c] sm:$0xf] %vm4689, %v4392
    %4906 = vst.msk [vmem:[%s2 + $0x360] sm:$0xf] %vm4689, %v4393
    %4907 = vst.msk [vmem:[%s2 + $0x364] sm:$0xf] %vm4689, %v4394
    %4908 = vst.msk [vmem:[%s2 + $0x368] sm:$0xf] %vm4689, %v4395
    %4909 = vst.msk [vmem:[%s2 + $0x36c] sm:$0xf] %vm4689, %v4396
    %4910 = vst.msk [vmem:[%s2 + $0x370] sm:$0xf] %vm4689, %v4397
    %4911 = vst.msk [vmem:[%s2 + $0x374] sm:$0xf] %vm4689, %v4398
    %4912 = vst.msk [vmem:[%s2 + $0x378] sm:$0xf] %vm4689, %v4399
    %4913 = vst.msk [vmem:[%s2 + $0x37c] sm:$0xf] %vm4689, %v4400
    %4914 = vst.msk [vmem:[%s2 + $0x380] sm:$0xf] %vm4689, %v4401
    %4915 = vst.msk [vmem:[%s2 + $0x384] sm:$0xf] %vm4689, %v4402
    %4916 = vst.msk [vmem:[%s2 + $0x388] sm:$0xf] %vm4689, %v4403
    %4917 = vst.msk [vmem:[%s2 + $0x38c] sm:$0xf] %vm4689, %v4404
    %4918 = vst.msk [vmem:[%s2 + $0x390] sm:$0xf] %vm4689, %v4405
    %4919 = vst.msk [vmem:[%s2 + $0x394] sm:$0xf] %vm4689, %v4406
    %4920 = vst.msk [vmem:[%s2 + $0x398] sm:$0xf] %vm4689, %v4407
    %4921 = vst.msk [vmem:[%s2 + $0x39c] sm:$0xf] %vm4689, %v4408
    %4922 = vst.msk [vmem:[%s2 + $0x3a0] sm:$0xf] %vm4689, %v4409
    %4923 = vst.msk [vmem:[%s2 + $0x3a4] sm:$0xf] %vm4689, %v4410
    %4924 = vst.msk [vmem:[%s2 + $0x3a8] sm:$0xf] %vm4689, %v4411
    %4925 = vst.msk [vmem:[%s2 + $0x3ac] sm:$0xf] %vm4689, %v4412
    %4926 = vst.msk [vmem:[%s2 + $0x3b0] sm:$0xf] %vm4689, %v4413
    %4927 = vst.msk [vmem:[%s2 + $0x3b4] sm:$0xf] %vm4689, %v4414
    %4928 = vst.msk [vmem:[%s2 + $0x3b8] sm:$0xf] %vm4689, %v4415
    %4929 = vst.msk [vmem:[%s2 + $0x3bc] sm:$0xf] %vm4689, %v4416
    %4930 = vst.msk [vmem:[%s2 + $0x3c0] sm:$0xf] %vm4689, %v4417
    %4931 = vst.msk [vmem:[%s2 + $0x3c4] sm:$0xf] %vm4689, %v4418
    %4932 = vst.msk [vmem:[%s2 + $0x3c8] sm:$0xf] %vm4689, %v4419
    %4933 = vst.msk [vmem:[%s2 + $0x3cc] sm:$0xf] %vm4689, %v4420
    %4934 = vst.msk [vmem:[%s2 + $0x3d0] sm:$0xf] %vm4689, %v4421
    %4935 = vst.msk [vmem:[%s2 + $0x3d4] sm:$0xf] %vm4689, %v4422
    %4936 = vst.msk [vmem:[%s2 + $0x3d8] sm:$0xf] %vm4689, %v4423
    %4937 = vst.msk [vmem:[%s2 + $0x3dc] sm:$0xf] %vm4689, %v4424
    %4938 = vst.msk [vmem:[%s2 + $0x3e0] sm:$0xf] %vm4689, %v4425
    %4939 = vst.msk [vmem:[%s2 + $0x3e4] sm:$0xf] %vm4689, %v4426
    %4940 = vst.msk [vmem:[%s2 + $0x3e8] sm:$0xf] %vm4689, %v4427
    %4941 = vst.msk [vmem:[%s2 + $0x3ec] sm:$0xf] %vm4689, %v4428
    %4942 = vst.msk [vmem:[%s2 + $0x3f0] sm:$0xf] %vm4689, %v4429
    %4943 = vst.msk [vmem:[%s2 + $0x3f4] sm:$0xf] %vm4689, %v4430
    %4944 = vst.msk [vmem:[%s2 + $0x3f8] sm:$0xf] %vm4689, %v4431
    %4945 = vst.msk [vmem:[%s2 + $0x3fc] sm:$0xf] %vm4689, %v4432
    %v4946 = vsel %vm3149, %v3409, 0.0
    %v4947 = vsel %vm3149, %v3410, 0.0
    %v4948 = vadd.f32 %v4946, %v4947
    %v4949 = vsel %vm3149, %v3411, 0.0
    %v4950 = vadd.f32 %v4948, %v4949
    %v4951 = vsel %vm3149, %v3412, 0.0
    %v4952 = vadd.f32 %v4950, %v4951
    %v4953 = vsel %vm3149, %v3413, 0.0
    %v4954 = vadd.f32 %v4952, %v4953
    %v4955 = vsel %vm3149, %v3414, 0.0
    %v4956 = vadd.f32 %v4954, %v4955
    %v4957 = vsel %vm3149, %v3415, 0.0
    %v4958 = vadd.f32 %v4956, %v4957
    %v4959 = vsel %vm3149, %v3416, 0.0
    %v4960 = vadd.f32 %v4958, %v4959
    %v4961 = vsel %vm3149, %v3417, 0.0
    %v4962 = vadd.f32 %v4960, %v4961
    %v4963 = vsel %vm3149, %v3418, 0.0
    %v4964 = vadd.f32 %v4962, %v4963
    %v4965 = vsel %vm3149, %v3419, 0.0
    %v4966 = vadd.f32 %v4964, %v4965
    %v4967 = vsel %vm3149, %v3420, 0.0
    %v4968 = vadd.f32 %v4966, %v4967
    %v4969 = vsel %vm3149, %v3421, 0.0
    %v4970 = vadd.f32 %v4968, %v4969
    %v4971 = vsel %vm3149, %v3422, 0.0
    %v4972 = vadd.f32 %v4970, %v4971
    %v4973 = vsel %vm3149, %v3423, 0.0
    %v4974 = vadd.f32 %v4972, %v4973
    %v4975 = vsel %vm3149, %v3424, 0.0
    %v4976 = vadd.f32 %v4974, %v4975
    %v4977 = vsel %vm3149, %v3425, 0.0
    %v4978 = vadd.f32 %v4976, %v4977
    %v4979 = vsel %vm3149, %v3426, 0.0
    %v4980 = vadd.f32 %v4978, %v4979
    %v4981 = vsel %vm3149, %v3427, 0.0
    %v4982 = vadd.f32 %v4980, %v4981
    %v4983 = vsel %vm3149, %v3428, 0.0
    %v4984 = vadd.f32 %v4982, %v4983
    %v4985 = vsel %vm3149, %v3429, 0.0
    %v4986 = vadd.f32 %v4984, %v4985
    %v4987 = vsel %vm3149, %v3430, 0.0
    %v4988 = vadd.f32 %v4986, %v4987
    %v4989 = vsel %vm3149, %v3431, 0.0
    %v4990 = vadd.f32 %v4988, %v4989
    %v4991 = vsel %vm3149, %v3432, 0.0
    %v4992 = vadd.f32 %v4990, %v4991
    %v4993 = vsel %vm3149, %v3433, 0.0
    %v4994 = vadd.f32 %v4992, %v4993
    %v4995 = vsel %vm3149, %v3434, 0.0
    %v4996 = vadd.f32 %v4994, %v4995
    %v4997 = vsel %vm3149, %v3435, 0.0
    %v4998 = vadd.f32 %v4996, %v4997
    %v4999 = vsel %vm3149, %v3436, 0.0
    %v5000 = vadd.f32 %v4998, %v4999
    %v5001 = vsel %vm3149, %v3437, 0.0
    %v5002 = vadd.f32 %v5000, %v5001
    %v5003 = vsel %vm3149, %v3438, 0.0
    %v5004 = vadd.f32 %v5002, %v5003
    %v5005 = vsel %vm3149, %v3439, 0.0
    %v5006 = vadd.f32 %v5004, %v5005
    %v5007 = vsel %vm3149, %v3440, 0.0
    %v5008 = vadd.f32 %v5006, %v5007
    %v5009 = vsel %vm3149, %v3441, 0.0
    %v5010 = vadd.f32 %v5008, %v5009
    %v5011 = vsel %vm3149, %v3442, 0.0
    %v5012 = vadd.f32 %v5010, %v5011
    %v5013 = vsel %vm3149, %v3443, 0.0
    %v5014 = vadd.f32 %v5012, %v5013
    %v5015 = vsel %vm3149, %v3444, 0.0
    %v5016 = vadd.f32 %v5014, %v5015
    %v5017 = vsel %vm3149, %v3445, 0.0
    %v5018 = vadd.f32 %v5016, %v5017
    %v5019 = vsel %vm3149, %v3446, 0.0
    %v5020 = vadd.f32 %v5018, %v5019
    %v5021 = vsel %vm3149, %v3447, 0.0
    %v5022 = vadd.f32 %v5020, %v5021
    %v5023 = vsel %vm3149, %v3448, 0.0
    %v5024 = vadd.f32 %v5022, %v5023
    %v5025 = vsel %vm3149, %v3449, 0.0
    %v5026 = vadd.f32 %v5024, %v5025
    %v5027 = vsel %vm3149, %v3450, 0.0
    %v5028 = vadd.f32 %v5026, %v5027
    %v5029 = vsel %vm3149, %v3451, 0.0
    %v5030 = vadd.f32 %v5028, %v5029
    %v5031 = vsel %vm3149, %v3452, 0.0
    %v5032 = vadd.f32 %v5030, %v5031
    %v5033 = vsel %vm3149, %v3453, 0.0
    %v5034 = vadd.f32 %v5032, %v5033
    %v5035 = vsel %vm3149, %v3454, 0.0
    %v5036 = vadd.f32 %v5034, %v5035
    %v5037 = vsel %vm3149, %v3455, 0.0
    %v5038 = vadd.f32 %v5036, %v5037
    %v5039 = vsel %vm3149, %v3456, 0.0
    %v5040 = vadd.f32 %v5038, %v5039
    %v5041 = vsel %vm3149, %v3457, 0.0
    %v5042 = vadd.f32 %v5040, %v5041
    %v5043 = vsel %vm3149, %v3458, 0.0
    %v5044 = vadd.f32 %v5042, %v5043
    %v5045 = vsel %vm3149, %v3459, 0.0
    %v5046 = vadd.f32 %v5044, %v5045
    %v5047 = vsel %vm3149, %v3460, 0.0
    %v5048 = vadd.f32 %v5046, %v5047
    %v5049 = vsel %vm3149, %v3461, 0.0
    %v5050 = vadd.f32 %v5048, %v5049
    %v5051 = vsel %vm3149, %v3462, 0.0
    %v5052 = vadd.f32 %v5050, %v5051
    %v5053 = vsel %vm3149, %v3463, 0.0
    %v5054 = vadd.f32 %v5052, %v5053
    %v5055 = vsel %vm3149, %v3464, 0.0
    %v5056 = vadd.f32 %v5054, %v5055
    %v5057 = vsel %vm3149, %v3465, 0.0
    %v5058 = vadd.f32 %v5056, %v5057
    %v5059 = vsel %vm3149, %v3466, 0.0
    %v5060 = vadd.f32 %v5058, %v5059
    %v5061 = vsel %vm3149, %v3467, 0.0
    %v5062 = vadd.f32 %v5060, %v5061
    %v5063 = vsel %vm3149, %v3468, 0.0
    %v5064 = vadd.f32 %v5062, %v5063
    %v5065 = vsel %vm3149, %v3469, 0.0
    %v5066 = vadd.f32 %v5064, %v5065
    %v5067 = vsel %vm3149, %v3470, 0.0
    %v5068 = vadd.f32 %v5066, %v5067
    %v5069 = vsel %vm3149, %v3471, 0.0
    %v5070 = vadd.f32 %v5068, %v5069
    %v5071 = vsel %vm3149, %v3472, 0.0
    %v5072 = vadd.f32 %v5070, %v5071
    %v5073 = vsel %vm3149, %v3473, 0.0
    %v5074 = vadd.f32 %v5072, %v5073
    %v5075 = vsel %vm3149, %v3474, 0.0
    %v5076 = vadd.f32 %v5074, %v5075
    %v5077 = vsel %vm3149, %v3475, 0.0
    %v5078 = vadd.f32 %v5076, %v5077
    %v5079 = vsel %vm3149, %v3476, 0.0
    %v5080 = vadd.f32 %v5078, %v5079
    %v5081 = vsel %vm3149, %v3477, 0.0
    %v5082 = vadd.f32 %v5080, %v5081
    %v5083 = vsel %vm3149, %v3478, 0.0
    %v5084 = vadd.f32 %v5082, %v5083
    %v5085 = vsel %vm3149, %v3479, 0.0
    %v5086 = vadd.f32 %v5084, %v5085
    %v5087 = vsel %vm3149, %v3480, 0.0
    %v5088 = vadd.f32 %v5086, %v5087
    %v5089 = vsel %vm3149, %v3481, 0.0
    %v5090 = vadd.f32 %v5088, %v5089
    %v5091 = vsel %vm3149, %v3482, 0.0
    %v5092 = vadd.f32 %v5090, %v5091
    %v5093 = vsel %vm3149, %v3483, 0.0
    %v5094 = vadd.f32 %v5092, %v5093
    %v5095 = vsel %vm3149, %v3484, 0.0
    %v5096 = vadd.f32 %v5094, %v5095
    %v5097 = vsel %vm3149, %v3485, 0.0
    %v5098 = vadd.f32 %v5096, %v5097
    %v5099 = vsel %vm3149, %v3486, 0.0
    %v5100 = vadd.f32 %v5098, %v5099
    %v5101 = vsel %vm3149, %v3487, 0.0
    %v5102 = vadd.f32 %v5100, %v5101
    %v5103 = vsel %vm3149, %v3488, 0.0
    %v5104 = vadd.f32 %v5102, %v5103
    %v5105 = vsel %vm3149, %v3489, 0.0
    %v5106 = vadd.f32 %v5104, %v5105
    %v5107 = vsel %vm3149, %v3490, 0.0
    %v5108 = vadd.f32 %v5106, %v5107
    %v5109 = vsel %vm3149, %v3491, 0.0
    %v5110 = vadd.f32 %v5108, %v5109
    %v5111 = vsel %vm3149, %v3492, 0.0
    %v5112 = vadd.f32 %v5110, %v5111
    %v5113 = vsel %vm3149, %v3493, 0.0
    %v5114 = vadd.f32 %v5112, %v5113
    %v5115 = vsel %vm3149, %v3494, 0.0
    %v5116 = vadd.f32 %v5114, %v5115
    %v5117 = vsel %vm3149, %v3495, 0.0
    %v5118 = vadd.f32 %v5116, %v5117
    %v5119 = vsel %vm3149, %v3496, 0.0
    %v5120 = vadd.f32 %v5118, %v5119
    %v5121 = vsel %vm3149, %v3497, 0.0
    %v5122 = vadd.f32 %v5120, %v5121
    %v5123 = vsel %vm3149, %v3498, 0.0
    %v5124 = vadd.f32 %v5122, %v5123
    %v5125 = vsel %vm3149, %v3499, 0.0
    %v5126 = vadd.f32 %v5124, %v5125
    %v5127 = vsel %vm3149, %v3500, 0.0
    %v5128 = vadd.f32 %v5126, %v5127
    %v5129 = vsel %vm3149, %v3501, 0.0
    %v5130 = vadd.f32 %v5128, %v5129
    %v5131 = vsel %vm3149, %v3502, 0.0
    %v5132 = vadd.f32 %v5130, %v5131
    %v5133 = vsel %vm3149, %v3503, 0.0
    %v5134 = vadd.f32 %v5132, %v5133
    %v5135 = vsel %vm3149, %v3504, 0.0
    %v5136 = vadd.f32 %v5134, %v5135
    %v5137 = vsel %vm3149, %v3505, 0.0
    %v5138 = vadd.f32 %v5136, %v5137
    %v5139 = vsel %vm3149, %v3506, 0.0
    %v5140 = vadd.f32 %v5138, %v5139
    %v5141 = vsel %vm3149, %v3507, 0.0
    %v5142 = vadd.f32 %v5140, %v5141
    %v5143 = vsel %vm3149, %v3508, 0.0
    %v5144 = vadd.f32 %v5142, %v5143
    %v5145 = vsel %vm3149, %v3509, 0.0
    %v5146 = vadd.f32 %v5144, %v5145
    %v5147 = vsel %vm3149, %v3510, 0.0
    %v5148 = vadd.f32 %v5146, %v5147
    %v5149 = vsel %vm3149, %v3511, 0.0
    %v5150 = vadd.f32 %v5148, %v5149
    %v5151 = vsel %vm3149, %v3512, 0.0
    %v5152 = vadd.f32 %v5150, %v5151
    %v5153 = vsel %vm3149, %v3513, 0.0
    %v5154 = vadd.f32 %v5152, %v5153
    %v5155 = vsel %vm3149, %v3514, 0.0
    %v5156 = vadd.f32 %v5154, %v5155
    %v5157 = vsel %vm3149, %v3515, 0.0
    %v5158 = vadd.f32 %v5156, %v5157
    %v5159 = vsel %vm3149, %v3516, 0.0
    %v5160 = vadd.f32 %v5158, %v5159
    %v5161 = vsel %vm3149, %v3517, 0.0
    %v5162 = vadd.f32 %v5160, %v5161
    %v5163 = vsel %vm3149, %v3518, 0.0
    %v5164 = vadd.f32 %v5162, %v5163
    %v5165 = vsel %vm3149, %v3519, 0.0
    %v5166 = vadd.f32 %v5164, %v5165
    %v5167 = vsel %vm3149, %v3520, 0.0
    %v5168 = vadd.f32 %v5166, %v5167
    %v5169 = vsel %vm3149, %v3521, 0.0
    %v5170 = vadd.f32 %v5168, %v5169
    %v5171 = vsel %vm3149, %v3522, 0.0
    %v5172 = vadd.f32 %v5170, %v5171
    %v5173 = vsel %vm3149, %v3523, 0.0
    %v5174 = vadd.f32 %v5172, %v5173
    %v5175 = vsel %vm3149, %v3524, 0.0
    %v5176 = vadd.f32 %v5174, %v5175
    %v5177 = vsel %vm3149, %v3525, 0.0
    %v5178 = vadd.f32 %v5176, %v5177
    %v5179 = vsel %vm3149, %v3526, 0.0
    %v5180 = vadd.f32 %v5178, %v5179
    %v5181 = vsel %vm3149, %v3527, 0.0
    %v5182 = vadd.f32 %v5180, %v5181
    %v5183 = vsel %vm3149, %v3528, 0.0
    %v5184 = vadd.f32 %v5182, %v5183
    %v5185 = vsel %vm3149, %v3529, 0.0
    %v5186 = vadd.f32 %v5184, %v5185
    %v5187 = vsel %vm3149, %v3530, 0.0
    %v5188 = vadd.f32 %v5186, %v5187
    %v5189 = vsel %vm3149, %v3531, 0.0
    %v5190 = vadd.f32 %v5188, %v5189
    %v5191 = vsel %vm3149, %v3532, 0.0
    %v5192 = vadd.f32 %v5190, %v5191
    %v5193 = vsel %vm3149, %v3533, 0.0
    %v5194 = vadd.f32 %v5192, %v5193
    %v5195 = vsel %vm3149, %v3534, 0.0
    %v5196 = vadd.f32 %v5194, %v5195
    %v5197 = vsel %vm3149, %v3535, 0.0
    %v5198 = vadd.f32 %v5196, %v5197
    %v5199 = vsel %vm3149, %v3536, 0.0
    %v5200 = vadd.f32 %v5198, %v5199
    %v5201 = vsel %vm3149, %v3537, 0.0
    %v5202 = vadd.f32 %v5200, %v5201
    %v5203 = vsel %vm3149, %v3538, 0.0
    %v5204 = vadd.f32 %v5202, %v5203
    %v5205 = vsel %vm3149, %v3539, 0.0
    %v5206 = vadd.f32 %v5204, %v5205
    %v5207 = vsel %vm3149, %v3540, 0.0
    %v5208 = vadd.f32 %v5206, %v5207
    %v5209 = vsel %vm3149, %v3541, 0.0
    %v5210 = vadd.f32 %v5208, %v5209
    %v5211 = vsel %vm3149, %v3542, 0.0
    %v5212 = vadd.f32 %v5210, %v5211
    %v5213 = vsel %vm3149, %v3543, 0.0
    %v5214 = vadd.f32 %v5212, %v5213
    %v5215 = vsel %vm3149, %v3544, 0.0
    %v5216 = vadd.f32 %v5214, %v5215
    %v5217 = vsel %vm3149, %v3545, 0.0
    %v5218 = vadd.f32 %v5216, %v5217
    %v5219 = vsel %vm3149, %v3546, 0.0
    %v5220 = vadd.f32 %v5218, %v5219
    %v5221 = vsel %vm3149, %v3547, 0.0
    %v5222 = vadd.f32 %v5220, %v5221
    %v5223 = vsel %vm3149, %v3548, 0.0
    %v5224 = vadd.f32 %v5222, %v5223
    %v5225 = vsel %vm3149, %v3549, 0.0
    %v5226 = vadd.f32 %v5224, %v5225
    %v5227 = vsel %vm3149, %v3550, 0.0
    %v5228 = vadd.f32 %v5226, %v5227
    %v5229 = vsel %vm3149, %v3551, 0.0
    %v5230 = vadd.f32 %v5228, %v5229
    %v5231 = vsel %vm3149, %v3552, 0.0
    %v5232 = vadd.f32 %v5230, %v5231
    %v5233 = vsel %vm3149, %v3553, 0.0
    %v5234 = vadd.f32 %v5232, %v5233
    %v5235 = vsel %vm3149, %v3554, 0.0
    %v5236 = vadd.f32 %v5234, %v5235
    %v5237 = vsel %vm3149, %v3555, 0.0
    %v5238 = vadd.f32 %v5236, %v5237
    %v5239 = vsel %vm3149, %v3556, 0.0
    %v5240 = vadd.f32 %v5238, %v5239
    %v5241 = vsel %vm3149, %v3557, 0.0
    %v5242 = vadd.f32 %v5240, %v5241
    %v5243 = vsel %vm3149, %v3558, 0.0
    %v5244 = vadd.f32 %v5242, %v5243
    %v5245 = vsel %vm3149, %v3559, 0.0
    %v5246 = vadd.f32 %v5244, %v5245
    %v5247 = vsel %vm3149, %v3560, 0.0
    %v5248 = vadd.f32 %v5246, %v5247
    %v5249 = vsel %vm3149, %v3561, 0.0
    %v5250 = vadd.f32 %v5248, %v5249
    %v5251 = vsel %vm3149, %v3562, 0.0
    %v5252 = vadd.f32 %v5250, %v5251
    %v5253 = vsel %vm3149, %v3563, 0.0
    %v5254 = vadd.f32 %v5252, %v5253
    %v5255 = vsel %vm3149, %v3564, 0.0
    %v5256 = vadd.f32 %v5254, %v5255
    %v5257 = vsel %vm3149, %v3565, 0.0
    %v5258 = vadd.f32 %v5256, %v5257
    %v5259 = vsel %vm3149, %v3566, 0.0
    %v5260 = vadd.f32 %v5258, %v5259
    %v5261 = vsel %vm3149, %v3567, 0.0
    %v5262 = vadd.f32 %v5260, %v5261
    %v5263 = vsel %vm3149, %v3568, 0.0
    %v5264 = vadd.f32 %v5262, %v5263
    %v5265 = vsel %vm3149, %v3569, 0.0
    %v5266 = vadd.f32 %v5264, %v5265
    %v5267 = vsel %vm3149, %v3570, 0.0
    %v5268 = vadd.f32 %v5266, %v5267
    %v5269 = vsel %vm3149, %v3571, 0.0
    %v5270 = vadd.f32 %v5268, %v5269
    %v5271 = vsel %vm3149, %v3572, 0.0
    %v5272 = vadd.f32 %v5270, %v5271
    %v5273 = vsel %vm3149, %v3573, 0.0
    %v5274 = vadd.f32 %v5272, %v5273
    %v5275 = vsel %vm3149, %v3574, 0.0
    %v5276 = vadd.f32 %v5274, %v5275
    %v5277 = vsel %vm3149, %v3575, 0.0
    %v5278 = vadd.f32 %v5276, %v5277
    %v5279 = vsel %vm3149, %v3576, 0.0
    %v5280 = vadd.f32 %v5278, %v5279
    %v5281 = vsel %vm3149, %v3577, 0.0
    %v5282 = vadd.f32 %v5280, %v5281
    %v5283 = vsel %vm3149, %v3578, 0.0
    %v5284 = vadd.f32 %v5282, %v5283
    %v5285 = vsel %vm3149, %v3579, 0.0
    %v5286 = vadd.f32 %v5284, %v5285
    %v5287 = vsel %vm3149, %v3580, 0.0
    %v5288 = vadd.f32 %v5286, %v5287
    %v5289 = vsel %vm3149, %v3581, 0.0
    %v5290 = vadd.f32 %v5288, %v5289
    %v5291 = vsel %vm3149, %v3582, 0.0
    %v5292 = vadd.f32 %v5290, %v5291
    %v5293 = vsel %vm3149, %v3583, 0.0
    %v5294 = vadd.f32 %v5292, %v5293
    %v5295 = vsel %vm3149, %v3584, 0.0
    %v5296 = vadd.f32 %v5294, %v5295
    %v5297 = vsel %vm3149, %v3585, 0.0
    %v5298 = vadd.f32 %v5296, %v5297
    %v5299 = vsel %vm3149, %v3586, 0.0
    %v5300 = vadd.f32 %v5298, %v5299
    %v5301 = vsel %vm3149, %v3587, 0.0
    %v5302 = vadd.f32 %v5300, %v5301
    %v5303 = vsel %vm3149, %v3588, 0.0
    %v5304 = vadd.f32 %v5302, %v5303
    %v5305 = vsel %vm3149, %v3589, 0.0
    %v5306 = vadd.f32 %v5304, %v5305
    %v5307 = vsel %vm3149, %v3590, 0.0
    %v5308 = vadd.f32 %v5306, %v5307
    %v5309 = vsel %vm3149, %v3591, 0.0
    %v5310 = vadd.f32 %v5308, %v5309
    %v5311 = vsel %vm3149, %v3592, 0.0
    %v5312 = vadd.f32 %v5310, %v5311
    %v5313 = vsel %vm3149, %v3593, 0.0
    %v5314 = vadd.f32 %v5312, %v5313
    %v5315 = vsel %vm3149, %v3594, 0.0
    %v5316 = vadd.f32 %v5314, %v5315
    %v5317 = vsel %vm3149, %v3595, 0.0
    %v5318 = vadd.f32 %v5316, %v5317
    %v5319 = vsel %vm3149, %v3596, 0.0
    %v5320 = vadd.f32 %v5318, %v5319
    %v5321 = vsel %vm3149, %v3597, 0.0
    %v5322 = vadd.f32 %v5320, %v5321
    %v5323 = vsel %vm3149, %v3598, 0.0
    %v5324 = vadd.f32 %v5322, %v5323
    %v5325 = vsel %vm3149, %v3599, 0.0
    %v5326 = vadd.f32 %v5324, %v5325
    %v5327 = vsel %vm3149, %v3600, 0.0
    %v5328 = vadd.f32 %v5326, %v5327
    %v5329 = vsel %vm3149, %v3601, 0.0
    %v5330 = vadd.f32 %v5328, %v5329
    %v5331 = vsel %vm3149, %v3602, 0.0
    %v5332 = vadd.f32 %v5330, %v5331
    %v5333 = vsel %vm3149, %v3603, 0.0
    %v5334 = vadd.f32 %v5332, %v5333
    %v5335 = vsel %vm3149, %v3604, 0.0
    %v5336 = vadd.f32 %v5334, %v5335
    %v5337 = vsel %vm3149, %v3605, 0.0
    %v5338 = vadd.f32 %v5336, %v5337
    %v5339 = vsel %vm3149, %v3606, 0.0
    %v5340 = vadd.f32 %v5338, %v5339
    %v5341 = vsel %vm3149, %v3607, 0.0
    %v5342 = vadd.f32 %v5340, %v5341
    %v5343 = vsel %vm3149, %v3608, 0.0
    %v5344 = vadd.f32 %v5342, %v5343
    %v5345 = vsel %vm3149, %v3609, 0.0
    %v5346 = vadd.f32 %v5344, %v5345
    %v5347 = vsel %vm3149, %v3610, 0.0
    %v5348 = vadd.f32 %v5346, %v5347
    %v5349 = vsel %vm3149, %v3611, 0.0
    %v5350 = vadd.f32 %v5348, %v5349
    %v5351 = vsel %vm3149, %v3612, 0.0
    %v5352 = vadd.f32 %v5350, %v5351
    %v5353 = vsel %vm3149, %v3613, 0.0
    %v5354 = vadd.f32 %v5352, %v5353
    %v5355 = vsel %vm3149, %v3614, 0.0
    %v5356 = vadd.f32 %v5354, %v5355
    %v5357 = vsel %vm3149, %v3615, 0.0
    %v5358 = vadd.f32 %v5356, %v5357
    %v5359 = vsel %vm3149, %v3616, 0.0
    %v5360 = vadd.f32 %v5358, %v5359
    %v5361 = vsel %vm3149, %v3617, 0.0
    %v5362 = vadd.f32 %v5360, %v5361
    %v5363 = vsel %vm3149, %v3618, 0.0
    %v5364 = vadd.f32 %v5362, %v5363
    %v5365 = vsel %vm3149, %v3619, 0.0
    %v5366 = vadd.f32 %v5364, %v5365
    %v5367 = vsel %vm3149, %v3620, 0.0
    %v5368 = vadd.f32 %v5366, %v5367
    %v5369 = vsel %vm3149, %v3621, 0.0
    %v5370 = vadd.f32 %v5368, %v5369
    %v5371 = vsel %vm3149, %v3622, 0.0
    %v5372 = vadd.f32 %v5370, %v5371
    %v5373 = vsel %vm3149, %v3623, 0.0
    %v5374 = vadd.f32 %v5372, %v5373
    %v5375 = vsel %vm3149, %v3624, 0.0
    %v5376 = vadd.f32 %v5374, %v5375
    %v5377 = vsel %vm3149, %v3625, 0.0
    %v5378 = vadd.f32 %v5376, %v5377
    %v5379 = vsel %vm3149, %v3626, 0.0
    %v5380 = vadd.f32 %v5378, %v5379
    %v5381 = vsel %vm3149, %v3627, 0.0
    %v5382 = vadd.f32 %v5380, %v5381
    %v5383 = vsel %vm3149, %v3628, 0.0
    %v5384 = vadd.f32 %v5382, %v5383
    %v5385 = vsel %vm3149, %v3629, 0.0
    %v5386 = vadd.f32 %v5384, %v5385
    %v5387 = vsel %vm3149, %v3630, 0.0
    %v5388 = vadd.f32 %v5386, %v5387
    %v5389 = vsel %vm3149, %v3631, 0.0
    %v5390 = vadd.f32 %v5388, %v5389
    %v5391 = vsel %vm3149, %v3632, 0.0
    %v5392 = vadd.f32 %v5390, %v5391
    %v5393 = vsel %vm3149, %v3633, 0.0
    %v5394 = vadd.f32 %v5392, %v5393
    %v5395 = vsel %vm3149, %v3634, 0.0
    %v5396 = vadd.f32 %v5394, %v5395
    %v5397 = vsel %vm3149, %v3635, 0.0
    %v5398 = vadd.f32 %v5396, %v5397
    %v5399 = vsel %vm3149, %v3636, 0.0
    %v5400 = vadd.f32 %v5398, %v5399
    %v5401 = vsel %vm3149, %v3637, 0.0
    %v5402 = vadd.f32 %v5400, %v5401
    %v5403 = vsel %vm3149, %v3638, 0.0
    %v5404 = vadd.f32 %v5402, %v5403
    %v5405 = vsel %vm3149, %v3639, 0.0
    %v5406 = vadd.f32 %v5404, %v5405
    %v5407 = vsel %vm3149, %v3640, 0.0
    %v5408 = vadd.f32 %v5406, %v5407
    %v5409 = vsel %vm3149, %v3641, 0.0
    %v5410 = vadd.f32 %v5408, %v5409
    %v5411 = vsel %vm3149, %v3642, 0.0
    %v5412 = vadd.f32 %v5410, %v5411
    %v5413 = vsel %vm3149, %v3643, 0.0
    %v5414 = vadd.f32 %v5412, %v5413
    %v5415 = vsel %vm3149, %v3644, 0.0
    %v5416 = vadd.f32 %v5414, %v5415
    %v5417 = vsel %vm3149, %v3645, 0.0
    %v5418 = vadd.f32 %v5416, %v5417
    %v5419 = vsel %vm3149, %v3646, 0.0
    %v5420 = vadd.f32 %v5418, %v5419
    %v5421 = vsel %vm3149, %v3647, 0.0
    %v5422 = vadd.f32 %v5420, %v5421
    %v5423 = vsel %vm3149, %v3648, 0.0
    %v5424 = vadd.f32 %v5422, %v5423
    %v5425 = vsel %vm3149, %v3649, 0.0
    %v5426 = vadd.f32 %v5424, %v5425
    %v5427 = vsel %vm3149, %v3650, 0.0
    %v5428 = vadd.f32 %v5426, %v5427
    %v5429 = vsel %vm3149, %v3651, 0.0
    %v5430 = vadd.f32 %v5428, %v5429
    %v5431 = vsel %vm3149, %v3652, 0.0
    %v5432 = vadd.f32 %v5430, %v5431
    %v5433 = vsel %vm3149, %v3653, 0.0
    %v5434 = vadd.f32 %v5432, %v5433
    %v5435 = vsel %vm3149, %v3654, 0.0
    %v5436 = vadd.f32 %v5434, %v5435
    %v5437 = vsel %vm3149, %v3655, 0.0
    %v5438 = vadd.f32 %v5436, %v5437
    %v5439 = vsel %vm3149, %v3656, 0.0
    %v5440 = vadd.f32 %v5438, %v5439
    %v5441 = vsel %vm3149, %v3657, 0.0
    %v5442 = vadd.f32 %v5440, %v5441
    %v5443 = vsel %vm3149, %v3658, 0.0
    %v5444 = vadd.f32 %v5442, %v5443
    %v5445 = vsel %vm3149, %v3659, 0.0
    %v5446 = vadd.f32 %v5444, %v5445
    %v5447 = vsel %vm3149, %v3660, 0.0
    %v5448 = vadd.f32 %v5446, %v5447
    %v5449 = vsel %vm3149, %v3661, 0.0
    %v5450 = vadd.f32 %v5448, %v5449
    %v5451 = vsel %vm3149, %v3662, 0.0
    %v5452 = vadd.f32 %v5450, %v5451
    %v5453 = vsel %vm3149, %v3663, 0.0
    %v5454 = vadd.f32 %v5452, %v5453
    %v5455 = vsel %vm3149, %v3664, 0.0
    %v5456 = vadd.f32 %v5454, %v5455
    %v5457 = vrot.slane %v5456, 4
    %v5458 = vadd.f32 %v5456, %v5457
    %v5459 = vrot.slane %v5458, 2
    %v5460 = vadd.f32 %v5458, %v5459
    %v5461 = vrot.slane %v5460, 1
    %v5462 = vadd.f32 %v5460, %v5461
    %v5463 = vmul.f32 %v3409, %v3409
    %v5464 = vmul.f32 %v3410, %v3410
    %v5465 = vmul.f32 %v3411, %v3411
    %v5466 = vmul.f32 %v3412, %v3412
    %v5467 = vmul.f32 %v3413, %v3413
    %v5468 = vmul.f32 %v3414, %v3414
    %v5469 = vmul.f32 %v3415, %v3415
    %v5470 = vmul.f32 %v3416, %v3416
    %v5471 = vmul.f32 %v3417, %v3417
    %v5472 = vmul.f32 %v3418, %v3418
    %v5473 = vmul.f32 %v3419, %v3419
    %v5474 = vmul.f32 %v3420, %v3420
    %v5475 = vmul.f32 %v3421, %v3421
    %v5476 = vmul.f32 %v3422, %v3422
    %v5477 = vmul.f32 %v3423, %v3423
    %v5478 = vmul.f32 %v3424, %v3424
    %v5479 = vmul.f32 %v3425, %v3425
    %v5480 = vmul.f32 %v3426, %v3426
    %v5481 = vmul.f32 %v3427, %v3427
    %v5482 = vmul.f32 %v3428, %v3428
    %v5483 = vmul.f32 %v3429, %v3429
    %v5484 = vmul.f32 %v3430, %v3430
    %v5485 = vmul.f32 %v3431, %v3431
    %v5486 = vmul.f32 %v3432, %v3432
    %v5487 = vmul.f32 %v3433, %v3433
    %v5488 = vmul.f32 %v3434, %v3434
    %v5489 = vmul.f32 %v3435, %v3435
    %v5490 = vmul.f32 %v3436, %v3436
    %v5491 = vmul.f32 %v3437, %v3437
    %v5492 = vmul.f32 %v3438, %v3438
    %v5493 = vmul.f32 %v3439, %v3439
    %v5494 = vmul.f32 %v3440, %v3440
    %v5495 = vmul.f32 %v3441, %v3441
    %v5496 = vmul.f32 %v3442, %v3442
    %v5497 = vmul.f32 %v3443, %v3443
    %v5498 = vmul.f32 %v3444, %v3444
    %v5499 = vmul.f32 %v3445, %v3445
    %v5500 = vmul.f32 %v3446, %v3446
    %v5501 = vmul.f32 %v3447, %v3447
    %v5502 = vmul.f32 %v3448, %v3448
    %v5503 = vmul.f32 %v3449, %v3449
    %v5504 = vmul.f32 %v3450, %v3450
    %v5505 = vmul.f32 %v3451, %v3451
    %v5506 = vmul.f32 %v3452, %v3452
    %v5507 = vmul.f32 %v3453, %v3453
    %v5508 = vmul.f32 %v3454, %v3454
    %v5509 = vmul.f32 %v3455, %v3455
    %v5510 = vmul.f32 %v3456, %v3456
    %v5511 = vmul.f32 %v3457, %v3457
    %v5512 = vmul.f32 %v3458, %v3458
    %v5513 = vmul.f32 %v3459, %v3459
    %v5514 = vmul.f32 %v3460, %v3460
    %v5515 = vmul.f32 %v3461, %v3461
    %v5516 = vmul.f32 %v3462, %v3462
    %v5517 = vmul.f32 %v3463, %v3463
    %v5518 = vmul.f32 %v3464, %v3464
    %v5519 = vmul.f32 %v3465, %v3465
    %v5520 = vmul.f32 %v3466, %v3466
    %v5521 = vmul.f32 %v3467, %v3467
    %v5522 = vmul.f32 %v3468, %v3468
    %v5523 = vmul.f32 %v3469, %v3469
    %v5524 = vmul.f32 %v3470, %v3470
    %v5525 = vmul.f32 %v3471, %v3471
    %v5526 = vmul.f32 %v3472, %v3472
    %v5527 = vmul.f32 %v3473, %v3473
    %v5528 = vmul.f32 %v3474, %v3474
    %v5529 = vmul.f32 %v3475, %v3475
    %v5530 = vmul.f32 %v3476, %v3476
    %v5531 = vmul.f32 %v3477, %v3477
    %v5532 = vmul.f32 %v3478, %v3478
    %v5533 = vmul.f32 %v3479, %v3479
    %v5534 = vmul.f32 %v3480, %v3480
    %v5535 = vmul.f32 %v3481, %v3481
    %v5536 = vmul.f32 %v3482, %v3482
    %v5537 = vmul.f32 %v3483, %v3483
    %v5538 = vmul.f32 %v3484, %v3484
    %v5539 = vmul.f32 %v3485, %v3485
    %v5540 = vmul.f32 %v3486, %v3486
    %v5541 = vmul.f32 %v3487, %v3487
    %v5542 = vmul.f32 %v3488, %v3488
    %v5543 = vmul.f32 %v3489, %v3489
    %v5544 = vmul.f32 %v3490, %v3490
    %v5545 = vmul.f32 %v3491, %v3491
    %v5546 = vmul.f32 %v3492, %v3492
    %v5547 = vmul.f32 %v3493, %v3493
    %v5548 = vmul.f32 %v3494, %v3494
    %v5549 = vmul.f32 %v3495, %v3495
    %v5550 = vmul.f32 %v3496, %v3496
    %v5551 = vmul.f32 %v3497, %v3497
    %v5552 = vmul.f32 %v3498, %v3498
    %v5553 = vmul.f32 %v3499, %v3499
    %v5554 = vmul.f32 %v3500, %v3500
    %v5555 = vmul.f32 %v3501, %v3501
    %v5556 = vmul.f32 %v3502, %v3502
    %v5557 = vmul.f32 %v3503, %v3503
    %v5558 = vmul.f32 %v3504, %v3504
    %v5559 = vmul.f32 %v3505, %v3505
    %v5560 = vmul.f32 %v3506, %v3506
    %v5561 = vmul.f32 %v3507, %v3507
    %v5562 = vmul.f32 %v3508, %v3508
    %v5563 = vmul.f32 %v3509, %v3509
    %v5564 = vmul.f32 %v3510, %v3510
    %v5565 = vmul.f32 %v3511, %v3511
    %v5566 = vmul.f32 %v3512, %v3512
    %v5567 = vmul.f32 %v3513, %v3513
    %v5568 = vmul.f32 %v3514, %v3514
    %v5569 = vmul.f32 %v3515, %v3515
    %v5570 = vmul.f32 %v3516, %v3516
    %v5571 = vmul.f32 %v3517, %v3517
    %v5572 = vmul.f32 %v3518, %v3518
    %v5573 = vmul.f32 %v3519, %v3519
    %v5574 = vmul.f32 %v3520, %v3520
    %v5575 = vmul.f32 %v3521, %v3521
    %v5576 = vmul.f32 %v3522, %v3522
    %v5577 = vmul.f32 %v3523, %v3523
    %v5578 = vmul.f32 %v3524, %v3524
    %v5579 = vmul.f32 %v3525, %v3525
    %v5580 = vmul.f32 %v3526, %v3526
    %v5581 = vmul.f32 %v3527, %v3527
    %v5582 = vmul.f32 %v3528, %v3528
    %v5583 = vmul.f32 %v3529, %v3529
    %v5584 = vmul.f32 %v3530, %v3530
    %v5585 = vmul.f32 %v3531, %v3531
    %v5586 = vmul.f32 %v3532, %v3532
    %v5587 = vmul.f32 %v3533, %v3533
    %v5588 = vmul.f32 %v3534, %v3534
    %v5589 = vmul.f32 %v3535, %v3535
    %v5590 = vmul.f32 %v3536, %v3536
    %v5591 = vmul.f32 %v3537, %v3537
    %v5592 = vmul.f32 %v3538, %v3538
    %v5593 = vmul.f32 %v3539, %v3539
    %v5594 = vmul.f32 %v3540, %v3540
    %v5595 = vmul.f32 %v3541, %v3541
    %v5596 = vmul.f32 %v3542, %v3542
    %v5597 = vmul.f32 %v3543, %v3543
    %v5598 = vmul.f32 %v3544, %v3544
    %v5599 = vmul.f32 %v3545, %v3545
    %v5600 = vmul.f32 %v3546, %v3546
    %v5601 = vmul.f32 %v3547, %v3547
    %v5602 = vmul.f32 %v3548, %v3548
    %v5603 = vmul.f32 %v3549, %v3549
    %v5604 = vmul.f32 %v3550, %v3550
    %v5605 = vmul.f32 %v3551, %v3551
    %v5606 = vmul.f32 %v3552, %v3552
    %v5607 = vmul.f32 %v3553, %v3553
    %v5608 = vmul.f32 %v3554, %v3554
    %v5609 = vmul.f32 %v3555, %v3555
    %v5610 = vmul.f32 %v3556, %v3556
    %v5611 = vmul.f32 %v3557, %v3557
    %v5612 = vmul.f32 %v3558, %v3558
    %v5613 = vmul.f32 %v3559, %v3559
    %v5614 = vmul.f32 %v3560, %v3560
    %v5615 = vmul.f32 %v3561, %v3561
    %v5616 = vmul.f32 %v3562, %v3562
    %v5617 = vmul.f32 %v3563, %v3563
    %v5618 = vmul.f32 %v3564, %v3564
    %v5619 = vmul.f32 %v3565, %v3565
    %v5620 = vmul.f32 %v3566, %v3566
    %v5621 = vmul.f32 %v3567, %v3567
    %v5622 = vmul.f32 %v3568, %v3568
    %v5623 = vmul.f32 %v3569, %v3569
    %v5624 = vmul.f32 %v3570, %v3570
    %v5625 = vmul.f32 %v3571, %v3571
    %v5626 = vmul.f32 %v3572, %v3572
    %v5627 = vmul.f32 %v3573, %v3573
    %v5628 = vmul.f32 %v3574, %v3574
    %v5629 = vmul.f32 %v3575, %v3575
    %v5630 = vmul.f32 %v3576, %v3576
    %v5631 = vmul.f32 %v3577, %v3577
    %v5632 = vmul.f32 %v3578, %v3578
    %v5633 = vmul.f32 %v3579, %v3579
    %v5634 = vmul.f32 %v3580, %v3580
    %v5635 = vmul.f32 %v3581, %v3581
    %v5636 = vmul.f32 %v3582, %v3582
    %v5637 = vmul.f32 %v3583, %v3583
    %v5638 = vmul.f32 %v3584, %v3584
    %v5639 = vmul.f32 %v3585, %v3585
    %v5640 = vmul.f32 %v3586, %v3586
    %v5641 = vmul.f32 %v3587, %v3587
    %v5642 = vmul.f32 %v3588, %v3588
    %v5643 = vmul.f32 %v3589, %v3589
    %v5644 = vmul.f32 %v3590, %v3590
    %v5645 = vmul.f32 %v3591, %v3591
    %v5646 = vmul.f32 %v3592, %v3592
    %v5647 = vmul.f32 %v3593, %v3593
    %v5648 = vmul.f32 %v3594, %v3594
    %v5649 = vmul.f32 %v3595, %v3595
    %v5650 = vmul.f32 %v3596, %v3596
    %v5651 = vmul.f32 %v3597, %v3597
    %v5652 = vmul.f32 %v3598, %v3598
    %v5653 = vmul.f32 %v3599, %v3599
    %v5654 = vmul.f32 %v3600, %v3600
    %v5655 = vmul.f32 %v3601, %v3601
    %v5656 = vmul.f32 %v3602, %v3602
    %v5657 = vmul.f32 %v3603, %v3603
    %v5658 = vmul.f32 %v3604, %v3604
    %v5659 = vmul.f32 %v3605, %v3605
    %v5660 = vmul.f32 %v3606, %v3606
    %v5661 = vmul.f32 %v3607, %v3607
    %v5662 = vmul.f32 %v3608, %v3608
    %v5663 = vmul.f32 %v3609, %v3609
    %v5664 = vmul.f32 %v3610, %v3610
    %v5665 = vmul.f32 %v3611, %v3611
    %v5666 = vmul.f32 %v3612, %v3612
    %v5667 = vmul.f32 %v3613, %v3613
    %v5668 = vmul.f32 %v3614, %v3614
    %v5669 = vmul.f32 %v3615, %v3615
    %v5670 = vmul.f32 %v3616, %v3616
    %v5671 = vmul.f32 %v3617, %v3617
    %v5672 = vmul.f32 %v3618, %v3618
    %v5673 = vmul.f32 %v3619, %v3619
    %v5674 = vmul.f32 %v3620, %v3620
    %v5675 = vmul.f32 %v3621, %v3621
    %v5676 = vmul.f32 %v3622, %v3622
    %v5677 = vmul.f32 %v3623, %v3623
    %v5678 = vmul.f32 %v3624, %v3624
    %v5679 = vmul.f32 %v3625, %v3625
    %v5680 = vmul.f32 %v3626, %v3626
    %v5681 = vmul.f32 %v3627, %v3627
    %v5682 = vmul.f32 %v3628, %v3628
    %v5683 = vmul.f32 %v3629, %v3629
    %v5684 = vmul.f32 %v3630, %v3630
    %v5685 = vmul.f32 %v3631, %v3631
    %v5686 = vmul.f32 %v3632, %v3632
    %v5687 = vmul.f32 %v3633, %v3633
    %v5688 = vmul.f32 %v3634, %v3634
    %v5689 = vmul.f32 %v3635, %v3635
    %v5690 = vmul.f32 %v3636, %v3636
    %v5691 = vmul.f32 %v3637, %v3637
    %v5692 = vmul.f32 %v3638, %v3638
    %v5693 = vmul.f32 %v3639, %v3639
    %v5694 = vmul.f32 %v3640, %v3640
    %v5695 = vmul.f32 %v3641, %v3641
    %v5696 = vmul.f32 %v3642, %v3642
    %v5697 = vmul.f32 %v3643, %v3643
    %v5698 = vmul.f32 %v3644, %v3644
    %v5699 = vmul.f32 %v3645, %v3645
    %v5700 = vmul.f32 %v3646, %v3646
    %v5701 = vmul.f32 %v3647, %v3647
    %v5702 = vmul.f32 %v3648, %v3648
    %v5703 = vmul.f32 %v3649, %v3649
    %v5704 = vmul.f32 %v3650, %v3650
    %v5705 = vmul.f32 %v3651, %v3651
    %v5706 = vmul.f32 %v3652, %v3652
    %v5707 = vmul.f32 %v3653, %v3653
    %v5708 = vmul.f32 %v3654, %v3654
    %v5709 = vmul.f32 %v3655, %v3655
    %v5710 = vmul.f32 %v3656, %v3656
    %v5711 = vmul.f32 %v3657, %v3657
    %v5712 = vmul.f32 %v3658, %v3658
    %v5713 = vmul.f32 %v3659, %v3659
    %v5714 = vmul.f32 %v3660, %v3660
    %v5715 = vmul.f32 %v3661, %v3661
    %v5716 = vmul.f32 %v3662, %v3662
    %v5717 = vmul.f32 %v3663, %v3663
    %v5718 = vmul.f32 %v3664, %v3664
    %v5719 = vsel %vm3149, %v5463, 0.0
    %v5720 = vsel %vm3149, %v5464, 0.0
    %v5721 = vadd.f32 %v5719, %v5720
    %v5722 = vsel %vm3149, %v5465, 0.0
    %v5723 = vadd.f32 %v5721, %v5722
    %v5724 = vsel %vm3149, %v5466, 0.0
    %v5725 = vadd.f32 %v5723, %v5724
    %v5726 = vsel %vm3149, %v5467, 0.0
    %v5727 = vadd.f32 %v5725, %v5726
    %v5728 = vsel %vm3149, %v5468, 0.0
    %v5729 = vadd.f32 %v5727, %v5728
    %v5730 = vsel %vm3149, %v5469, 0.0
    %v5731 = vadd.f32 %v5729, %v5730
    %v5732 = vsel %vm3149, %v5470, 0.0
    %v5733 = vadd.f32 %v5731, %v5732
    %v5734 = vsel %vm3149, %v5471, 0.0
    %v5735 = vadd.f32 %v5733, %v5734
    %v5736 = vsel %vm3149, %v5472, 0.0
    %v5737 = vadd.f32 %v5735, %v5736
    %v5738 = vsel %vm3149, %v5473, 0.0
    %v5739 = vadd.f32 %v5737, %v5738
    %v5740 = vsel %vm3149, %v5474, 0.0
    %v5741 = vadd.f32 %v5739, %v5740
    %v5742 = vsel %vm3149, %v5475, 0.0
    %v5743 = vadd.f32 %v5741, %v5742
    %v5744 = vsel %vm3149, %v5476, 0.0
    %v5745 = vadd.f32 %v5743, %v5744
    %v5746 = vsel %vm3149, %v5477, 0.0
    %v5747 = vadd.f32 %v5745, %v5746
    %v5748 = vsel %vm3149, %v5478, 0.0
    %v5749 = vadd.f32 %v5747, %v5748
    %v5750 = vsel %vm3149, %v5479, 0.0
    %v5751 = vadd.f32 %v5749, %v5750
    %v5752 = vsel %vm3149, %v5480, 0.0
    %v5753 = vadd.f32 %v5751, %v5752
    %v5754 = vsel %vm3149, %v5481, 0.0
    %v5755 = vadd.f32 %v5753, %v5754
    %v5756 = vsel %vm3149, %v5482, 0.0
    %v5757 = vadd.f32 %v5755, %v5756
    %v5758 = vsel %vm3149, %v5483, 0.0
    %v5759 = vadd.f32 %v5757, %v5758
    %v5760 = vsel %vm3149, %v5484, 0.0
    %v5761 = vadd.f32 %v5759, %v5760
    %v5762 = vsel %vm3149, %v5485, 0.0
    %v5763 = vadd.f32 %v5761, %v5762
    %v5764 = vsel %vm3149, %v5486, 0.0
    %v5765 = vadd.f32 %v5763, %v5764
    %v5766 = vsel %vm3149, %v5487, 0.0
    %v5767 = vadd.f32 %v5765, %v5766
    %v5768 = vsel %vm3149, %v5488, 0.0
    %v5769 = vadd.f32 %v5767, %v5768
    %v5770 = vsel %vm3149, %v5489, 0.0
    %v5771 = vadd.f32 %v5769, %v5770
    %v5772 = vsel %vm3149, %v5490, 0.0
    %v5773 = vadd.f32 %v5771, %v5772
    %v5774 = vsel %vm3149, %v5491, 0.0
    %v5775 = vadd.f32 %v5773, %v5774
    %v5776 = vsel %vm3149, %v5492, 0.0
    %v5777 = vadd.f32 %v5775, %v5776
    %v5778 = vsel %vm3149, %v5493, 0.0
    %v5779 = vadd.f32 %v5777, %v5778
    %v5780 = vsel %vm3149, %v5494, 0.0
    %v5781 = vadd.f32 %v5779, %v5780
    %v5782 = vsel %vm3149, %v5495, 0.0
    %v5783 = vadd.f32 %v5781, %v5782
    %v5784 = vsel %vm3149, %v5496, 0.0
    %v5785 = vadd.f32 %v5783, %v5784
    %v5786 = vsel %vm3149, %v5497, 0.0
    %v5787 = vadd.f32 %v5785, %v5786
    %v5788 = vsel %vm3149, %v5498, 0.0
    %v5789 = vadd.f32 %v5787, %v5788
    %v5790 = vsel %vm3149, %v5499, 0.0
    %v5791 = vadd.f32 %v5789, %v5790
    %v5792 = vsel %vm3149, %v5500, 0.0
    %v5793 = vadd.f32 %v5791, %v5792
    %v5794 = vsel %vm3149, %v5501, 0.0
    %v5795 = vadd.f32 %v5793, %v5794
    %v5796 = vsel %vm3149, %v5502, 0.0
    %v5797 = vadd.f32 %v5795, %v5796
    %v5798 = vsel %vm3149, %v5503, 0.0
    %v5799 = vadd.f32 %v5797, %v5798
    %v5800 = vsel %vm3149, %v5504, 0.0
    %v5801 = vadd.f32 %v5799, %v5800
    %v5802 = vsel %vm3149, %v5505, 0.0
    %v5803 = vadd.f32 %v5801, %v5802
    %v5804 = vsel %vm3149, %v5506, 0.0
    %v5805 = vadd.f32 %v5803, %v5804
    %v5806 = vsel %vm3149, %v5507, 0.0
    %v5807 = vadd.f32 %v5805, %v5806
    %v5808 = vsel %vm3149, %v5508, 0.0
    %v5809 = vadd.f32 %v5807, %v5808
    %v5810 = vsel %vm3149, %v5509, 0.0
    %v5811 = vadd.f32 %v5809, %v5810
    %v5812 = vsel %vm3149, %v5510, 0.0
    %v5813 = vadd.f32 %v5811, %v5812
    %v5814 = vsel %vm3149, %v5511, 0.0
    %v5815 = vadd.f32 %v5813, %v5814
    %v5816 = vsel %vm3149, %v5512, 0.0
    %v5817 = vadd.f32 %v5815, %v5816
    %v5818 = vsel %vm3149, %v5513, 0.0
    %v5819 = vadd.f32 %v5817, %v5818
    %v5820 = vsel %vm3149, %v5514, 0.0
    %v5821 = vadd.f32 %v5819, %v5820
    %v5822 = vsel %vm3149, %v5515, 0.0
    %v5823 = vadd.f32 %v5821, %v5822
    %v5824 = vsel %vm3149, %v5516, 0.0
    %v5825 = vadd.f32 %v5823, %v5824
    %v5826 = vsel %vm3149, %v5517, 0.0
    %v5827 = vadd.f32 %v5825, %v5826
    %v5828 = vsel %vm3149, %v5518, 0.0
    %v5829 = vadd.f32 %v5827, %v5828
    %v5830 = vsel %vm3149, %v5519, 0.0
    %v5831 = vadd.f32 %v5829, %v5830
    %v5832 = vsel %vm3149, %v5520, 0.0
    %v5833 = vadd.f32 %v5831, %v5832
    %v5834 = vsel %vm3149, %v5521, 0.0
    %v5835 = vadd.f32 %v5833, %v5834
    %v5836 = vsel %vm3149, %v5522, 0.0
    %v5837 = vadd.f32 %v5835, %v5836
    %v5838 = vsel %vm3149, %v5523, 0.0
    %v5839 = vadd.f32 %v5837, %v5838
    %v5840 = vsel %vm3149, %v5524, 0.0
    %v5841 = vadd.f32 %v5839, %v5840
    %v5842 = vsel %vm3149, %v5525, 0.0
    %v5843 = vadd.f32 %v5841, %v5842
    %v5844 = vsel %vm3149, %v5526, 0.0
    %v5845 = vadd.f32 %v5843, %v5844
    %v5846 = vsel %vm3149, %v5527, 0.0
    %v5847 = vadd.f32 %v5845, %v5846
    %v5848 = vsel %vm3149, %v5528, 0.0
    %v5849 = vadd.f32 %v5847, %v5848
    %v5850 = vsel %vm3149, %v5529, 0.0
    %v5851 = vadd.f32 %v5849, %v5850
    %v5852 = vsel %vm3149, %v5530, 0.0
    %v5853 = vadd.f32 %v5851, %v5852
    %v5854 = vsel %vm3149, %v5531, 0.0
    %v5855 = vadd.f32 %v5853, %v5854
    %v5856 = vsel %vm3149, %v5532, 0.0
    %v5857 = vadd.f32 %v5855, %v5856
    %v5858 = vsel %vm3149, %v5533, 0.0
    %v5859 = vadd.f32 %v5857, %v5858
    %v5860 = vsel %vm3149, %v5534, 0.0
    %v5861 = vadd.f32 %v5859, %v5860
    %v5862 = vsel %vm3149, %v5535, 0.0
    %v5863 = vadd.f32 %v5861, %v5862
    %v5864 = vsel %vm3149, %v5536, 0.0
    %v5865 = vadd.f32 %v5863, %v5864
    %v5866 = vsel %vm3149, %v5537, 0.0
    %v5867 = vadd.f32 %v5865, %v5866
    %v5868 = vsel %vm3149, %v5538, 0.0
    %v5869 = vadd.f32 %v5867, %v5868
    %v5870 = vsel %vm3149, %v5539, 0.0
    %v5871 = vadd.f32 %v5869, %v5870
    %v5872 = vsel %vm3149, %v5540, 0.0
    %v5873 = vadd.f32 %v5871, %v5872
    %v5874 = vsel %vm3149, %v5541, 0.0
    %v5875 = vadd.f32 %v5873, %v5874
    %v5876 = vsel %vm3149, %v5542, 0.0
    %v5877 = vadd.f32 %v5875, %v5876
    %v5878 = vsel %vm3149, %v5543, 0.0
    %v5879 = vadd.f32 %v5877, %v5878
    %v5880 = vsel %vm3149, %v5544, 0.0
    %v5881 = vadd.f32 %v5879, %v5880
    %v5882 = vsel %vm3149, %v5545, 0.0
    %v5883 = vadd.f32 %v5881, %v5882
    %v5884 = vsel %vm3149, %v5546, 0.0
    %v5885 = vadd.f32 %v5883, %v5884
    %v5886 = vsel %vm3149, %v5547, 0.0
    %v5887 = vadd.f32 %v5885, %v5886
    %v5888 = vsel %vm3149, %v5548, 0.0
    %v5889 = vadd.f32 %v5887, %v5888
    %v5890 = vsel %vm3149, %v5549, 0.0
    %v5891 = vadd.f32 %v5889, %v5890
    %v5892 = vsel %vm3149, %v5550, 0.0
    %v5893 = vadd.f32 %v5891, %v5892
    %v5894 = vsel %vm3149, %v5551, 0.0
    %v5895 = vadd.f32 %v5893, %v5894
    %v5896 = vsel %vm3149, %v5552, 0.0
    %v5897 = vadd.f32 %v5895, %v5896
    %v5898 = vsel %vm3149, %v5553, 0.0
    %v5899 = vadd.f32 %v5897, %v5898
    %v5900 = vsel %vm3149, %v5554, 0.0
    %v5901 = vadd.f32 %v5899, %v5900
    %v5902 = vsel %vm3149, %v5555, 0.0
    %v5903 = vadd.f32 %v5901, %v5902
    %v5904 = vsel %vm3149, %v5556, 0.0
    %v5905 = vadd.f32 %v5903, %v5904
    %v5906 = vsel %vm3149, %v5557, 0.0
    %v5907 = vadd.f32 %v5905, %v5906
    %v5908 = vsel %vm3149, %v5558, 0.0
    %v5909 = vadd.f32 %v5907, %v5908
    %v5910 = vsel %vm3149, %v5559, 0.0
    %v5911 = vadd.f32 %v5909, %v5910
    %v5912 = vsel %vm3149, %v5560, 0.0
    %v5913 = vadd.f32 %v5911, %v5912
    %v5914 = vsel %vm3149, %v5561, 0.0
    %v5915 = vadd.f32 %v5913, %v5914
    %v5916 = vsel %vm3149, %v5562, 0.0
    %v5917 = vadd.f32 %v5915, %v5916
    %v5918 = vsel %vm3149, %v5563, 0.0
    %v5919 = vadd.f32 %v5917, %v5918
    %v5920 = vsel %vm3149, %v5564, 0.0
    %v5921 = vadd.f32 %v5919, %v5920
    %v5922 = vsel %vm3149, %v5565, 0.0
    %v5923 = vadd.f32 %v5921, %v5922
    %v5924 = vsel %vm3149, %v5566, 0.0
    %v5925 = vadd.f32 %v5923, %v5924
    %v5926 = vsel %vm3149, %v5567, 0.0
    %v5927 = vadd.f32 %v5925, %v5926
    %v5928 = vsel %vm3149, %v5568, 0.0
    %v5929 = vadd.f32 %v5927, %v5928
    %v5930 = vsel %vm3149, %v5569, 0.0
    %v5931 = vadd.f32 %v5929, %v5930
    %v5932 = vsel %vm3149, %v5570, 0.0
    %v5933 = vadd.f32 %v5931, %v5932
    %v5934 = vsel %vm3149, %v5571, 0.0
    %v5935 = vadd.f32 %v5933, %v5934
    %v5936 = vsel %vm3149, %v5572, 0.0
    %v5937 = vadd.f32 %v5935, %v5936
    %v5938 = vsel %vm3149, %v5573, 0.0
    %v5939 = vadd.f32 %v5937, %v5938
    %v5940 = vsel %vm3149, %v5574, 0.0
    %v5941 = vadd.f32 %v5939, %v5940
    %v5942 = vsel %vm3149, %v5575, 0.0
    %v5943 = vadd.f32 %v5941, %v5942
    %v5944 = vsel %vm3149, %v5576, 0.0
    %v5945 = vadd.f32 %v5943, %v5944
    %v5946 = vsel %vm3149, %v5577, 0.0
    %v5947 = vadd.f32 %v5945, %v5946
    %v5948 = vsel %vm3149, %v5578, 0.0
    %v5949 = vadd.f32 %v5947, %v5948
    %v5950 = vsel %vm3149, %v5579, 0.0
    %v5951 = vadd.f32 %v5949, %v5950
    %v5952 = vsel %vm3149, %v5580, 0.0
    %v5953 = vadd.f32 %v5951, %v5952
    %v5954 = vsel %vm3149, %v5581, 0.0
    %v5955 = vadd.f32 %v5953, %v5954
    %v5956 = vsel %vm3149, %v5582, 0.0
    %v5957 = vadd.f32 %v5955, %v5956
    %v5958 = vsel %vm3149, %v5583, 0.0
    %v5959 = vadd.f32 %v5957, %v5958
    %v5960 = vsel %vm3149, %v5584, 0.0
    %v5961 = vadd.f32 %v5959, %v5960
    %v5962 = vsel %vm3149, %v5585, 0.0
    %v5963 = vadd.f32 %v5961, %v5962
    %v5964 = vsel %vm3149, %v5586, 0.0
    %v5965 = vadd.f32 %v5963, %v5964
    %v5966 = vsel %vm3149, %v5587, 0.0
    %v5967 = vadd.f32 %v5965, %v5966
    %v5968 = vsel %vm3149, %v5588, 0.0
    %v5969 = vadd.f32 %v5967, %v5968
    %v5970 = vsel %vm3149, %v5589, 0.0
    %v5971 = vadd.f32 %v5969, %v5970
    %v5972 = vsel %vm3149, %v5590, 0.0
    %v5973 = vadd.f32 %v5971, %v5972
    %v5974 = vsel %vm3149, %v5591, 0.0
    %v5975 = vadd.f32 %v5973, %v5974
    %v5976 = vsel %vm3149, %v5592, 0.0
    %v5977 = vadd.f32 %v5975, %v5976
    %v5978 = vsel %vm3149, %v5593, 0.0
    %v5979 = vadd.f32 %v5977, %v5978
    %v5980 = vsel %vm3149, %v5594, 0.0
    %v5981 = vadd.f32 %v5979, %v5980
    %v5982 = vsel %vm3149, %v5595, 0.0
    %v5983 = vadd.f32 %v5981, %v5982
    %v5984 = vsel %vm3149, %v5596, 0.0
    %v5985 = vadd.f32 %v5983, %v5984
    %v5986 = vsel %vm3149, %v5597, 0.0
    %v5987 = vadd.f32 %v5985, %v5986
    %v5988 = vsel %vm3149, %v5598, 0.0
    %v5989 = vadd.f32 %v5987, %v5988
    %v5990 = vsel %vm3149, %v5599, 0.0
    %v5991 = vadd.f32 %v5989, %v5990
    %v5992 = vsel %vm3149, %v5600, 0.0
    %v5993 = vadd.f32 %v5991, %v5992
    %v5994 = vsel %vm3149, %v5601, 0.0
    %v5995 = vadd.f32 %v5993, %v5994
    %v5996 = vsel %vm3149, %v5602, 0.0
    %v5997 = vadd.f32 %v5995, %v5996
    %v5998 = vsel %vm3149, %v5603, 0.0
    %v5999 = vadd.f32 %v5997, %v5998
    %v6000 = vsel %vm3149, %v5604, 0.0
    %v6001 = vadd.f32 %v5999, %v6000
    %v6002 = vsel %vm3149, %v5605, 0.0
    %v6003 = vadd.f32 %v6001, %v6002
    %v6004 = vsel %vm3149, %v5606, 0.0
    %v6005 = vadd.f32 %v6003, %v6004
    %v6006 = vsel %vm3149, %v5607, 0.0
    %v6007 = vadd.f32 %v6005, %v6006
    %v6008 = vsel %vm3149, %v5608, 0.0
    %v6009 = vadd.f32 %v6007, %v6008
    %v6010 = vsel %vm3149, %v5609, 0.0
    %v6011 = vadd.f32 %v6009, %v6010
    %v6012 = vsel %vm3149, %v5610, 0.0
    %v6013 = vadd.f32 %v6011, %v6012
    %v6014 = vsel %vm3149, %v5611, 0.0
    %v6015 = vadd.f32 %v6013, %v6014
    %v6016 = vsel %vm3149, %v5612, 0.0
    %v6017 = vadd.f32 %v6015, %v6016
    %v6018 = vsel %vm3149, %v5613, 0.0
    %v6019 = vadd.f32 %v6017, %v6018
    %v6020 = vsel %vm3149, %v5614, 0.0
    %v6021 = vadd.f32 %v6019, %v6020
    %v6022 = vsel %vm3149, %v5615, 0.0
    %v6023 = vadd.f32 %v6021, %v6022
    %v6024 = vsel %vm3149, %v5616, 0.0
    %v6025 = vadd.f32 %v6023, %v6024
    %v6026 = vsel %vm3149, %v5617, 0.0
    %v6027 = vadd.f32 %v6025, %v6026
    %v6028 = vsel %vm3149, %v5618, 0.0
    %v6029 = vadd.f32 %v6027, %v6028
    %v6030 = vsel %vm3149, %v5619, 0.0
    %v6031 = vadd.f32 %v6029, %v6030
    %v6032 = vsel %vm3149, %v5620, 0.0
    %v6033 = vadd.f32 %v6031, %v6032
    %v6034 = vsel %vm3149, %v5621, 0.0
    %v6035 = vadd.f32 %v6033, %v6034
    %v6036 = vsel %vm3149, %v5622, 0.0
    %v6037 = vadd.f32 %v6035, %v6036
    %v6038 = vsel %vm3149, %v5623, 0.0
    %v6039 = vadd.f32 %v6037, %v6038
    %v6040 = vsel %vm3149, %v5624, 0.0
    %v6041 = vadd.f32 %v6039, %v6040
    %v6042 = vsel %vm3149, %v5625, 0.0
    %v6043 = vadd.f32 %v6041, %v6042
    %v6044 = vsel %vm3149, %v5626, 0.0
    %v6045 = vadd.f32 %v6043, %v6044
    %v6046 = vsel %vm3149, %v5627, 0.0
    %v6047 = vadd.f32 %v6045, %v6046
    %v6048 = vsel %vm3149, %v5628, 0.0
    %v6049 = vadd.f32 %v6047, %v6048
    %v6050 = vsel %vm3149, %v5629, 0.0
    %v6051 = vadd.f32 %v6049, %v6050
    %v6052 = vsel %vm3149, %v5630, 0.0
    %v6053 = vadd.f32 %v6051, %v6052
    %v6054 = vsel %vm3149, %v5631, 0.0
    %v6055 = vadd.f32 %v6053, %v6054
    %v6056 = vsel %vm3149, %v5632, 0.0
    %v6057 = vadd.f32 %v6055, %v6056
    %v6058 = vsel %vm3149, %v5633, 0.0
    %v6059 = vadd.f32 %v6057, %v6058
    %v6060 = vsel %vm3149, %v5634, 0.0
    %v6061 = vadd.f32 %v6059, %v6060
    %v6062 = vsel %vm3149, %v5635, 0.0
    %v6063 = vadd.f32 %v6061, %v6062
    %v6064 = vsel %vm3149, %v5636, 0.0
    %v6065 = vadd.f32 %v6063, %v6064
    %v6066 = vsel %vm3149, %v5637, 0.0
    %v6067 = vadd.f32 %v6065, %v6066
    %v6068 = vsel %vm3149, %v5638, 0.0
    %v6069 = vadd.f32 %v6067, %v6068
    %v6070 = vsel %vm3149, %v5639, 0.0
    %v6071 = vadd.f32 %v6069, %v6070
    %v6072 = vsel %vm3149, %v5640, 0.0
    %v6073 = vadd.f32 %v6071, %v6072
    %v6074 = vsel %vm3149, %v5641, 0.0
    %v6075 = vadd.f32 %v6073, %v6074
    %v6076 = vsel %vm3149, %v5642, 0.0
    %v6077 = vadd.f32 %v6075, %v6076
    %v6078 = vsel %vm3149, %v5643, 0.0
    %v6079 = vadd.f32 %v6077, %v6078
    %v6080 = vsel %vm3149, %v5644, 0.0
    %v6081 = vadd.f32 %v6079, %v6080
    %v6082 = vsel %vm3149, %v5645, 0.0
    %v6083 = vadd.f32 %v6081, %v6082
    %v6084 = vsel %vm3149, %v5646, 0.0
    %v6085 = vadd.f32 %v6083, %v6084
    %v6086 = vsel %vm3149, %v5647, 0.0
    %v6087 = vadd.f32 %v6085, %v6086
    %v6088 = vsel %vm3149, %v5648, 0.0
    %v6089 = vadd.f32 %v6087, %v6088
    %v6090 = vsel %vm3149, %v5649, 0.0
    %v6091 = vadd.f32 %v6089, %v6090
    %v6092 = vsel %vm3149, %v5650, 0.0
    %v6093 = vadd.f32 %v6091, %v6092
    %v6094 = vsel %vm3149, %v5651, 0.0
    %v6095 = vadd.f32 %v6093, %v6094
    %v6096 = vsel %vm3149, %v5652, 0.0
    %v6097 = vadd.f32 %v6095, %v6096
    %v6098 = vsel %vm3149, %v5653, 0.0
    %v6099 = vadd.f32 %v6097, %v6098
    %v6100 = vsel %vm3149, %v5654, 0.0
    %v6101 = vadd.f32 %v6099, %v6100
    %v6102 = vsel %vm3149, %v5655, 0.0
    %v6103 = vadd.f32 %v6101, %v6102
    %v6104 = vsel %vm3149, %v5656, 0.0
    %v6105 = vadd.f32 %v6103, %v6104
    %v6106 = vsel %vm3149, %v5657, 0.0
    %v6107 = vadd.f32 %v6105, %v6106
    %v6108 = vsel %vm3149, %v5658, 0.0
    %v6109 = vadd.f32 %v6107, %v6108
    %v6110 = vsel %vm3149, %v5659, 0.0
    %v6111 = vadd.f32 %v6109, %v6110
    %v6112 = vsel %vm3149, %v5660, 0.0
    %v6113 = vadd.f32 %v6111, %v6112
    %v6114 = vsel %vm3149, %v5661, 0.0
    %v6115 = vadd.f32 %v6113, %v6114
    %v6116 = vsel %vm3149, %v5662, 0.0
    %v6117 = vadd.f32 %v6115, %v6116
    %v6118 = vsel %vm3149, %v5663, 0.0
    %v6119 = vadd.f32 %v6117, %v6118
    %v6120 = vsel %vm3149, %v5664, 0.0
    %v6121 = vadd.f32 %v6119, %v6120
    %v6122 = vsel %vm3149, %v5665, 0.0
    %v6123 = vadd.f32 %v6121, %v6122
    %v6124 = vsel %vm3149, %v5666, 0.0
    %v6125 = vadd.f32 %v6123, %v6124
    %v6126 = vsel %vm3149, %v5667, 0.0
    %v6127 = vadd.f32 %v6125, %v6126
    %v6128 = vsel %vm3149, %v5668, 0.0
    %v6129 = vadd.f32 %v6127, %v6128
    %v6130 = vsel %vm3149, %v5669, 0.0
    %v6131 = vadd.f32 %v6129, %v6130
    %v6132 = vsel %vm3149, %v5670, 0.0
    %v6133 = vadd.f32 %v6131, %v6132
    %v6134 = vsel %vm3149, %v5671, 0.0
    %v6135 = vadd.f32 %v6133, %v6134
    %v6136 = vsel %vm3149, %v5672, 0.0
    %v6137 = vadd.f32 %v6135, %v6136
    %v6138 = vsel %vm3149, %v5673, 0.0
    %v6139 = vadd.f32 %v6137, %v6138
    %v6140 = vsel %vm3149, %v5674, 0.0
    %v6141 = vadd.f32 %v6139, %v6140
    %v6142 = vsel %vm3149, %v5675, 0.0
    %v6143 = vadd.f32 %v6141, %v6142
    %v6144 = vsel %vm3149, %v5676, 0.0
    %v6145 = vadd.f32 %v6143, %v6144
    %v6146 = vsel %vm3149, %v5677, 0.0
    %v6147 = vadd.f32 %v6145, %v6146
    %v6148 = vsel %vm3149, %v5678, 0.0
    %v6149 = vadd.f32 %v6147, %v6148
    %v6150 = vsel %vm3149, %v5679, 0.0
    %v6151 = vadd.f32 %v6149, %v6150
    %v6152 = vsel %vm3149, %v5680, 0.0
    %v6153 = vadd.f32 %v6151, %v6152
    %v6154 = vsel %vm3149, %v5681, 0.0
    %v6155 = vadd.f32 %v6153, %v6154
    %v6156 = vsel %vm3149, %v5682, 0.0
    %v6157 = vadd.f32 %v6155, %v6156
    %v6158 = vsel %vm3149, %v5683, 0.0
    %v6159 = vadd.f32 %v6157, %v6158
    %v6160 = vsel %vm3149, %v5684, 0.0
    %v6161 = vadd.f32 %v6159, %v6160
    %v6162 = vsel %vm3149, %v5685, 0.0
    %v6163 = vadd.f32 %v6161, %v6162
    %v6164 = vsel %vm3149, %v5686, 0.0
    %v6165 = vadd.f32 %v6163, %v6164
    %v6166 = vsel %vm3149, %v5687, 0.0
    %v6167 = vadd.f32 %v6165, %v6166
    %v6168 = vsel %vm3149, %v5688, 0.0
    %v6169 = vadd.f32 %v6167, %v6168
    %v6170 = vsel %vm3149, %v5689, 0.0
    %v6171 = vadd.f32 %v6169, %v6170
    %v6172 = vsel %vm3149, %v5690, 0.0
    %v6173 = vadd.f32 %v6171, %v6172
    %v6174 = vsel %vm3149, %v5691, 0.0
    %v6175 = vadd.f32 %v6173, %v6174
    %v6176 = vsel %vm3149, %v5692, 0.0
    %v6177 = vadd.f32 %v6175, %v6176
    %v6178 = vsel %vm3149, %v5693, 0.0
    %v6179 = vadd.f32 %v6177, %v6178
    %v6180 = vsel %vm3149, %v5694, 0.0
    %v6181 = vadd.f32 %v6179, %v6180
    %v6182 = vsel %vm3149, %v5695, 0.0
    %v6183 = vadd.f32 %v6181, %v6182
    %v6184 = vsel %vm3149, %v5696, 0.0
    %v6185 = vadd.f32 %v6183, %v6184
    %v6186 = vsel %vm3149, %v5697, 0.0
    %v6187 = vadd.f32 %v6185, %v6186
    %v6188 = vsel %vm3149, %v5698, 0.0
    %v6189 = vadd.f32 %v6187, %v6188
    %v6190 = vsel %vm3149, %v5699, 0.0
    %v6191 = vadd.f32 %v6189, %v6190
    %v6192 = vsel %vm3149, %v5700, 0.0
    %v6193 = vadd.f32 %v6191, %v6192
    %v6194 = vsel %vm3149, %v5701, 0.0
    %v6195 = vadd.f32 %v6193, %v6194
    %v6196 = vsel %vm3149, %v5702, 0.0
    %v6197 = vadd.f32 %v6195, %v6196
    %v6198 = vsel %vm3149, %v5703, 0.0
    %v6199 = vadd.f32 %v6197, %v6198
    %v6200 = vsel %vm3149, %v5704, 0.0
    %v6201 = vadd.f32 %v6199, %v6200
    %v6202 = vsel %vm3149, %v5705, 0.0
    %v6203 = vadd.f32 %v6201, %v6202
    %v6204 = vsel %vm3149, %v5706, 0.0
    %v6205 = vadd.f32 %v6203, %v6204
    %v6206 = vsel %vm3149, %v5707, 0.0
    %v6207 = vadd.f32 %v6205, %v6206
    %v6208 = vsel %vm3149, %v5708, 0.0
    %v6209 = vadd.f32 %v6207, %v6208
    %v6210 = vsel %vm3149, %v5709, 0.0
    %v6211 = vadd.f32 %v6209, %v6210
    %v6212 = vsel %vm3149, %v5710, 0.0
    %v6213 = vadd.f32 %v6211, %v6212
    %v6214 = vsel %vm3149, %v5711, 0.0
    %v6215 = vadd.f32 %v6213, %v6214
    %v6216 = vsel %vm3149, %v5712, 0.0
    %v6217 = vadd.f32 %v6215, %v6216
    %v6218 = vsel %vm3149, %v5713, 0.0
    %v6219 = vadd.f32 %v6217, %v6218
    %v6220 = vsel %vm3149, %v5714, 0.0
    %v6221 = vadd.f32 %v6219, %v6220
    %v6222 = vsel %vm3149, %v5715, 0.0
    %v6223 = vadd.f32 %v6221, %v6222
    %v6224 = vsel %vm3149, %v5716, 0.0
    %v6225 = vadd.f32 %v6223, %v6224
    %v6226 = vsel %vm3149, %v5717, 0.0
    %v6227 = vadd.f32 %v6225, %v6226
    %v6228 = vsel %vm3149, %v5718, 0.0
    %v6229 = vadd.f32 %v6227, %v6228
    %v6230 = vrot.slane %v6229, 4
    %v6231 = vadd.f32 %v6229, %v6230
    %v6232 = vrot.slane %v6231, 2
    %v6233 = vadd.f32 %v6231, %v6232
    %v6234 = vrot.slane %v6233, 1
    %v6235 = vadd.f32 %v6233, %v6234
    %vm6236 = vcmask 1040384
    %v6237 = vsel %vm6236, %v5462, %v6235
    %vm6238 = vcmask 58368
    %6239 = vst.msk [vmem:[%s3] sm:$0x3] %vm6238, %v6237
  $region17: #{discriminator_forward.5} parent=0 // pred_fallthru
    _
  // Predicated region
  $region18: #{discriminator_forward.5} parent=0 // pred_check
    _
  $region19: #{discriminator_forward.5} parent=0 // pred_check_branch
    %6241 = sbr.rel (0) target = $region21
  $region20: #{discriminator_forward.5} parent=0 // pred_region
    _
  $region21: #{discriminator_forward.5} parent=0 // pred_fallthru
    _
  // Predicated region
  $region22: #{discriminator_forward.5} parent=0 // pred_check
    _
  $region23: #{discriminator_forward.5} parent=0 // pred_check_branch
    %6243 = sbr.rel (0) target = $region25
  $region24: #{discriminator_forward.5} parent=0 // pred_region
    _
  $region25: #{discriminator_forward.5} parent=0 // pred_fallthru
    _
  // Predicated region
  $region26: #{discriminator_forward.5} parent=0 // pred_check
    _
  $region27: #{discriminator_forward.5} parent=0 // pred_check_branch
    %6245 = sbr.rel (0) target = $region29
  $region28: #{discriminator_forward.5} parent=0 // pred_region
    _
  $region29: #{discriminator_forward.5} parent=0 // pred_fallthru
    _
  // Predicated region
  $region30: #{discriminator_forward.5} parent=0 // pred_check
    _
  $region31: #{discriminator_forward.5} parent=0 // pred_check_branch
    %6247 = sbr.rel (0) target = $region33
  $region32: #{discriminator_forward.5} parent=0 // pred_region
    _
  $region33: #{discriminator_forward.5} parent=0 // pred_fallthru
    _

// kernel: discriminator_forward.6
$region0: #{discriminator_forward.6}
  #allocation0 [shape = 'u32[]', space=smem, size = 0x4, offset = 0x4, fixed_abs, tag = 'smem constant byte address 0x4 - core index']
  #allocation1 [shape = 'u32[144,128]{1,0:T(1,128)}', space=vmem, size = 0x12000, scoped, tag = 'internal scratch']
  #allocation2 [shape = 'f32[512,16]{1,0:T(8,128)}', space=vmem, size = 0x40000, scoped, tag = 'scratch operand']
  %s0 = inlined_call_operand.vmem [shape: bf16[512,128], index: 0, kind: input, shape index: {}]
  %s1 = inlined_call_operand.vmem [shape: bf16[128,16], index: 1, kind: input, shape index: {}]
  %s2 = inlined_call_operand.vmem [shape: bf16[512,16], index: 2, kind: output, shape index: {0}]
  %s3 = inlined_call_operand.vmem [shape: f32[1,2,16], index: 3, kind: output, shape index: {1}]
  %4 = xla_tuple %s2, %s3
  %s5 = sld [smem:[#allocation0]]
  $region34: #{discriminator_forward.6} parent=0
    _
  %s7 = ssub.s32 1, %s5
  %s8 = scalar_select 0, %s7, %s5
  // Predicated region
  $region2: #{discriminator_forward.6} parent=0 // pred_check
    _
  $region3: #{discriminator_forward.6} parent=0 // pred_check_branch
    %10 = sbr.rel (0) target = $region5
  $region4: #{discriminator_forward.6} parent=0 // pred_region
    _
  $region5: #{discriminator_forward.6} parent=0 // pred_fallthru
    _
  // Predicated region
  $region6: #{discriminator_forward.6} parent=0 // pred_check
    _
  $region7: #{discriminator_forward.6} parent=0 // pred_check_branch
    %12 = sbr.rel (0) target = $region9
  $region8: #{discriminator_forward.6} parent=0 // pred_region
    _
  $region9: #{discriminator_forward.6} parent=0 // pred_fallthru
    _
  %p14 = scmp.eq.s32.totalorder 0, 0
  // Predicated region
  $region10: #{discriminator_forward.6} parent=0 // pred_check
    %p15 = pneg %p14
  $region11: #{discriminator_forward.6} parent=0 // pred_check_branch
    %17 = sbr.rel (%p15) target = $region13
  $region12: #{discriminator_forward.6} parent=0 // pred_region
    %vm18 = vcmask 130048
    %19 = vst.msk [vmem:[#allocation2] sm:$0xff] %vm18, 0.0
    %20 = vst.msk [vmem:[#allocation2 + $0x8] sm:$0xff] %vm18, 0.0
    %21 = vst.msk [vmem:[#allocation2 + $0x10] sm:$0xff] %vm18, 0.0
    %22 = vst.msk [vmem:[#allocation2 + $0x18] sm:$0xff] %vm18, 0.0
    %23 = vst.msk [vmem:[#allocation2 + $0x20] sm:$0xff] %vm18, 0.0
    %24 = vst.msk [vmem:[#allocation2 + $0x28] sm:$0xff] %vm18, 0.0
    %25 = vst.msk [vmem:[#allocation2 + $0x30] sm:$0xff] %vm18, 0.0
    %26 = vst.msk [vmem:[#allocation2 + $0x38] sm:$0xff] %vm18, 0.0
    %27 = vst.msk [vmem:[#allocation2 + $0x40] sm:$0xff] %vm18, 0.0
    %28 = vst.msk [vmem:[#allocation2 + $0x48] sm:$0xff] %vm18, 0.0
    %29 = vst.msk [vmem:[#allocation2 + $0x50] sm:$0xff] %vm18, 0.0
    %30 = vst.msk [vmem:[#allocation2 + $0x58] sm:$0xff] %vm18, 0.0
    %31 = vst.msk [vmem:[#allocation2 + $0x60] sm:$0xff] %vm18, 0.0
    %32 = vst.msk [vmem:[#allocation2 + $0x68] sm:$0xff] %vm18, 0.0
    %33 = vst.msk [vmem:[#allocation2 + $0x70] sm:$0xff] %vm18, 0.0
    %34 = vst.msk [vmem:[#allocation2 + $0x78] sm:$0xff] %vm18, 0.0
    %35 = vst.msk [vmem:[#allocation2 + $0x80] sm:$0xff] %vm18, 0.0
    %36 = vst.msk [vmem:[#allocation2 + $0x88] sm:$0xff] %vm18, 0.0
    %37 = vst.msk [vmem:[#allocation2 + $0x90] sm:$0xff] %vm18, 0.0
    %38 = vst.msk [vmem:[#allocation2 + $0x98] sm:$0xff] %vm18, 0.0
    %39 = vst.msk [vmem:[#allocation2 + $0xa0] sm:$0xff] %vm18, 0.0
    %40 = vst.msk [vmem:[#allocation2 + $0xa8] sm:$0xff] %vm18, 0.0
    %41 = vst.msk [vmem:[#allocation2 + $0xb0] sm:$0xff] %vm18, 0.0
    %42 = vst.msk [vmem:[#allocation2 + $0xb8] sm:$0xff] %vm18, 0.0
    %43 = vst.msk [vmem:[#allocation2 + $0xc0] sm:$0xff] %vm18, 0.0
    %44 = vst.msk [vmem:[#allocation2 + $0xc8] sm:$0xff] %vm18, 0.0
    %45 = vst.msk [vmem:[#allocation2 + $0xd0] sm:$0xff] %vm18, 0.0
    %46 = vst.msk [vmem:[#allocation2 + $0xd8] sm:$0xff] %vm18, 0.0
    %47 = vst.msk [vmem:[#allocation2 + $0xe0] sm:$0xff] %vm18, 0.0
    %48 = vst.msk [vmem:[#allocation2 + $0xe8] sm:$0xff] %vm18, 0.0
    %49 = vst.msk [vmem:[#allocation2 + $0xf0] sm:$0xff] %vm18, 0.0
    %50 = vst.msk [vmem:[#allocation2 + $0xf8] sm:$0xff] %vm18, 0.0
    %51 = vst.msk [vmem:[#allocation2 + $0x100] sm:$0xff] %vm18, 0.0
    %52 = vst.msk [vmem:[#allocation2 + $0x108] sm:$0xff] %vm18, 0.0
    %53 = vst.msk [vmem:[#allocation2 + $0x110] sm:$0xff] %vm18, 0.0
    %54 = vst.msk [vmem:[#allocation2 + $0x118] sm:$0xff] %vm18, 0.0
    %55 = vst.msk [vmem:[#allocation2 + $0x120] sm:$0xff] %vm18, 0.0
    %56 = vst.msk [vmem:[#allocation2 + $0x128] sm:$0xff] %vm18, 0.0
    %57 = vst.msk [vmem:[#allocation2 + $0x130] sm:$0xff] %vm18, 0.0
    %58 = vst.msk [vmem:[#allocation2 + $0x138] sm:$0xff] %vm18, 0.0
    %59 = vst.msk [vmem:[#allocation2 + $0x140] sm:$0xff] %vm18, 0.0
    %60 = vst.msk [vmem:[#allocation2 + $0x148] sm:$0xff] %vm18, 0.0
    %61 = vst.msk [vmem:[#allocation2 + $0x150] sm:$0xff] %vm18, 0.0
    %62 = vst.msk [vmem:[#allocation2 + $0x158] sm:$0xff] %vm18, 0.0
    %63 = vst.msk [vmem:[#allocation2 + $0x160] sm:$0xff] %vm18, 0.0
    %64 = vst.msk [vmem:[#allocation2 + $0x168] sm:$0xff] %vm18, 0.0
    %65 = vst.msk [vmem:[#allocation2 + $0x170] sm:$0xff] %vm18, 0.0
    %66 = vst.msk [vmem:[#allocation2 + $0x178] sm:$0xff] %vm18, 0.0
    %67 = vst.msk [vmem:[#allocation2 + $0x180] sm:$0xff] %vm18, 0.0
    %68 = vst.msk [vmem:[#allocation2 + $0x188] sm:$0xff] %vm18, 0.0
    %69 = vst.msk [vmem:[#allocation2 + $0x190] sm:$0xff] %vm18, 0.0
    %70 = vst.msk [vmem:[#allocation2 + $0x198] sm:$0xff] %vm18, 0.0
    %71 = vst.msk [vmem:[#allocation2 + $0x1a0] sm:$0xff] %vm18, 0.0
    %72 = vst.msk [vmem:[#allocation2 + $0x1a8] sm:$0xff] %vm18, 0.0
    %73 = vst.msk [vmem:[#allocation2 + $0x1b0] sm:$0xff] %vm18, 0.0
    %74 = vst.msk [vmem:[#allocation2 + $0x1b8] sm:$0xff] %vm18, 0.0
    %75 = vst.msk [vmem:[#allocation2 + $0x1c0] sm:$0xff] %vm18, 0.0
    %76 = vst.msk [vmem:[#allocation2 + $0x1c8] sm:$0xff] %vm18, 0.0
    %77 = vst.msk [vmem:[#allocation2 + $0x1d0] sm:$0xff] %vm18, 0.0
    %78 = vst.msk [vmem:[#allocation2 + $0x1d8] sm:$0xff] %vm18, 0.0
    %79 = vst.msk [vmem:[#allocation2 + $0x1e0] sm:$0xff] %vm18, 0.0
    %80 = vst.msk [vmem:[#allocation2 + $0x1e8] sm:$0xff] %vm18, 0.0
    %81 = vst.msk [vmem:[#allocation2 + $0x1f0] sm:$0xff] %vm18, 0.0
    %82 = vst.msk [vmem:[#allocation2 + $0x1f8] sm:$0xff] %vm18, 0.0
  $region13: #{discriminator_forward.6} parent=0 // pred_fallthru
    _
  %v83 = vld [vmem:[#allocation2] sm:$0xff]
  %v84 = vld [vmem:[#allocation2 + $0x8] sm:$0xff]
  %v85 = vld [vmem:[#allocation2 + $0x10] sm:$0xff]
  %v86 = vld [vmem:[#allocation2 + $0x18] sm:$0xff]
  %v87 = vld [vmem:[#allocation2 + $0x20] sm:$0xff]
  %v88 = vld [vmem:[#allocation2 + $0x28] sm:$0xff]
  %v89 = vld [vmem:[#allocation2 + $0x30] sm:$0xff]
  %v90 = vld [vmem:[#allocation2 + $0x38] sm:$0xff]
  %v91 = vld [vmem:[#allocation2 + $0x40] sm:$0xff]
  %v92 = vld [vmem:[#allocation2 + $0x48] sm:$0xff]
  %v93 = vld [vmem:[#allocation2 + $0x50] sm:$0xff]
  %v94 = vld [vmem:[#allocation2 + $0x58] sm:$0xff]
  %v95 = vld [vmem:[#allocation2 + $0x60] sm:$0xff]
  %v96 = vld [vmem:[#allocation2 + $0x68] sm:$0xff]
  %v97 = vld [vmem:[#allocation2 + $0x70] sm:$0xff]
  %v98 = vld [vmem:[#allocation2 + $0x78] sm:$0xff]
  %v99 = vld [vmem:[#allocation2 + $0x80] sm:$0xff]
  %v100 = vld [vmem:[#allocation2 + $0x88] sm:$0xff]
  %v101 = vld [vmem:[#allocation2 + $0x90] sm:$0xff]
  %v102 = vld [vmem:[#allocation2 + $0x98] sm:$0xff]
  %v103 = vld [vmem:[#allocation2 + $0xa0] sm:$0xff]
  %v104 = vld [vmem:[#allocation2 + $0xa8] sm:$0xff]
  %v105 = vld [vmem:[#allocation2 + $0xb0] sm:$0xff]
  %v106 = vld [vmem:[#allocation2 + $0xb8] sm:$0xff]
  %v107 = vld [vmem:[#allocation2 + $0xc0] sm:$0xff]
  %v108 = vld [vmem:[#allocation2 + $0xc8] sm:$0xff]
  %v109 = vld [vmem:[#allocation2 + $0xd0] sm:$0xff]
  %v110 = vld [vmem:[#allocation2 + $0xd8] sm:$0xff]
  %v111 = vld [vmem:[#allocation2 + $0xe0] sm:$0xff]
  %v112 = vld [vmem:[#allocation2 + $0xe8] sm:$0xff]
  %v113 = vld [vmem:[#allocation2 + $0xf0] sm:$0xff]
  %v114 = vld [vmem:[#allocation2 + $0xf8] sm:$0xff]
  %v115 = vld [vmem:[#allocation2 + $0x100] sm:$0xff]
  %v116 = vld [vmem:[#allocation2 + $0x108] sm:$0xff]
  %v117 = vld [vmem:[#allocation2 + $0x110] sm:$0xff]
  %v118 = vld [vmem:[#allocation2 + $0x118] sm:$0xff]
  %v119 = vld [vmem:[#allocation2 + $0x120] sm:$0xff]
  %v120 = vld [vmem:[#allocation2 + $0x128] sm:$0xff]
  %v121 = vld [vmem:[#allocation2 + $0x130] sm:$0xff]
  %v122 = vld [vmem:[#allocation2 + $0x138] sm:$0xff]
  %v123 = vld [vmem:[#allocation2 + $0x140] sm:$0xff]
  %v124 = vld [vmem:[#allocation2 + $0x148] sm:$0xff]
  %v125 = vld [vmem:[#allocation2 + $0x150] sm:$0xff]
  %v126 = vld [vmem:[#allocation2 + $0x158] sm:$0xff]
  %v127 = vld [vmem:[#allocation2 + $0x160] sm:$0xff]
  %v128 = vld [vmem:[#allocation2 + $0x168] sm:$0xff]
  %v129 = vld [vmem:[#allocation2 + $0x170] sm:$0xff]
  %v130 = vld [vmem:[#allocation2 + $0x178] sm:$0xff]
  %v131 = vld [vmem:[#allocation2 + $0x180] sm:$0xff]
  %v132 = vld [vmem:[#allocation2 + $0x188] sm:$0xff]
  %v133 = vld [vmem:[#allocation2 + $0x190] sm:$0xff]
  %v134 = vld [vmem:[#allocation2 + $0x198] sm:$0xff]
  %v135 = vld [vmem:[#allocation2 + $0x1a0] sm:$0xff]
  %v136 = vld [vmem:[#allocation2 + $0x1a8] sm:$0xff]
  %v137 = vld [vmem:[#allocation2 + $0x1b0] sm:$0xff]
  %v138 = vld [vmem:[#allocation2 + $0x1b8] sm:$0xff]
  %v139 = vld [vmem:[#allocation2 + $0x1c0] sm:$0xff]
  %v140 = vld [vmem:[#allocation2 + $0x1c8] sm:$0xff]
  %v141 = vld [vmem:[#allocation2 + $0x1d0] sm:$0xff]
  %v142 = vld [vmem:[#allocation2 + $0x1d8] sm:$0xff]
  %v143 = vld [vmem:[#allocation2 + $0x1e0] sm:$0xff]
  %v144 = vld [vmem:[#allocation2 + $0x1e8] sm:$0xff]
  %v145 = vld [vmem:[#allocation2 + $0x1f0] sm:$0xff]
  %v146 = vld [vmem:[#allocation2 + $0x1f8] sm:$0xff]
  %v147 = vld [vmem:[%s0] sm:$0xf]
  %v148 = vld [vmem:[%s0 + $0x4] sm:$0xf]
  %v149 = vld [vmem:[%s0 + $0x8] sm:$0xf]
  %v150 = vld [vmem:[%s0 + $0xc] sm:$0xf]
  %v151 = vld [vmem:[%s0 + $0x10] sm:$0xf]
  %v152 = vld [vmem:[%s0 + $0x14] sm:$0xf]
  %v153 = vld [vmem:[%s0 + $0x18] sm:$0xf]
  %v154 = vld [vmem:[%s0 + $0x1c] sm:$0xf]
  %v155 = vld [vmem:[%s0 + $0x20] sm:$0xf]
  %v156 = vld [vmem:[%s0 + $0x24] sm:$0xf]
  %v157 = vld [vmem:[%s0 + $0x28] sm:$0xf]
  %v158 = vld [vmem:[%s0 + $0x2c] sm:$0xf]
  %v159 = vld [vmem:[%s0 + $0x30] sm:$0xf]
  %v160 = vld [vmem:[%s0 + $0x34] sm:$0xf]
  %v161 = vld [vmem:[%s0 + $0x38] sm:$0xf]
  %v162 = vld [vmem:[%s0 + $0x3c] sm:$0xf]
  %v163 = vld [vmem:[%s0 + $0x40] sm:$0xf]
  %v164 = vld [vmem:[%s0 + $0x44] sm:$0xf]
  %v165 = vld [vmem:[%s0 + $0x48] sm:$0xf]
  %v166 = vld [vmem:[%s0 + $0x4c] sm:$0xf]
  %v167 = vld [vmem:[%s0 + $0x50] sm:$0xf]
  %v168 = vld [vmem:[%s0 + $0x54] sm:$0xf]
  %v169 = vld [vmem:[%s0 + $0x58] sm:$0xf]
  %v170 = vld [vmem:[%s0 + $0x5c] sm:$0xf]
  %v171 = vld [vmem:[%s0 + $0x60] sm:$0xf]
  %v172 = vld [vmem:[%s0 + $0x64] sm:$0xf]
  %v173 = vld [vmem:[%s0 + $0x68] sm:$0xf]
  %v174 = vld [vmem:[%s0 + $0x6c] sm:$0xf]
  %v175 = vld [vmem:[%s0 + $0x70] sm:$0xf]
  %v176 = vld [vmem:[%s0 + $0x74] sm:$0xf]
  %v177 = vld [vmem:[%s0 + $0x78] sm:$0xf]
  %v178 = vld [vmem:[%s0 + $0x7c] sm:$0xf]
  %v179 = vld [vmem:[%s0 + $0x80] sm:$0xf]
  %v180 = vld [vmem:[%s0 + $0x84] sm:$0xf]
  %v181 = vld [vmem:[%s0 + $0x88] sm:$0xf]
  %v182 = vld [vmem:[%s0 + $0x8c] sm:$0xf]
  %v183 = vld [vmem:[%s0 + $0x90] sm:$0xf]
  %v184 = vld [vmem:[%s0 + $0x94] sm:$0xf]
  %v185 = vld [vmem:[%s0 + $0x98] sm:$0xf]
  %v186 = vld [vmem:[%s0 + $0x9c] sm:$0xf]
  %v187 = vld [vmem:[%s0 + $0xa0] sm:$0xf]
  %v188 = vld [vmem:[%s0 + $0xa4] sm:$0xf]
  %v189 = vld [vmem:[%s0 + $0xa8] sm:$0xf]
  %v190 = vld [vmem:[%s0 + $0xac] sm:$0xf]
  %v191 = vld [vmem:[%s0 + $0xb0] sm:$0xf]
  %v192 = vld [vmem:[%s0 + $0xb4] sm:$0xf]
  %v193 = vld [vmem:[%s0 + $0xb8] sm:$0xf]
  %v194 = vld [vmem:[%s0 + $0xbc] sm:$0xf]
  %v195 = vld [vmem:[%s0 + $0xc0] sm:$0xf]
  %v196 = vld [vmem:[%s0 + $0xc4] sm:$0xf]
  %v197 = vld [vmem:[%s0 + $0xc8] sm:$0xf]
  %v198 = vld [vmem:[%s0 + $0xcc] sm:$0xf]
  %v199 = vld [vmem:[%s0 + $0xd0] sm:$0xf]
  %v200 = vld [vmem:[%s0 + $0xd4] sm:$0xf]
  %v201 = vld [vmem:[%s0 + $0xd8] sm:$0xf]
  %v202 = vld [vmem:[%s0 + $0xdc] sm:$0xf]
  %v203 = vld [vmem:[%s0 + $0xe0] sm:$0xf]
  %v204 = vld [vmem:[%s0 + $0xe4] sm:$0xf]
  %v205 = vld [vmem:[%s0 + $0xe8] sm:$0xf]
  %v206 = vld [vmem:[%s0 + $0xec] sm:$0xf]
  %v207 = vld [vmem:[%s0 + $0xf0] sm:$0xf]
  %v208 = vld [vmem:[%s0 + $0xf4] sm:$0xf]
  %v209 = vld [vmem:[%s0 + $0xf8] sm:$0xf]
  %v210 = vld [vmem:[%s0 + $0xfc] sm:$0xf]
  %v211 = vld [vmem:[%s1] sm:$0xf]
  %v212 = vld [vmem:[%s1 + $0x4] sm:$0xf]
  %v213 = vld [vmem:[%s1 + $0x8] sm:$0xf]
  %v214 = vld [vmem:[%s1 + $0xc] sm:$0xf]
  %v215 = vld [vmem:[%s1 + $0x10] sm:$0xf]
  %v216 = vld [vmem:[%s1 + $0x14] sm:$0xf]
  %v217 = vld [vmem:[%s1 + $0x18] sm:$0xf]
  %v218 = vld [vmem:[%s1 + $0x1c] sm:$0xf]
  %v219 = vld [vmem:[%s1 + $0x20] sm:$0xf]
  %v220 = vld [vmem:[%s1 + $0x24] sm:$0xf]
  %v221 = vld [vmem:[%s1 + $0x28] sm:$0xf]
  %v222 = vld [vmem:[%s1 + $0x2c] sm:$0xf]
  %v223 = vld [vmem:[%s1 + $0x30] sm:$0xf]
  %v224 = vld [vmem:[%s1 + $0x34] sm:$0xf]
  %v225 = vld [vmem:[%s1 + $0x38] sm:$0xf]
  %v226 = vld [vmem:[%s1 + $0x3c] sm:$0xf]
  %v291 = vunpack.c.l.b16 %v147
  %v292 = vunpack.c.l.b16 %v148
  %v293 = vunpack.c.l.b16 %v149
  %v294 = vunpack.c.l.b16 %v150
  %v295 = vunpack.c.l.b16 %v151
  %v296 = vunpack.c.l.b16 %v152
  %v297 = vunpack.c.l.b16 %v153
  %v298 = vunpack.c.l.b16 %v154
  %v299 = vunpack.c.l.b16 %v155
  %v300 = vunpack.c.l.b16 %v156
  %v301 = vunpack.c.l.b16 %v157
  %v302 = vunpack.c.l.b16 %v158
  %v303 = vunpack.c.l.b16 %v159
  %v304 = vunpack.c.l.b16 %v160
  %v305 = vunpack.c.l.b16 %v161
  %v306 = vunpack.c.l.b16 %v162
  %v307 = vunpack.c.l.b16 %v163
  %v308 = vunpack.c.l.b16 %v164
  %v309 = vunpack.c.l.b16 %v165
  %v310 = vunpack.c.l.b16 %v166
  %v311 = vunpack.c.l.b16 %v167
  %v312 = vunpack.c.l.b16 %v168
  %v313 = vunpack.c.l.b16 %v169
  %v314 = vunpack.c.l.b16 %v170
  %v315 = vunpack.c.l.b16 %v171
  %v316 = vunpack.c.l.b16 %v172
  %v317 = vunpack.c.l.b16 %v173
  %v318 = vunpack.c.l.b16 %v174
  %v319 = vunpack.c.l.b16 %v175
  %v320 = vunpack.c.l.b16 %v176
  %v321 = vunpack.c.l.b16 %v177
  %v322 = vunpack.c.l.b16 %v178
  %v323 = vunpack.c.l.b16 %v179
  %v324 = vunpack.c.l.b16 %v180
  %v325 = vunpack.c.l.b16 %v181
  %v326 = vunpack.c.l.b16 %v182
  %v327 = vunpack.c.l.b16 %v183
  %v328 = vunpack.c.l.b16 %v184
  %v329 = vunpack.c.l.b16 %v185
  %v330 = vunpack.c.l.b16 %v186
  %v331 = vunpack.c.l.b16 %v187
  %v332 = vunpack.c.l.b16 %v188
  %v333 = vunpack.c.l.b16 %v189
  %v334 = vunpack.c.l.b16 %v190
  %v335 = vunpack.c.l.b16 %v191
  %v336 = vunpack.c.l.b16 %v192
  %v337 = vunpack.c.l.b16 %v193
  %v338 = vunpack.c.l.b16 %v194
  %v339 = vunpack.c.l.b16 %v195
  %v340 = vunpack.c.l.b16 %v196
  %v341 = vunpack.c.l.b16 %v197
  %v342 = vunpack.c.l.b16 %v198
  %v343 = vunpack.c.l.b16 %v199
  %v344 = vunpack.c.l.b16 %v200
  %v345 = vunpack.c.l.b16 %v201
  %v346 = vunpack.c.l.b16 %v202
  %v347 = vunpack.c.l.b16 %v203
  %v348 = vunpack.c.l.b16 %v204
  %v349 = vunpack.c.l.b16 %v205
  %v350 = vunpack.c.l.b16 %v206
  %v351 = vunpack.c.l.b16 %v207
  %v352 = vunpack.c.l.b16 %v208
  %v353 = vunpack.c.l.b16 %v209
  %v354 = vunpack.c.l.b16 %v210
  %v355 = vpack.c.b16 %v292, %v291
  %v356 = vpack.c.b16 %v294, %v293
  %v357 = vpack.c.b16 %v296, %v295
  %v358 = vpack.c.b16 %v298, %v297
  %v359 = vpack.c.b16 %v300, %v299
  %v360 = vpack.c.b16 %v302, %v301
  %v361 = vpack.c.b16 %v304, %v303
  %v362 = vpack.c.b16 %v306, %v305
  %v363 = vpack.c.b16 %v308, %v307
  %v364 = vpack.c.b16 %v310, %v309
  %v365 = vpack.c.b16 %v312, %v311
  %v366 = vpack.c.b16 %v314, %v313
  %v367 = vpack.c.b16 %v316, %v315
  %v368 = vpack.c.b16 %v318, %v317
  %v369 = vpack.c.b16 %v320, %v319
  %v370 = vpack.c.b16 %v322, %v321
  %v371 = vpack.c.b16 %v324, %v323
  %v372 = vpack.c.b16 %v326, %v325
  %v373 = vpack.c.b16 %v328, %v327
  %v374 = vpack.c.b16 %v330, %v329
  %v375 = vpack.c.b16 %v332, %v331
  %v376 = vpack.c.b16 %v334, %v333
  %v377 = vpack.c.b16 %v336, %v335
  %v378 = vpack.c.b16 %v338, %v337
  %v379 = vpack.c.b16 %v340, %v339
  %v380 = vpack.c.b16 %v342, %v341
  %v381 = vpack.c.b16 %v344, %v343
  %v382 = vpack.c.b16 %v346, %v345
  %v383 = vpack.c.b16 %v348, %v347
  %v384 = vpack.c.b16 %v350, %v349
  %v385 = vpack.c.b16 %v352, %v351
  %v386 = vpack.c.b16 %v354, %v353
  %v435 = vunpack.c.l.b16 %v211
  %v436 = vunpack.c.l.b16 %v212
  %v437 = vunpack.c.l.b16 %v213
  %v438 = vunpack.c.l.b16 %v214
  %v439 = vunpack.c.l.b16 %v215
  %v440 = vunpack.c.l.b16 %v216
  %v441 = vunpack.c.l.b16 %v217
  %v442 = vunpack.c.l.b16 %v218
  %v443 = vunpack.c.l.b16 %v219
  %v444 = vunpack.c.l.b16 %v220
  %v445 = vunpack.c.l.b16 %v221
  %v446 = vunpack.c.l.b16 %v222
  %v447 = vunpack.c.l.b16 %v223
  %v448 = vunpack.c.l.b16 %v224
  %v449 = vunpack.c.l.b16 %v225
  %v450 = vunpack.c.l.b16 %v226
  %v451 = vpack.c.b16 %v436, %v435
  %v452 = vpack.c.b16 %v438, %v437
  %v453 = vpack.c.b16 %v440, %v439
  %v454 = vpack.c.b16 %v442, %v441
  %v455 = vpack.c.b16 %v444, %v443
  %v456 = vpack.c.b16 %v446, %v445
  %v457 = vpack.c.b16 %v448, %v447
  %v458 = vpack.c.b16 %v450, %v449
  %467 = vmatprep.subr.bf16.mxu0 0
  %468 = vmatpush1.bf16.msra.mxu0 %v451
  %469 = vmatprep.subr.bf16.mxu0 0
  %470 = vmatpush1.bf16.msra.mxu0 %v452
  %471 = vmatprep.subr.bf16.mxu0 0
  %472 = vmatpush1.bf16.msra.mxu0 %v453
  %473 = vmatprep.subr.bf16.mxu0 0
  %474 = vmatpush1.bf16.msra.mxu0 %v454
  %475 = vmatprep.subr.bf16.mxu0 0
  %476 = vmatpush1.bf16.msra.mxu0 %v455
  %477 = vmatprep.subr.bf16.mxu0 0
  %478 = vmatpush1.bf16.msra.mxu0 %v456
  %479 = vmatprep.subr.bf16.mxu0 0
  %480 = vmatpush1.bf16.msra.mxu0 %v457
  %481 = vmatprep.subr.bf16.mxu0 0
  %482 = vmatpush1.bf16.msra.mxu0 %v458
  %483 = vmatprep.subr.bf16.mxu0 0
  %484 = vmatpush1.bf16.msra.mxu0 0
  %485 = vmatprep.subr.bf16.mxu0 0
  %486 = vmatpush1.bf16.msra.mxu0 0
  %487 = vmatprep.subr.bf16.mxu0 0
  %488 = vmatpush1.bf16.msra.mxu0 0
  %489 = vmatprep.subr.bf16.mxu0 0
  %490 = vmatpush1.bf16.msra.mxu0 0
  %491 = vmatprep.subr.bf16.mxu0 0
  %492 = vmatpush1.bf16.msra.mxu0 0
  %493 = vmatprep.subr.bf16.mxu0 0
  %494 = vmatpush1.bf16.msra.mxu0 0
  %495 = vmatprep.subr.bf16.mxu0 0
  %496 = vmatpush1.bf16.msra.mxu0 0
  %497 = vmatprep.subr.bf16.mxu0 0
  %498 = vmatpush1.bf16.msra.mxu0 0
  %499 = vmatprep.mubr.bf16.mxu0 0
  %500 = vmatmul.mubr.bf16.gmra.mrb[0].mxu0 %v355
  %v501 = vpop.f32.mrb[0].mxu0
  %v502 = vadd.f32 0.0, %v501
  %v503 = vpop.f32.mrb[0].mxu0
  %v504 = vpop.f32.mrb[0].mxu0
  %v505 = vadd.f32 0.0, %v504
  %v506 = vpop.f32.mrb[0].mxu0
  %507 = vmatprep.mubr.bf16.mxu0 0
  %508 = vmatmul.mubr.bf16.gmra.mrb[0].mxu0 %v356
  %v509 = vpop.f32.mrb[0].mxu0
  %v510 = vadd.f32 0.0, %v509
  %v511 = vpop.f32.mrb[0].mxu0
  %v512 = vpop.f32.mrb[0].mxu0
  %v513 = vadd.f32 0.0, %v512
  %v514 = vpop.f32.mrb[0].mxu0
  %515 = vmatprep.mubr.bf16.mxu0 0
  %516 = vmatmul.mubr.bf16.gmra.mrb[0].mxu0 %v357
  %v517 = vpop.f32.mrb[0].mxu0
  %v518 = vadd.f32 0.0, %v517
  %v519 = vpop.f32.mrb[0].mxu0
  %v520 = vpop.f32.mrb[0].mxu0
  %v521 = vadd.f32 0.0, %v520
  %v522 = vpop.f32.mrb[0].mxu0
  %523 = vmatprep.mubr.bf16.mxu0 0
  %524 = vmatmul.mubr.bf16.gmra.mrb[0].mxu0 %v358
  %v525 = vpop.f32.mrb[0].mxu0
  %v526 = vadd.f32 0.0, %v525
  %v527 = vpop.f32.mrb[0].mxu0
  %v528 = vpop.f32.mrb[0].mxu0
  %v529 = vadd.f32 0.0, %v528
  %v530 = vpop.f32.mrb[0].mxu0
  %531 = vmatprep.mubr.bf16.mxu0 0
  %532 = vmatmul.mubr.bf16.gmra.mrb[0].mxu0 %v359
  %v533 = vpop.f32.mrb[0].mxu0
  %v534 = vadd.f32 0.0, %v533
  %v535 = vpop.f32.mrb[0].mxu0
  %v536 = vpop.f32.mrb[0].mxu0
  %v537 = vadd.f32 0.0, %v536
  %v538 = vpop.f32.mrb[0].mxu0
  %539 = vmatprep.mubr.bf16.mxu0 0
  %540 = vmatmul.mubr.bf16.gmra.mrb[0].mxu0 %v360
  %v541 = vpop.f32.mrb[0].mxu0
  %v542 = vadd.f32 0.0, %v541
  %v543 = vpop.f32.mrb[0].mxu0
  %v544 = vpop.f32.mrb[0].mxu0
  %v545 = vadd.f32 0.0, %v544
  %v546 = vpop.f32.mrb[0].mxu0
  %547 = vmatprep.mubr.bf16.mxu0 0
  %548 = vmatmul.mubr.bf16.gmra.mrb[0].mxu0 %v361
  %v549 = vpop.f32.mrb[0].mxu0
  %v550 = vadd.f32 0.0, %v549
  %v551 = vpop.f32.mrb[0].mxu0
  %v552 = vpop.f32.mrb[0].mxu0
  %v553 = vadd.f32 0.0, %v552
  %v554 = vpop.f32.mrb[0].mxu0
  %555 = vmatprep.mubr.bf16.mxu0 0
  %556 = vmatmul.mubr.bf16.gmra.mrb[0].mxu0 %v362
  %v557 = vpop.f32.mrb[0].mxu0
  %v558 = vadd.f32 0.0, %v557
  %v559 = vpop.f32.mrb[0].mxu0
  %v560 = vpop.f32.mrb[0].mxu0
  %v561 = vadd.f32 0.0, %v560
  %v562 = vpop.f32.mrb[0].mxu0
  %563 = vmatprep.mubr.bf16.mxu0 0
  %564 = vmatmul.mubr.bf16.gmra.mrb[0].mxu0 %v363
  %v565 = vpop.f32.mrb[0].mxu0
  %v566 = vadd.f32 0.0, %v565
  %v567 = vpop.f32.mrb[0].mxu0
  %v568 = vpop.f32.mrb[0].mxu0
  %v569 = vadd.f32 0.0, %v568
  %v570 = vpop.f32.mrb[0].mxu0
  %571 = vmatprep.mubr.bf16.mxu0 0
  %572 = vmatmul.mubr.bf16.gmra.mrb[0].mxu0 %v364
  %v573 = vpop.f32.mrb[0].mxu0
  %v574 = vadd.f32 0.0, %v573
  %v575 = vpop.f32.mrb[0].mxu0
  %v576 = vpop.f32.mrb[0].mxu0
  %v577 = vadd.f32 0.0, %v576
  %v578 = vpop.f32.mrb[0].mxu0
  %579 = vmatprep.mubr.bf16.mxu0 0
  %580 = vmatmul.mubr.bf16.gmra.mrb[0].mxu0 %v365
  %v581 = vpop.f32.mrb[0].mxu0
  %v582 = vadd.f32 0.0, %v581
  %v583 = vpop.f32.mrb[0].mxu0
  %v584 = vpop.f32.mrb[0].mxu0
  %v585 = vadd.f32 0.0, %v584
  %v586 = vpop.f32.mrb[0].mxu0
  %587 = vmatprep.mubr.bf16.mxu0 0
  %588 = vmatmul.mubr.bf16.gmra.mrb[0].mxu0 %v366
  %v589 = vpop.f32.mrb[0].mxu0
  %v590 = vadd.f32 0.0, %v589
  %v591 = vpop.f32.mrb[0].mxu0
  %v592 = vpop.f32.mrb[0].mxu0
  %v593 = vadd.f32 0.0, %v592
  %v594 = vpop.f32.mrb[0].mxu0
  %595 = vmatprep.mubr.bf16.mxu0 0
  %596 = vmatmul.mubr.bf16.gmra.mrb[0].mxu0 %v367
  %v597 = vpop.f32.mrb[0].mxu0
  %v598 = vadd.f32 0.0, %v597
  %v599 = vpop.f32.mrb[0].mxu0
  %v600 = vpop.f32.mrb[0].mxu0
  %v601 = vadd.f32 0.0, %v600
  %v602 = vpop.f32.mrb[0].mxu0
  %603 = vmatprep.mubr.bf16.mxu0 0
  %604 = vmatmul.mubr.bf16.gmra.mrb[0].mxu0 %v368
  %v605 = vpop.f32.mrb[0].mxu0
  %v606 = vadd.f32 0.0, %v605
  %v607 = vpop.f32.mrb[0].mxu0
  %v608 = vpop.f32.mrb[0].mxu0
  %v609 = vadd.f32 0.0, %v608
  %v610 = vpop.f32.mrb[0].mxu0
  %611 = vmatprep.mubr.bf16.mxu0 0
  %612 = vmatmul.mubr.bf16.gmra.mrb[0].mxu0 %v369
  %v613 = vpop.f32.mrb[0].mxu0
  %v614 = vadd.f32 0.0, %v613
  %v615 = vpop.f32.mrb[0].mxu0
  %v616 = vpop.f32.mrb[0].mxu0
  %v617 = vadd.f32 0.0, %v616
  %v618 = vpop.f32.mrb[0].mxu0
  %619 = vmatprep.mubr.bf16.mxu0 0
  %620 = vmatmul.mubr.bf16.gmra.mrb[0].mxu0 %v370
  %v621 = vpop.f32.mrb[0].mxu0
  %v622 = vadd.f32 0.0, %v621
  %v623 = vpop.f32.mrb[0].mxu0
  %v624 = vpop.f32.mrb[0].mxu0
  %v625 = vadd.f32 0.0, %v624
  %v626 = vpop.f32.mrb[0].mxu0
  %627 = vmatprep.mubr.bf16.mxu0 0
  %628 = vmatmul.mubr.bf16.gmra.mrb[0].mxu0 %v371
  %v629 = vpop.f32.mrb[0].mxu0
  %v630 = vadd.f32 0.0, %v629
  %v631 = vpop.f32.mrb[0].mxu0
  %v632 = vpop.f32.mrb[0].mxu0
  %v633 = vadd.f32 0.0, %v632
  %v634 = vpop.f32.mrb[0].mxu0
  %635 = vmatprep.mubr.bf16.mxu0 0
  %636 = vmatmul.mubr.bf16.gmra.mrb[0].mxu0 %v372
  %v637 = vpop.f32.mrb[0].mxu0
  %v638 = vadd.f32 0.0, %v637
  %v639 = vpop.f32.mrb[0].mxu0
  %v640 = vpop.f32.mrb[0].mxu0
  %v641 = vadd.f32 0.0, %v640
  %v642 = vpop.f32.mrb[0].mxu0
  %643 = vmatprep.mubr.bf16.mxu0 0
  %644 = vmatmul.mubr.bf16.gmra.mrb[0].mxu0 %v373
  %v645 = vpop.f32.mrb[0].mxu0
  %v646 = vadd.f32 0.0, %v645
  %v647 = vpop.f32.mrb[0].mxu0
  %v648 = vpop.f32.mrb[0].mxu0
  %v649 = vadd.f32 0.0, %v648
  %v650 = vpop.f32.mrb[0].mxu0
  %651 = vmatprep.mubr.bf16.mxu0 0
  %652 = vmatmul.mubr.bf16.gmra.mrb[0].mxu0 %v374
  %v653 = vpop.f32.mrb[0].mxu0
  %v654 = vadd.f32 0.0, %v653
  %v655 = vpop.f32.mrb[0].mxu0
  %v656 = vpop.f32.mrb[0].mxu0
  %v657 = vadd.f32 0.0, %v656
  %v658 = vpop.f32.mrb[0].mxu0
  %659 = vmatprep.mubr.bf16.mxu0 0
  %660 = vmatmul.mubr.bf16.gmra.mrb[0].mxu0 %v375
  %v661 = vpop.f32.mrb[0].mxu0
  %v662 = vadd.f32 0.0, %v661
  %v663 = vpop.f32.mrb[0].mxu0
  %v664 = vpop.f32.mrb[0].mxu0
  %v665 = vadd.f32 0.0, %v664
  %v666 = vpop.f32.mrb[0].mxu0
  %667 = vmatprep.mubr.bf16.mxu0 0
  %668 = vmatmul.mubr.bf16.gmra.mrb[0].mxu0 %v376
  %v669 = vpop.f32.mrb[0].mxu0
  %v670 = vadd.f32 0.0, %v669
  %v671 = vpop.f32.mrb[0].mxu0
  %v672 = vpop.f32.mrb[0].mxu0
  %v673 = vadd.f32 0.0, %v672
  %v674 = vpop.f32.mrb[0].mxu0
  %675 = vmatprep.mubr.bf16.mxu0 0
  %676 = vmatmul.mubr.bf16.gmra.mrb[0].mxu0 %v377
  %v677 = vpop.f32.mrb[0].mxu0
  %v678 = vadd.f32 0.0, %v677
  %v679 = vpop.f32.mrb[0].mxu0
  %v680 = vpop.f32.mrb[0].mxu0
  %v681 = vadd.f32 0.0, %v680
  %v682 = vpop.f32.mrb[0].mxu0
  %683 = vmatprep.mubr.bf16.mxu0 0
  %684 = vmatmul.mubr.bf16.gmra.mrb[0].mxu0 %v378
  %v685 = vpop.f32.mrb[0].mxu0
  %v686 = vadd.f32 0.0, %v685
  %v687 = vpop.f32.mrb[0].mxu0
  %v688 = vpop.f32.mrb[0].mxu0
  %v689 = vadd.f32 0.0, %v688
  %v690 = vpop.f32.mrb[0].mxu0
  %691 = vmatprep.mubr.bf16.mxu0 0
  %692 = vmatmul.mubr.bf16.gmra.mrb[0].mxu0 %v379
  %v693 = vpop.f32.mrb[0].mxu0
  %v694 = vadd.f32 0.0, %v693
  %v695 = vpop.f32.mrb[0].mxu0
  %v696 = vpop.f32.mrb[0].mxu0
  %v697 = vadd.f32 0.0, %v696
  %v698 = vpop.f32.mrb[0].mxu0
  %699 = vmatprep.mubr.bf16.mxu0 0
  %700 = vmatmul.mubr.bf16.gmra.mrb[0].mxu0 %v380
  %v701 = vpop.f32.mrb[0].mxu0
  %v702 = vadd.f32 0.0, %v701
  %v703 = vpop.f32.mrb[0].mxu0
  %v704 = vpop.f32.mrb[0].mxu0
  %v705 = vadd.f32 0.0, %v704
  %v706 = vpop.f32.mrb[0].mxu0
  %707 = vmatprep.mubr.bf16.mxu0 0
  %708 = vmatmul.mubr.bf16.gmra.mrb[0].mxu0 %v381
  %v709 = vpop.f32.mrb[0].mxu0
  %v710 = vadd.f32 0.0, %v709
  %v711 = vpop.f32.mrb[0].mxu0
  %v712 = vpop.f32.mrb[0].mxu0
  %v713 = vadd.f32 0.0, %v712
  %v714 = vpop.f32.mrb[0].mxu0
  %715 = vmatprep.mubr.bf16.mxu0 0
  %716 = vmatmul.mubr.bf16.gmra.mrb[0].mxu0 %v382
  %v717 = vpop.f32.mrb[0].mxu0
  %v718 = vadd.f32 0.0, %v717
  %v719 = vpop.f32.mrb[0].mxu0
  %v720 = vpop.f32.mrb[0].mxu0
  %v721 = vadd.f32 0.0, %v720
  %v722 = vpop.f32.mrb[0].mxu0
  %723 = vmatprep.mubr.bf16.mxu0 0
  %724 = vmatmul.mubr.bf16.gmra.mrb[0].mxu0 %v383
  %v725 = vpop.f32.mrb[0].mxu0
  %v726 = vadd.f32 0.0, %v725
  %v727 = vpop.f32.mrb[0].mxu0
  %v728 = vpop.f32.mrb[0].mxu0
  %v729 = vadd.f32 0.0, %v728
  %v730 = vpop.f32.mrb[0].mxu0
  %731 = vmatprep.mubr.bf16.mxu0 0
  %732 = vmatmul.mubr.bf16.gmra.mrb[0].mxu0 %v384
  %v733 = vpop.f32.mrb[0].mxu0
  %v734 = vadd.f32 0.0, %v733
  %v735 = vpop.f32.mrb[0].mxu0
  %v736 = vpop.f32.mrb[0].mxu0
  %v737 = vadd.f32 0.0, %v736
  %v738 = vpop.f32.mrb[0].mxu0
  %739 = vmatprep.mubr.bf16.mxu0 0
  %740 = vmatmul.mubr.bf16.gmra.mrb[0].mxu0 %v385
  %v741 = vpop.f32.mrb[0].mxu0
  %v742 = vadd.f32 0.0, %v741
  %v743 = vpop.f32.mrb[0].mxu0
  %v744 = vpop.f32.mrb[0].mxu0
  %v745 = vadd.f32 0.0, %v744
  %v746 = vpop.f32.mrb[0].mxu0
  %747 = vmatprep.mubr.bf16.mxu0 0
  %748 = vmatmul.mubr.bf16.gmra.mrb[0].mxu0 %v386
  %v749 = vpop.f32.mrb[0].mxu0
  %v750 = vadd.f32 0.0, %v749
  %v751 = vpop.f32.mrb[0].mxu0
  %v752 = vpop.f32.mrb[0].mxu0
  %v753 = vadd.f32 0.0, %v752
  %v754 = vpop.f32.mrb[0].mxu0
  %755 = vdwg.mxu0
  %v756 = vadd.f32 %v83, %v502
  %v757 = vadd.f32 %v84, %v505
  %v758 = vadd.f32 %v85, %v510
  %v759 = vadd.f32 %v86, %v513
  %v760 = vadd.f32 %v87, %v518
  %v761 = vadd.f32 %v88, %v521
  %v762 = vadd.f32 %v89, %v526
  %v763 = vadd.f32 %v90, %v529
  %v764 = vadd.f32 %v91, %v534
  %v765 = vadd.f32 %v92, %v537
  %v766 = vadd.f32 %v93, %v542
  %v767 = vadd.f32 %v94, %v545
  %v768 = vadd.f32 %v95, %v550
  %v769 = vadd.f32 %v96, %v553
  %v770 = vadd.f32 %v97, %v558
  %v771 = vadd.f32 %v98, %v561
  %v772 = vadd.f32 %v99, %v566
  %v773 = vadd.f32 %v100, %v569
  %v774 = vadd.f32 %v101, %v574
  %v775 = vadd.f32 %v102, %v577
  %v776 = vadd.f32 %v103, %v582
  %v777 = vadd.f32 %v104, %v585
  %v778 = vadd.f32 %v105, %v590
  %v779 = vadd.f32 %v106, %v593
  %v780 = vadd.f32 %v107, %v598
  %v781 = vadd.f32 %v108, %v601
  %v782 = vadd.f32 %v109, %v606
  %v783 = vadd.f32 %v110, %v609
  %v784 = vadd.f32 %v111, %v614
  %v785 = vadd.f32 %v112, %v617
  %v786 = vadd.f32 %v113, %v622
  %v787 = vadd.f32 %v114, %v625
  %v788 = vadd.f32 %v115, %v630
  %v789 = vadd.f32 %v116, %v633
  %v790 = vadd.f32 %v117, %v638
  %v791 = vadd.f32 %v118, %v641
  %v792 = vadd.f32 %v119, %v646
  %v793 = vadd.f32 %v120, %v649
  %v794 = vadd.f32 %v121, %v654
  %v795 = vadd.f32 %v122, %v657
  %v796 = vadd.f32 %v123, %v662
  %v797 = vadd.f32 %v124, %v665
  %v798 = vadd.f32 %v125, %v670
  %v799 = vadd.f32 %v126, %v673
  %v800 = vadd.f32 %v127, %v678
  %v801 = vadd.f32 %v128, %v681
  %v802 = vadd.f32 %v129, %v686
  %v803 = vadd.f32 %v130, %v689
  %v804 = vadd.f32 %v131, %v694
  %v805 = vadd.f32 %v132, %v697
  %v806 = vadd.f32 %v133, %v702
  %v807 = vadd.f32 %v134, %v705
  %v808 = vadd.f32 %v135, %v710
  %v809 = vadd.f32 %v136, %v713
  %v810 = vadd.f32 %v137, %v718
  %v811 = vadd.f32 %v138, %v721
  %v812 = vadd.f32 %v139, %v726
  %v813 = vadd.f32 %v140, %v729
  %v814 = vadd.f32 %v141, %v734
  %v815 = vadd.f32 %v142, %v737
  %v816 = vadd.f32 %v143, %v742
  %v817 = vadd.f32 %v144, %v745
  %v818 = vadd.f32 %v145, %v750
  %v819 = vadd.f32 %v146, %v753
  %vm820 = vcmask 130048
  %821 = vst.msk [vmem:[#allocation2] sm:$0xff] %vm820, %v756
  %822 = vst.msk [vmem:[#allocation2 + $0x8] sm:$0xff] %vm820, %v757
  %823 = vst.msk [vmem:[#allocation2 + $0x10] sm:$0xff] %vm820, %v758
  %824 = vst.msk [vmem:[#allocation2 + $0x18] sm:$0xff] %vm820, %v759
  %825 = vst.msk [vmem:[#allocation2 + $0x20] sm:$0xff] %vm820, %v760
  %826 = vst.msk [vmem:[#allocation2 + $0x28] sm:$0xff] %vm820, %v761
  %827 = vst.msk [vmem:[#allocation2 + $0x30] sm:$0xff] %vm820, %v762
  %828 = vst.msk [vmem:[#allocation2 + $0x38] sm:$0xff] %vm820, %v763
  %829 = vst.msk [vmem:[#allocation2 + $0x40] sm:$0xff] %vm820, %v764
  %830 = vst.msk [vmem:[#allocation2 + $0x48] sm:$0xff] %vm820, %v765
  %831 = vst.msk [vmem:[#allocation2 + $0x50] sm:$0xff] %vm820, %v766
  %832 = vst.msk [vmem:[#allocation2 + $0x58] sm:$0xff] %vm820, %v767
  %833 = vst.msk [vmem:[#allocation2 + $0x60] sm:$0xff] %vm820, %v768
  %834 = vst.msk [vmem:[#allocation2 + $0x68] sm:$0xff] %vm820, %v769
  %835 = vst.msk [vmem:[#allocation2 + $0x70] sm:$0xff] %vm820, %v770
  %836 = vst.msk [vmem:[#allocation2 + $0x78] sm:$0xff] %vm820, %v771
  %837 = vst.msk [vmem:[#allocation2 + $0x80] sm:$0xff] %vm820, %v772
  %838 = vst.msk [vmem:[#allocation2 + $0x88] sm:$0xff] %vm820, %v773
  %839 = vst.msk [vmem:[#allocation2 + $0x90] sm:$0xff] %vm820, %v774
  %840 = vst.msk [vmem:[#allocation2 + $0x98] sm:$0xff] %vm820, %v775
  %841 = vst.msk [vmem:[#allocation2 + $0xa0] sm:$0xff] %vm820, %v776
  %842 = vst.msk [vmem:[#allocation2 + $0xa8] sm:$0xff] %vm820, %v777
  %843 = vst.msk [vmem:[#allocation2 + $0xb0] sm:$0xff] %vm820, %v778
  %844 = vst.msk [vmem:[#allocation2 + $0xb8] sm:$0xff] %vm820, %v779
  %845 = vst.msk [vmem:[#allocation2 + $0xc0] sm:$0xff] %vm820, %v780
  %846 = vst.msk [vmem:[#allocation2 + $0xc8] sm:$0xff] %vm820, %v781
  %847 = vst.msk [vmem:[#allocation2 + $0xd0] sm:$0xff] %vm820, %v782
  %848 = vst.msk [vmem:[#allocation2 + $0xd8] sm:$0xff] %vm820, %v783
  %849 = vst.msk [vmem:[#allocation2 + $0xe0] sm:$0xff] %vm820, %v784
  %850 = vst.msk [vmem:[#allocation2 + $0xe8] sm:$0xff] %vm820, %v785
  %851 = vst.msk [vmem:[#allocation2 + $0xf0] sm:$0xff] %vm820, %v786
  %852 = vst.msk [vmem:[#allocation2 + $0xf8] sm:$0xff] %vm820, %v787
  %853 = vst.msk [vmem:[#allocation2 + $0x100] sm:$0xff] %vm820, %v788
  %854 = vst.msk [vmem:[#allocation2 + $0x108] sm:$0xff] %vm820, %v789
  %855 = vst.msk [vmem:[#allocation2 + $0x110] sm:$0xff] %vm820, %v790
  %856 = vst.msk [vmem:[#allocation2 + $0x118] sm:$0xff] %vm820, %v791
  %857 = vst.msk [vmem:[#allocation2 + $0x120] sm:$0xff] %vm820, %v792
  %858 = vst.msk [vmem:[#allocation2 + $0x128] sm:$0xff] %vm820, %v793
  %859 = vst.msk [vmem:[#allocation2 + $0x130] sm:$0xff] %vm820, %v794
  %860 = vst.msk [vmem:[#allocation2 + $0x138] sm:$0xff] %vm820, %v795
  %861 = vst.msk [vmem:[#allocation2 + $0x140] sm:$0xff] %vm820, %v796
  %862 = vst.msk [vmem:[#allocation2 + $0x148] sm:$0xff] %vm820, %v797
  %863 = vst.msk [vmem:[#allocation2 + $0x150] sm:$0xff] %vm820, %v798
  %864 = vst.msk [vmem:[#allocation2 + $0x158] sm:$0xff] %vm820, %v799
  %865 = vst.msk [vmem:[#allocation2 + $0x160] sm:$0xff] %vm820, %v800
  %866 = vst.msk [vmem:[#allocation2 + $0x168] sm:$0xff] %vm820, %v801
  %867 = vst.msk [vmem:[#allocation2 + $0x170] sm:$0xff] %vm820, %v802
  %868 = vst.msk [vmem:[#allocation2 + $0x178] sm:$0xff] %vm820, %v803
  %869 = vst.msk [vmem:[#allocation2 + $0x180] sm:$0xff] %vm820, %v804
  %870 = vst.msk [vmem:[#allocation2 + $0x188] sm:$0xff] %vm820, %v805
  %871 = vst.msk [vmem:[#allocation2 + $0x190] sm:$0xff] %vm820, %v806
  %872 = vst.msk [vmem:[#allocation2 + $0x198] sm:$0xff] %vm820, %v807
  %873 = vst.msk [vmem:[#allocation2 + $0x1a0] sm:$0xff] %vm820, %v808
  %874 = vst.msk [vmem:[#allocation2 + $0x1a8] sm:$0xff] %vm820, %v809
  %875 = vst.msk [vmem:[#allocation2 + $0x1b0] sm:$0xff] %vm820, %v810
  %876 = vst.msk [vmem:[#allocation2 + $0x1b8] sm:$0xff] %vm820, %v811
  %877 = vst.msk [vmem:[#allocation2 + $0x1c0] sm:$0xff] %vm820, %v812
  %878 = vst.msk [vmem:[#allocation2 + $0x1c8] sm:$0xff] %vm820, %v813
  %879 = vst.msk [vmem:[#allocation2 + $0x1d0] sm:$0xff] %vm820, %v814
  %880 = vst.msk [vmem:[#allocation2 + $0x1d8] sm:$0xff] %vm820, %v815
  %881 = vst.msk [vmem:[#allocation2 + $0x1e0] sm:$0xff] %vm820, %v816
  %882 = vst.msk [vmem:[#allocation2 + $0x1e8] sm:$0xff] %vm820, %v817
  %883 = vst.msk [vmem:[#allocation2 + $0x1f0] sm:$0xff] %vm820, %v818
  %884 = vst.msk [vmem:[#allocation2 + $0x1f8] sm:$0xff] %vm820, %v819
  // Predicated region
  $region14: #{discriminator_forward.6} parent=0 // pred_check
    %p885 = pneg %p14
  $region15: #{discriminator_forward.6} parent=0 // pred_check_branch
    %887 = sbr.rel (%p885) target = $region17
  $region16: #{discriminator_forward.6} parent=0 // pred_region
    %v888 = vld [vmem:[#allocation2] sm:$0xff]
    %v889 = vld [vmem:[#allocation2 + $0x8] sm:$0xff]
    %v890 = vld [vmem:[#allocation2 + $0x10] sm:$0xff]
    %v891 = vld [vmem:[#allocation2 + $0x18] sm:$0xff]
    %v892 = vld [vmem:[#allocation2 + $0x20] sm:$0xff]
    %v893 = vld [vmem:[#allocation2 + $0x28] sm:$0xff]
    %v894 = vld [vmem:[#allocation2 + $0x30] sm:$0xff]
    %v895 = vld [vmem:[#allocation2 + $0x38] sm:$0xff]
    %v896 = vld [vmem:[#allocation2 + $0x40] sm:$0xff]
    %v897 = vld [vmem:[#allocation2 + $0x48] sm:$0xff]
    %v898 = vld [vmem:[#allocation2 + $0x50] sm:$0xff]
    %v899 = vld [vmem:[#allocation2 + $0x58] sm:$0xff]
    %v900 = vld [vmem:[#allocation2 + $0x60] sm:$0xff]
    %v901 = vld [vmem:[#allocation2 + $0x68] sm:$0xff]
    %v902 = vld [vmem:[#allocation2 + $0x70] sm:$0xff]
    %v903 = vld [vmem:[#allocation2 + $0x78] sm:$0xff]
    %v904 = vld [vmem:[#allocation2 + $0x80] sm:$0xff]
    %v905 = vld [vmem:[#allocation2 + $0x88] sm:$0xff]
    %v906 = vld [vmem:[#allocation2 + $0x90] sm:$0xff]
    %v907 = vld [vmem:[#allocation2 + $0x98] sm:$0xff]
    %v908 = vld [vmem:[#allocation2 + $0xa0] sm:$0xff]
    %v909 = vld [vmem:[#allocation2 + $0xa8] sm:$0xff]
    %v910 = vld [vmem:[#allocation2 + $0xb0] sm:$0xff]
    %v911 = vld [vmem:[#allocation2 + $0xb8] sm:$0xff]
    %v912 = vld [vmem:[#allocation2 + $0xc0] sm:$0xff]
    %v913 = vld [vmem:[#allocation2 + $0xc8] sm:$0xff]
    %v914 = vld [vmem:[#allocation2 + $0xd0] sm:$0xff]
    %v915 = vld [vmem:[#allocation2 + $0xd8] sm:$0xff]
    %v916 = vld [vmem:[#allocation2 + $0xe0] sm:$0xff]
    %v917 = vld [vmem:[#allocation2 + $0xe8] sm:$0xff]
    %v918 = vld [vmem:[#allocation2 + $0xf0] sm:$0xff]
    %v919 = vld [vmem:[#allocation2 + $0xf8] sm:$0xff]
    %v920 = vld [vmem:[#allocation2 + $0x100] sm:$0xff]
    %v921 = vld [vmem:[#allocation2 + $0x108] sm:$0xff]
    %v922 = vld [vmem:[#allocation2 + $0x110] sm:$0xff]
    %v923 = vld [vmem:[#allocation2 + $0x118] sm:$0xff]
    %v924 = vld [vmem:[#allocation2 + $0x120] sm:$0xff]
    %v925 = vld [vmem:[#allocation2 + $0x128] sm:$0xff]
    %v926 = vld [vmem:[#allocation2 + $0x130] sm:$0xff]
    %v927 = vld [vmem:[#allocation2 + $0x138] sm:$0xff]
    %v928 = vld [vmem:[#allocation2 + $0x140] sm:$0xff]
    %v929 = vld [vmem:[#allocation2 + $0x148] sm:$0xff]
    %v930 = vld [vmem:[#allocation2 + $0x150] sm:$0xff]
    %v931 = vld [vmem:[#allocation2 + $0x158] sm:$0xff]
    %v932 = vld [vmem:[#allocation2 + $0x160] sm:$0xff]
    %v933 = vld [vmem:[#allocation2 + $0x168] sm:$0xff]
    %v934 = vld [vmem:[#allocation2 + $0x170] sm:$0xff]
    %v935 = vld [vmem:[#allocation2 + $0x178] sm:$0xff]
    %v936 = vld [vmem:[#allocation2 + $0x180] sm:$0xff]
    %v937 = vld [vmem:[#allocation2 + $0x188] sm:$0xff]
    %v938 = vld [vmem:[#allocation2 + $0x190] sm:$0xff]
    %v939 = vld [vmem:[#allocation2 + $0x198] sm:$0xff]
    %v940 = vld [vmem:[#allocation2 + $0x1a0] sm:$0xff]
    %v941 = vld [vmem:[#allocation2 + $0x1a8] sm:$0xff]
    %v942 = vld [vmem:[#allocation2 + $0x1b0] sm:$0xff]
    %v943 = vld [vmem:[#allocation2 + $0x1b8] sm:$0xff]
    %v944 = vld [vmem:[#allocation2 + $0x1c0] sm:$0xff]
    %v945 = vld [vmem:[#allocation2 + $0x1c8] sm:$0xff]
    %v946 = vld [vmem:[#allocation2 + $0x1d0] sm:$0xff]
    %v947 = vld [vmem:[#allocation2 + $0x1d8] sm:$0xff]
    %v948 = vld [vmem:[#allocation2 + $0x1e0] sm:$0xff]
    %v949 = vld [vmem:[#allocation2 + $0x1e8] sm:$0xff]
    %v950 = vld [vmem:[#allocation2 + $0x1f0] sm:$0xff]
    %v951 = vld [vmem:[#allocation2 + $0x1f8] sm:$0xff]
    %v952 = vpack.c.bf16 %v889, %v888
    %v953 = vpack.c.bf16 %v891, %v890
    %v954 = vpack.c.bf16 %v893, %v892
    %v955 = vpack.c.bf16 %v895, %v894
    %v956 = vpack.c.bf16 %v897, %v896
    %v957 = vpack.c.bf16 %v899, %v898
    %v958 = vpack.c.bf16 %v901, %v900
    %v959 = vpack.c.bf16 %v903, %v902
    %v960 = vpack.c.bf16 %v905, %v904
    %v961 = vpack.c.bf16 %v907, %v906
    %v962 = vpack.c.bf16 %v909, %v908
    %v963 = vpack.c.bf16 %v911, %v910
    %v964 = vpack.c.bf16 %v913, %v912
    %v965 = vpack.c.bf16 %v915, %v914
    %v966 = vpack.c.bf16 %v917, %v916
    %v967 = vpack.c.bf16 %v919, %v918
    %v968 = vpack.c.bf16 %v921, %v920
    %v969 = vpack.c.bf16 %v923, %v922
    %v970 = vpack.c.bf16 %v925, %v924
    %v971 = vpack.c.bf16 %v927, %v926
    %v972 = vpack.c.bf16 %v929, %v928
    %v973 = vpack.c.bf16 %v931, %v930
    %v974 = vpack.c.bf16 %v933, %v932
    %v975 = vpack.c.bf16 %v935, %v934
    %v976 = vpack.c.bf16 %v937, %v936
    %v977 = vpack.c.bf16 %v939, %v938
    %v978 = vpack.c.bf16 %v941, %v940
    %v979 = vpack.c.bf16 %v943, %v942
    %v980 = vpack.c.bf16 %v945, %v944
    %v981 = vpack.c.bf16 %v947, %v946
    %v982 = vpack.c.bf16 %v949, %v948
    %v983 = vpack.c.bf16 %v951, %v950
    %v1016 = vunpack.c.l.b16 %v952
    %v1017 = vunpack.c.h.b16 %v952
    %v1018 = vunpack.c.l.b16 %v953
    %v1019 = vunpack.c.h.b16 %v953
    %v1020 = vunpack.c.l.b16 %v954
    %v1021 = vunpack.c.h.b16 %v954
    %v1022 = vunpack.c.l.b16 %v955
    %v1023 = vunpack.c.h.b16 %v955
    %v1024 = vunpack.c.l.b16 %v956
    %v1025 = vunpack.c.h.b16 %v956
    %v1026 = vunpack.c.l.b16 %v957
    %v1027 = vunpack.c.h.b16 %v957
    %v1028 = vunpack.c.l.b16 %v958
    %v1029 = vunpack.c.h.b16 %v958
    %v1030 = vunpack.c.l.b16 %v959
    %v1031 = vunpack.c.h.b16 %v959
    %v1032 = vunpack.c.l.b16 %v960
    %v1033 = vunpack.c.h.b16 %v960
    %v1034 = vunpack.c.l.b16 %v961
    %v1035 = vunpack.c.h.b16 %v961
    %v1036 = vunpack.c.l.b16 %v962
    %v1037 = vunpack.c.h.b16 %v962
    %v1038 = vunpack.c.l.b16 %v963
    %v1039 = vunpack.c.h.b16 %v963
    %v1040 = vunpack.c.l.b16 %v964
    %v1041 = vunpack.c.h.b16 %v964
    %v1042 = vunpack.c.l.b16 %v965
    %v1043 = vunpack.c.h.b16 %v965
    %v1044 = vunpack.c.l.b16 %v966
    %v1045 = vunpack.c.h.b16 %v966
    %v1046 = vunpack.c.l.b16 %v967
    %v1047 = vunpack.c.h.b16 %v967
    %v1048 = vunpack.c.l.b16 %v968
    %v1049 = vunpack.c.h.b16 %v968
    %v1050 = vunpack.c.l.b16 %v969
    %v1051 = vunpack.c.h.b16 %v969
    %v1052 = vunpack.c.l.b16 %v970
    %v1053 = vunpack.c.h.b16 %v970
    %v1054 = vunpack.c.l.b16 %v971
    %v1055 = vunpack.c.h.b16 %v971
    %v1056 = vunpack.c.l.b16 %v972
    %v1057 = vunpack.c.h.b16 %v972
    %v1058 = vunpack.c.l.b16 %v973
    %v1059 = vunpack.c.h.b16 %v973
    %v1060 = vunpack.c.l.b16 %v974
    %v1061 = vunpack.c.h.b16 %v974
    %v1062 = vunpack.c.l.b16 %v975
    %v1063 = vunpack.c.h.b16 %v975
    %v1064 = vunpack.c.l.b16 %v976
    %v1065 = vunpack.c.h.b16 %v976
    %v1066 = vunpack.c.l.b16 %v977
    %v1067 = vunpack.c.h.b16 %v977
    %v1068 = vunpack.c.l.b16 %v978
    %v1069 = vunpack.c.h.b16 %v978
    %v1070 = vunpack.c.l.b16 %v979
    %v1071 = vunpack.c.h.b16 %v979
    %v1072 = vunpack.c.l.b16 %v980
    %v1073 = vunpack.c.h.b16 %v980
    %v1074 = vunpack.c.l.b16 %v981
    %v1075 = vunpack.c.h.b16 %v981
    %v1076 = vunpack.c.l.b16 %v982
    %v1077 = vunpack.c.h.b16 %v982
    %v1078 = vunpack.c.l.b16 %v983
    %v1079 = vunpack.c.h.b16 %v983
    %v1080 = vpack.c.b16 %v1016, %v1016
    %v1081 = vpack.c.b16 %v1017, %v1017
    %v1082 = vpack.c.b16 %v1018, %v1018
    %v1083 = vpack.c.b16 %v1019, %v1019
    %v1084 = vpack.c.b16 %v1020, %v1020
    %v1085 = vpack.c.b16 %v1021, %v1021
    %v1086 = vpack.c.b16 %v1022, %v1022
    %v1087 = vpack.c.b16 %v1023, %v1023
    %v1088 = vpack.c.b16 %v1024, %v1024
    %v1089 = vpack.c.b16 %v1025, %v1025
    %v1090 = vpack.c.b16 %v1026, %v1026
    %v1091 = vpack.c.b16 %v1027, %v1027
    %v1092 = vpack.c.b16 %v1028, %v1028
    %v1093 = vpack.c.b16 %v1029, %v1029
    %v1094 = vpack.c.b16 %v1030, %v1030
    %v1095 = vpack.c.b16 %v1031, %v1031
    %v1096 = vpack.c.b16 %v1032, %v1032
    %v1097 = vpack.c.b16 %v1033, %v1033
    %v1098 = vpack.c.b16 %v1034, %v1034
    %v1099 = vpack.c.b16 %v1035, %v1035
    %v1100 = vpack.c.b16 %v1036, %v1036
    %v1101 = vpack.c.b16 %v1037, %v1037
    %v1102 = vpack.c.b16 %v1038, %v1038
    %v1103 = vpack.c.b16 %v1039, %v1039
    %v1104 = vpack.c.b16 %v1040, %v1040
    %v1105 = vpack.c.b16 %v1041, %v1041
    %v1106 = vpack.c.b16 %v1042, %v1042
    %v1107 = vpack.c.b16 %v1043, %v1043
    %v1108 = vpack.c.b16 %v1044, %v1044
    %v1109 = vpack.c.b16 %v1045, %v1045
    %v1110 = vpack.c.b16 %v1046, %v1046
    %v1111 = vpack.c.b16 %v1047, %v1047
    %v1112 = vpack.c.b16 %v1048, %v1048
    %v1113 = vpack.c.b16 %v1049, %v1049
    %v1114 = vpack.c.b16 %v1050, %v1050
    %v1115 = vpack.c.b16 %v1051, %v1051
    %v1116 = vpack.c.b16 %v1052, %v1052
    %v1117 = vpack.c.b16 %v1053, %v1053
    %v1118 = vpack.c.b16 %v1054, %v1054
    %v1119 = vpack.c.b16 %v1055, %v1055
    %v1120 = vpack.c.b16 %v1056, %v1056
    %v1121 = vpack.c.b16 %v1057, %v1057
    %v1122 = vpack.c.b16 %v1058, %v1058
    %v1123 = vpack.c.b16 %v1059, %v1059
    %v1124 = vpack.c.b16 %v1060, %v1060
    %v1125 = vpack.c.b16 %v1061, %v1061
    %v1126 = vpack.c.b16 %v1062, %v1062
    %v1127 = vpack.c.b16 %v1063, %v1063
    %v1128 = vpack.c.b16 %v1064, %v1064
    %v1129 = vpack.c.b16 %v1065, %v1065
    %v1130 = vpack.c.b16 %v1066, %v1066
    %v1131 = vpack.c.b16 %v1067, %v1067
    %v1132 = vpack.c.b16 %v1068, %v1068
    %v1133 = vpack.c.b16 %v1069, %v1069
    %v1134 = vpack.c.b16 %v1070, %v1070
    %v1135 = vpack.c.b16 %v1071, %v1071
    %v1136 = vpack.c.b16 %v1072, %v1072
    %v1137 = vpack.c.b16 %v1073, %v1073
    %v1138 = vpack.c.b16 %v1074, %v1074
    %v1139 = vpack.c.b16 %v1075, %v1075
    %v1140 = vpack.c.b16 %v1076, %v1076
    %v1141 = vpack.c.b16 %v1077, %v1077
    %v1142 = vpack.c.b16 %v1078, %v1078
    %v1143 = vpack.c.b16 %v1079, %v1079
    %vm1208 = vcmask 125952
    %1209 = vst.msk [vmem:[%s2] sm:$0xf] %vm1208, %v1080
    %1210 = vst.msk [vmem:[%s2 + $0x4] sm:$0xf] %vm1208, %v1081
    %1211 = vst.msk [vmem:[%s2 + $0x8] sm:$0xf] %vm1208, %v1082
    %1212 = vst.msk [vmem:[%s2 + $0xc] sm:$0xf] %vm1208, %v1083
    %1213 = vst.msk [vmem:[%s2 + $0x10] sm:$0xf] %vm1208, %v1084
    %1214 = vst.msk [vmem:[%s2 + $0x14] sm:$0xf] %vm1208, %v1085
    %1215 = vst.msk [vmem:[%s2 + $0x18] sm:$0xf] %vm1208, %v1086
    %1216 = vst.msk [vmem:[%s2 + $0x1c] sm:$0xf] %vm1208, %v1087
    %1217 = vst.msk [vmem:[%s2 + $0x20] sm:$0xf] %vm1208, %v1088
    %1218 = vst.msk [vmem:[%s2 + $0x24] sm:$0xf] %vm1208, %v1089
    %1219 = vst.msk [vmem:[%s2 + $0x28] sm:$0xf] %vm1208, %v1090
    %1220 = vst.msk [vmem:[%s2 + $0x2c] sm:$0xf] %vm1208, %v1091
    %1221 = vst.msk [vmem:[%s2 + $0x30] sm:$0xf] %vm1208, %v1092
    %1222 = vst.msk [vmem:[%s2 + $0x34] sm:$0xf] %vm1208, %v1093
    %1223 = vst.msk [vmem:[%s2 + $0x38] sm:$0xf] %vm1208, %v1094
    %1224 = vst.msk [vmem:[%s2 + $0x3c] sm:$0xf] %vm1208, %v1095
    %1225 = vst.msk [vmem:[%s2 + $0x40] sm:$0xf] %vm1208, %v1096
    %1226 = vst.msk [vmem:[%s2 + $0x44] sm:$0xf] %vm1208, %v1097
    %1227 = vst.msk [vmem:[%s2 + $0x48] sm:$0xf] %vm1208, %v1098
    %1228 = vst.msk [vmem:[%s2 + $0x4c] sm:$0xf] %vm1208, %v1099
    %1229 = vst.msk [vmem:[%s2 + $0x50] sm:$0xf] %vm1208, %v1100
    %1230 = vst.msk [vmem:[%s2 + $0x54] sm:$0xf] %vm1208, %v1101
    %1231 = vst.msk [vmem:[%s2 + $0x58] sm:$0xf] %vm1208, %v1102
    %1232 = vst.msk [vmem:[%s2 + $0x5c] sm:$0xf] %vm1208, %v1103
    %1233 = vst.msk [vmem:[%s2 + $0x60] sm:$0xf] %vm1208, %v1104
    %1234 = vst.msk [vmem:[%s2 + $0x64] sm:$0xf] %vm1208, %v1105
    %1235 = vst.msk [vmem:[%s2 + $0x68] sm:$0xf] %vm1208, %v1106
    %1236 = vst.msk [vmem:[%s2 + $0x6c] sm:$0xf] %vm1208, %v1107
    %1237 = vst.msk [vmem:[%s2 + $0x70] sm:$0xf] %vm1208, %v1108
    %1238 = vst.msk [vmem:[%s2 + $0x74] sm:$0xf] %vm1208, %v1109
    %1239 = vst.msk [vmem:[%s2 + $0x78] sm:$0xf] %vm1208, %v1110
    %1240 = vst.msk [vmem:[%s2 + $0x7c] sm:$0xf] %vm1208, %v1111
    %1241 = vst.msk [vmem:[%s2 + $0x80] sm:$0xf] %vm1208, %v1112
    %1242 = vst.msk [vmem:[%s2 + $0x84] sm:$0xf] %vm1208, %v1113
    %1243 = vst.msk [vmem:[%s2 + $0x88] sm:$0xf] %vm1208, %v1114
    %1244 = vst.msk [vmem:[%s2 + $0x8c] sm:$0xf] %vm1208, %v1115
    %1245 = vst.msk [vmem:[%s2 + $0x90] sm:$0xf] %vm1208, %v1116
    %1246 = vst.msk [vmem:[%s2 + $0x94] sm:$0xf] %vm1208, %v1117
    %1247 = vst.msk [vmem:[%s2 + $0x98] sm:$0xf] %vm1208, %v1118
    %1248 = vst.msk [vmem:[%s2 + $0x9c] sm:$0xf] %vm1208, %v1119
    %1249 = vst.msk [vmem:[%s2 + $0xa0] sm:$0xf] %vm1208, %v1120
    %1250 = vst.msk [vmem:[%s2 + $0xa4] sm:$0xf] %vm1208, %v1121
    %1251 = vst.msk [vmem:[%s2 + $0xa8] sm:$0xf] %vm1208, %v1122
    %1252 = vst.msk [vmem:[%s2 + $0xac] sm:$0xf] %vm1208, %v1123
    %1253 = vst.msk [vmem:[%s2 + $0xb0] sm:$0xf] %vm1208, %v1124
    %1254 = vst.msk [vmem:[%s2 + $0xb4] sm:$0xf] %vm1208, %v1125
    %1255 = vst.msk [vmem:[%s2 + $0xb8] sm:$0xf] %vm1208, %v1126
    %1256 = vst.msk [vmem:[%s2 + $0xbc] sm:$0xf] %vm1208, %v1127
    %1257 = vst.msk [vmem:[%s2 + $0xc0] sm:$0xf] %vm1208, %v1128
    %1258 = vst.msk [vmem:[%s2 + $0xc4] sm:$0xf] %vm1208, %v1129
    %1259 = vst.msk [vmem:[%s2 + $0xc8] sm:$0xf] %vm1208, %v1130
    %1260 = vst.msk [vmem:[%s2 + $0xcc] sm:$0xf] %vm1208, %v1131
    %1261 = vst.msk [vmem:[%s2 + $0xd0] sm:$0xf] %vm1208, %v1132
    %1262 = vst.msk [vmem:[%s2 + $0xd4] sm:$0xf] %vm1208, %v1133
    %1263 = vst.msk [vmem:[%s2 + $0xd8] sm:$0xf] %vm1208, %v1134
    %1264 = vst.msk [vmem:[%s2 + $0xdc] sm:$0xf] %vm1208, %v1135
    %1265 = vst.msk [vmem:[%s2 + $0xe0] sm:$0xf] %vm1208, %v1136
    %1266 = vst.msk [vmem:[%s2 + $0xe4] sm:$0xf] %vm1208, %v1137
    %1267 = vst.msk [vmem:[%s2 + $0xe8] sm:$0xf] %vm1208, %v1138
    %1268 = vst.msk [vmem:[%s2 + $0xec] sm:$0xf] %vm1208, %v1139
    %1269 = vst.msk [vmem:[%s2 + $0xf0] sm:$0xf] %vm1208, %v1140
    %1270 = vst.msk [vmem:[%s2 + $0xf4] sm:$0xf] %vm1208, %v1141
    %1271 = vst.msk [vmem:[%s2 + $0xf8] sm:$0xf] %vm1208, %v1142
    %1272 = vst.msk [vmem:[%s2 + $0xfc] sm:$0xf] %vm1208, %v1143
    %v1273 = vsel %vm820, %v888, 0.0
    %v1274 = vsel %vm820, %v889, 0.0
    %v1275 = vadd.f32 %v1273, %v1274
    %v1276 = vsel %vm820, %v890, 0.0
    %v1277 = vadd.f32 %v1275, %v1276
    %v1278 = vsel %vm820, %v891, 0.0
    %v1279 = vadd.f32 %v1277, %v1278
    %v1280 = vsel %vm820, %v892, 0.0
    %v1281 = vadd.f32 %v1279, %v1280
    %v1282 = vsel %vm820, %v893, 0.0
    %v1283 = vadd.f32 %v1281, %v1282
    %v1284 = vsel %vm820, %v894, 0.0
    %v1285 = vadd.f32 %v1283, %v1284
    %v1286 = vsel %vm820, %v895, 0.0
    %v1287 = vadd.f32 %v1285, %v1286
    %v1288 = vsel %vm820, %v896, 0.0
    %v1289 = vadd.f32 %v1287, %v1288
    %v1290 = vsel %vm820, %v897, 0.0
    %v1291 = vadd.f32 %v1289, %v1290
    %v1292 = vsel %vm820, %v898, 0.0
    %v1293 = vadd.f32 %v1291, %v1292
    %v1294 = vsel %vm820, %v899, 0.0
    %v1295 = vadd.f32 %v1293, %v1294
    %v1296 = vsel %vm820, %v900, 0.0
    %v1297 = vadd.f32 %v1295, %v1296
    %v1298 = vsel %vm820, %v901, 0.0
    %v1299 = vadd.f32 %v1297, %v1298
    %v1300 = vsel %vm820, %v902, 0.0
    %v1301 = vadd.f32 %v1299, %v1300
    %v1302 = vsel %vm820, %v903, 0.0
    %v1303 = vadd.f32 %v1301, %v1302
    %v1304 = vsel %vm820, %v904, 0.0
    %v1305 = vadd.f32 %v1303, %v1304
    %v1306 = vsel %vm820, %v905, 0.0
    %v1307 = vadd.f32 %v1305, %v1306
    %v1308 = vsel %vm820, %v906, 0.0
    %v1309 = vadd.f32 %v1307, %v1308
    %v1310 = vsel %vm820, %v907, 0.0
    %v1311 = vadd.f32 %v1309, %v1310
    %v1312 = vsel %vm820, %v908, 0.0
    %v1313 = vadd.f32 %v1311, %v1312
    %v1314 = vsel %vm820, %v909, 0.0
    %v1315 = vadd.f32 %v1313, %v1314
    %v1316 = vsel %vm820, %v910, 0.0
    %v1317 = vadd.f32 %v1315, %v1316
    %v1318 = vsel %vm820, %v911, 0.0
    %v1319 = vadd.f32 %v1317, %v1318
    %v1320 = vsel %vm820, %v912, 0.0
    %v1321 = vadd.f32 %v1319, %v1320
    %v1322 = vsel %vm820, %v913, 0.0
    %v1323 = vadd.f32 %v1321, %v1322
    %v1324 = vsel %vm820, %v914, 0.0
    %v1325 = vadd.f32 %v1323, %v1324
    %v1326 = vsel %vm820, %v915, 0.0
    %v1327 = vadd.f32 %v1325, %v1326
    %v1328 = vsel %vm820, %v916, 0.0
    %v1329 = vadd.f32 %v1327, %v1328
    %v1330 = vsel %vm820, %v917, 0.0
    %v1331 = vadd.f32 %v1329, %v1330
    %v1332 = vsel %vm820, %v918, 0.0
    %v1333 = vadd.f32 %v1331, %v1332
    %v1334 = vsel %vm820, %v919, 0.0
    %v1335 = vadd.f32 %v1333, %v1334
    %v1336 = vsel %vm820, %v920, 0.0
    %v1337 = vadd.f32 %v1335, %v1336
    %v1338 = vsel %vm820, %v921, 0.0
    %v1339 = vadd.f32 %v1337, %v1338
    %v1340 = vsel %vm820, %v922, 0.0
    %v1341 = vadd.f32 %v1339, %v1340
    %v1342 = vsel %vm820, %v923, 0.0
    %v1343 = vadd.f32 %v1341, %v1342
    %v1344 = vsel %vm820, %v924, 0.0
    %v1345 = vadd.f32 %v1343, %v1344
    %v1346 = vsel %vm820, %v925, 0.0
    %v1347 = vadd.f32 %v1345, %v1346
    %v1348 = vsel %vm820, %v926, 0.0
    %v1349 = vadd.f32 %v1347, %v1348
    %v1350 = vsel %vm820, %v927, 0.0
    %v1351 = vadd.f32 %v1349, %v1350
    %v1352 = vsel %vm820, %v928, 0.0
    %v1353 = vadd.f32 %v1351, %v1352
    %v1354 = vsel %vm820, %v929, 0.0
    %v1355 = vadd.f32 %v1353, %v1354
    %v1356 = vsel %vm820, %v930, 0.0
    %v1357 = vadd.f32 %v1355, %v1356
    %v1358 = vsel %vm820, %v931, 0.0
    %v1359 = vadd.f32 %v1357, %v1358
    %v1360 = vsel %vm820, %v932, 0.0
    %v1361 = vadd.f32 %v1359, %v1360
    %v1362 = vsel %vm820, %v933, 0.0
    %v1363 = vadd.f32 %v1361, %v1362
    %v1364 = vsel %vm820, %v934, 0.0
    %v1365 = vadd.f32 %v1363, %v1364
    %v1366 = vsel %vm820, %v935, 0.0
    %v1367 = vadd.f32 %v1365, %v1366
    %v1368 = vsel %vm820, %v936, 0.0
    %v1369 = vadd.f32 %v1367, %v1368
    %v1370 = vsel %vm820, %v937, 0.0
    %v1371 = vadd.f32 %v1369, %v1370
    %v1372 = vsel %vm820, %v938, 0.0
    %v1373 = vadd.f32 %v1371, %v1372
    %v1374 = vsel %vm820, %v939, 0.0
    %v1375 = vadd.f32 %v1373, %v1374
    %v1376 = vsel %vm820, %v940, 0.0
    %v1377 = vadd.f32 %v1375, %v1376
    %v1378 = vsel %vm820, %v941, 0.0
    %v1379 = vadd.f32 %v1377, %v1378
    %v1380 = vsel %vm820, %v942, 0.0
    %v1381 = vadd.f32 %v1379, %v1380
    %v1382 = vsel %vm820, %v943, 0.0
    %v1383 = vadd.f32 %v1381, %v1382
    %v1384 = vsel %vm820, %v944, 0.0
    %v1385 = vadd.f32 %v1383, %v1384
    %v1386 = vsel %vm820, %v945, 0.0
    %v1387 = vadd.f32 %v1385, %v1386
    %v1388 = vsel %vm820, %v946, 0.0
    %v1389 = vadd.f32 %v1387, %v1388
    %v1390 = vsel %vm820, %v947, 0.0
    %v1391 = vadd.f32 %v1389, %v1390
    %v1392 = vsel %vm820, %v948, 0.0
    %v1393 = vadd.f32 %v1391, %v1392
    %v1394 = vsel %vm820, %v949, 0.0
    %v1395 = vadd.f32 %v1393, %v1394
    %v1396 = vsel %vm820, %v950, 0.0
    %v1397 = vadd.f32 %v1395, %v1396
    %v1398 = vsel %vm820, %v951, 0.0
    %v1399 = vadd.f32 %v1397, %v1398
    %v1400 = vrot.slane %v1399, 4
    %v1401 = vadd.f32 %v1399, %v1400
    %v1402 = vrot.slane %v1401, 2
    %v1403 = vadd.f32 %v1401, %v1402
    %v1404 = vrot.slane %v1403, 1
    %v1405 = vadd.f32 %v1403, %v1404
    %v1406 = vmul.f32 %v888, %v888
    %v1407 = vmul.f32 %v889, %v889
    %v1408 = vmul.f32 %v890, %v890
    %v1409 = vmul.f32 %v891, %v891
    %v1410 = vmul.f32 %v892, %v892
    %v1411 = vmul.f32 %v893, %v893
    %v1412 = vmul.f32 %v894, %v894
    %v1413 = vmul.f32 %v895, %v895
    %v1414 = vmul.f32 %v896, %v896
    %v1415 = vmul.f32 %v897, %v897
    %v1416 = vmul.f32 %v898, %v898
    %v1417 = vmul.f32 %v899, %v899
    %v1418 = vmul.f32 %v900, %v900
    %v1419 = vmul.f32 %v901, %v901
    %v1420 = vmul.f32 %v902, %v902
    %v1421 = vmul.f32 %v903, %v903
    %v1422 = vmul.f32 %v904, %v904
    %v1423 = vmul.f32 %v905, %v905
    %v1424 = vmul.f32 %v906, %v906
    %v1425 = vmul.f32 %v907, %v907
    %v1426 = vmul.f32 %v908, %v908
    %v1427 = vmul.f32 %v909, %v909
    %v1428 = vmul.f32 %v910, %v910
    %v1429 = vmul.f32 %v911, %v911
    %v1430 = vmul.f32 %v912, %v912
    %v1431 = vmul.f32 %v913, %v913
    %v1432 = vmul.f32 %v914, %v914
    %v1433 = vmul.f32 %v915, %v915
    %v1434 = vmul.f32 %v916, %v916
    %v1435 = vmul.f32 %v917, %v917
    %v1436 = vmul.f32 %v918, %v918
    %v1437 = vmul.f32 %v919, %v919
    %v1438 = vmul.f32 %v920, %v920
    %v1439 = vmul.f32 %v921, %v921
    %v1440 = vmul.f32 %v922, %v922
    %v1441 = vmul.f32 %v923, %v923
    %v1442 = vmul.f32 %v924, %v924
    %v1443 = vmul.f32 %v925, %v925
    %v1444 = vmul.f32 %v926, %v926
    %v1445 = vmul.f32 %v927, %v927
    %v1446 = vmul.f32 %v928, %v928
    %v1447 = vmul.f32 %v929, %v929
    %v1448 = vmul.f32 %v930, %v930
    %v1449 = vmul.f32 %v931, %v931
    %v1450 = vmul.f32 %v932, %v932
    %v1451 = vmul.f32 %v933, %v933
    %v1452 = vmul.f32 %v934, %v934
    %v1453 = vmul.f32 %v935, %v935
    %v1454 = vmul.f32 %v936, %v936
    %v1455 = vmul.f32 %v937, %v937
    %v1456 = vmul.f32 %v938, %v938
    %v1457 = vmul.f32 %v939, %v939
    %v1458 = vmul.f32 %v940, %v940
    %v1459 = vmul.f32 %v941, %v941
    %v1460 = vmul.f32 %v942, %v942
    %v1461 = vmul.f32 %v943, %v943
    %v1462 = vmul.f32 %v944, %v944
    %v1463 = vmul.f32 %v945, %v945
    %v1464 = vmul.f32 %v946, %v946
    %v1465 = vmul.f32 %v947, %v947
    %v1466 = vmul.f32 %v948, %v948
    %v1467 = vmul.f32 %v949, %v949
    %v1468 = vmul.f32 %v950, %v950
    %v1469 = vmul.f32 %v951, %v951
    %v1470 = vsel %vm820, %v1406, 0.0
    %v1471 = vsel %vm820, %v1407, 0.0
    %v1472 = vadd.f32 %v1470, %v1471
    %v1473 = vsel %vm820, %v1408, 0.0
    %v1474 = vadd.f32 %v1472, %v1473
    %v1475 = vsel %vm820, %v1409, 0.0
    %v1476 = vadd.f32 %v1474, %v1475
    %v1477 = vsel %vm820, %v1410, 0.0
    %v1478 = vadd.f32 %v1476, %v1477
    %v1479 = vsel %vm820, %v1411, 0.0
    %v1480 = vadd.f32 %v1478, %v1479
    %v1481 = vsel %vm820, %v1412, 0.0
    %v1482 = vadd.f32 %v1480, %v1481
    %v1483 = vsel %vm820, %v1413, 0.0
    %v1484 = vadd.f32 %v1482, %v1483
    %v1485 = vsel %vm820, %v1414, 0.0
    %v1486 = vadd.f32 %v1484, %v1485
    %v1487 = vsel %vm820, %v1415, 0.0
    %v1488 = vadd.f32 %v1486, %v1487
    %v1489 = vsel %vm820, %v1416, 0.0
    %v1490 = vadd.f32 %v1488, %v1489
    %v1491 = vsel %vm820, %v1417, 0.0
    %v1492 = vadd.f32 %v1490, %v1491
    %v1493 = vsel %vm820, %v1418, 0.0
    %v1494 = vadd.f32 %v1492, %v1493
    %v1495 = vsel %vm820, %v1419, 0.0
    %v1496 = vadd.f32 %v1494, %v1495
    %v1497 = vsel %vm820, %v1420, 0.0
    %v1498 = vadd.f32 %v1496, %v1497
    %v1499 = vsel %vm820, %v1421, 0.0
    %v1500 = vadd.f32 %v1498, %v1499
    %v1501 = vsel %vm820, %v1422, 0.0
    %v1502 = vadd.f32 %v1500, %v1501
    %v1503 = vsel %vm820, %v1423, 0.0
    %v1504 = vadd.f32 %v1502, %v1503
    %v1505 = vsel %vm820, %v1424, 0.0
    %v1506 = vadd.f32 %v1504, %v1505
    %v1507 = vsel %vm820, %v1425, 0.0
    %v1508 = vadd.f32 %v1506, %v1507
    %v1509 = vsel %vm820, %v1426, 0.0
    %v1510 = vadd.f32 %v1508, %v1509
    %v1511 = vsel %vm820, %v1427, 0.0
    %v1512 = vadd.f32 %v1510, %v1511
    %v1513 = vsel %vm820, %v1428, 0.0
    %v1514 = vadd.f32 %v1512, %v1513
    %v1515 = vsel %vm820, %v1429, 0.0
    %v1516 = vadd.f32 %v1514, %v1515
    %v1517 = vsel %vm820, %v1430, 0.0
    %v1518 = vadd.f32 %v1516, %v1517
    %v1519 = vsel %vm820, %v1431, 0.0
    %v1520 = vadd.f32 %v1518, %v1519
    %v1521 = vsel %vm820, %v1432, 0.0
    %v1522 = vadd.f32 %v1520, %v1521
    %v1523 = vsel %vm820, %v1433, 0.0
    %v1524 = vadd.f32 %v1522, %v1523
    %v1525 = vsel %vm820, %v1434, 0.0
    %v1526 = vadd.f32 %v1524, %v1525
    %v1527 = vsel %vm820, %v1435, 0.0
    %v1528 = vadd.f32 %v1526, %v1527
    %v1529 = vsel %vm820, %v1436, 0.0
    %v1530 = vadd.f32 %v1528, %v1529
    %v1531 = vsel %vm820, %v1437, 0.0
    %v1532 = vadd.f32 %v1530, %v1531
    %v1533 = vsel %vm820, %v1438, 0.0
    %v1534 = vadd.f32 %v1532, %v1533
    %v1535 = vsel %vm820, %v1439, 0.0
    %v1536 = vadd.f32 %v1534, %v1535
    %v1537 = vsel %vm820, %v1440, 0.0
    %v1538 = vadd.f32 %v1536, %v1537
    %v1539 = vsel %vm820, %v1441, 0.0
    %v1540 = vadd.f32 %v1538, %v1539
    %v1541 = vsel %vm820, %v1442, 0.0
    %v1542 = vadd.f32 %v1540, %v1541
    %v1543 = vsel %vm820, %v1443, 0.0
    %v1544 = vadd.f32 %v1542, %v1543
    %v1545 = vsel %vm820, %v1444, 0.0
    %v1546 = vadd.f32 %v1544, %v1545
    %v1547 = vsel %vm820, %v1445, 0.0
    %v1548 = vadd.f32 %v1546, %v1547
    %v1549 = vsel %vm820, %v1446, 0.0
    %v1550 = vadd.f32 %v1548, %v1549
    %v1551 = vsel %vm820, %v1447, 0.0
    %v1552 = vadd.f32 %v1550, %v1551
    %v1553 = vsel %vm820, %v1448, 0.0
    %v1554 = vadd.f32 %v1552, %v1553
    %v1555 = vsel %vm820, %v1449, 0.0
    %v1556 = vadd.f32 %v1554, %v1555
    %v1557 = vsel %vm820, %v1450, 0.0
    %v1558 = vadd.f32 %v1556, %v1557
    %v1559 = vsel %vm820, %v1451, 0.0
    %v1560 = vadd.f32 %v1558, %v1559
    %v1561 = vsel %vm820, %v1452, 0.0
    %v1562 = vadd.f32 %v1560, %v1561
    %v1563 = vsel %vm820, %v1453, 0.0
    %v1564 = vadd.f32 %v1562, %v1563
    %v1565 = vsel %vm820, %v1454, 0.0
    %v1566 = vadd.f32 %v1564, %v1565
    %v1567 = vsel %vm820, %v1455, 0.0
    %v1568 = vadd.f32 %v1566, %v1567
    %v1569 = vsel %vm820, %v1456, 0.0
    %v1570 = vadd.f32 %v1568, %v1569
    %v1571 = vsel %vm820, %v1457, 0.0
    %v1572 = vadd.f32 %v1570, %v1571
    %v1573 = vsel %vm820, %v1458, 0.0
    %v1574 = vadd.f32 %v1572, %v1573
    %v1575 = vsel %vm820, %v1459, 0.0
    %v1576 = vadd.f32 %v1574, %v1575
    %v1577 = vsel %vm820, %v1460, 0.0
    %v1578 = vadd.f32 %v1576, %v1577
    %v1579 = vsel %vm820, %v1461, 0.0
    %v1580 = vadd.f32 %v1578, %v1579
    %v1581 = vsel %vm820, %v1462, 0.0
    %v1582 = vadd.f32 %v1580, %v1581
    %v1583 = vsel %vm820, %v1463, 0.0
    %v1584 = vadd.f32 %v1582, %v1583
    %v1585 = vsel %vm820, %v1464, 0.0
    %v1586 = vadd.f32 %v1584, %v1585
    %v1587 = vsel %vm820, %v1465, 0.0
    %v1588 = vadd.f32 %v1586, %v1587
    %v1589 = vsel %vm820, %v1466, 0.0
    %v1590 = vadd.f32 %v1588, %v1589
    %v1591 = vsel %vm820, %v1467, 0.0
    %v1592 = vadd.f32 %v1590, %v1591
    %v1593 = vsel %vm820, %v1468, 0.0
    %v1594 = vadd.f32 %v1592, %v1593
    %v1595 = vsel %vm820, %v1469, 0.0
    %v1596 = vadd.f32 %v1594, %v1595
    %v1597 = vrot.slane %v1596, 4
    %v1598 = vadd.f32 %v1596, %v1597
    %v1599 = vrot.slane %v1598, 2
    %v1600 = vadd.f32 %v1598, %v1599
    %v1601 = vrot.slane %v1600, 1
    %v1602 = vadd.f32 %v1600, %v1601
    %vm1603 = vcmask 1040384
    %v1604 = vsel %vm1603, %v1405, %v1602
    %vm1605 = vcmask 123904
    %1606 = vst.msk [vmem:[%s3] sm:$0x3] %vm1605, %v1604
  $region17: #{discriminator_forward.6} parent=0 // pred_fallthru
    _
  // Predicated region
  $region18: #{discriminator_forward.6} parent=0 // pred_check
    _
  $region19: #{discriminator_forward.6} parent=0 // pred_check_branch
    %1608 = sbr.rel (0) target = $region21
  $region20: #{discriminator_forward.6} parent=0 // pred_region
    _
  $region21: #{discriminator_forward.6} parent=0 // pred_fallthru
    _
  // Predicated region
  $region22: #{discriminator_forward.6} parent=0 // pred_check
    _
  $region23: #{discriminator_forward.6} parent=0 // pred_check_branch
    %1610 = sbr.rel (0) target = $region25
  $region24: #{discriminator_forward.6} parent=0 // pred_region
    _
  $region25: #{discriminator_forward.6} parent=0 // pred_fallthru
    _
  // Predicated region
  $region26: #{discriminator_forward.6} parent=0 // pred_check
    _
  $region27: #{discriminator_forward.6} parent=0 // pred_check_branch
    %1612 = sbr.rel (0) target = $region29
  $region28: #{discriminator_forward.6} parent=0 // pred_region
    _
  $region29: #{discriminator_forward.6} parent=0 // pred_fallthru
    _
  // Predicated region
  $region30: #{discriminator_forward.6} parent=0 // pred_check
    _
  $region31: #{discriminator_forward.6} parent=0 // pred_check_branch
    %1614 = sbr.rel (0) target = $region33
  $region32: #{discriminator_forward.6} parent=0 // pred_region
    _
  $region33: #{discriminator_forward.6} parent=0 // pred_fallthru
    _

// kernel: discriminator_forward.7
$region0: #{discriminator_forward.7}
  #allocation0 [shape = 'u32[]', space=smem, size = 0x4, offset = 0x4, fixed_abs, tag = 'smem constant byte address 0x4 - core index']
  #allocation1 [shape = 'u32[144,128]{1,0:T(1,128)}', space=vmem, size = 0x12000, scoped, tag = 'internal scratch']
  #allocation2 [shape = 'f32[128,32]{1,0:T(8,128)}', space=vmem, size = 0x10000, scoped, tag = 'scratch operand']
  %s0 = inlined_call_operand.vmem [shape: bf16[128,256], index: 0, kind: input, shape index: {}]
  %s1 = inlined_call_operand.vmem [shape: bf16[256,32], index: 1, kind: input, shape index: {}]
  %s2 = inlined_call_operand.vmem [shape: bf16[128,32], index: 2, kind: output, shape index: {0}]
  %s3 = inlined_call_operand.vmem [shape: f32[1,2,32], index: 3, kind: output, shape index: {1}]
  %4 = xla_tuple %s2, %s3
  %s5 = sld [smem:[#allocation0]]
  $region34: #{discriminator_forward.7} parent=0
    _
  %s7 = ssub.s32 1, %s5
  %s8 = scalar_select 0, %s7, %s5
  // Predicated region
  $region2: #{discriminator_forward.7} parent=0 // pred_check
    _
  $region3: #{discriminator_forward.7} parent=0 // pred_check_branch
    %10 = sbr.rel (0) target = $region5
  $region4: #{discriminator_forward.7} parent=0 // pred_region
    _
  $region5: #{discriminator_forward.7} parent=0 // pred_fallthru
    _
  // Predicated region
  $region6: #{discriminator_forward.7} parent=0 // pred_check
    _
  $region7: #{discriminator_forward.7} parent=0 // pred_check_branch
    %12 = sbr.rel (0) target = $region9
  $region8: #{discriminator_forward.7} parent=0 // pred_region
    _
  $region9: #{discriminator_forward.7} parent=0 // pred_fallthru
    _
  %p14 = scmp.eq.s32.totalorder 0, 0
  // Predicated region
  $region10: #{discriminator_forward.7} parent=0 // pred_check
    %p15 = pneg %p14
  $region11: #{discriminator_forward.7} parent=0 // pred_check_branch
    %17 = sbr.rel (%p15) target = $region13
  $region12: #{discriminator_forward.7} parent=0 // pred_region
    %vm18 = vcmask 261120
    %19 = vst.msk [vmem:[#allocation2] sm:$0xff] %vm18, 0.0
    %20 = vst.msk [vmem:[#allocation2 + $0x8] sm:$0xff] %vm18, 0.0
    %21 = vst.msk [vmem:[#allocation2 + $0x10] sm:$0xff] %vm18, 0.0
    %22 = vst.msk [vmem:[#allocation2 + $0x18] sm:$0xff] %vm18, 0.0
    %23 = vst.msk [vmem:[#allocation2 + $0x20] sm:$0xff] %vm18, 0.0
    %24 = vst.msk [vmem:[#allocation2 + $0x28] sm:$0xff] %vm18, 0.0
    %25 = vst.msk [vmem:[#allocation2 + $0x30] sm:$0xff] %vm18, 0.0
    %26 = vst.msk [vmem:[#allocation2 + $0x38] sm:$0xff] %vm18, 0.0
    %27 = vst.msk [vmem:[#allocation2 + $0x40] sm:$0xff] %vm18, 0.0
    %28 = vst.msk [vmem:[#allocation2 + $0x48] sm:$0xff] %vm18, 0.0
    %29 = vst.msk [vmem:[#allocation2 + $0x50] sm:$0xff] %vm18, 0.0
    %30 = vst.msk [vmem:[#allocation2 + $0x58] sm:$0xff] %vm18, 0.0
    %31 = vst.msk [vmem:[#allocation2 + $0x60] sm:$0xff] %vm18, 0.0
    %32 = vst.msk [vmem:[#allocation2 + $0x68] sm:$0xff] %vm18, 0.0
    %33 = vst.msk [vmem:[#allocation2 + $0x70] sm:$0xff] %vm18, 0.0
    %34 = vst.msk [vmem:[#allocation2 + $0x78] sm:$0xff] %vm18, 0.0
  $region13: #{discriminator_forward.7} parent=0 // pred_fallthru
    _
  %v35 = vld [vmem:[#allocation2] sm:$0xff]
  %v36 = vld [vmem:[#allocation2 + $0x8] sm:$0xff]
  %v37 = vld [vmem:[#allocation2 + $0x10] sm:$0xff]
  %v38 = vld [vmem:[#allocation2 + $0x18] sm:$0xff]
  %v39 = vld [vmem:[#allocation2 + $0x20] sm:$0xff]
  %v40 = vld [vmem:[#allocation2 + $0x28] sm:$0xff]
  %v41 = vld [vmem:[#allocation2 + $0x30] sm:$0xff]
  %v42 = vld [vmem:[#allocation2 + $0x38] sm:$0xff]
  %v43 = vld [vmem:[#allocation2 + $0x40] sm:$0xff]
  %v44 = vld [vmem:[#allocation2 + $0x48] sm:$0xff]
  %v45 = vld [vmem:[#allocation2 + $0x50] sm:$0xff]
  %v46 = vld [vmem:[#allocation2 + $0x58] sm:$0xff]
  %v47 = vld [vmem:[#allocation2 + $0x60] sm:$0xff]
  %v48 = vld [vmem:[#allocation2 + $0x68] sm:$0xff]
  %v49 = vld [vmem:[#allocation2 + $0x70] sm:$0xff]
  %v50 = vld [vmem:[#allocation2 + $0x78] sm:$0xff]
  %v51 = vld [vmem:[%s0] sm:$0xff]
  %v52 = vld [vmem:[%s0 + $0x8] sm:$0xff]
  %v53 = vld [vmem:[%s0 + $0x10] sm:$0xff]
  %v54 = vld [vmem:[%s0 + $0x18] sm:$0xff]
  %v55 = vld [vmem:[%s0 + $0x20] sm:$0xff]
  %v56 = vld [vmem:[%s0 + $0x28] sm:$0xff]
  %v57 = vld [vmem:[%s0 + $0x30] sm:$0xff]
  %v58 = vld [vmem:[%s0 + $0x38] sm:$0xff]
  %v59 = vld [vmem:[%s0 + $0x40] sm:$0xff]
  %v60 = vld [vmem:[%s0 + $0x48] sm:$0xff]
  %v61 = vld [vmem:[%s0 + $0x50] sm:$0xff]
  %v62 = vld [vmem:[%s0 + $0x58] sm:$0xff]
  %v63 = vld [vmem:[%s0 + $0x60] sm:$0xff]
  %v64 = vld [vmem:[%s0 + $0x68] sm:$0xff]
  %v65 = vld [vmem:[%s0 + $0x70] sm:$0xff]
  %v66 = vld [vmem:[%s0 + $0x78] sm:$0xff]
  %v67 = vld [vmem:[%s1] sm:$0xf]
  %v68 = vld [vmem:[%s1 + $0x4] sm:$0xf]
  %v69 = vld [vmem:[%s1 + $0x8] sm:$0xf]
  %v70 = vld [vmem:[%s1 + $0xc] sm:$0xf]
  %v71 = vld [vmem:[%s1 + $0x10] sm:$0xf]
  %v72 = vld [vmem:[%s1 + $0x14] sm:$0xf]
  %v73 = vld [vmem:[%s1 + $0x18] sm:$0xf]
  %v74 = vld [vmem:[%s1 + $0x1c] sm:$0xf]
  %v75 = vld [vmem:[%s1 + $0x20] sm:$0xf]
  %v76 = vld [vmem:[%s1 + $0x24] sm:$0xf]
  %v77 = vld [vmem:[%s1 + $0x28] sm:$0xf]
  %v78 = vld [vmem:[%s1 + $0x2c] sm:$0xf]
  %v79 = vld [vmem:[%s1 + $0x30] sm:$0xf]
  %v80 = vld [vmem:[%s1 + $0x34] sm:$0xf]
  %v81 = vld [vmem:[%s1 + $0x38] sm:$0xf]
  %v82 = vld [vmem:[%s1 + $0x3c] sm:$0xf]
  %v83 = vld [vmem:[%s1 + $0x40] sm:$0xf]
  %v84 = vld [vmem:[%s1 + $0x44] sm:$0xf]
  %v85 = vld [vmem:[%s1 + $0x48] sm:$0xf]
  %v86 = vld [vmem:[%s1 + $0x4c] sm:$0xf]
  %v87 = vld [vmem:[%s1 + $0x50] sm:$0xf]
  %v88 = vld [vmem:[%s1 + $0x54] sm:$0xf]
  %v89 = vld [vmem:[%s1 + $0x58] sm:$0xf]
  %v90 = vld [vmem:[%s1 + $0x5c] sm:$0xf]
  %v91 = vld [vmem:[%s1 + $0x60] sm:$0xf]
  %v92 = vld [vmem:[%s1 + $0x64] sm:$0xf]
  %v93 = vld [vmem:[%s1 + $0x68] sm:$0xf]
  %v94 = vld [vmem:[%s1 + $0x6c] sm:$0xf]
  %v95 = vld [vmem:[%s1 + $0x70] sm:$0xf]
  %v96 = vld [vmem:[%s1 + $0x74] sm:$0xf]
  %v97 = vld [vmem:[%s1 + $0x78] sm:$0xf]
  %v98 = vld [vmem:[%s1 + $0x7c] sm:$0xf]
  %v115 = vunpack.c.l.b16 %v51
  %v116 = vunpack.c.h.b16 %v51
  %v117 = vunpack.c.l.b16 %v52
  %v118 = vunpack.c.h.b16 %v52
  %v119 = vunpack.c.l.b16 %v53
  %v120 = vunpack.c.h.b16 %v53
  %v121 = vunpack.c.l.b16 %v54
  %v122 = vunpack.c.h.b16 %v54
  %v123 = vunpack.c.l.b16 %v55
  %v124 = vunpack.c.h.b16 %v55
  %v125 = vunpack.c.l.b16 %v56
  %v126 = vunpack.c.h.b16 %v56
  %v127 = vunpack.c.l.b16 %v57
  %v128 = vunpack.c.h.b16 %v57
  %v129 = vunpack.c.l.b16 %v58
  %v130 = vunpack.c.h.b16 %v58
  %v131 = vunpack.c.l.b16 %v59
  %v132 = vunpack.c.h.b16 %v59
  %v133 = vunpack.c.l.b16 %v60
  %v134 = vunpack.c.h.b16 %v60
  %v135 = vunpack.c.l.b16 %v61
  %v136 = vunpack.c.h.b16 %v61
  %v137 = vunpack.c.l.b16 %v62
  %v138 = vunpack.c.h.b16 %v62
  %v139 = vunpack.c.l.b16 %v63
  %v140 = vunpack.c.h.b16 %v63
  %v141 = vunpack.c.l.b16 %v64
  %v142 = vunpack.c.h.b16 %v64
  %v143 = vunpack.c.l.b16 %v65
  %v144 = vunpack.c.h.b16 %v65
  %v145 = vunpack.c.l.b16 %v66
  %v146 = vunpack.c.h.b16 %v66
  %v147 = vpack.c.b16 %v117, %v115
  %v148 = vpack.c.b16 %v118, %v116
  %v149 = vpack.c.b16 %v121, %v119
  %v150 = vpack.c.b16 %v122, %v120
  %v151 = vpack.c.b16 %v125, %v123
  %v152 = vpack.c.b16 %v126, %v124
  %v153 = vpack.c.b16 %v129, %v127
  %v154 = vpack.c.b16 %v130, %v128
  %v155 = vpack.c.b16 %v133, %v131
  %v156 = vpack.c.b16 %v134, %v132
  %v157 = vpack.c.b16 %v137, %v135
  %v158 = vpack.c.b16 %v138, %v136
  %v159 = vpack.c.b16 %v141, %v139
  %v160 = vpack.c.b16 %v142, %v140
  %v161 = vpack.c.b16 %v145, %v143
  %v162 = vpack.c.b16 %v146, %v144
  %v211 = vunpack.c.l.b16 %v67
  %v212 = vunpack.c.l.b16 %v68
  %v213 = vunpack.c.l.b16 %v69
  %v214 = vunpack.c.l.b16 %v70
  %v215 = vunpack.c.l.b16 %v71
  %v216 = vunpack.c.l.b16 %v72
  %v217 = vunpack.c.l.b16 %v73
  %v218 = vunpack.c.l.b16 %v74
  %v219 = vunpack.c.l.b16 %v75
  %v220 = vunpack.c.l.b16 %v76
  %v221 = vunpack.c.l.b16 %v77
  %v222 = vunpack.c.l.b16 %v78
  %v223 = vunpack.c.l.b16 %v79
  %v224 = vunpack.c.l.b16 %v80
  %v225 = vunpack.c.l.b16 %v81
  %v226 = vunpack.c.l.b16 %v82
  %v227 = vunpack.c.l.b16 %v83
  %v228 = vunpack.c.l.b16 %v84
  %v229 = vunpack.c.l.b16 %v85
  %v230 = vunpack.c.l.b16 %v86
  %v231 = vunpack.c.l.b16 %v87
  %v232 = vunpack.c.l.b16 %v88
  %v233 = vunpack.c.l.b16 %v89
  %v234 = vunpack.c.l.b16 %v90
  %v235 = vunpack.c.l.b16 %v91
  %v236 = vunpack.c.l.b16 %v92
  %v237 = vunpack.c.l.b16 %v93
  %v238 = vunpack.c.l.b16 %v94
  %v239 = vunpack.c.l.b16 %v95
  %v240 = vunpack.c.l.b16 %v96
  %v241 = vunpack.c.l.b16 %v97
  %v242 = vunpack.c.l.b16 %v98
  %v243 = vpack.c.b16 %v212, %v211
  %v244 = vpack.c.b16 %v214, %v213
  %v245 = vpack.c.b16 %v216, %v215
  %v246 = vpack.c.b16 %v218, %v217
  %v247 = vpack.c.b16 %v220, %v219
  %v248 = vpack.c.b16 %v222, %v221
  %v249 = vpack.c.b16 %v224, %v223
  %v250 = vpack.c.b16 %v226, %v225
  %v251 = vpack.c.b16 %v228, %v227
  %v252 = vpack.c.b16 %v230, %v229
  %v253 = vpack.c.b16 %v232, %v231
  %v254 = vpack.c.b16 %v234, %v233
  %v255 = vpack.c.b16 %v236, %v235
  %v256 = vpack.c.b16 %v238, %v237
  %v257 = vpack.c.b16 %v240, %v239
  %v258 = vpack.c.b16 %v242, %v241
  %275 = vmatprep.subr.bf16.mxu0 0
  %276 = vmatpush1.bf16.msra.mxu0 %v243
  %277 = vmatprep.subr.bf16.mxu0 0
  %278 = vmatpush1.bf16.msra.mxu0 %v244
  %279 = vmatprep.subr.bf16.mxu0 0
  %280 = vmatpush1.bf16.msra.mxu0 %v245
  %281 = vmatprep.subr.bf16.mxu0 0
  %282 = vmatpush1.bf16.msra.mxu0 %v246
  %283 = vmatprep.subr.bf16.mxu0 0
  %284 = vmatpush1.bf16.msra.mxu0 %v247
  %285 = vmatprep.subr.bf16.mxu0 0
  %286 = vmatpush1.bf16.msra.mxu0 %v248
  %287 = vmatprep.subr.bf16.mxu0 0
  %288 = vmatpush1.bf16.msra.mxu0 %v249
  %289 = vmatprep.subr.bf16.mxu0 0
  %290 = vmatpush1.bf16.msra.mxu0 %v250
  %291 = vmatprep.subr.bf16.mxu0 0
  %292 = vmatpush1.bf16.msra.mxu0 %v251
  %293 = vmatprep.subr.bf16.mxu0 0
  %294 = vmatpush1.bf16.msra.mxu0 %v252
  %295 = vmatprep.subr.bf16.mxu0 0
  %296 = vmatpush1.bf16.msra.mxu0 %v253
  %297 = vmatprep.subr.bf16.mxu0 0
  %298 = vmatpush1.bf16.msra.mxu0 %v254
  %299 = vmatprep.subr.bf16.mxu0 0
  %300 = vmatpush1.bf16.msra.mxu0 %v255
  %301 = vmatprep.subr.bf16.mxu0 0
  %302 = vmatpush1.bf16.msra.mxu0 %v256
  %303 = vmatprep.subr.bf16.mxu0 0
  %304 = vmatpush1.bf16.msra.mxu0 %v257
  %305 = vmatprep.subr.bf16.mxu0 0
  %306 = vmatpush1.bf16.msra.mxu0 %v258
  %307 = vmatprep.mubr.bf16.mxu0 %v148
  %308 = vmatmul.mubr.bf16.gmra.mrb[0].mxu0 %v147
  %v309 = vpop.f32.mrb[0].mxu0
  %v310 = vadd.f32 0.0, %v309
  %v311 = vpop.f32.mrb[0].mxu0
  %v312 = vpop.f32.mrb[0].mxu0
  %v313 = vadd.f32 0.0, %v312
  %v314 = vpop.f32.mrb[0].mxu0
  %315 = vmatprep.mubr.bf16.mxu0 %v150
  %316 = vmatmul.mubr.bf16.gmra.mrb[0].mxu0 %v149
  %v317 = vpop.f32.mrb[0].mxu0
  %v318 = vadd.f32 0.0, %v317
  %v319 = vpop.f32.mrb[0].mxu0
  %v320 = vpop.f32.mrb[0].mxu0
  %v321 = vadd.f32 0.0, %v320
  %v322 = vpop.f32.mrb[0].mxu0
  %323 = vmatprep.mubr.bf16.mxu0 %v152
  %324 = vmatmul.mubr.bf16.gmra.mrb[0].mxu0 %v151
  %v325 = vpop.f32.mrb[0].mxu0
  %v326 = vadd.f32 0.0, %v325
  %v327 = vpop.f32.mrb[0].mxu0
  %v328 = vpop.f32.mrb[0].mxu0
  %v329 = vadd.f32 0.0, %v328
  %v330 = vpop.f32.mrb[0].mxu0
  %331 = vmatprep.mubr.bf16.mxu0 %v154
  %332 = vmatmul.mubr.bf16.gmra.mrb[0].mxu0 %v153
  %v333 = vpop.f32.mrb[0].mxu0
  %v334 = vadd.f32 0.0, %v333
  %v335 = vpop.f32.mrb[0].mxu0
  %v336 = vpop.f32.mrb[0].mxu0
  %v337 = vadd.f32 0.0, %v336
  %v338 = vpop.f32.mrb[0].mxu0
  %339 = vmatprep.mubr.bf16.mxu0 %v156
  %340 = vmatmul.mubr.bf16.gmra.mrb[0].mxu0 %v155
  %v341 = vpop.f32.mrb[0].mxu0
  %v342 = vadd.f32 0.0, %v341
  %v343 = vpop.f32.mrb[0].mxu0
  %v344 = vpop.f32.mrb[0].mxu0
  %v345 = vadd.f32 0.0, %v344
  %v346 = vpop.f32.mrb[0].mxu0
  %347 = vmatprep.mubr.bf16.mxu0 %v158
  %348 = vmatmul.mubr.bf16.gmra.mrb[0].mxu0 %v157
  %v349 = vpop.f32.mrb[0].mxu0
  %v350 = vadd.f32 0.0, %v349
  %v351 = vpop.f32.mrb[0].mxu0
  %v352 = vpop.f32.mrb[0].mxu0
  %v353 = vadd.f32 0.0, %v352
  %v354 = vpop.f32.mrb[0].mxu0
  %355 = vmatprep.mubr.bf16.mxu0 %v160
  %356 = vmatmul.mubr.bf16.gmra.mrb[0].mxu0 %v159
  %v357 = vpop.f32.mrb[0].mxu0
  %v358 = vadd.f32 0.0, %v357
  %v359 = vpop.f32.mrb[0].mxu0
  %v360 = vpop.f32.mrb[0].mxu0
  %v361 = vadd.f32 0.0, %v360
  %v362 = vpop.f32.mrb[0].mxu0
  %363 = vmatprep.mubr.bf16.mxu0 %v162
  %364 = vmatmul.mubr.bf16.gmra.mrb[0].mxu0 %v161
  %v365 = vpop.f32.mrb[0].mxu0
  %v366 = vadd.f32 0.0, %v365
  %v367 = vpop.f32.mrb[0].mxu0
  %v368 = vpop.f32.mrb[0].mxu0
  %v369 = vadd.f32 0.0, %v368
  %v370 = vpop.f32.mrb[0].mxu0
  %371 = vdwg.mxu0
  %v372 = vadd.f32 %v35, %v310
  %v373 = vadd.f32 %v36, %v313
  %v374 = vadd.f32 %v37, %v318
  %v375 = vadd.f32 %v38, %v321
  %v376 = vadd.f32 %v39, %v326
  %v377 = vadd.f32 %v40, %v329
  %v378 = vadd.f32 %v41, %v334
  %v379 = vadd.f32 %v42, %v337
  %v380 = vadd.f32 %v43, %v342
  %v381 = vadd.f32 %v44, %v345
  %v382 = vadd.f32 %v45, %v350
  %v383 = vadd.f32 %v46, %v353
  %v384 = vadd.f32 %v47, %v358
  %v385 = vadd.f32 %v48, %v361
  %v386 = vadd.f32 %v49, %v366
  %v387 = vadd.f32 %v50, %v369
  %vm388 = vcmask 261120
  %389 = vst.msk [vmem:[#allocation2] sm:$0xff] %vm388, %v372
  %390 = vst.msk [vmem:[#allocation2 + $0x8] sm:$0xff] %vm388, %v373
  %391 = vst.msk [vmem:[#allocation2 + $0x10] sm:$0xff] %vm388, %v374
  %392 = vst.msk [vmem:[#allocation2 + $0x18] sm:$0xff] %vm388, %v375
  %393 = vst.msk [vmem:[#allocation2 + $0x20] sm:$0xff] %vm388, %v376
  %394 = vst.msk [vmem:[#allocation2 + $0x28] sm:$0xff] %vm388, %v377
  %395 = vst.msk [vmem:[#allocation2 + $0x30] sm:$0xff] %vm388, %v378
  %396 = vst.msk [vmem:[#allocation2 + $0x38] sm:$0xff] %vm388, %v379
  %397 = vst.msk [vmem:[#allocation2 + $0x40] sm:$0xff] %vm388, %v380
  %398 = vst.msk [vmem:[#allocation2 + $0x48] sm:$0xff] %vm388, %v381
  %399 = vst.msk [vmem:[#allocation2 + $0x50] sm:$0xff] %vm388, %v382
  %400 = vst.msk [vmem:[#allocation2 + $0x58] sm:$0xff] %vm388, %v383
  %401 = vst.msk [vmem:[#allocation2 + $0x60] sm:$0xff] %vm388, %v384
  %402 = vst.msk [vmem:[#allocation2 + $0x68] sm:$0xff] %vm388, %v385
  %403 = vst.msk [vmem:[#allocation2 + $0x70] sm:$0xff] %vm388, %v386
  %404 = vst.msk [vmem:[#allocation2 + $0x78] sm:$0xff] %vm388, %v387
  // Predicated region
  $region14: #{discriminator_forward.7} parent=0 // pred_check
    %p405 = pneg %p14
  $region15: #{discriminator_forward.7} parent=0 // pred_check_branch
    %407 = sbr.rel (%p405) target = $region17
  $region16: #{discriminator_forward.7} parent=0 // pred_region
    %v408 = vld [vmem:[#allocation2] sm:$0xff]
    %v409 = vld [vmem:[#allocation2 + $0x8] sm:$0xff]
    %v410 = vld [vmem:[#allocation2 + $0x10] sm:$0xff]
    %v411 = vld [vmem:[#allocation2 + $0x18] sm:$0xff]
    %v412 = vld [vmem:[#allocation2 + $0x20] sm:$0xff]
    %v413 = vld [vmem:[#allocation2 + $0x28] sm:$0xff]
    %v414 = vld [vmem:[#allocation2 + $0x30] sm:$0xff]
    %v415 = vld [vmem:[#allocation2 + $0x38] sm:$0xff]
    %v416 = vld [vmem:[#allocation2 + $0x40] sm:$0xff]
    %v417 = vld [vmem:[#allocation2 + $0x48] sm:$0xff]
    %v418 = vld [vmem:[#allocation2 + $0x50] sm:$0xff]
    %v419 = vld [vmem:[#allocation2 + $0x58] sm:$0xff]
    %v420 = vld [vmem:[#allocation2 + $0x60] sm:$0xff]
    %v421 = vld [vmem:[#allocation2 + $0x68] sm:$0xff]
    %v422 = vld [vmem:[#allocation2 + $0x70] sm:$0xff]
    %v423 = vld [vmem:[#allocation2 + $0x78] sm:$0xff]
    %v424 = vpack.c.bf16 %v409, %v408
    %v425 = vpack.c.bf16 %v411, %v410
    %v426 = vpack.c.bf16 %v413, %v412
    %v427 = vpack.c.bf16 %v415, %v414
    %v428 = vpack.c.bf16 %v417, %v416
    %v429 = vpack.c.bf16 %v419, %v418
    %v430 = vpack.c.bf16 %v421, %v420
    %v431 = vpack.c.bf16 %v423, %v422
    %v440 = vunpack.c.l.b16 %v424
    %v441 = vunpack.c.h.b16 %v424
    %v442 = vunpack.c.l.b16 %v425
    %v443 = vunpack.c.h.b16 %v425
    %v444 = vunpack.c.l.b16 %v426
    %v445 = vunpack.c.h.b16 %v426
    %v446 = vunpack.c.l.b16 %v427
    %v447 = vunpack.c.h.b16 %v427
    %v448 = vunpack.c.l.b16 %v428
    %v449 = vunpack.c.h.b16 %v428
    %v450 = vunpack.c.l.b16 %v429
    %v451 = vunpack.c.h.b16 %v429
    %v452 = vunpack.c.l.b16 %v430
    %v453 = vunpack.c.h.b16 %v430
    %v454 = vunpack.c.l.b16 %v431
    %v455 = vunpack.c.h.b16 %v431
    %v456 = vpack.c.b16 %v440, %v440
    %v457 = vpack.c.b16 %v441, %v441
    %v458 = vpack.c.b16 %v442, %v442
    %v459 = vpack.c.b16 %v443, %v443
    %v460 = vpack.c.b16 %v444, %v444
    %v461 = vpack.c.b16 %v445, %v445
    %v462 = vpack.c.b16 %v446, %v446
    %v463 = vpack.c.b16 %v447, %v447
    %v464 = vpack.c.b16 %v448, %v448
    %v465 = vpack.c.b16 %v449, %v449
    %v466 = vpack.c.b16 %v450, %v450
    %v467 = vpack.c.b16 %v451, %v451
    %v468 = vpack.c.b16 %v452, %v452
    %v469 = vpack.c.b16 %v453, %v453
    %v470 = vpack.c.b16 %v454, %v454
    %v471 = vpack.c.b16 %v455, %v455
    %vm488 = vcmask 257024
    %489 = vst.msk [vmem:[%s2] sm:$0xf] %vm488, %v456
    %490 = vst.msk [vmem:[%s2 + $0x4] sm:$0xf] %vm488, %v457
    %491 = vst.msk [vmem:[%s2 + $0x8] sm:$0xf] %vm488, %v458
    %492 = vst.msk [vmem:[%s2 + $0xc] sm:$0xf] %vm488, %v459
    %493 = vst.msk [vmem:[%s2 + $0x10] sm:$0xf] %vm488, %v460
    %494 = vst.msk [vmem:[%s2 + $0x14] sm:$0xf] %vm488, %v461
    %495 = vst.msk [vmem:[%s2 + $0x18] sm:$0xf] %vm488, %v462
    %496 = vst.msk [vmem:[%s2 + $0x1c] sm:$0xf] %vm488, %v463
    %497 = vst.msk [vmem:[%s2 + $0x20] sm:$0xf] %vm488, %v464
    %498 = vst.msk [vmem:[%s2 + $0x24] sm:$0xf] %vm488, %v465
    %499 = vst.msk [vmem:[%s2 + $0x28] sm:$0xf] %vm488, %v466
    %500 = vst.msk [vmem:[%s2 + $0x2c] sm:$0xf] %vm488, %v467
    %501 = vst.msk [vmem:[%s2 + $0x30] sm:$0xf] %vm488, %v468
    %502 = vst.msk [vmem:[%s2 + $0x34] sm:$0xf] %vm488, %v469
    %503 = vst.msk [vmem:[%s2 + $0x38] sm:$0xf] %vm488, %v470
    %504 = vst.msk [vmem:[%s2 + $0x3c] sm:$0xf] %vm488, %v471
    %v505 = vsel %vm388, %v408, 0.0
    %v506 = vsel %vm388, %v409, 0.0
    %v507 = vadd.f32 %v505, %v506
    %v508 = vsel %vm388, %v410, 0.0
    %v509 = vadd.f32 %v507, %v508
    %v510 = vsel %vm388, %v411, 0.0
    %v511 = vadd.f32 %v509, %v510
    %v512 = vsel %vm388, %v412, 0.0
    %v513 = vadd.f32 %v511, %v512
    %v514 = vsel %vm388, %v413, 0.0
    %v515 = vadd.f32 %v513, %v514
    %v516 = vsel %vm388, %v414, 0.0
    %v517 = vadd.f32 %v515, %v516
    %v518 = vsel %vm388, %v415, 0.0
    %v519 = vadd.f32 %v517, %v518
    %v520 = vsel %vm388, %v416, 0.0
    %v521 = vadd.f32 %v519, %v520
    %v522 = vsel %vm388, %v417, 0.0
    %v523 = vadd.f32 %v521, %v522
    %v524 = vsel %vm388, %v418, 0.0
    %v525 = vadd.f32 %v523, %v524
    %v526 = vsel %vm388, %v419, 0.0
    %v527 = vadd.f32 %v525, %v526
    %v528 = vsel %vm388, %v420, 0.0
    %v529 = vadd.f32 %v527, %v528
    %v530 = vsel %vm388, %v421, 0.0
    %v531 = vadd.f32 %v529, %v530
    %v532 = vsel %vm388, %v422, 0.0
    %v533 = vadd.f32 %v531, %v532
    %v534 = vsel %vm388, %v423, 0.0
    %v535 = vadd.f32 %v533, %v534
    %v536 = vrot.slane %v535, 4
    %v537 = vadd.f32 %v535, %v536
    %v538 = vrot.slane %v537, 2
    %v539 = vadd.f32 %v537, %v538
    %v540 = vrot.slane %v539, 1
    %v541 = vadd.f32 %v539, %v540
    %v542 = vmul.f32 %v408, %v408
    %v543 = vmul.f32 %v409, %v409
    %v544 = vmul.f32 %v410, %v410
    %v545 = vmul.f32 %v411, %v411
    %v546 = vmul.f32 %v412, %v412
    %v547 = vmul.f32 %v413, %v413
    %v548 = vmul.f32 %v414, %v414
    %v549 = vmul.f32 %v415, %v415
    %v550 = vmul.f32 %v416, %v416
    %v551 = vmul.f32 %v417, %v417
    %v552 = vmul.f32 %v418, %v418
    %v553 = vmul.f32 %v419, %v419
    %v554 = vmul.f32 %v420, %v420
    %v555 = vmul.f32 %v421, %v421
    %v556 = vmul.f32 %v422, %v422
    %v557 = vmul.f32 %v423, %v423
    %v558 = vsel %vm388, %v542, 0.0
    %v559 = vsel %vm388, %v543, 0.0
    %v560 = vadd.f32 %v558, %v559
    %v561 = vsel %vm388, %v544, 0.0
    %v562 = vadd.f32 %v560, %v561
    %v563 = vsel %vm388, %v545, 0.0
    %v564 = vadd.f32 %v562, %v563
    %v565 = vsel %vm388, %v546, 0.0
    %v566 = vadd.f32 %v564, %v565
    %v567 = vsel %vm388, %v547, 0.0
    %v568 = vadd.f32 %v566, %v567
    %v569 = vsel %vm388, %v548, 0.0
    %v570 = vadd.f32 %v568, %v569
    %v571 = vsel %vm388, %v549, 0.0
    %v572 = vadd.f32 %v570, %v571
    %v573 = vsel %vm388, %v550, 0.0
    %v574 = vadd.f32 %v572, %v573
    %v575 = vsel %vm388, %v551, 0.0
    %v576 = vadd.f32 %v574, %v575
    %v577 = vsel %vm388, %v552, 0.0
    %v578 = vadd.f32 %v576, %v577
    %v579 = vsel %vm388, %v553, 0.0
    %v580 = vadd.f32 %v578, %v579
    %v581 = vsel %vm388, %v554, 0.0
    %v582 = vadd.f32 %v580, %v581
    %v583 = vsel %vm388, %v555, 0.0
    %v584 = vadd.f32 %v582, %v583
    %v585 = vsel %vm388, %v556, 0.0
    %v586 = vadd.f32 %v584, %v585
    %v587 = vsel %vm388, %v557, 0.0
    %v588 = vadd.f32 %v586, %v587
    %v589 = vrot.slane %v588, 4
    %v590 = vadd.f32 %v588, %v589
    %v591 = vrot.slane %v590, 2
    %v592 = vadd.f32 %v590, %v591
    %v593 = vrot.slane %v592, 1
    %v594 = vadd.f32 %v592, %v593
    %vm595 = vcmask 1040384
    %v596 = vsel %vm595, %v541, %v594
    %vm597 = vcmask 254976
    %598 = vst.msk [vmem:[%s3] sm:$0x3] %vm597, %v596
  $region17: #{discriminator_forward.7} parent=0 // pred_fallthru
    _
  // Predicated region
  $region18: #{discriminator_forward.7} parent=0 // pred_check
    _
  $region19: #{discriminator_forward.7} parent=0 // pred_check_branch
    %600 = sbr.rel (0) target = $region21
  $region20: #{discriminator_forward.7} parent=0 // pred_region
    _
  $region21: #{discriminator_forward.7} parent=0 // pred_fallthru
    _
  // Predicated region
  $region22: #{discriminator_forward.7} parent=0 // pred_check
    _
  $region23: #{discriminator_forward.7} parent=0 // pred_check_branch
    %602 = sbr.rel (0) target = $region25
  $region24: #{discriminator_forward.7} parent=0 // pred_region
    _
  $region25: #{discriminator_forward.7} parent=0 // pred_fallthru
    _
  // Predicated region
  $region26: #{discriminator_forward.7} parent=0 // pred_check
    _
  $region27: #{discriminator_forward.7} parent=0 // pred_check_branch
    %604 = sbr.rel (0) target = $region29
  $region28: #{discriminator_forward.7} parent=0 // pred_region
    _
  $region29: #{discriminator_forward.7} parent=0 // pred_fallthru
    _
  // Predicated region
  $region30: #{discriminator_forward.7} parent=0 // pred_check
    _
  $region31: #{discriminator_forward.7} parent=0 // pred_check_branch
    %606 = sbr.rel (0) target = $region33
  $region32: #{discriminator_forward.7} parent=0 // pred_region
    _
  $region33: #{discriminator_forward.7} parent=0 // pred_fallthru
    _

// kernel: discriminator_forward.8
$region0: #{discriminator_forward.8}
  #allocation0 [shape = 'u32[]', space=smem, size = 0x4, offset = 0x4, fixed_abs, tag = 'smem constant byte address 0x4 - core index']
  #allocation1 [shape = 'u32[144,128]{1,0:T(1,128)}', space=vmem, size = 0x12000, scoped, tag = 'internal scratch']
  #allocation2 [shape = 'f32[32,64]{1,0:T(8,128)}', space=vmem, size = 0x4000, scoped, tag = 'scratch operand']
  %s0 = inlined_call_operand.vmem [shape: bf16[32,512], index: 0, kind: input, shape index: {}]
  %s1 = inlined_call_operand.vmem [shape: bf16[512,64], index: 1, kind: input, shape index: {}]
  %s2 = inlined_call_operand.vmem [shape: bf16[32,64], index: 2, kind: output, shape index: {0}]
  %s3 = inlined_call_operand.vmem [shape: f32[1,2,64], index: 3, kind: output, shape index: {1}]
  %4 = xla_tuple %s2, %s3
  %s5 = sld [smem:[#allocation0]]
  $region34: #{discriminator_forward.8} parent=0
    _
  %s7 = ssub.s32 1, %s5
  %s8 = scalar_select 0, %s7, %s5
  // Predicated region
  $region2: #{discriminator_forward.8} parent=0 // pred_check
    _
  $region3: #{discriminator_forward.8} parent=0 // pred_check_branch
    %10 = sbr.rel (0) target = $region5
  $region4: #{discriminator_forward.8} parent=0 // pred_region
    _
  $region5: #{discriminator_forward.8} parent=0 // pred_fallthru
    _
  // Predicated region
  $region6: #{discriminator_forward.8} parent=0 // pred_check
    _
  $region7: #{discriminator_forward.8} parent=0 // pred_check_branch
    %12 = sbr.rel (0) target = $region9
  $region8: #{discriminator_forward.8} parent=0 // pred_region
    _
  $region9: #{discriminator_forward.8} parent=0 // pred_fallthru
    _
  %p14 = scmp.eq.s32.totalorder 0, 0
  // Predicated region
  $region10: #{discriminator_forward.8} parent=0 // pred_check
    %p15 = pneg %p14
  $region11: #{discriminator_forward.8} parent=0 // pred_check_branch
    %17 = sbr.rel (%p15) target = $region13
  $region12: #{discriminator_forward.8} parent=0 // pred_region
    %vm18 = vcmask 523264
    %19 = vst.msk [vmem:[#allocation2] sm:$0xff] %vm18, 0.0
    %20 = vst.msk [vmem:[#allocation2 + $0x8] sm:$0xff] %vm18, 0.0
    %21 = vst.msk [vmem:[#allocation2 + $0x10] sm:$0xff] %vm18, 0.0
    %22 = vst.msk [vmem:[#allocation2 + $0x18] sm:$0xff] %vm18, 0.0
  $region13: #{discriminator_forward.8} parent=0 // pred_fallthru
    _
  %v23 = vld [vmem:[#allocation2] sm:$0xff]
  %v24 = vld [vmem:[#allocation2 + $0x8] sm:$0xff]
  %v25 = vld [vmem:[#allocation2 + $0x10] sm:$0xff]
  %v26 = vld [vmem:[#allocation2 + $0x18] sm:$0xff]
  %v27 = vld [vmem:[%s0] sm:$0xff]
  %v28 = vld [vmem:[%s0 + $0x8] sm:$0xff]
  %v29 = vld [vmem:[%s0 + $0x10] sm:$0xff]
  %v30 = vld [vmem:[%s0 + $0x18] sm:$0xff]
  %v31 = vld [vmem:[%s0 + $0x20] sm:$0xff]
  %v32 = vld [vmem:[%s0 + $0x28] sm:$0xff]
  %v33 = vld [vmem:[%s0 + $0x30] sm:$0xff]
  %v34 = vld [vmem:[%s0 + $0x38] sm:$0xff]
  %v35 = vld [vmem:[%s1] sm:$0xf]
  %v36 = vld [vmem:[%s1 + $0x4] sm:$0xf]
  %v37 = vld [vmem:[%s1 + $0x8] sm:$0xf]
  %v38 = vld [vmem:[%s1 + $0xc] sm:$0xf]
  %v39 = vld [vmem:[%s1 + $0x10] sm:$0xf]
  %v40 = vld [vmem:[%s1 + $0x14] sm:$0xf]
  %v41 = vld [vmem:[%s1 + $0x18] sm:$0xf]
  %v42 = vld [vmem:[%s1 + $0x1c] sm:$0xf]
  %v43 = vld [vmem:[%s1 + $0x20] sm:$0xf]
  %v44 = vld [vmem:[%s1 + $0x24] sm:$0xf]
  %v45 = vld [vmem:[%s1 + $0x28] sm:$0xf]
  %v46 = vld [vmem:[%s1 + $0x2c] sm:$0xf]
  %v47 = vld [vmem:[%s1 + $0x30] sm:$0xf]
  %v48 = vld [vmem:[%s1 + $0x34] sm:$0xf]
  %v49 = vld [vmem:[%s1 + $0x38] sm:$0xf]
  %v50 = vld [vmem:[%s1 + $0x3c] sm:$0xf]
  %v51 = vld [vmem:[%s1 + $0x40] sm:$0xf]
  %v52 = vld [vmem:[%s1 + $0x44] sm:$0xf]
  %v53 = vld [vmem:[%s1 + $0x48] sm:$0xf]
  %v54 = vld [vmem:[%s1 + $0x4c] sm:$0xf]
  %v55 = vld [vmem:[%s1 + $0x50] sm:$0xf]
  %v56 = vld [vmem:[%s1 + $0x54] sm:$0xf]
  %v57 = vld [vmem:[%s1 + $0x58] sm:$0xf]
  %v58 = vld [vmem:[%s1 + $0x5c] sm:$0xf]
  %v59 = vld [vmem:[%s1 + $0x60] sm:$0xf]
  %v60 = vld [vmem:[%s1 + $0x64] sm:$0xf]
  %v61 = vld [vmem:[%s1 + $0x68] sm:$0xf]
  %v62 = vld [vmem:[%s1 + $0x6c] sm:$0xf]
  %v63 = vld [vmem:[%s1 + $0x70] sm:$0xf]
  %v64 = vld [vmem:[%s1 + $0x74] sm:$0xf]
  %v65 = vld [vmem:[%s1 + $0x78] sm:$0xf]
  %v66 = vld [vmem:[%s1 + $0x7c] sm:$0xf]
  %v67 = vld [vmem:[%s1 + $0x80] sm:$0xf]
  %v68 = vld [vmem:[%s1 + $0x84] sm:$0xf]
  %v69 = vld [vmem:[%s1 + $0x88] sm:$0xf]
  %v70 = vld [vmem:[%s1 + $0x8c] sm:$0xf]
  %v71 = vld [vmem:[%s1 + $0x90] sm:$0xf]
  %v72 = vld [vmem:[%s1 + $0x94] sm:$0xf]
  %v73 = vld [vmem:[%s1 + $0x98] sm:$0xf]
  %v74 = vld [vmem:[%s1 + $0x9c] sm:$0xf]
  %v75 = vld [vmem:[%s1 + $0xa0] sm:$0xf]
  %v76 = vld [vmem:[%s1 + $0xa4] sm:$0xf]
  %v77 = vld [vmem:[%s1 + $0xa8] sm:$0xf]
  %v78 = vld [vmem:[%s1 + $0xac] sm:$0xf]
  %v79 = vld [vmem:[%s1 + $0xb0] sm:$0xf]
  %v80 = vld [vmem:[%s1 + $0xb4] sm:$0xf]
  %v81 = vld [vmem:[%s1 + $0xb8] sm:$0xf]
  %v82 = vld [vmem:[%s1 + $0xbc] sm:$0xf]
  %v83 = vld [vmem:[%s1 + $0xc0] sm:$0xf]
  %v84 = vld [vmem:[%s1 + $0xc4] sm:$0xf]
  %v85 = vld [vmem:[%s1 + $0xc8] sm:$0xf]
  %v86 = vld [vmem:[%s1 + $0xcc] sm:$0xf]
  %v87 = vld [vmem:[%s1 + $0xd0] sm:$0xf]
  %v88 = vld [vmem:[%s1 + $0xd4] sm:$0xf]
  %v89 = vld [vmem:[%s1 + $0xd8] sm:$0xf]
  %v90 = vld [vmem:[%s1 + $0xdc] sm:$0xf]
  %v91 = vld [vmem:[%s1 + $0xe0] sm:$0xf]
  %v92 = vld [vmem:[%s1 + $0xe4] sm:$0xf]
  %v93 = vld [vmem:[%s1 + $0xe8] sm:$0xf]
  %v94 = vld [vmem:[%s1 + $0xec] sm:$0xf]
  %v95 = vld [vmem:[%s1 + $0xf0] sm:$0xf]
  %v96 = vld [vmem:[%s1 + $0xf4] sm:$0xf]
  %v97 = vld [vmem:[%s1 + $0xf8] sm:$0xf]
  %v98 = vld [vmem:[%s1 + $0xfc] sm:$0xf]
  %v107 = vunpack.c.l.b16 %v27
  %v108 = vunpack.c.h.b16 %v27
  %v109 = vunpack.c.l.b16 %v28
  %v110 = vunpack.c.h.b16 %v28
  %v111 = vunpack.c.l.b16 %v29
  %v112 = vunpack.c.h.b16 %v29
  %v113 = vunpack.c.l.b16 %v30
  %v114 = vunpack.c.h.b16 %v30
  %v115 = vunpack.c.l.b16 %v31
  %v116 = vunpack.c.h.b16 %v31
  %v117 = vunpack.c.l.b16 %v32
  %v118 = vunpack.c.h.b16 %v32
  %v119 = vunpack.c.l.b16 %v33
  %v120 = vunpack.c.h.b16 %v33
  %v121 = vunpack.c.l.b16 %v34
  %v122 = vunpack.c.h.b16 %v34
  %v123 = vpack.c.b16 %v111, %v107
  %v124 = vpack.c.b16 %v112, %v108
  %v125 = vpack.c.b16 %v113, %v109
  %v126 = vpack.c.b16 %v114, %v110
  %v127 = vpack.c.b16 %v119, %v115
  %v128 = vpack.c.b16 %v120, %v116
  %v129 = vpack.c.b16 %v121, %v117
  %v130 = vpack.c.b16 %v122, %v118
  %v203 = vunpack.c.l.b16 %v35
  %v204 = vunpack.c.l.b16 %v36
  %v205 = vunpack.c.l.b16 %v37
  %v206 = vunpack.c.l.b16 %v38
  %v207 = vunpack.c.l.b16 %v39
  %v208 = vunpack.c.l.b16 %v40
  %v209 = vunpack.c.l.b16 %v41
  %v210 = vunpack.c.l.b16 %v42
  %v211 = vunpack.c.l.b16 %v43
  %v212 = vunpack.c.l.b16 %v44
  %v213 = vunpack.c.l.b16 %v45
  %v214 = vunpack.c.l.b16 %v46
  %v215 = vunpack.c.l.b16 %v47
  %v216 = vunpack.c.l.b16 %v48
  %v217 = vunpack.c.l.b16 %v49
  %v218 = vunpack.c.l.b16 %v50
  %v219 = vunpack.c.l.b16 %v51
  %v220 = vunpack.c.l.b16 %v52
  %v221 = vunpack.c.l.b16 %v53
  %v222 = vunpack.c.l.b16 %v54
  %v223 = vunpack.c.l.b16 %v55
  %v224 = vunpack.c.l.b16 %v56
  %v225 = vunpack.c.l.b16 %v57
  %v226 = vunpack.c.l.b16 %v58
  %v227 = vunpack.c.l.b16 %v59
  %v228 = vunpack.c.l.b16 %v60
  %v229 = vunpack.c.l.b16 %v61
  %v230 = vunpack.c.l.b16 %v62
  %v231 = vunpack.c.l.b16 %v63
  %v232 = vunpack.c.l.b16 %v64
  %v233 = vunpack.c.l.b16 %v65
  %v234 = vunpack.c.l.b16 %v66
  %v235 = vunpack.c.l.b16 %v67
  %v236 = vunpack.c.l.b16 %v68
  %v237 = vunpack.c.l.b16 %v69
  %v238 = vunpack.c.l.b16 %v70
  %v239 = vunpack.c.l.b16 %v71
  %v240 = vunpack.c.l.b16 %v72
  %v241 = vunpack.c.l.b16 %v73
  %v242 = vunpack.c.l.b16 %v74
  %v243 = vunpack.c.l.b16 %v75
  %v244 = vunpack.c.l.b16 %v76
  %v245 = vunpack.c.l.b16 %v77
  %v246 = vunpack.c.l.b16 %v78
  %v247 = vunpack.c.l.b16 %v79
  %v248 = vunpack.c.l.b16 %v80
  %v249 = vunpack.c.l.b16 %v81
  %v250 = vunpack.c.l.b16 %v82
  %v251 = vunpack.c.l.b16 %v83
  %v252 = vunpack.c.l.b16 %v84
  %v253 = vunpack.c.l.b16 %v85
  %v254 = vunpack.c.l.b16 %v86
  %v255 = vunpack.c.l.b16 %v87
  %v256 = vunpack.c.l.b16 %v88
  %v257 = vunpack.c.l.b16 %v89
  %v258 = vunpack.c.l.b16 %v90
  %v259 = vunpack.c.l.b16 %v91
  %v260 = vunpack.c.l.b16 %v92
  %v261 = vunpack.c.l.b16 %v93
  %v262 = vunpack.c.l.b16 %v94
  %v263 = vunpack.c.l.b16 %v95
  %v264 = vunpack.c.l.b16 %v96
  %v265 = vunpack.c.l.b16 %v97
  %v266 = vunpack.c.l.b16 %v98
  %v267 = vpack.c.b16 %v204, %v203
  %v268 = vpack.c.b16 %v206, %v205
  %v269 = vpack.c.b16 %v208, %v207
  %v270 = vpack.c.b16 %v210, %v209
  %v271 = vpack.c.b16 %v212, %v211
  %v272 = vpack.c.b16 %v214, %v213
  %v273 = vpack.c.b16 %v216, %v215
  %v274 = vpack.c.b16 %v218, %v217
  %v275 = vpack.c.b16 %v220, %v219
  %v276 = vpack.c.b16 %v222, %v221
  %v277 = vpack.c.b16 %v224, %v223
  %v278 = vpack.c.b16 %v226, %v225
  %v279 = vpack.c.b16 %v228, %v227
  %v280 = vpack.c.b16 %v230, %v229
  %v281 = vpack.c.b16 %v232, %v231
  %v282 = vpack.c.b16 %v234, %v233
  %v283 = vpack.c.b16 %v236, %v235
  %v284 = vpack.c.b16 %v238, %v237
  %v285 = vpack.c.b16 %v240, %v239
  %v286 = vpack.c.b16 %v242, %v241
  %v287 = vpack.c.b16 %v244, %v243
  %v288 = vpack.c.b16 %v246, %v245
  %v289 = vpack.c.b16 %v248, %v247
  %v290 = vpack.c.b16 %v250, %v249
  %v291 = vpack.c.b16 %v252, %v251
  %v292 = vpack.c.b16 %v254, %v253
  %v293 = vpack.c.b16 %v256, %v255
  %v294 = vpack.c.b16 %v258, %v257
  %v295 = vpack.c.b16 %v260, %v259
  %v296 = vpack.c.b16 %v262, %v261
  %v297 = vpack.c.b16 %v264, %v263
  %v298 = vpack.c.b16 %v266, %v265
  %331 = vmatprep.subr.bf16.mxu0 0
  %332 = vmatpush1.bf16.msra.mxu0 %v267
  %333 = vmatprep.subr.bf16.mxu0 0
  %334 = vmatpush1.bf16.msra.mxu0 %v268
  %335 = vmatprep.subr.bf16.mxu0 0
  %336 = vmatpush1.bf16.msra.mxu0 %v269
  %337 = vmatprep.subr.bf16.mxu0 0
  %338 = vmatpush1.bf16.msra.mxu0 %v270
  %339 = vmatprep.subr.bf16.mxu0 0
  %340 = vmatpush1.bf16.msra.mxu0 %v271
  %341 = vmatprep.subr.bf16.mxu0 0
  %342 = vmatpush1.bf16.msra.mxu0 %v272
  %343 = vmatprep.subr.bf16.mxu0 0
  %344 = vmatpush1.bf16.msra.mxu0 %v273
  %345 = vmatprep.subr.bf16.mxu0 0
  %346 = vmatpush1.bf16.msra.mxu0 %v274
  %347 = vmatprep.subr.bf16.mxu0 0
  %348 = vmatpush1.bf16.msra.mxu0 %v275
  %349 = vmatprep.subr.bf16.mxu0 0
  %350 = vmatpush1.bf16.msra.mxu0 %v276
  %351 = vmatprep.subr.bf16.mxu0 0
  %352 = vmatpush1.bf16.msra.mxu0 %v277
  %353 = vmatprep.subr.bf16.mxu0 0
  %354 = vmatpush1.bf16.msra.mxu0 %v278
  %355 = vmatprep.subr.bf16.mxu0 0
  %356 = vmatpush1.bf16.msra.mxu0 %v279
  %357 = vmatprep.subr.bf16.mxu0 0
  %358 = vmatpush1.bf16.msra.mxu0 %v280
  %359 = vmatprep.subr.bf16.mxu0 0
  %360 = vmatpush1.bf16.msra.mxu0 %v281
  %361 = vmatprep.subr.bf16.mxu0 0
  %362 = vmatpush1.bf16.msra.mxu0 %v282
  %363 = vmatprep.mubr.bf16.mxu0 %v124
  %364 = vmatmul.mubr.bf16.gmra.mrb[0].mxu0 %v123
  %v365 = vpop.f32.mrb[0].mxu0
  %v366 = vadd.f32 0.0, %v365
  %v367 = vpop.f32.mrb[0].mxu0
  %v368 = vpop.f32.mrb[0].mxu0
  %v369 = vadd.f32 0.0, %v368
  %v370 = vpop.f32.mrb[0].mxu0
  %371 = vmatprep.mubr.bf16.mxu0 %v128
  %372 = vmatmul.mubr.bf16.gmra.mrb[0].mxu0 %v127
  %v373 = vpop.f32.mrb[0].mxu0
  %v374 = vadd.f32 0.0, %v373
  %v375 = vpop.f32.mrb[0].mxu0
  %v376 = vpop.f32.mrb[0].mxu0
  %v377 = vadd.f32 0.0, %v376
  %v378 = vpop.f32.mrb[0].mxu0
  %379 = vdwg.mxu0
  %380 = vmatprep.subr.bf16.mxu0 0
  %381 = vmatpush1.bf16.msra.mxu0 %v283
  %382 = vmatprep.subr.bf16.mxu0 0
  %383 = vmatpush1.bf16.msra.mxu0 %v284
  %384 = vmatprep.subr.bf16.mxu0 0
  %385 = vmatpush1.bf16.msra.mxu0 %v285
  %386 = vmatprep.subr.bf16.mxu0 0
  %387 = vmatpush1.bf16.msra.mxu0 %v286
  %388 = vmatprep.subr.bf16.mxu0 0
  %389 = vmatpush1.bf16.msra.mxu0 %v287
  %390 = vmatprep.subr.bf16.mxu0 0
  %391 = vmatpush1.bf16.msra.mxu0 %v288
  %392 = vmatprep.subr.bf16.mxu0 0
  %393 = vmatpush1.bf16.msra.mxu0 %v289
  %394 = vmatprep.subr.bf16.mxu0 0
  %395 = vmatpush1.bf16.msra.mxu0 %v290
  %396 = vmatprep.subr.bf16.mxu0 0
  %397 = vmatpush1.bf16.msra.mxu0 %v291
  %398 = vmatprep.subr.bf16.mxu0 0
  %399 = vmatpush1.bf16.msra.mxu0 %v292
  %400 = vmatprep.subr.bf16.mxu0 0
  %401 = vmatpush1.bf16.msra.mxu0 %v293
  %402 = vmatprep.subr.bf16.mxu0 0
  %403 = vmatpush1.bf16.msra.mxu0 %v294
  %404 = vmatprep.subr.bf16.mxu0 0
  %405 = vmatpush1.bf16.msra.mxu0 %v295
  %406 = vmatprep.subr.bf16.mxu0 0
  %407 = vmatpush1.bf16.msra.mxu0 %v296
  %408 = vmatprep.subr.bf16.mxu0 0
  %409 = vmatpush1.bf16.msra.mxu0 %v297
  %410 = vmatprep.subr.bf16.mxu0 0
  %411 = vmatpush1.bf16.msra.mxu0 %v298
  %412 = vmatprep.mubr.bf16.mxu0 %v126
  %413 = vmatmul.mubr.bf16.gmra.mrb[0].mxu0 %v125
  %v414 = vpop.f32.mrb[0].mxu0
  %v415 = vadd.f32 %v366, %v414
  %v416 = vpop.f32.mrb[0].mxu0
  %v417 = vpop.f32.mrb[0].mxu0
  %v418 = vadd.f32 %v369, %v417
  %v419 = vpop.f32.mrb[0].mxu0
  %420 = vmatprep.mubr.bf16.mxu0 %v130
  %421 = vmatmul.mubr.bf16.gmra.mrb[0].mxu0 %v129
  %v422 = vpop.f32.mrb[0].mxu0
  %v423 = vadd.f32 %v374, %v422
  %v424 = vpop.f32.mrb[0].mxu0
  %v425 = vpop.f32.mrb[0].mxu0
  %v426 = vadd.f32 %v377, %v425
  %v427 = vpop.f32.mrb[0].mxu0
  %428 = vdwg.mxu0
  %v429 = vadd.f32 %v23, %v415
  %v430 = vadd.f32 %v24, %v418
  %v431 = vadd.f32 %v25, %v423
  %v432 = vadd.f32 %v26, %v426
  %vm433 = vcmask 523264
  %434 = vst.msk [vmem:[#allocation2] sm:$0xff] %vm433, %v429
  %435 = vst.msk [vmem:[#allocation2 + $0x8] sm:$0xff] %vm433, %v430
  %436 = vst.msk [vmem:[#allocation2 + $0x10] sm:$0xff] %vm433, %v431
  %437 = vst.msk [vmem:[#allocation2 + $0x18] sm:$0xff] %vm433, %v432
  // Predicated region
  $region14: #{discriminator_forward.8} parent=0 // pred_check
    %p438 = pneg %p14
  $region15: #{discriminator_forward.8} parent=0 // pred_check_branch
    %440 = sbr.rel (%p438) target = $region17
  $region16: #{discriminator_forward.8} parent=0 // pred_region
    %v441 = vld [vmem:[#allocation2] sm:$0xff]
    %v442 = vld [vmem:[#allocation2 + $0x8] sm:$0xff]
    %v443 = vld [vmem:[#allocation2 + $0x10] sm:$0xff]
    %v444 = vld [vmem:[#allocation2 + $0x18] sm:$0xff]
    %v445 = vpack.c.bf16 %v442, %v441
    %v446 = vpack.c.bf16 %v444, %v443
    %v449 = vunpack.c.l.b16 %v445
    %v450 = vunpack.c.h.b16 %v445
    %v451 = vunpack.c.l.b16 %v446
    %v452 = vunpack.c.h.b16 %v446
    %v453 = vpack.c.b16 %v449, %v449
    %v454 = vpack.c.b16 %v450, %v450
    %v455 = vpack.c.b16 %v451, %v451
    %v456 = vpack.c.b16 %v452, %v452
    %vm461 = vcmask 519168
    %462 = vst.msk [vmem:[%s2] sm:$0xf] %vm461, %v453
    %463 = vst.msk [vmem:[%s2 + $0x4] sm:$0xf] %vm461, %v454
    %464 = vst.msk [vmem:[%s2 + $0x8] sm:$0xf] %vm461, %v455
    %465 = vst.msk [vmem:[%s2 + $0xc] sm:$0xf] %vm461, %v456
    %v466 = vsel %vm433, %v441, 0.0
    %v467 = vsel %vm433, %v442, 0.0
    %v468 = vadd.f32 %v466, %v467
    %v469 = vsel %vm433, %v443, 0.0
    %v470 = vadd.f32 %v468, %v469
    %v471 = vsel %vm433, %v444, 0.0
    %v472 = vadd.f32 %v470, %v471
    %v473 = vrot.slane %v472, 4
    %v474 = vadd.f32 %v472, %v473
    %v475 = vrot.slane %v474, 2
    %v476 = vadd.f32 %v474, %v475
    %v477 = vrot.slane %v476, 1
    %v478 = vadd.f32 %v476, %v477
    %v479 = vmul.f32 %v441, %v441
    %v480 = vmul.f32 %v442, %v442
    %v481 = vmul.f32 %v443, %v443
    %v482 = vmul.f32 %v444, %v444
    %v483 = vsel %vm433, %v479, 0.0
    %v484 = vsel %vm433, %v480, 0.0
    %v485 = vadd.f32 %v483, %v484
    %v486 = vsel %vm433, %v481, 0.0
    %v487 = vadd.f32 %v485, %v486
    %v488 = vsel %vm433, %v482, 0.0
    %v489 = vadd.f32 %v487, %v488
    %v490 = vrot.slane %v489, 4
    %v491 = vadd.f32 %v489, %v490
    %v492 = vrot.slane %v491, 2
    %v493 = vadd.f32 %v491, %v492
    %v494 = vrot.slane %v493, 1
    %v495 = vadd.f32 %v493, %v494
    %vm496 = vcmask 1040384
    %v497 = vsel %vm496, %v478, %v495
    %vm498 = vcmask 517120
    %499 = vst.msk [vmem:[%s3] sm:$0x3] %vm498, %v497
  $region17: #{discriminator_forward.8} parent=0 // pred_fallthru
    _
  // Predicated region
  $region18: #{discriminator_forward.8} parent=0 // pred_check
    _
  $region19: #{discriminator_forward.8} parent=0 // pred_check_branch
    %501 = sbr.rel (0) target = $region21
  $region20: #{discriminator_forward.8} parent=0 // pred_region
    _
  $region21: #{discriminator_forward.8} parent=0 // pred_fallthru
    _
  // Predicated region
  $region22: #{discriminator_forward.8} parent=0 // pred_check
    _
  $region23: #{discriminator_forward.8} parent=0 // pred_check_branch
    %503 = sbr.rel (0) target = $region25
  $region24: #{discriminator_forward.8} parent=0 // pred_region
    _
  $region25: #{discriminator_forward.8} parent=0 // pred_fallthru
    _
  // Predicated region
  $region26: #{discriminator_forward.8} parent=0 // pred_check
    _
  $region27: #{discriminator_forward.8} parent=0 // pred_check_branch
    %505 = sbr.rel (0) target = $region29
  $region28: #{discriminator_forward.8} parent=0 // pred_region
    _
  $region29: #{discriminator_forward.8} parent=0 // pred_fallthru
    _
  // Predicated region
  $region30: #{discriminator_forward.8} parent=0 // pred_check
    _
  $region31: #{discriminator_forward.8} parent=0 // pred_check_branch
    %507 = sbr.rel (0) target = $region33
  $region32: #{discriminator_forward.8} parent=0 // pred_region
    _
  $region33: #{discriminator_forward.8} parent=0 // pred_fallthru
    _

// kernel: discriminator_forward.9
$region0: #{discriminator_forward.9}
  #allocation0 [shape = 'u32[]', space=smem, size = 0x4, offset = 0x4, fixed_abs, tag = 'smem constant byte address 0x4 - core index']
  #allocation1 [shape = 'u32[144,128]{1,0:T(1,128)}', space=vmem, size = 0x12000, scoped, tag = 'internal scratch']
  #allocation2 [shape = 'f32[16,1]{1,0:T(8,128)}', space=vmem, size = 0x2000, scoped, tag = 'scratch operand']
  %s0 = inlined_call_operand.vmem [shape: bf16[16,1024], index: 0, kind: input, shape index: {}]
  %s1 = inlined_call_operand.vmem [shape: bf16[1024,1], index: 1, kind: input, shape index: {}]
  %s2 = inlined_call_operand.vmem [shape: f32[16,1], index: 2, kind: output, shape index: {}]
  %s3 = sld [smem:[#allocation0]]
  $region72: #{discriminator_forward.9} parent=0
    _
  %s5 = ssub.s32 1, %s3
  %s6 = scalar_select 0, %s5, %s3
  $region1: #{discriminator_forward.9} parent=0
    #allocation3 [shape = 'u8[32768]{0}', space=vmem, size = 0x8000, scoped, tag = 'input window, operand 0']
    loop: start=0, step=1, limit=4
    $region2: #{discriminator_forward.9} parent=1 // loop_pre_header
      _
    $region3: #{discriminator_forward.9} parent=1 // loop_header
      %s8 = sphi 0, %s12
      %p9 = scmp.ge.s32.totalorder %s8, 4
      %s15 = sphi 0, %s27
      %s16 = sphi 0, %s23
      %s17 = sphi 0, %s15
      %s18 = sphi 0, %s16
      %s19 = sphi 0, %s17
      %s20 = sphi 0, %s18
      %s32 = sphi 0, %s34
      %s35 = sphi 0, %s32
      %s36 = sphi 0, %s35
      %s52 = sphi 0, %s36
      %s58 = sphi 0, %s60
      %s61 = sphi 0, %s58
      %s62 = sphi 0, %s61
      %s78 = sphi 0, %s62
      %s84 = sphi 0, %s86
      %s87 = sphi 0, %s84
      %s88 = sphi 0, %s87
      %s104 = sphi 0, %s88
    $region4: #{discriminator_forward.9} parent=1 // loop_header_branch
      %11 = sbr.rel (%p9) target = $region8
    $region5: #{discriminator_forward.9} parent=1 // loop_body
      %s13 = ssub.s32 %s8, 1
      %s14 = ssub.s32 %s8, 2
      %s21 = sadd.s32 1, %s16
      %p22 = scmp.ge.s32.totalorder %s21, 2
      %s23 = scalar_select %p22, 0, %s21
      %s24 = sadd.s32 1, %s15
      %s25 = scalar_select %p22, %s24, %s15
      %p26 = scmp.ge.s32.totalorder %s25, 1
      %s27 = scalar_select %p26, 0, %s25
      %s28 = ssub.s32 %s15, %s27
      %s29 = ssub.s32 %s16, %s23
      %s30 = sor.u32 %s28, %s29
      %p31 = scmp.eq.s32.totalorder %s30, 0
      %s33 = sadd.s32 %s32, 1
      %s34 = scalar_select %p31, %s32, %s33
      %p37 = pneg %p31
      %p38 = scmp.eq.s32.totalorder %s8, 1
      %p39 = por %p37, %p38
      %p40 = scmp.ne.s32.totalorder %s32, %s35
      %p41 = scmp.eq.s32.totalorder %s8, 0
      %p42 = por %p40, %p41
      %p43 = scmp.ne.s32.totalorder %s32, %s35
      %p44 = scmp.eq.s32.totalorder %s13, 1
      %p45 = por %p43, %p44
      %p46 = scmp.ne.s32.totalorder %s35, %s36
      %p47 = scmp.eq.s32.totalorder %s13, 0
      %p48 = por %p46, %p47
      %p49 = scmp.ne.s32.totalorder %s35, %s36
      %p50 = scmp.eq.s32.totalorder %s14, 1
      %p51 = por %p49, %p50
      %p53 = scmp.ne.s32.totalorder %s36, %s52
      %p54 = scmp.eq.s32.totalorder %s14, 0
      %p55 = por %p53, %p54
      %s56 = ssub.s32 %s16, %s23
      %p57 = scmp.eq.s32.totalorder %s56, 0
      %s59 = sadd.s32 %s58, 1
      %s60 = scalar_select %p57, %s58, %s59
      %p63 = pneg %p57
      %p64 = scmp.eq.s32.totalorder %s8, 1
      %p65 = por %p63, %p64
      %p66 = scmp.ne.s32.totalorder %s58, %s61
      %p67 = scmp.eq.s32.totalorder %s8, 0
      %p68 = por %p66, %p67
      %p69 = scmp.ne.s32.totalorder %s58, %s61
      %p70 = scmp.eq.s32.totalorder %s13, 1
      %p71 = por %p69, %p70
      %p72 = scmp.ne.s32.totalorder %s61, %s62
      %p73 = scmp.eq.s32.totalorder %s13, 0
      %p74 = por %p72, %p73
      %p75 = scmp.ne.s32.totalorder %s61, %s62
      %p76 = scmp.eq.s32.totalorder %s14, 1
      %p77 = por %p75, %p76
      %p79 = scmp.ne.s32.totalorder %s62, %s78
      %p80 = scmp.eq.s32.totalorder %s14, 0
      %p81 = por %p79, %p80
      %s82 = ssub.s32 %s15, %s27
      %p83 = scmp.eq.s32.totalorder %s82, 0
      %s85 = sadd.s32 %s84, 1
      %s86 = scalar_select %p83, %s84, %s85
      %p89 = pneg %p83
      %p90 = scmp.eq.s32.totalorder %s8, 1
      %p91 = por %p89, %p90
      %p92 = scmp.ne.s32.totalorder %s84, %s87
      %p93 = scmp.eq.s32.totalorder %s8, 0
      %p94 = por %p92, %p93
      %p95 = scmp.ne.s32.totalorder %s84, %s87
      %p96 = scmp.eq.s32.totalorder %s13, 1
      %p97 = por %p95, %p96
      %p98 = scmp.ne.s32.totalorder %s87, %s88
      %p99 = scmp.eq.s32.totalorder %s13, 0
      %p100 = por %p98, %p99
      %p101 = scmp.ne.s32.totalorder %s87, %s88
      %p102 = scmp.eq.s32.totalorder %s14, 1
      %p103 = por %p101, %p102
      %p105 = scmp.ne.s32.totalorder %s88, %s104
      %p106 = scmp.eq.s32.totalorder %s14, 0
      %p107 = por %p105, %p106
      %p108 = scmp.le.s32.totalorder 1, %s8
      %p109 = scmp.lt.s32.totalorder %s8, 3
      %p110 = pnand %p108, %p109
      %p111 = pneg %p110
      // Predicated region
      $region9: #{discriminator_forward.9} parent=5 // pred_check
        _
      $region10: #{discriminator_forward.9} parent=5 // pred_check_branch
        %113 = sbr.rel (%p110) target = $region12
      $region11: #{discriminator_forward.9} parent=5 // pred_region
        %s114 = ssub.s32 %s8, 1
      $region12: #{discriminator_forward.9} parent=5 // pred_fallthru
        _
      %p115 = scmp.lt.s32.totalorder %s8, 2
      // Predicated region
      $region13: #{discriminator_forward.9} parent=5 // pred_check
        %p116 = pneg %p115
      $region14: #{discriminator_forward.9} parent=5 // pred_check_branch
        %118 = sbr.rel (%p116) target = $region16
      $region15: #{discriminator_forward.9} parent=5 // pred_region
        // Predicated region
        $region17: #{discriminator_forward.9} parent=15 // pred_check
          %p119 = pneg %p42
        $region18: #{discriminator_forward.9} parent=15 // pred_check_branch
          %121 = sbr.rel (%p119) target = $region20
        $region19: #{discriminator_forward.9} parent=15 // pred_region
          %s122 = sand.u32 %s32, 1
          %s123 = sand.u32 %s32, 1
          %s124 = smul.addr %s123, 32
          %s125 = scalar_lea.vmem [#allocation3], %s124
          %s126 = smul.u32 2, %s15
          %s127 = smul.u32 4, %s16
          %s128 = smul.addr %s126, 8
          %s129 = sadd.s32 %s127, %s128
          %s130 = smul.addr %s129, 4
          %s131 = scalar_lea.vmem %s0, %s130
          // Predicated region
          $region21: #{discriminator_forward.9} parent=19 // pred_check
            _
          $region22: #{discriminator_forward.9} parent=19 // pred_check_branch
            %133 = sbr.rel (0) target = $region24
          $region23: #{discriminator_forward.9} parent=19 // pred_region
            // Predicated region
            $region25: #{discriminator_forward.9} parent=23 // pred_check
              _
            $region26: #{discriminator_forward.9} parent=23 // pred_check_branch
              %135 = sbr.rel (0) target = $region28
            $region27: #{discriminator_forward.9} parent=23 // pred_region
              loop: start=0, step=1, limit=1
              $region29: #{discriminator_forward.9} parent=27 // loop_pre_header
                _
              $region30: #{discriminator_forward.9} parent=27 // loop_header
                %s137 = sphi 0, %s141
                %p138 = scmp.ge.s32.totalorder %s137, 1
                %s142 = sphi %s131, %s131
                %s143 = sphi %s125, %s125
              $region31: #{discriminator_forward.9} parent=27 // loop_header_branch
                %140 = sbr.rel (%p138) target = $region35
              $region32: #{discriminator_forward.9} parent=27 // loop_body
                %v144 = vld [vmem:[%s142] sm:$0xff]
                %145 = vst [vmem:[%s143] sm:$0xff] %v144
                %v146 = vld [vmem:[%s142 + $0x8] sm:$0xff]
                %147 = vst [vmem:[%s143 + $0x8] sm:$0xff] %v146
                %v148 = vld [vmem:[%s142 + $0x20] sm:$0xff]
                %149 = vst [vmem:[%s143 + $0x10] sm:$0xff] %v148
                %v150 = vld [vmem:[%s142 + $0x28] sm:$0xff]
                %151 = vst [vmem:[%s143 + $0x18] sm:$0xff] %v150
              $region33: #{discriminator_forward.9} parent=27 // loop_footer
                %s141 = sadd.s32 1, %s137
              $region34: #{discriminator_forward.9} parent=27 // loop_footer_branch
                %136 = sbr.rel target = $region30
              $region35: #{discriminator_forward.9} parent=27 // loop_exit
                _
            $region28: #{discriminator_forward.9} parent=23 // pred_fallthru
              _
            // Predicated region
            $region36: #{discriminator_forward.9} parent=23 // pred_check
              _
            $region37: #{discriminator_forward.9} parent=23 // pred_check_branch
              %153 = sbr.rel target = $region39
            $region38: #{discriminator_forward.9} parent=23 // pred_region
              _
            $region39: #{discriminator_forward.9} parent=23 // pred_fallthru
              _
          $region24: #{discriminator_forward.9} parent=19 // pred_fallthru
            _
          %154 = vnop
        $region20: #{discriminator_forward.9} parent=15 // pred_fallthru
          _
        // Predicated region
        $region40: #{discriminator_forward.9} parent=15 // pred_check
          %p155 = pneg %p68
        $region41: #{discriminator_forward.9} parent=15 // pred_check_branch
          %157 = sbr.rel (%p155) target = $region43
        $region42: #{discriminator_forward.9} parent=15 // pred_region
          %s158 = smul.u32 64, %s16
          %p159 = scmp.lt.s32.totalorder %s158, 127
          %s160 = scalar_select %p159, %s158, 127
          %s161 = smul.addr %s160, 4
          %s162 = scalar_lea.vmem %s1, %s161
          %s163 = smul.u32 64, %s16
        $region43: #{discriminator_forward.9} parent=15 // pred_fallthru
          _
      $region16: #{discriminator_forward.9} parent=5 // pred_fallthru
        _
      %p164 = scmp.le.s32.totalorder 1, %s8
      %p165 = scmp.lt.s32.totalorder %s8, 3
      %p166 = pnand %p164, %p165
      %p167 = pneg %p166
      // Predicated region
      $region44: #{discriminator_forward.9} parent=5 // pred_check
        _
      $region45: #{discriminator_forward.9} parent=5 // pred_check_branch
        %169 = sbr.rel (%p166) target = $region47
      $region46: #{discriminator_forward.9} parent=5 // pred_region
        %s170 = ssub.s32 %s8, 1
        %s171 = sand.u32 %s35, 1
        %s172 = sand.u32 %s35, 1
        %s173 = smul.addr %s172, 32
        %s174 = scalar_lea.vmem [#allocation3], %s173
        // Predicated region
        $region48: #{discriminator_forward.9} parent=46 // pred_check
          %p175 = pneg %p48
        $region49: #{discriminator_forward.9} parent=46 // pred_check_branch
          %177 = sbr.rel (%p175) target = $region51
        $region50: #{discriminator_forward.9} parent=46 // pred_region
          _
        $region51: #{discriminator_forward.9} parent=46 // pred_fallthru
          _
        %s178 = sand.u32 %s35, 1
        %s179 = sand.u32 %s35, 1
        %s180 = smul.addr %s179, 32
        %s181 = scalar_lea.vmem [#allocation3], %s180
        %p182 = pneg %p48
        %p183 = pneg %p45
        %s184 = smul.u32 64, %s18
        %p185 = scmp.lt.s32.totalorder %s184, 127
        %s186 = scalar_select %p185, %s184, 127
        %s187 = smul.addr %s186, 4
        %s188 = scalar_lea.vmem %s1, %s187
        %p189 = pneg %p74
        %p190 = pneg %p71
        %p191 = pneg %p100
        %p192 = pneg %p97
        %s193 = smul.u32 2, %s17
        %p194 = scmp.lt.s32.totalorder %s193, 1
        %s195 = scalar_select %p194, %s193, 1
        %s196 = smul.addr %s195, 8
        %s197 = scalar_lea.vmem %s2, %s196
        %s198 = smul.u32 2, %s17
        %s199 = smul.u32 4, %s18
        %s200 = smul.u32 64, %s18
        %p201 = scmp.lt.s32.totalorder %s200, 127
        %s202 = scalar_select %p201, %s200, 127
        %s203 = smul.addr %s202, 4
        %s204 = scalar_lea.vmem %s1, %s203
        %s205 = smul.u32 64, %s18
        %s206 = smul.u32 2, %s17
        %p207 = scmp.lt.s32.totalorder %s206, 1
        %s208 = scalar_select %p207, %s206, 1
        %s209 = smul.addr %s208, 8
        %s210 = scalar_lea.vmem %s2, %s209
        %s211 = smul.u32 2, %s17
        %p213 = scmp.eq.s32.totalorder %s18, 0
        // Predicated region
        $region52: #{discriminator_forward.9} parent=46 // pred_check
          %p214 = pneg %p213
        $region53: #{discriminator_forward.9} parent=46 // pred_check_branch
          %216 = sbr.rel (%p214) target = $region55
        $region54: #{discriminator_forward.9} parent=46 // pred_region
          %vm217 = vcmask 7168
          %218 = vst.msk [vmem:[#allocation2] sm:$0xff] %vm217, 0.0
          %219 = vst.msk [vmem:[#allocation2 + $0x8] sm:$0xff] %vm217, 0.0
        $region55: #{discriminator_forward.9} parent=46 // pred_fallthru
          _
        %v220 = vld [vmem:[#allocation2] sm:$0xff]
        %v221 = vld [vmem:[#allocation2 + $0x8] sm:$0xff]
        %v222 = vld [vmem:[%s174] sm:$0xff]
        %v223 = vld [vmem:[%s174 + $0x8] sm:$0xff]
        %v224 = vld [vmem:[%s174 + $0x10] sm:$0xff]
        %v225 = vld [vmem:[%s174 + $0x18] sm:$0xff]
        %v226 = vld [vmem:[%s204] sm:$0xf]
        %v227 = vld [vmem:[%s204 + $0x4] sm:$0xf]
        %v228 = vld [vmem:[%s204 + $0x8] sm:$0xf]
        %v229 = vld [vmem:[%s204 + $0xc] sm:$0xf]
        %v230 = vld [vmem:[%s204 + $0x10] sm:$0xf]
        %v231 = vld [vmem:[%s204 + $0x14] sm:$0xf]
        %v232 = vld [vmem:[%s204 + $0x18] sm:$0xf]
        %v233 = vld [vmem:[%s204 + $0x1c] sm:$0xf]
        %v234 = vld [vmem:[%s204 + $0x20] sm:$0xf]
        %v235 = vld [vmem:[%s204 + $0x24] sm:$0xf]
        %v236 = vld [vmem:[%s204 + $0x28] sm:$0xf]
        %v237 = vld [vmem:[%s204 + $0x2c] sm:$0xf]
        %v238 = vld [vmem:[%s204 + $0x30] sm:$0xf]
        %v239 = vld [vmem:[%s204 + $0x34] sm:$0xf]
        %v240 = vld [vmem:[%s204 + $0x38] sm:$0xf]
        %v241 = vld [vmem:[%s204 + $0x3c] sm:$0xf]
        %v242 = vld [vmem:[%s204 + $0x40] sm:$0xf]
        %v243 = vld [vmem:[%s204 + $0x44] sm:$0xf]
        %v244 = vld [vmem:[%s204 + $0x48] sm:$0xf]
        %v245 = vld [vmem:[%s204 + $0x4c] sm:$0xf]
        %v246 = vld [vmem:[%s204 + $0x50] sm:$0xf]
        %v247 = vld [vmem:[%s204 + $0x54] sm:$0xf]
        %v248 = vld [vmem:[%s204 + $0x58] sm:$0xf]
        %v249 = vld [vmem:[%s204 + $0x5c] sm:$0xf]
        %v250 = vld [vmem:[%s204 + $0x60] sm:$0xf]
        %v251 = vld [vmem:[%s204 + $0x64] sm:$0xf]
        %v252 = vld [vmem:[%s204 + $0x68] sm:$0xf]
        %v253 = vld [vmem:[%s204 + $0x6c] sm:$0xf]
        %v254 = vld [vmem:[%s204 + $0x70] sm:$0xf]
        %v255 = vld [vmem:[%s204 + $0x74] sm:$0xf]
        %v256 = vld [vmem:[%s204 + $0x78] sm:$0xf]
        %v257 = vld [vmem:[%s204 + $0x7c] sm:$0xf]
        %v258 = vld [vmem:[%s204 + $0x80] sm:$0xf]
        %v259 = vld [vmem:[%s204 + $0x84] sm:$0xf]
        %v260 = vld [vmem:[%s204 + $0x88] sm:$0xf]
        %v261 = vld [vmem:[%s204 + $0x8c] sm:$0xf]
        %v262 = vld [vmem:[%s204 + $0x90] sm:$0xf]
        %v263 = vld [vmem:[%s204 + $0x94] sm:$0xf]
        %v264 = vld [vmem:[%s204 + $0x98] sm:$0xf]
        %v265 = vld [vmem:[%s204 + $0x9c] sm:$0xf]
        %v266 = vld [vmem:[%s204 + $0xa0] sm:$0xf]
        %v267 = vld [vmem:[%s204 + $0xa4] sm:$0xf]
        %v268 = vld [vmem:[%s204 + $0xa8] sm:$0xf]
        %v269 = vld [vmem:[%s204 + $0xac] sm:$0xf]
        %v270 = vld [vmem:[%s204 + $0xb0] sm:$0xf]
        %v271 = vld [vmem:[%s204 + $0xb4] sm:$0xf]
        %v272 = vld [vmem:[%s204 + $0xb8] sm:$0xf]
        %v273 = vld [vmem:[%s204 + $0xbc] sm:$0xf]
        %v274 = vld [vmem:[%s204 + $0xc0] sm:$0xf]
        %v275 = vld [vmem:[%s204 + $0xc4] sm:$0xf]
        %v276 = vld [vmem:[%s204 + $0xc8] sm:$0xf]
        %v277 = vld [vmem:[%s204 + $0xcc] sm:$0xf]
        %v278 = vld [vmem:[%s204 + $0xd0] sm:$0xf]
        %v279 = vld [vmem:[%s204 + $0xd4] sm:$0xf]
        %v280 = vld [vmem:[%s204 + $0xd8] sm:$0xf]
        %v281 = vld [vmem:[%s204 + $0xdc] sm:$0xf]
        %v282 = vld [vmem:[%s204 + $0xe0] sm:$0xf]
        %v283 = vld [vmem:[%s204 + $0xe4] sm:$0xf]
        %v284 = vld [vmem:[%s204 + $0xe8] sm:$0xf]
        %v285 = vld [vmem:[%s204 + $0xec] sm:$0xf]
        %v286 = vld [vmem:[%s204 + $0xf0] sm:$0xf]
        %v287 = vld [vmem:[%s204 + $0xf4] sm:$0xf]
        %v288 = vld [vmem:[%s204 + $0xf8] sm:$0xf]
        %v289 = vld [vmem:[%s204 + $0xfc] sm:$0xf]
        %v294 = vunpack.c.l.b16 %v222
        %v295 = vunpack.c.h.b16 %v222
        %v296 = vunpack.c.l.b16 %v223
        %v297 = vunpack.c.h.b16 %v223
        %v298 = vunpack.c.l.b16 %v224
        %v299 = vunpack.c.h.b16 %v224
        %v300 = vunpack.c.l.b16 %v225
        %v301 = vunpack.c.h.b16 %v225
        %v302 = vpack.c.b16 %v298, %v294
        %v303 = vpack.c.b16 %v299, %v295
        %v304 = vpack.c.b16 %v300, %v296
        %v305 = vpack.c.b16 %v301, %v297
        %v374 = vunpack.c.l.b16 %v226
        %v375 = vunpack.c.l.b16 %v227
        %v376 = vunpack.c.l.b16 %v228
        %v377 = vunpack.c.l.b16 %v229
        %v378 = vunpack.c.l.b16 %v230
        %v379 = vunpack.c.l.b16 %v231
        %v380 = vunpack.c.l.b16 %v232
        %v381 = vunpack.c.l.b16 %v233
        %v382 = vunpack.c.l.b16 %v234
        %v383 = vunpack.c.l.b16 %v235
        %v384 = vunpack.c.l.b16 %v236
        %v385 = vunpack.c.l.b16 %v237
        %v386 = vunpack.c.l.b16 %v238
        %v387 = vunpack.c.l.b16 %v239
        %v388 = vunpack.c.l.b16 %v240
        %v389 = vunpack.c.l.b16 %v241
        %v390 = vunpack.c.l.b16 %v242
        %v391 = vunpack.c.l.b16 %v243
        %v392 = vunpack.c.l.b16 %v244
        %v393 = vunpack.c.l.b16 %v245
        %v394 = vunpack.c.l.b16 %v246
        %v395 = vunpack.c.l.b16 %v247
        %v396 = vunpack.c.l.b16 %v248
        %v397 = vunpack.c.l.b16 %v249
        %v398 = vunpack.c.l.b16 %v250
        %v399 = vunpack.c.l.b16 %v251
        %v400 = vunpack.c.l.b16 %v252
        %v401 = vunpack.c.l.b16 %v253
        %v402 = vunpack.c.l.b16 %v254
        %v403 = vunpack.c.l.b16 %v255
        %v404 = vunpack.c.l.b16 %v256
        %v405 = vunpack.c.l.b16 %v257
        %v406 = vunpack.c.l.b16 %v258
        %v407 = vunpack.c.l.b16 %v259
        %v408 = vunpack.c.l.b16 %v260
        %v409 = vunpack.c.l.b16 %v261
        %v410 = vunpack.c.l.b16 %v262
        %v411 = vunpack.c.l.b16 %v263
        %v412 = vunpack.c.l.b16 %v264
        %v413 = vunpack.c.l.b16 %v265
        %v414 = vunpack.c.l.b16 %v266
        %v415 = vunpack.c.l.b16 %v267
        %v416 = vunpack.c.l.b16 %v268
        %v417 = vunpack.c.l.b16 %v269
        %v418 = vunpack.c.l.b16 %v270
        %v419 = vunpack.c.l.b16 %v271
        %v420 = vunpack.c.l.b16 %v272
        %v421 = vunpack.c.l.b16 %v273
        %v422 = vunpack.c.l.b16 %v274
        %v423 = vunpack.c.l.b16 %v275
        %v424 = vunpack.c.l.b16 %v276
        %v425 = vunpack.c.l.b16 %v277
        %v426 = vunpack.c.l.b16 %v278
        %v427 = vunpack.c.l.b16 %v279
        %v428 = vunpack.c.l.b16 %v280
        %v429 = vunpack.c.l.b16 %v281
        %v430 = vunpack.c.l.b16 %v282
        %v431 = vunpack.c.l.b16 %v283
        %v432 = vunpack.c.l.b16 %v284
        %v433 = vunpack.c.l.b16 %v285
        %v434 = vunpack.c.l.b16 %v286
        %v435 = vunpack.c.l.b16 %v287
        %v436 = vunpack.c.l.b16 %v288
        %v437 = vunpack.c.l.b16 %v289
        %v438 = vpack.c.b16 %v375, %v374
        %v439 = vpack.c.b16 %v377, %v376
        %v440 = vpack.c.b16 %v379, %v378
        %v441 = vpack.c.b16 %v381, %v380
        %v442 = vpack.c.b16 %v383, %v382
        %v443 = vpack.c.b16 %v385, %v384
        %v444 = vpack.c.b16 %v387, %v386
        %v445 = vpack.c.b16 %v389, %v388
        %v446 = vpack.c.b16 %v391, %v390
        %v447 = vpack.c.b16 %v393, %v392
        %v448 = vpack.c.b16 %v395, %v394
        %v449 = vpack.c.b16 %v397, %v396
        %v450 = vpack.c.b16 %v399, %v398
        %v451 = vpack.c.b16 %v401, %v400
        %v452 = vpack.c.b16 %v403, %v402
        %v453 = vpack.c.b16 %v405, %v404
        %v454 = vpack.c.b16 %v407, %v406
        %v455 = vpack.c.b16 %v409, %v408
        %v456 = vpack.c.b16 %v411, %v410
        %v457 = vpack.c.b16 %v413, %v412
        %v458 = vpack.c.b16 %v415, %v414
        %v459 = vpack.c.b16 %v417, %v416
        %v460 = vpack.c.b16 %v419, %v418
        %v461 = vpack.c.b16 %v421, %v420
        %v462 = vpack.c.b16 %v423, %v422
        %v463 = vpack.c.b16 %v425, %v424
        %v464 = vpack.c.b16 %v427, %v426
        %v465 = vpack.c.b16 %v429, %v428
        %v466 = vpack.c.b16 %v431, %v430
        %v467 = vpack.c.b16 %v433, %v432
        %v468 = vpack.c.b16 %v435, %v434
        %v469 = vpack.c.b16 %v437, %v436
        %502 = vmatprep.subr.bf16.mxu0 0
        %503 = vmatpush1.bf16.msra.mxu0 %v438
        %504 = vmatprep.subr.bf16.mxu0 0
        %505 = vmatpush1.bf16.msra.mxu0 %v439
        %506 = vmatprep.subr.bf16.mxu0 0
        %507 = vmatpush1.bf16.msra.mxu0 %v440
        %508 = vmatprep.subr.bf16.mxu0 0
        %509 = vmatpush1.bf16.msra.mxu0 %v441
        %510 = vmatprep.subr.bf16.mxu0 0
        %511 = vmatpush1.bf16.msra.mxu0 %v442
        %512 = vmatprep.subr.bf16.mxu0 0
        %513 = vmatpush1.bf16.msra.mxu0 %v443
        %514 = vmatprep.subr.bf16.mxu0 0
        %515 = vmatpush1.bf16.msra.mxu0 %v444
        %516 = vmatprep.subr.bf16.mxu0 0
        %517 = vmatpush1.bf16.msra.mxu0 %v445
        %518 = vmatprep.subr.bf16.mxu0 0
        %519 = vmatpush1.bf16.msra.mxu0 %v446
        %520 = vmatprep.subr.bf16.mxu0 0
        %521 = vmatpush1.bf16.msra.mxu0 %v447
        %522 = vmatprep.subr.bf16.mxu0 0
        %523 = vmatpush1.bf16.msra.mxu0 %v448
        %524 = vmatprep.subr.bf16.mxu0 0
        %525 = vmatpush1.bf16.msra.mxu0 %v449
        %526 = vmatprep.subr.bf16.mxu0 0
        %527 = vmatpush1.bf16.msra.mxu0 %v450
        %528 = vmatprep.subr.bf16.mxu0 0
        %529 = vmatpush1.bf16.msra.mxu0 %v451
        %530 = vmatprep.subr.bf16.mxu0 0
        %531 = vmatpush1.bf16.msra.mxu0 %v452
        %532 = vmatprep.subr.bf16.mxu0 0
        %533 = vmatpush1.bf16.msra.mxu0 %v453
        %534 = vmatprep.mubr.bf16.mxu0 %v303
        %535 = vmatmul.mubr.bf16.gmra.mrb[0].mxu0 %v302
        %v536 = vpop.f32.mrb[0].mxu0
        %v537 = vadd.f32 0.0, %v536
        %v538 = vpop.f32.mrb[0].mxu0
        %v539 = vpop.f32.mrb[0].mxu0
        %v540 = vadd.f32 0.0, %v539
        %v541 = vpop.f32.mrb[0].mxu0
        %542 = vdwg.mxu0
        %543 = vmatprep.subr.bf16.mxu0 0
        %544 = vmatpush1.bf16.msra.mxu0 %v454
        %545 = vmatprep.subr.bf16.mxu0 0
        %546 = vmatpush1.bf16.msra.mxu0 %v455
        %547 = vmatprep.subr.bf16.mxu0 0
        %548 = vmatpush1.bf16.msra.mxu0 %v456
        %549 = vmatprep.subr.bf16.mxu0 0
        %550 = vmatpush1.bf16.msra.mxu0 %v457
        %551 = vmatprep.subr.bf16.mxu0 0
        %552 = vmatpush1.bf16.msra.mxu0 %v458
        %553 = vmatprep.subr.bf16.mxu0 0
        %554 = vmatpush1.bf16.msra.mxu0 %v459
        %555 = vmatprep.subr.bf16.mxu0 0
        %556 = vmatpush1.bf16.msra.mxu0 %v460
        %557 = vmatprep.subr.bf16.mxu0 0
        %558 = vmatpush1.bf16.msra.mxu0 %v461
        %559 = vmatprep.subr.bf16.mxu0 0
        %560 = vmatpush1.bf16.msra.mxu0 %v462
        %561 = vmatprep.subr.bf16.mxu0 0
        %562 = vmatpush1.bf16.msra.mxu0 %v463
        %563 = vmatprep.subr.bf16.mxu0 0
        %564 = vmatpush1.bf16.msra.mxu0 %v464
        %565 = vmatprep.subr.bf16.mxu0 0
        %566 = vmatpush1.bf16.msra.mxu0 %v465
        %567 = vmatprep.subr.bf16.mxu0 0
        %568 = vmatpush1.bf16.msra.mxu0 %v466
        %569 = vmatprep.subr.bf16.mxu0 0
        %570 = vmatpush1.bf16.msra.mxu0 %v467
        %571 = vmatprep.subr.bf16.mxu0 0
        %572 = vmatpush1.bf16.msra.mxu0 %v468
        %573 = vmatprep.subr.bf16.mxu0 0
        %574 = vmatpush1.bf16.msra.mxu0 %v469
        %575 = vmatprep.mubr.bf16.mxu0 %v305
        %576 = vmatmul.mubr.bf16.gmra.mrb[0].mxu0 %v304
        %v577 = vpop.f32.mrb[0].mxu0
        %v578 = vadd.f32 %v537, %v577
        %v579 = vpop.f32.mrb[0].mxu0
        %v580 = vpop.f32.mrb[0].mxu0
        %v581 = vadd.f32 %v540, %v580
        %v582 = vpop.f32.mrb[0].mxu0
        %583 = vdwg.mxu0
        %v584 = vadd.f32 %v220, %v578
        %v585 = vadd.f32 %v221, %v581
        %vm586 = vcmask 7168
        %587 = vst.msk [vmem:[#allocation2] sm:$0xff] %vm586, %v584
        %588 = vst.msk [vmem:[#allocation2 + $0x8] sm:$0xff] %vm586, %v585
        %p589 = scmp.eq.s32.totalorder %s18, 1
        // Predicated region
        $region56: #{discriminator_forward.9} parent=46 // pred_check
          %p590 = pneg %p589
        $region57: #{discriminator_forward.9} parent=46 // pred_check_branch
          %592 = sbr.rel (%p590) target = $region59
        $region58: #{discriminator_forward.9} parent=46 // pred_region
          %v593 = vld [vmem:[#allocation2] sm:$0xff]
          %v594 = vld [vmem:[#allocation2 + $0x8] sm:$0xff]
          %v595 = vxor.u32 %v593, 2147483648
          %v596 = vxor.u32 %v594, 2147483648
          %v597 = vmul.f32 %v595, 1.442695
          %v598 = vpow.pop %v597
          %v599 = vmul.f32 %v596, 1.442695
          %v600 = vpow.pop %v599
          %v601 = vadd.f32 %v598, 1.0
          %v602 = vadd.f32 %v600, 1.0
          %v603 = vrcp.pop %v601
          %v604 = vmul.f32 1.0, %v603
          %v605 = vrcp.pop %v602
          %v606 = vmul.f32 1.0, %v605
          %607 = vst.msk [vmem:[%s210] sm:$0xff] %vm586, %v604
          %608 = vst.msk [vmem:[%s210 + $0x8] sm:$0xff] %vm586, %v606
        $region59: #{discriminator_forward.9} parent=46 // pred_fallthru
          _
        %s609 = smul.u32 2, %s17
        %p610 = scmp.lt.s32.totalorder %s609, 1
        %s611 = scalar_select %p610, %s609, 1
        %s612 = smul.addr %s611, 8
        %s613 = scalar_lea.vmem %s2, %s612
        // Predicated region
        $region60: #{discriminator_forward.9} parent=46 // pred_check
          %p614 = pneg %p97
        $region61: #{discriminator_forward.9} parent=46 // pred_check_branch
          %616 = sbr.rel (%p614) target = $region63
        $region62: #{discriminator_forward.9} parent=46 // pred_region
          %s617 = smul.u32 2, %s17
        $region63: #{discriminator_forward.9} parent=46 // pred_fallthru
          _
        // Predicated region
        $region64: #{discriminator_forward.9} parent=46 // pred_check
          %p618 = pneg %p97
        $region65: #{discriminator_forward.9} parent=46 // pred_check_branch
          %620 = sbr.rel (%p618) target = $region67
        $region66: #{discriminator_forward.9} parent=46 // pred_region
          %s621 = smul.u32 2, %s17
          %p622 = scmp.lt.s32.totalorder %s621, 1
          %s623 = scalar_select %p622, %s621, 1
          %s624 = smul.addr %s623, 8
          %s625 = scalar_lea.vmem %s2, %s624
        $region67: #{discriminator_forward.9} parent=46 // pred_fallthru
          _
      $region47: #{discriminator_forward.9} parent=5 // pred_fallthru
        _
      %p626 = scmp.le.s32.totalorder 2, %s8
      // Predicated region
      $region68: #{discriminator_forward.9} parent=5 // pred_check
        %p627 = pneg %p626
      $region69: #{discriminator_forward.9} parent=5 // pred_check_branch
        %629 = sbr.rel (%p627) target = $region71
      $region70: #{discriminator_forward.9} parent=5 // pred_region
        %s630 = ssub.s32 %s8, 2
      $region71: #{discriminator_forward.9} parent=5 // pred_fallthru
        _
    $region6: #{discriminator_forward.9} parent=1 // loop_footer
      %s12 = sadd.s32 1, %s8
    $region7: #{discriminator_forward.9} parent=1 // loop_footer_branch
      %7 = sbr.rel target = $region3
    $region8: #{discriminator_forward.9} parent=1 // loop_exit
      _

</llo_original>
